<compile_context>
chip_gen: v6e
topology: v6e:2x2x1
jax: 0.10.0
libtpu: 0.0.40
codegen_flags: <defaults>
</compile_context>

<pallas_src>
import functools

import numpy as np
import jax
import jax.numpy as jnp
from jax import lax
from jax.experimental import pallas as pl
from jax.experimental.pallas import tpu as pltpu


# ------------------------------- helpers ----------------------------------- #

def _fold_bn(conv_bias, bn, shape):
    """Fold conv bias + inference BatchNorm into per-channel scale/bias (f32)."""
    gamma, beta, mean, var, eps = bn
    s = gamma / jnp.sqrt(var + eps)
    scale = s.reshape(shape).astype(jnp.float32)
    bias = ((conv_bias - mean) * s + beta).reshape(shape).astype(jnp.float32)
    return scale, bias


def _flip_weights(w_t):
    # (Cin, Cout, KH, KW) -> spatially flipped -> (KH, KW, Cin, Cout)
    return jnp.transpose(w_t[:, :, ::-1, ::-1], (2, 3, 0, 1))


# --------------------------- dense + BN + ReLU ------------------------------ #

def dense_bn_relu_kernel(x_ref, w_ref, scale_ref, bias_ref, o_ref):
    # x: (B, 1920) bf16, w: (1920, 192) bf16, scale/bias: (1, 192) f32, o: (B, 192) bf16
    y = jnp.dot(x_ref[...], w_ref[...], preferred_element_type=jnp.float32)
    y = y * scale_ref[...] + bias_ref[...]
    o_ref[...] = jnp.maximum(y, 0.0).astype(o_ref.dtype)


def dense_bn_relu(x, w, scale, bias):
    B, N = x.shape[0], w.shape[1]
    return pl.pallas_call(
        dense_bn_relu_kernel,
        out_shape=jax.ShapeDtypeStruct((B, N), jnp.bfloat16),
    )(x, w, scale, bias)


# ---------------- generic stride-1 "tap" conv (NHWC, one image/step) -------- #

def conv_taps_kernel(x_ref, w_ref, scale_ref, bias_ref, o_ref, *,
                     KH, KW, Hout, Wout, act):
    # x_ref:  (Hpad, Wpad, Cin) bf16  -- one full (pre-padded) image, VMEM resident
    # w_ref:  (KH*KW, Cin, Cout) bf16 -- pre-flipped per-tap weights
    # scale/bias: (1, Cout) f32       -- folded conv bias + BatchNorm (inference)
    # o_ref:  (Hout, Wout, Cout)
    Cin = x_ref.shape[-1]
    Cout = o_ref.shape[-1]
    scale = scale_ref[...]          # hoisted out of the row loop
    bias = bias_ref[...]

    def row_body(h, carry):
        acc = jnp.zeros((Wout, Cout), jnp.float32)
        for kh in range(KH):
            for kw in range(KW):
                patch = x_ref[h + kh, pl.ds(kw, Wout), :]        # (Wout, Cin)
                w_tap = w_ref[kh * KW + kw]                      # (Cin, Cout)
                if Cin == 1:
                    # outer product on the VPU (avoid K=1 MXU matmul)
                    acc = acc + patch.astype(jnp.float32) * w_tap.astype(jnp.float32)
                else:
                    acc = acc + jnp.dot(patch, w_tap,
                                        preferred_element_type=jnp.float32)
        y = acc * scale + bias
        if act == "relu":
            y = jnp.maximum(y, 0.0)
        else:  # sigmoid
            y = pl.reciprocal(1.0 + jnp.exp(-y), approx=True)
        o_ref[h] = y.astype(o_ref.dtype)
        return carry

    lax.fori_loop(0, Hout, row_body, 0)


def conv_taps_nhwc(x_pad, w_taps, scale, bias, *, KH, KW, Hout, Wout, act,
                   out_dtype=jnp.bfloat16):
    B, Hp, Wp, Cin = x_pad.shape
    Cout = w_taps.shape[-1]
    kernel = functools.partial(conv_taps_kernel, KH=KH, KW=KW,
                               Hout=Hout, Wout=Wout, act=act)
    return pl.pallas_call(
        kernel,
        out_shape=jax.ShapeDtypeStruct((B, Hout, Wout, Cout), out_dtype),
        grid=(B,),
        in_specs=[
            pl.BlockSpec((None, Hp, Wp, Cin), lambda b: (b, 0, 0, 0)),
            pl.BlockSpec((KH * KW, Cin, Cout), lambda b: (0, 0, 0)),
            pl.BlockSpec((1, Cout), lambda b: (0, 0)),
            pl.BlockSpec((1, Cout), lambda b: (0, 0)),
        ],
        out_specs=pl.BlockSpec((None, Hout, Wout, Cout), lambda b: (b, 0, 0, 0)),
        compiler_params=pltpu.CompilerParams(dimension_semantics=("parallel",)),
    )(x_pad, w_taps, scale, bias)


# ---------------- deconv via zero-dilation (only used for Cin=1 layer) ------ #

def deconv_bn_act_dilated(x, w_t, b, bn, *, stride, padding, act):
    """ConvTranspose2d + BN(inference) + act via the dilated-conv lowering (NHWC)."""
    Cin, Cout, KH, KW = w_t.shape
    sh, sw = stride
    ph, pw = padding
    B, H, W, _ = x.shape
    Hout = (H - 1) * sh - 2 * ph + KH
    Wout = (W - 1) * sw - 2 * pw + KW

    if sh > 1 or sw > 1:
        xd = jnp.zeros((B, (H - 1) * sh + 1, (W - 1) * sw + 1, Cin), x.dtype)
        xd = xd.at[:, ::sh, ::sw, :].set(x)
    else:
        xd = x
    x_pad = jnp.pad(xd, ((0, 0), (KH - 1 - ph,) * 2, (KW - 1 - pw,) * 2, (0, 0)))

    w_taps = _flip_weights(w_t).reshape(KH * KW, Cin, Cout).astype(jnp.bfloat16)
    scale, bias = _fold_bn(b, bn, (1, Cout))
    return conv_taps_nhwc(x_pad, w_taps, scale, bias, KH=KH, KW=KW,
                          Hout=Hout, Wout=Wout, act=act)


# ------------- stride-2 deconv via sub-pixel (phase) decomposition ---------- #

def _phase_taps(K, s, p, r):
    """Taps of the flipped kernel contributing to output phase r (stride s)."""
    rem = (K - 1 - p - r) % s
    taps = [d for d in range(K) if d % s == rem]
    e0 = (r + taps[0] - (K - 1 - p)) // s      # input offset of the first tap (<= 0 here)
    return taps, e0


def deconv_bn_act_phase2(x, w_t, b, bn, *, padding, act):
    """stride-2 ConvTranspose2d(k=4) + BN + act, no zero-dilated input.

    Each output phase (oh%2, ow%2) is a stride-1 conv of the undilated input with a
    2x2 sub-kernel (same Pallas kernel); the four phase outputs are interleaved.
    """
    s = 2
    Cin, Cout, KH, KW = w_t.shape
    ph, pw = padding
    B, H, W, _ = x.shape
    Hout = (H - 1) * s - 2 * ph + KH
    Wout = (W - 1) * s - 2 * pw + KW
    assert KH % s == 0 and KW % s == 0 and Hout % s == 0 and Wout % s == 0
    Mh, Mw = Hout // s, Wout // s

    wf = _flip_weights(w_t)                        # (KH, KW, Cin, Cout)
    scale, bias = _fold_bn(b, bn, (1, Cout))

    row_blocks = []
    for rh in range(s):
        th, eh0 = _phase_taps(KH, s, ph, rh)
        assert eh0 <= 0
        lo_h = -eh0
        hi_h = max(0, Mh + eh0 + len(th) - 1 - H)
        col_blocks = []
        for rw in range(s):
            tw, ew0 = _phase_taps(KW, s, pw, rw)
            assert ew0 <= 0
            lo_w = -ew0
            hi_w = max(0, Mw + ew0 + len(tw) - 1 - W)
            x_pad = jnp.pad(x, ((0, 0), (lo_h, hi_h), (lo_w, hi_w), (0, 0)))
            w_sub = wf[th[0]::s, tw[0]::s]                       # (2, 2, Cin, Cout)
            w_taps = w_sub.reshape(len(th) * len(tw), Cin, Cout).astype(jnp.bfloat16)
            y = conv_taps_nhwc(x_pad, w_taps, scale, bias,
                               KH=len(th), KW=len(tw), Hout=Mh, Wout=Mw, act=act)
            col_blocks.append(y)
        # interleave the two width phases: (B, Mh, Mw, C) x2 -> (B, Mh, Wout, C)
        row_blocks.append(jnp.stack(col_blocks, axis=3).reshape(B, Mh, Wout, Cout))
    # interleave the two height phases -> (B, Hout, Wout, C)
    return jnp.stack(row_blocks, axis=2).reshape(B, Hout, Wout, Cout)


# -------- final stride-1 deconv (Cout=3) computed in (C, W) orientation ----- #

def conv_out_cw_kernel(x_ref, w_ref, scale_ref, bias_ref, o_ref, *, KH, KW, Hout, Wout):
    # x_ref: (Hpad, Cin, Wpad) bf16 (HCW layout); w_ref: (KH*KW, Cout, Cin) bf16
    # scale/bias: (Cout, 1) f32;  o_ref: (Hout, Cout, Wout) f32
    Cout = o_ref.shape[1]
    scale = scale_ref[...]
    bias = bias_ref[...]

    def row_body(h, carry):
        acc = jnp.zeros((Cout, Wout), jnp.float32)
        for kh in range(KH):
            row = x_ref[h + kh]                       # (Cin, Wpad), W on lanes
            for kw in range(KW):
                slab = row[:, kw:kw + Wout]           # (Cin, Wout)
                acc = acc + jnp.dot(w_ref[kh * KW + kw], slab,
                                    preferred_element_type=jnp.float32)
        y = acc * scale + bias
        y = pl.reciprocal(1.0 + jnp.exp(-y), approx=True)    # sigmoid on the EUP
        o_ref[h] = y.astype(o_ref.dtype)
        return carry

    lax.fori_loop(0, Hout, row_body, 0)


def deconv_out_sigmoid_cw(x_nhwc, w_t, b, bn, *, padding):
    """Final ConvTranspose2d(32->3, k=7, s=1) + BN + sigmoid; returns (B, H, C, W)."""
    Cin, Cout, KH, KW = w_t.shape
    ph, pw = padding
    B, H, W, _ = x_nhwc.shape
    Hout = H - 2 * ph + KH - 1
    Wout = W - 2 * pw + KW - 1

    x_hcw = jnp.transpose(x_nhwc, (0, 1, 3, 2))                      # (B, H, Cin, W)
    x_pad = jnp.pad(x_hcw, ((0, 0), (KH - 1 - ph,) * 2, (0, 0), (KW - 1 - pw,) * 2))
    Hp, Wp = x_pad.shape[1], x_pad.shape[3]

    # (Cin, Cout, KH, KW) -> flip -> (KH, KW, Cout, Cin) -> (KH*KW, Cout, Cin)
    w_taps = jnp.transpose(w_t[:, :, ::-1, ::-1], (2, 3, 1, 0))
    w_taps = w_taps.reshape(KH * KW, Cout, Cin).astype(jnp.bfloat16)
    scale, bias = _fold_bn(b, bn, (Cout, 1))

    kernel = functools.partial(conv_out_cw_kernel, KH=KH, KW=KW, Hout=Hout, Wout=Wout)
    return pl.pallas_call(
        kernel,
        out_shape=jax.ShapeDtypeStruct((B, Hout, Cout, Wout), jnp.float32),
        grid=(B,),
        in_specs=[
            pl.BlockSpec((None, Hp, Cin, Wp), lambda bb: (bb, 0, 0, 0)),
            pl.BlockSpec((KH * KW, Cout, Cin), lambda bb: (0, 0, 0)),
            pl.BlockSpec((Cout, 1), lambda bb: (0, 0)),
            pl.BlockSpec((Cout, 1), lambda bb: (0, 0)),
        ],
        out_specs=pl.BlockSpec((None, Hout, Cout, Wout), lambda bb: (bb, 0, 0, 0)),
        compiler_params=pltpu.CompilerParams(dimension_semantics=("parallel",)),
    )(x_pad, w_taps, scale, bias)


# ----------------------------- model (Pallas) ------------------------------- #

def generator_deconv_pallas(x, p):
    B = x.shape[0]
    x2d = x.reshape(B, 1920).astype(jnp.bfloat16)

    scale, bias = _fold_bn(p["lin_b"], p["lin_bn"], (1, 192))
    h = dense_bn_relu(x2d, p["lin_w"].astype(jnp.bfloat16), scale, bias)  # (B, 192) bf16

    h = h.reshape(B, 1, 12, 16)                 # NCHW (PyTorch reshape semantics)
    h = jnp.transpose(h, (0, 2, 3, 1))          # -> NHWC (B, 12, 16, 1)

    h = deconv_bn_act_dilated(h, p["w0"], p["b0"], p["bn0"],
                              stride=(2, 2), padding=(2, 2), act="relu")   # (B,21,29,128)
    h = deconv_bn_act_phase2(h, p["w1"], p["b1"], p["bn1"],
                             padding=(0, 0), act="relu")                   # (B,44,60,64)
    h = deconv_bn_act_phase2(h, p["w2"], p["b2"], p["bn2"],
                             padding=(0, 1), act="relu")                   # (B,90,120,32)
    h = deconv_out_sigmoid_cw(h, p["w3"], p["b3"], p["bn3"],
                              padding=(3, 3))                              # (B,90,3,120)
    return jnp.transpose(h, (0, 2, 1, 3))       # -> NCHW (B, 3, 90, 120)


# --------------------------- pure-JAX reference ----------------------------- #

def _deconv_ref_nchw(x, w_t, b, bn, stride, padding, act):
    gamma, beta, mean, var, eps = bn
    KH, KW = w_t.shape[2], w_t.shape[3]
    w_conv = jnp.transpose(w_t[:, :, ::-1, ::-1], (1, 0, 2, 3))    # OIHW
    y = jax.lax.conv_general_dilated(
        x, w_conv, window_strides=(1, 1),
        padding=[(KH - 1 - padding[0],) * 2, (KW - 1 - padding[1],) * 2],
        lhs_dilation=stride,
        dimension_numbers=("NCHW", "OIHW", "NCHW"))
    y = y + b[None, :, None, None]
    y = ((y - mean[None, :, None, None]) / jnp.sqrt(var[None, :, None, None] + eps)
         * gamma[None, :, None, None] + beta[None, :, None, None])
    return jnp.maximum(y, 0.0) if act == "relu" else jax.nn.sigmoid(y)


def generator_deconv_ref(x, p):
    B = x.shape[0]
    h = x.reshape(B, 1920) @ p["lin_w"] + p["lin_b"]
    gamma, beta, mean, var, eps = p["lin_bn"]
    h = (h - mean) / jnp.sqrt(var + eps) * gamma + beta
    h = jnp.maximum(h, 0.0)
    h = h.reshape(B, 1, 12, 16)
    h = _deconv_ref_nchw(h, p["w0"], p["b0"], p["bn0"], (2, 2), (2, 2), "relu")
    h = _deconv_ref_nchw(h, p["w1"], p["b1"], p["bn1"], (2, 2), (0, 0), "relu")
    h = _deconv_ref_nchw(h, p["w2"], p["b2"], p["bn2"], (2, 2), (0, 1), "relu")
    h = _deconv_ref_nchw(h, p["w3"], p["b3"], p["bn3"], (1, 1), (3, 3), "sigmoid")
    return h


# -------------------------------- parameters -------------------------------- #

def init_params(key):
    ks = jax.random.split(key, 16)

    def w(k, shape, s=0.05):
        return s * jax.random.normal(k, shape, jnp.float32)

    def bn(k, c, eps):
        k1, k2, k3, k4 = jax.random.split(k, 4)
        gamma = 1.0 + 0.1 * jax.random.normal(k1, (c,), jnp.float32)
        beta = 0.1 * jax.random.normal(k2, (c,), jnp.float32)
        mean = 0.1 * jax.random.normal(k3, (c,), jnp.float32)
        var = 1.0 + 0.5 * jax.random.uniform(k4, (c,), jnp.float32)
        return (gamma, beta, mean, var, eps)

    p = {}
    p["lin_w"] = w(ks[0], (1920, 192))
    p["lin_b"] = w(ks[1], (192,))
    p["lin_bn"] = bn(ks[2], 192, 1e-5)
    # ConvTranspose2d weights in PyTorch layout (Cin, Cout, KH, KW); eps per module
    p["w0"] = w(ks[3], (1, 128, 3, 3));  p["b0"] = w(ks[4], (128,));  p["bn0"] = bn(ks[5], 128, 32.0)
    p["w1"] = w(ks[6], (128, 64, 4, 4)); p["b1"] = w(ks[7], (64,));   p["bn1"] = bn(ks[8], 64, 32.0)
    p["w2"] = w(ks[9], (64, 32, 4, 4));  p["b2"] = w(ks[10], (32,));  p["bn2"] = bn(ks[11], 32, 90.0)
    p["w3"] = w(ks[12], (32, 3, 7, 7));  p["b3"] = w(ks[13], (3,));   p["bn3"] = bn(ks[14], 3, 90.0)
    return p


# ----------------------------------- main ------------------------------------ #

if __name__ == "__main__":
    key = jax.random.PRNGKey(0)
    kx, kp = jax.random.split(key)
    batch_size = 2
    x = jax.random.normal(kx, (batch_size, 1920), jnp.float32)
    params = init_params(kp)

    out = jax.jit(generator_deconv_pallas)(x, params)
    out = jax.block_until_ready(out)
    assert out.shape == (batch_size, 3, 90, 120), out.shape

    ref = generator_deconv_ref(x, params)
    # bf16 MXU operands with f32 accumulation -> compare against the f32 reference
    # with a correspondingly relaxed (but still bug-catching) tolerance.
    np.testing.assert_allclose(np.asarray(out), np.asarray(ref), rtol=2e-2, atol=2e-2)

    print("KERNEL_OK")
</pallas_src>

<mosaic_0001>
module attributes {stable_mosaic.version = 11 : i64} {
  func.func @dense_bn_relu_kernel(%arg0: memref<2x1920xbf16, #tpu.memory_space<vmem>>, %arg1: memref<1920x192xbf16, #tpu.memory_space<vmem>>, %arg2: memref<1x192xf32, #tpu.memory_space<vmem>>, %arg3: memref<1x192xf32, #tpu.memory_space<vmem>>, %arg4: memref<2x192xbf16, #tpu.memory_space<vmem>>) attributes {dimension_semantics = [], scalar_prefetch = 0 : i64, scratch_operands = 0 : i64, tpu.core_type = #tpu.core_type<tc>} {
    %c0 = arith.constant 0 : index
    %c0_0 = arith.constant 0 : index
    %0 = vector.load %arg0[%c0, %c0_0] : memref<2x1920xbf16, #tpu.memory_space<vmem>>, vector<2x1920xbf16>
    %c0_1 = arith.constant 0 : index
    %c0_2 = arith.constant 0 : index
    %1 = vector.load %arg1[%c0_1, %c0_2] : memref<1920x192xbf16, #tpu.memory_space<vmem>>, vector<1920x192xbf16>
    %cst = arith.constant dense<0.000000e+00> : vector<2x192xf32>
    %2 = tpu.matmul %0, %1, %cst {dimension_numbers = #tpu.dot_dimension_numbers<[1], [0], [0], [1], [0, 0, 1, 1], [], []>} : vector<2x1920xbf16>, vector<1920x192xbf16>, vector<2x192xf32> -> vector<2x192xf32>
    %c0_3 = arith.constant 0 : index
    %c0_4 = arith.constant 0 : index
    %3 = vector.load %arg2[%c0_3, %c0_4] : memref<1x192xf32, #tpu.memory_space<vmem>>, vector<1x192xf32>
    %4 = vector.broadcast %3 : vector<1x192xf32> to vector<2x192xf32>
    %5 = arith.mulf %2, %4 : vector<2x192xf32>
    %c0_5 = arith.constant 0 : index
    %c0_6 = arith.constant 0 : index
    %6 = vector.load %arg3[%c0_5, %c0_6] : memref<1x192xf32, #tpu.memory_space<vmem>>, vector<1x192xf32>
    %7 = vector.broadcast %6 : vector<1x192xf32> to vector<2x192xf32>
    %8 = arith.addf %5, %7 : vector<2x192xf32>
    %cst_7 = arith.constant 0.000000e+00 : f32
    %9 = vector.broadcast %cst_7 : f32 to vector<2x192xf32>
    %10 = arith.maximumf %8, %9 : vector<2x192xf32>
    %11 = arith.truncf %10 : vector<2x192xf32> to vector<2x192xbf16>
    %c0_8 = arith.constant 0 : index
    %c0_9 = arith.constant 0 : index
    %12 = vector.load %arg4[%c0_8, %c0_9] : memref<2x192xbf16, #tpu.memory_space<vmem>>, vector<2x192xbf16>
    tpu.vector_store %arg4[%c0_8, %c0_9], %11 {strides = array<i32>} : memref<2x192xbf16, #tpu.memory_space<vmem>>, vector<2x192xbf16>,
    return
  }
}

module attributes {stable_mosaic.version = 11 : i64} {
  func.func @conv_taps_kernel(%arg0: i32, %arg1: memref<1x23x31x1xbf16, #tpu.memory_space<vmem>>, %arg2: memref<9x1x128xbf16, #tpu.memory_space<vmem>>, %arg3: memref<1x128xf32, #tpu.memory_space<vmem>>, %arg4: memref<1x128xf32, #tpu.memory_space<vmem>>, %arg5: memref<1x21x29x128xbf16, #tpu.memory_space<vmem>>) attributes {dimension_semantics = [#tpu.dimension_semantics<parallel>], iteration_bounds = array<i64: 2>, scalar_prefetch = 0 : i64, scratch_operands = 0 : i64, tpu.core_type = #tpu.core_type<tc>, window_params = [{transform_indices = @transform_0, window_bounds = array<i64: 1, 23, 31, 1>}, {pipeline_mode = #tpu.pipeline_mode<synchronous>, transform_indices = @transform_1, window_bounds = array<i64: 9, 1, 128>}, {pipeline_mode = #tpu.pipeline_mode<synchronous>, transform_indices = @transform_2, window_bounds = array<i64: 1, 128>}, {pipeline_mode = #tpu.pipeline_mode<synchronous>, transform_indices = @transform_3, window_bounds = array<i64: 1, 128>}, {transform_indices = @transform_4, window_bounds = array<i64: 1, 21, 29, 128>}]} {
    %c0 = arith.constant 0 : index
    %c0_0 = arith.constant 0 : index
    %0 = vector.load %arg3[%c0, %c0_0] : memref<1x128xf32, #tpu.memory_space<vmem>>, vector<1x128xf32>
    %c0_1 = arith.constant 0 : index
    %c0_2 = arith.constant 0 : index
    %1 = vector.load %arg4[%c0_1, %c0_2] : memref<1x128xf32, #tpu.memory_space<vmem>>, vector<1x128xf32>
    %c0_i32 = arith.constant 0 : i32
    %c21_i32 = arith.constant 21 : i32
    %2 = arith.addi %c0_i32, %c21_i32 : i32
    %c1_i32 = arith.constant 1 : i32
    scf.for %arg6 = %c0_i32 to %2 step %c1_i32  : i32 {
      %cst = arith.constant 0.000000e+00 : f32
      %3 = vector.broadcast %cst : f32 to vector<29x128xf32>
      %c0_i32_4 = arith.constant 0 : i32
      %4 = arith.addi %arg6, %c0_i32_4 : i32
      %c0_5 = arith.constant 0 : index
      %5 = arith.index_cast %4 : i32 to index
      %c0_6 = arith.constant 0 : index
      %c0_7 = arith.constant 0 : index
      %6 = vector.load %arg1[%c0_5, %5, %c0_6, %c0_7] : memref<1x23x31x1xbf16, #tpu.memory_space<vmem>>, vector<1x1x29x1xbf16>
      %7 = vector.shape_cast %6 : vector<1x1x29x1xbf16> to vector<29x1xbf16>
      %c0_8 = arith.constant 0 : index
      %c0_9 = arith.constant 0 : index
      %c0_10 = arith.constant 0 : index
      %8 = vector.load %arg2[%c0_8, %c0_9, %c0_10] : memref<9x1x128xbf16, #tpu.memory_space<vmem>>, vector<1x1x128xbf16>
      %9 = vector.shape_cast %8 : vector<1x1x128xbf16> to vector<1x128xbf16>
      %10 = arith.extf %7 : vector<29x1xbf16> to vector<29x1xf32>
      %11 = arith.extf %9 : vector<1x128xbf16> to vector<1x128xf32>
      %12 = vector.broadcast %10 : vector<29x1xf32> to vector<29x128xf32>
      %13 = vector.broadcast %11 : vector<1x128xf32> to vector<29x128xf32>
      %14 = arith.mulf %12, %13 : vector<29x128xf32>
      %15 = arith.addf %3, %14 : vector<29x128xf32>
      %c0_i32_11 = arith.constant 0 : i32
      %16 = arith.addi %arg6, %c0_i32_11 : i32
      %c0_12 = arith.constant 0 : index
      %17 = arith.index_cast %16 : i32 to index
      %c1 = arith.constant 1 : index
      %c0_13 = arith.constant 0 : index
      %18 = vector.load %arg1[%c0_12, %17, %c1, %c0_13] : memref<1x23x31x1xbf16, #tpu.memory_space<vmem>>, vector<1x1x29x1xbf16>
      %19 = vector.shape_cast %18 : vector<1x1x29x1xbf16> to vector<29x1xbf16>
      %c1_14 = arith.constant 1 : index
      %c0_15 = arith.constant 0 : index
      %c0_16 = arith.constant 0 : index
      %20 = vector.load %arg2[%c1_14, %c0_15, %c0_16] : memref<9x1x128xbf16, #tpu.memory_space<vmem>>, vector<1x1x128xbf16>
      %21 = vector.shape_cast %20 : vector<1x1x128xbf16> to vector<1x128xbf16>
      %22 = arith.extf %19 : vector<29x1xbf16> to vector<29x1xf32>
      %23 = arith.extf %21 : vector<1x128xbf16> to vector<1x128xf32>
      %24 = vector.broadcast %22 : vector<29x1xf32> to vector<29x128xf32>
      %25 = vector.broadcast %23 : vector<1x128xf32> to vector<29x128xf32>
      %26 = arith.mulf %24, %25 : vector<29x128xf32>
      %27 = arith.addf %15, %26 : vector<29x128xf32>
      %c0_i32_17 = arith.constant 0 : i32
      %28 = arith.addi %arg6, %c0_i32_17 : i32
      %c0_18 = arith.constant 0 : index
      %29 = arith.index_cast %28 : i32 to index
      %c2 = arith.constant 2 : index
      %c0_19 = arith.constant 0 : index
      %30 = vector.load %arg1[%c0_18, %29, %c2, %c0_19] : memref<1x23x31x1xbf16, #tpu.memory_space<vmem>>, vector<1x1x29x1xbf16>
      %31 = vector.shape_cast %30 : vector<1x1x29x1xbf16> to vector<29x1xbf16>
      %c2_20 = arith.constant 2 : index
      %c0_21 = arith.constant 0 : index
      %c0_22 = arith.constant 0 : index
      %32 = vector.load %arg2[%c2_20, %c0_21, %c0_22] : memref<9x1x128xbf16, #tpu.memory_space<vmem>>, vector<1x1x128xbf16>
      %33 = vector.shape_cast %32 : vector<1x1x128xbf16> to vector<1x128xbf16>
      %34 = arith.extf %31 : vector<29x1xbf16> to vector<29x1xf32>
      %35 = arith.extf %33 : vector<1x128xbf16> to vector<1x128xf32>
      %36 = vector.broadcast %34 : vector<29x1xf32> to vector<29x128xf32>
      %37 = vector.broadcast %35 : vector<1x128xf32> to vector<29x128xf32>
      %38 = arith.mulf %36, %37 : vector<29x128xf32>
      %39 = arith.addf %27, %38 : vector<29x128xf32>
      %c1_i32_23 = arith.constant 1 : i32
      %40 = arith.addi %arg6, %c1_i32_23 : i32
      %c0_24 = arith.constant 0 : index
      %41 = arith.index_cast %40 : i32 to index
      %c0_25 = arith.constant 0 : index
      %c0_26 = arith.constant 0 : index
      %42 = vector.load %arg1[%c0_24, %41, %c0_25, %c0_26] : memref<1x23x31x1xbf16, #tpu.memory_space<vmem>>, vector<1x1x29x1xbf16>
      %43 = vector.shape_cast %42 : vector<1x1x29x1xbf16> to vector<29x1xbf16>
      %c3 = arith.constant 3 : index
      %c0_27 = arith.constant 0 : index
      %c0_28 = arith.constant 0 : index
      %44 = vector.load %arg2[%c3, %c0_27, %c0_28] : memref<9x1x128xbf16, #tpu.memory_space<vmem>>, vector<1x1x128xbf16>
      %45 = vector.shape_cast %44 : vector<1x1x128xbf16> to vector<1x128xbf16>
      %46 = arith.extf %43 : vector<29x1xbf16> to vector<29x1xf32>
      %47 = arith.extf %45 : vector<1x128xbf16> to vector<1x128xf32>
      %48 = vector.broadcast %46 : vector<29x1xf32> to vector<29x128xf32>
      %49 = vector.broadcast %47 : vector<1x128xf32> to vector<29x128xf32>
      %50 = arith.mulf %48, %49 : vector<29x128xf32>
      %51 = arith.addf %39, %50 : vector<29x128xf32>
      %c1_i32_29 = arith.constant 1 : i32
      %52 = arith.addi %arg6, %c1_i32_29 : i32
      %c0_30 = arith.constant 0 : index
      %53 = arith.index_cast %52 : i32 to index
      %c1_31 = arith.constant 1 : index
      %c0_32 = arith.constant 0 : index
      %54 = vector.load %arg1[%c0_30, %53, %c1_31, %c0_32] : memref<1x23x31x1xbf16, #tpu.memory_space<vmem>>, vector<1x1x29x1xbf16>
      %55 = vector.shape_cast %54 : vector<1x1x29x1xbf16> to vector<29x1xbf16>
      %c4 = arith.constant 4 : index
      %c0_33 = arith.constant 0 : index
      %c0_34 = arith.constant 0 : index
      %56 = vector.load %arg2[%c4, %c0_33, %c0_34] : memref<9x1x128xbf16, #tpu.memory_space<vmem>>, vector<1x1x128xbf16>
      %57 = vector.shape_cast %56 : vector<1x1x128xbf16> to vector<1x128xbf16>
      %58 = arith.extf %55 : vector<29x1xbf16> to vector<29x1xf32>
      %59 = arith.extf %57 : vector<1x128xbf16> to vector<1x128xf32>
      %60 = vector.broadcast %58 : vector<29x1xf32> to vector<29x128xf32>
      %61 = vector.broadcast %59 : vector<1x128xf32> to vector<29x128xf32>
      %62 = arith.mulf %60, %61 : vector<29x128xf32>
      %63 = arith.addf %51, %62 : vector<29x128xf32>
      %c1_i32_35 = arith.constant 1 : i32
      %64 = arith.addi %arg6, %c1_i32_35 : i32
      %c0_36 = arith.constant 0 : index
      %65 = arith.index_cast %64 : i32 to index
      %c2_37 = arith.constant 2 : index
      %c0_38 = arith.constant 0 : index
      %66 = vector.load %arg1[%c0_36, %65, %c2_37, %c0_38] : memref<1x23x31x1xbf16, #tpu.memory_space<vmem>>, vector<1x1x29x1xbf16>
      %67 = vector.shape_cast %66 : vector<1x1x29x1xbf16> to vector<29x1xbf16>
      %c5 = arith.constant 5 : index
      %c0_39 = arith.constant 0 : index
      %c0_40 = arith.constant 0 : index
      %68 = vector.load %arg2[%c5, %c0_39, %c0_40] : memref<9x1x128xbf16, #tpu.memory_space<vmem>>, vector<1x1x128xbf16>
      %69 = vector.shape_cast %68 : vector<1x1x128xbf16> to vector<1x128xbf16>
      %70 = arith.extf %67 : vector<29x1xbf16> to vector<29x1xf32>
      %71 = arith.extf %69 : vector<1x128xbf16> to vector<1x128xf32>
      %72 = vector.broadcast %70 : vector<29x1xf32> to vector<29x128xf32>
      %73 = vector.broadcast %71 : vector<1x128xf32> to vector<29x128xf32>
      %74 = arith.mulf %72, %73 : vector<29x128xf32>
      %75 = arith.addf %63, %74 : vector<29x128xf32>
      %c2_i32 = arith.constant 2 : i32
      %76 = arith.addi %arg6, %c2_i32 : i32
      %c0_41 = arith.constant 0 : index
      %77 = arith.index_cast %76 : i32 to index
      %c0_42 = arith.constant 0 : index
      %c0_43 = arith.constant 0 : index
      %78 = vector.load %arg1[%c0_41, %77, %c0_42, %c0_43] : memref<1x23x31x1xbf16, #tpu.memory_space<vmem>>, vector<1x1x29x1xbf16>
      %79 = vector.shape_cast %78 : vector<1x1x29x1xbf16> to vector<29x1xbf16>
      %c6 = arith.constant 6 : index
      %c0_44 = arith.constant 0 : index
      %c0_45 = arith.constant 0 : index
      %80 = vector.load %arg2[%c6, %c0_44, %c0_45] : memref<9x1x128xbf16, #tpu.memory_space<vmem>>, vector<1x1x128xbf16>
      %81 = vector.shape_cast %80 : vector<1x1x128xbf16> to vector<1x128xbf16>
      %82 = arith.extf %79 : vector<29x1xbf16> to vector<29x1xf32>
      %83 = arith.extf %81 : vector<1x128xbf16> to vector<1x128xf32>
      %84 = vector.broadcast %82 : vector<29x1xf32> to vector<29x128xf32>
      %85 = vector.broadcast %83 : vector<1x128xf32> to vector<29x128xf32>
      %86 = arith.mulf %84, %85 : vector<29x128xf32>
      %87 = arith.addf %75, %86 : vector<29x128xf32>
      %c2_i32_46 = arith.constant 2 : i32
      %88 = arith.addi %arg6, %c2_i32_46 : i32
      %c0_47 = arith.constant 0 : index
      %89 = arith.index_cast %88 : i32 to index
      %c1_48 = arith.constant 1 : index
      %c0_49 = arith.constant 0 : index
      %90 = vector.load %arg1[%c0_47, %89, %c1_48, %c0_49] : memref<1x23x31x1xbf16, #tpu.memory_space<vmem>>, vector<1x1x29x1xbf16>
      %91 = vector.shape_cast %90 : vector<1x1x29x1xbf16> to vector<29x1xbf16>
      %c7 = arith.constant 7 : index
      %c0_50 = arith.constant 0 : index
      %c0_51 = arith.constant 0 : index
      %92 = vector.load %arg2[%c7, %c0_50, %c0_51] : memref<9x1x128xbf16, #tpu.memory_space<vmem>>, vector<1x1x128xbf16>
      %93 = vector.shape_cast %92 : vector<1x1x128xbf16> to vector<1x128xbf16>
      %94 = arith.extf %91 : vector<29x1xbf16> to vector<29x1xf32>
      %95 = arith.extf %93 : vector<1x128xbf16> to vector<1x128xf32>
      %96 = vector.broadcast %94 : vector<29x1xf32> to vector<29x128xf32>
      %97 = vector.broadcast %95 : vector<1x128xf32> to vector<29x128xf32>
      %98 = arith.mulf %96, %97 : vector<29x128xf32>
      %99 = arith.addf %87, %98 : vector<29x128xf32>
      %c2_i32_52 = arith.constant 2 : i32
      %100 = arith.addi %arg6, %c2_i32_52 : i32
      %c0_53 = arith.constant 0 : index
      %101 = arith.index_cast %100 : i32 to index
      %c2_54 = arith.constant 2 : index
      %c0_55 = arith.constant 0 : index
      %102 = vector.load %arg1[%c0_53, %101, %c2_54, %c0_55] : memref<1x23x31x1xbf16, #tpu.memory_space<vmem>>, vector<1x1x29x1xbf16>
      %103 = vector.shape_cast %102 : vector<1x1x29x1xbf16> to vector<29x1xbf16>
      %c8 = arith.constant 8 : index
      %c0_56 = arith.constant 0 : index
      %c0_57 = arith.constant 0 : index
      %104 = vector.load %arg2[%c8, %c0_56, %c0_57] : memref<9x1x128xbf16, #tpu.memory_space<vmem>>, vector<1x1x128xbf16>
      %105 = vector.shape_cast %104 : vector<1x1x128xbf16> to vector<1x128xbf16>
      %106 = arith.extf %103 : vector<29x1xbf16> to vector<29x1xf32>
      %107 = arith.extf %105 : vector<1x128xbf16> to vector<1x128xf32>
      %108 = vector.broadcast %106 : vector<29x1xf32> to vector<29x128xf32>
      %109 = vector.broadcast %107 : vector<1x128xf32> to vector<29x128xf32>
      %110 = arith.mulf %108, %109 : vector<29x128xf32>
      %111 = arith.addf %99, %110 : vector<29x128xf32>
      %112 = vector.broadcast %0 : vector<1x128xf32> to vector<29x128xf32>
      %113 = arith.mulf %111, %112 : vector<29x128xf32>
      %114 = vector.broadcast %1 : vector<1x128xf32> to vector<29x128xf32>
      %115 = arith.addf %113, %114 : vector<29x128xf32>
      %cst_58 = arith.constant 0.000000e+00 : f32
      %116 = vector.broadcast %cst_58 : f32 to vector<29x128xf32>
      %117 = arith.maximumf %115, %116 : vector<29x128xf32>
      %118 = arith.truncf %117 : vector<29x128xf32> to vector<29x128xbf16>
      %c0_59 = arith.constant 0 : index
      %119 = arith.index_cast %arg6 : i32 to index
      %c0_60 = arith.constant 0 : index
      %c0_61 = arith.constant 0 : index
      %120 = vector.load %arg5[%c0_59, %119, %c0_60, %c0_61] : memref<1x21x29x128xbf16, #tpu.memory_space<vmem>>, vector<1x1x29x128xbf16>
      %121 = vector.shape_cast %120 : vector<1x1x29x128xbf16> to vector<29x128xbf16>
      %122 = vector.shape_cast %118 : vector<29x128xbf16> to vector<1x1x29x128xbf16>
      tpu.vector_store %arg5[%c0_59, %119, %c0_60, %c0_61], %122 {strides = array<i32>} : memref<1x21x29x128xbf16, #tpu.memory_space<vmem>>, vector<1x1x29x128xbf16>,
    }
    %c21_i32_3 = arith.constant 21 : i32
    return
  }
  func.func @transform_0(%arg0: i32) -> (i32, i32, i32, i32) {
    %c0_i32 = arith.constant 0 : i32
    %c0_i32_0 = arith.constant 0 : i32
    %c0_i32_1 = arith.constant 0 : i32
    %c0_i32_2 = arith.constant 0 : i32
    return %arg0, %c0_i32, %c0_i32_0, %c0_i32_1 : i32, i32, i32, i32
  }
  func.func @transform_1(%arg0: i32) -> (i32, i32, i32) {
    %c0_i32 = arith.constant 0 : i32
    %c0_i32_0 = arith.constant 0 : i32
    %c0_i32_1 = arith.constant 0 : i32
    %c0_i32_2 = arith.constant 0 : i32
    return %c0_i32, %c0_i32_0, %c0_i32_1 : i32, i32, i32
  }
  func.func @transform_2(%arg0: i32) -> (i32, i32) {
    %c0_i32 = arith.constant 0 : i32
    %c0_i32_0 = arith.constant 0 : i32
    %c0_i32_1 = arith.constant 0 : i32
    return %c0_i32, %c0_i32_0 : i32, i32
  }
  func.func @transform_3(%arg0: i32) -> (i32, i32) {
    %c0_i32 = arith.constant 0 : i32
    %c0_i32_0 = arith.constant 0 : i32
    %c0_i32_1 = arith.constant 0 : i32
    return %c0_i32, %c0_i32_0 : i32, i32
  }
  func.func @transform_4(%arg0: i32) -> (i32, i32, i32, i32) {
    %c0_i32 = arith.constant 0 : i32
    %c0_i32_0 = arith.constant 0 : i32
    %c0_i32_1 = arith.constant 0 : i32
    %c0_i32_2 = arith.constant 0 : i32
    return %arg0, %c0_i32, %c0_i32_0, %c0_i32_1 : i32, i32, i32, i32
  }
}

module attributes {stable_mosaic.version = 11 : i64} {
  func.func @conv_taps_kernel(%arg0: i32, %arg1: memref<1x23x31x128xbf16, #tpu.memory_space<vmem>>, %arg2: memref<4x128x64xbf16, #tpu.memory_space<vmem>>, %arg3: memref<1x64xf32, #tpu.memory_space<vmem>>, %arg4: memref<1x64xf32, #tpu.memory_space<vmem>>, %arg5: memref<1x22x30x64xbf16, #tpu.memory_space<vmem>>) attributes {dimension_semantics = [#tpu.dimension_semantics<parallel>], iteration_bounds = array<i64: 2>, scalar_prefetch = 0 : i64, scratch_operands = 0 : i64, tpu.core_type = #tpu.core_type<tc>, window_params = [{transform_indices = @transform_0, window_bounds = array<i64: 1, 23, 31, 128>}, {pipeline_mode = #tpu.pipeline_mode<synchronous>, transform_indices = @transform_1, window_bounds = array<i64: 4, 128, 64>}, {pipeline_mode = #tpu.pipeline_mode<synchronous>, transform_indices = @transform_2, window_bounds = array<i64: 1, 64>}, {pipeline_mode = #tpu.pipeline_mode<synchronous>, transform_indices = @transform_3, window_bounds = array<i64: 1, 64>}, {transform_indices = @transform_4, window_bounds = array<i64: 1, 22, 30, 64>}]} {
    %c0 = arith.constant 0 : index
    %c0_0 = arith.constant 0 : index
    %0 = vector.load %arg3[%c0, %c0_0] : memref<1x64xf32, #tpu.memory_space<vmem>>, vector<1x64xf32>
    %c0_1 = arith.constant 0 : index
    %c0_2 = arith.constant 0 : index
    %1 = vector.load %arg4[%c0_1, %c0_2] : memref<1x64xf32, #tpu.memory_space<vmem>>, vector<1x64xf32>
    %c0_i32 = arith.constant 0 : i32
    %c22_i32 = arith.constant 22 : i32
    %2 = arith.addi %c0_i32, %c22_i32 : i32
    %c1_i32 = arith.constant 1 : i32
    scf.for %arg6 = %c0_i32 to %2 step %c1_i32  : i32 {
      %cst = arith.constant 0.000000e+00 : f32
      %3 = vector.broadcast %cst : f32 to vector<30x64xf32>
      %c0_i32_4 = arith.constant 0 : i32
      %4 = arith.addi %arg6, %c0_i32_4 : i32
      %c0_5 = arith.constant 0 : index
      %5 = arith.index_cast %4 : i32 to index
      %c0_6 = arith.constant 0 : index
      %c0_7 = arith.constant 0 : index
      %6 = vector.load %arg1[%c0_5, %5, %c0_6, %c0_7] : memref<1x23x31x128xbf16, #tpu.memory_space<vmem>>, vector<1x1x30x128xbf16>
      %7 = vector.shape_cast %6 : vector<1x1x30x128xbf16> to vector<30x128xbf16>
      %c0_8 = arith.constant 0 : index
      %c0_9 = arith.constant 0 : index
      %c0_10 = arith.constant 0 : index
      %8 = vector.load %arg2[%c0_8, %c0_9, %c0_10] : memref<4x128x64xbf16, #tpu.memory_space<vmem>>, vector<1x128x64xbf16>
      %9 = vector.shape_cast %8 : vector<1x128x64xbf16> to vector<128x64xbf16>
      %cst_11 = arith.constant dense<0.000000e+00> : vector<30x64xf32>
      %10 = tpu.matmul %7, %9, %cst_11 {dimension_numbers = #tpu.dot_dimension_numbers<[1], [0], [0], [1], [0, 0, 1, 1], [], []>} : vector<30x128xbf16>, vector<128x64xbf16>, vector<30x64xf32> -> vector<30x64xf32>
      %11 = arith.addf %3, %10 : vector<30x64xf32>
      %c0_i32_12 = arith.constant 0 : i32
      %12 = arith.addi %arg6, %c0_i32_12 : i32
      %c0_13 = arith.constant 0 : index
      %13 = arith.index_cast %12 : i32 to index
      %c1 = arith.constant 1 : index
      %c0_14 = arith.constant 0 : index
      %14 = vector.load %arg1[%c0_13, %13, %c1, %c0_14] : memref<1x23x31x128xbf16, #tpu.memory_space<vmem>>, vector<1x1x30x128xbf16>
      %15 = vector.shape_cast %14 : vector<1x1x30x128xbf16> to vector<30x128xbf16>
      %c1_15 = arith.constant 1 : index
      %c0_16 = arith.constant 0 : index
      %c0_17 = arith.constant 0 : index
      %16 = vector.load %arg2[%c1_15, %c0_16, %c0_17] : memref<4x128x64xbf16, #tpu.memory_space<vmem>>, vector<1x128x64xbf16>
      %17 = vector.shape_cast %16 : vector<1x128x64xbf16> to vector<128x64xbf16>
      %cst_18 = arith.constant dense<0.000000e+00> : vector<30x64xf32>
      %18 = tpu.matmul %15, %17, %cst_18 {dimension_numbers = #tpu.dot_dimension_numbers<[1], [0], [0], [1], [0, 0, 1, 1], [], []>} : vector<30x128xbf16>, vector<128x64xbf16>, vector<30x64xf32> -> vector<30x64xf32>
      %19 = arith.addf %11, %18 : vector<30x64xf32>
      %c1_i32_19 = arith.constant 1 : i32
      %20 = arith.addi %arg6, %c1_i32_19 : i32
      %c0_20 = arith.constant 0 : index
      %21 = arith.index_cast %20 : i32 to index
      %c0_21 = arith.constant 0 : index
      %c0_22 = arith.constant 0 : index
      %22 = vector.load %arg1[%c0_20, %21, %c0_21, %c0_22] : memref<1x23x31x128xbf16, #tpu.memory_space<vmem>>, vector<1x1x30x128xbf16>
      %23 = vector.shape_cast %22 : vector<1x1x30x128xbf16> to vector<30x128xbf16>
      %c2 = arith.constant 2 : index
      %c0_23 = arith.constant 0 : index
      %c0_24 = arith.constant 0 : index
      %24 = vector.load %arg2[%c2, %c0_23, %c0_24] : memref<4x128x64xbf16, #tpu.memory_space<vmem>>, vector<1x128x64xbf16>
      %25 = vector.shape_cast %24 : vector<1x128x64xbf16> to vector<128x64xbf16>
      %cst_25 = arith.constant dense<0.000000e+00> : vector<30x64xf32>
      %26 = tpu.matmul %23, %25, %cst_25 {dimension_numbers = #tpu.dot_dimension_numbers<[1], [0], [0], [1], [0, 0, 1, 1], [], []>} : vector<30x128xbf16>, vector<128x64xbf16>, vector<30x64xf32> -> vector<30x64xf32>
      %27 = arith.addf %19, %26 : vector<30x64xf32>
      %c1_i32_26 = arith.constant 1 : i32
      %28 = arith.addi %arg6, %c1_i32_26 : i32
      %c0_27 = arith.constant 0 : index
      %29 = arith.index_cast %28 : i32 to index
      %c1_28 = arith.constant 1 : index
      %c0_29 = arith.constant 0 : index
      %30 = vector.load %arg1[%c0_27, %29, %c1_28, %c0_29] : memref<1x23x31x128xbf16, #tpu.memory_space<vmem>>, vector<1x1x30x128xbf16>
      %31 = vector.shape_cast %30 : vector<1x1x30x128xbf16> to vector<30x128xbf16>
      %c3 = arith.constant 3 : index
      %c0_30 = arith.constant 0 : index
      %c0_31 = arith.constant 0 : index
      %32 = vector.load %arg2[%c3, %c0_30, %c0_31] : memref<4x128x64xbf16, #tpu.memory_space<vmem>>, vector<1x128x64xbf16>
      %33 = vector.shape_cast %32 : vector<1x128x64xbf16> to vector<128x64xbf16>
      %cst_32 = arith.constant dense<0.000000e+00> : vector<30x64xf32>
      %34 = tpu.matmul %31, %33, %cst_32 {dimension_numbers = #tpu.dot_dimension_numbers<[1], [0], [0], [1], [0, 0, 1, 1], [], []>} : vector<30x128xbf16>, vector<128x64xbf16>, vector<30x64xf32> -> vector<30x64xf32>
      %35 = arith.addf %27, %34 : vector<30x64xf32>
      %36 = vector.broadcast %0 : vector<1x64xf32> to vector<30x64xf32>
      %37 = arith.mulf %35, %36 : vector<30x64xf32>
      %38 = vector.broadcast %1 : vector<1x64xf32> to vector<30x64xf32>
      %39 = arith.addf %37, %38 : vector<30x64xf32>
      %cst_33 = arith.constant 0.000000e+00 : f32
      %40 = vector.broadcast %cst_33 : f32 to vector<30x64xf32>
      %41 = arith.maximumf %39, %40 : vector<30x64xf32>
      %42 = arith.truncf %41 : vector<30x64xf32> to vector<30x64xbf16>
      %c0_34 = arith.constant 0 : index
      %43 = arith.index_cast %arg6 : i32 to index
      %c0_35 = arith.constant 0 : index
      %c0_36 = arith.constant 0 : index
      %44 = vector.load %arg5[%c0_34, %43, %c0_35, %c0_36] : memref<1x22x30x64xbf16, #tpu.memory_space<vmem>>, vector<1x1x30x64xbf16>
      %45 = vector.shape_cast %44 : vector<1x1x30x64xbf16> to vector<30x64xbf16>
      %46 = vector.shape_cast %42 : vector<30x64xbf16> to vector<1x1x30x64xbf16>
      tpu.vector_store %arg5[%c0_34, %43, %c0_35, %c0_36], %46 {strides = array<i32>} : memref<1x22x30x64xbf16, #tpu.memory_space<vmem>>, vector<1x1x30x64xbf16>,
    }
    %c22_i32_3 = arith.constant 22 : i32
    return
  }
  func.func @transform_0(%arg0: i32) -> (i32, i32, i32, i32) {
    %c0_i32 = arith.constant 0 : i32
    %c0_i32_0 = arith.constant 0 : i32
    %c0_i32_1 = arith.constant 0 : i32
    %c0_i32_2 = arith.constant 0 : i32
    return %arg0, %c0_i32, %c0_i32_0, %c0_i32_1 : i32, i32, i32, i32
  }
  func.func @transform_1(%arg0: i32) -> (i32, i32, i32) {
    %c0_i32 = arith.constant 0 : i32
    %c0_i32_0 = arith.constant 0 : i32
    %c0_i32_1 = arith.constant 0 : i32
    %c0_i32_2 = arith.constant 0 : i32
    return %c0_i32, %c0_i32_0, %c0_i32_1 : i32, i32, i32
  }
  func.func @transform_2(%arg0: i32) -> (i32, i32) {
    %c0_i32 = arith.constant 0 : i32
    %c0_i32_0 = arith.constant 0 : i32
    %c0_i32_1 = arith.constant 0 : i32
    return %c0_i32, %c0_i32_0 : i32, i32
  }
  func.func @transform_3(%arg0: i32) -> (i32, i32) {
    %c0_i32 = arith.constant 0 : i32
    %c0_i32_0 = arith.constant 0 : i32
    %c0_i32_1 = arith.constant 0 : i32
    return %c0_i32, %c0_i32_0 : i32, i32
  }
  func.func @transform_4(%arg0: i32) -> (i32, i32, i32, i32) {
    %c0_i32 = arith.constant 0 : i32
    %c0_i32_0 = arith.constant 0 : i32
    %c0_i32_1 = arith.constant 0 : i32
    %c0_i32_2 = arith.constant 0 : i32
    return %arg0, %c0_i32, %c0_i32_0, %c0_i32_1 : i32, i32, i32, i32
  }
}

module attributes {stable_mosaic.version = 11 : i64} {
  func.func @conv_taps_kernel(%arg0: i32, %arg1: memref<1x46x61x64xbf16, #tpu.memory_space<vmem>>, %arg2: memref<4x64x32xbf16, #tpu.memory_space<vmem>>, %arg3: memref<1x32xf32, #tpu.memory_space<vmem>>, %arg4: memref<1x32xf32, #tpu.memory_space<vmem>>, %arg5: memref<1x45x60x32xbf16, #tpu.memory_space<vmem>>) attributes {dimension_semantics = [#tpu.dimension_semantics<parallel>], iteration_bounds = array<i64: 2>, scalar_prefetch = 0 : i64, scratch_operands = 0 : i64, tpu.core_type = #tpu.core_type<tc>, window_params = [{transform_indices = @transform_0, window_bounds = array<i64: 1, 46, 61, 64>}, {pipeline_mode = #tpu.pipeline_mode<synchronous>, transform_indices = @transform_1, window_bounds = array<i64: 4, 64, 32>}, {pipeline_mode = #tpu.pipeline_mode<synchronous>, transform_indices = @transform_2, window_bounds = array<i64: 1, 32>}, {pipeline_mode = #tpu.pipeline_mode<synchronous>, transform_indices = @transform_3, window_bounds = array<i64: 1, 32>}, {transform_indices = @transform_4, window_bounds = array<i64: 1, 45, 60, 32>}]} {
    %c0 = arith.constant 0 : index
    %c0_0 = arith.constant 0 : index
    %0 = vector.load %arg3[%c0, %c0_0] : memref<1x32xf32, #tpu.memory_space<vmem>>, vector<1x32xf32>
    %c0_1 = arith.constant 0 : index
    %c0_2 = arith.constant 0 : index
    %1 = vector.load %arg4[%c0_1, %c0_2] : memref<1x32xf32, #tpu.memory_space<vmem>>, vector<1x32xf32>
    %c0_i32 = arith.constant 0 : i32
    %c45_i32 = arith.constant 45 : i32
    %2 = arith.addi %c0_i32, %c45_i32 : i32
    %c1_i32 = arith.constant 1 : i32
    scf.for %arg6 = %c0_i32 to %2 step %c1_i32  : i32 {
      %cst = arith.constant 0.000000e+00 : f32
      %3 = vector.broadcast %cst : f32 to vector<60x32xf32>
      %c0_i32_4 = arith.constant 0 : i32
      %4 = arith.addi %arg6, %c0_i32_4 : i32
      %c0_5 = arith.constant 0 : index
      %5 = arith.index_cast %4 : i32 to index
      %c0_6 = arith.constant 0 : index
      %c0_7 = arith.constant 0 : index
      %6 = vector.load %arg1[%c0_5, %5, %c0_6, %c0_7] : memref<1x46x61x64xbf16, #tpu.memory_space<vmem>>, vector<1x1x60x64xbf16>
      %7 = vector.shape_cast %6 : vector<1x1x60x64xbf16> to vector<60x64xbf16>
      %c0_8 = arith.constant 0 : index
      %c0_9 = arith.constant 0 : index
      %c0_10 = arith.constant 0 : index
      %8 = vector.load %arg2[%c0_8, %c0_9, %c0_10] : memref<4x64x32xbf16, #tpu.memory_space<vmem>>, vector<1x64x32xbf16>
      %9 = vector.shape_cast %8 : vector<1x64x32xbf16> to vector<64x32xbf16>
      %cst_11 = arith.constant dense<0.000000e+00> : vector<60x32xf32>
      %10 = tpu.matmul %7, %9, %cst_11 {dimension_numbers = #tpu.dot_dimension_numbers<[1], [0], [0], [1], [0, 0, 1, 1], [], []>} : vector<60x64xbf16>, vector<64x32xbf16>, vector<60x32xf32> -> vector<60x32xf32>
      %11 = arith.addf %3, %10 : vector<60x32xf32>
      %c0_i32_12 = arith.constant 0 : i32
      %12 = arith.addi %arg6, %c0_i32_12 : i32
      %c0_13 = arith.constant 0 : index
      %13 = arith.index_cast %12 : i32 to index
      %c1 = arith.constant 1 : index
      %c0_14 = arith.constant 0 : index
      %14 = vector.load %arg1[%c0_13, %13, %c1, %c0_14] : memref<1x46x61x64xbf16, #tpu.memory_space<vmem>>, vector<1x1x60x64xbf16>
      %15 = vector.shape_cast %14 : vector<1x1x60x64xbf16> to vector<60x64xbf16>
      %c1_15 = arith.constant 1 : index
      %c0_16 = arith.constant 0 : index
      %c0_17 = arith.constant 0 : index
      %16 = vector.load %arg2[%c1_15, %c0_16, %c0_17] : memref<4x64x32xbf16, #tpu.memory_space<vmem>>, vector<1x64x32xbf16>
      %17 = vector.shape_cast %16 : vector<1x64x32xbf16> to vector<64x32xbf16>
      %cst_18 = arith.constant dense<0.000000e+00> : vector<60x32xf32>
      %18 = tpu.matmul %15, %17, %cst_18 {dimension_numbers = #tpu.dot_dimension_numbers<[1], [0], [0], [1], [0, 0, 1, 1], [], []>} : vector<60x64xbf16>, vector<64x32xbf16>, vector<60x32xf32> -> vector<60x32xf32>
      %19 = arith.addf %11, %18 : vector<60x32xf32>
      %c1_i32_19 = arith.constant 1 : i32
      %20 = arith.addi %arg6, %c1_i32_19 : i32
      %c0_20 = arith.constant 0 : index
      %21 = arith.index_cast %20 : i32 to index
      %c0_21 = arith.constant 0 : index
      %c0_22 = arith.constant 0 : index
      %22 = vector.load %arg1[%c0_20, %21, %c0_21, %c0_22] : memref<1x46x61x64xbf16, #tpu.memory_space<vmem>>, vector<1x1x60x64xbf16>
      %23 = vector.shape_cast %22 : vector<1x1x60x64xbf16> to vector<60x64xbf16>
      %c2 = arith.constant 2 : index
      %c0_23 = arith.constant 0 : index
      %c0_24 = arith.constant 0 : index
      %24 = vector.load %arg2[%c2, %c0_23, %c0_24] : memref<4x64x32xbf16, #tpu.memory_space<vmem>>, vector<1x64x32xbf16>
      %25 = vector.shape_cast %24 : vector<1x64x32xbf16> to vector<64x32xbf16>
      %cst_25 = arith.constant dense<0.000000e+00> : vector<60x32xf32>
      %26 = tpu.matmul %23, %25, %cst_25 {dimension_numbers = #tpu.dot_dimension_numbers<[1], [0], [0], [1], [0, 0, 1, 1], [], []>} : vector<60x64xbf16>, vector<64x32xbf16>, vector<60x32xf32> -> vector<60x32xf32>
      %27 = arith.addf %19, %26 : vector<60x32xf32>
      %c1_i32_26 = arith.constant 1 : i32
      %28 = arith.addi %arg6, %c1_i32_26 : i32
      %c0_27 = arith.constant 0 : index
      %29 = arith.index_cast %28 : i32 to index
      %c1_28 = arith.constant 1 : index
      %c0_29 = arith.constant 0 : index
      %30 = vector.load %arg1[%c0_27, %29, %c1_28, %c0_29] : memref<1x46x61x64xbf16, #tpu.memory_space<vmem>>, vector<1x1x60x64xbf16>
      %31 = vector.shape_cast %30 : vector<1x1x60x64xbf16> to vector<60x64xbf16>
      %c3 = arith.constant 3 : index
      %c0_30 = arith.constant 0 : index
      %c0_31 = arith.constant 0 : index
      %32 = vector.load %arg2[%c3, %c0_30, %c0_31] : memref<4x64x32xbf16, #tpu.memory_space<vmem>>, vector<1x64x32xbf16>
      %33 = vector.shape_cast %32 : vector<1x64x32xbf16> to vector<64x32xbf16>
      %cst_32 = arith.constant dense<0.000000e+00> : vector<60x32xf32>
      %34 = tpu.matmul %31, %33, %cst_32 {dimension_numbers = #tpu.dot_dimension_numbers<[1], [0], [0], [1], [0, 0, 1, 1], [], []>} : vector<60x64xbf16>, vector<64x32xbf16>, vector<60x32xf32> -> vector<60x32xf32>
      %35 = arith.addf %27, %34 : vector<60x32xf32>
      %36 = vector.broadcast %0 : vector<1x32xf32> to vector<60x32xf32>
      %37 = arith.mulf %35, %36 : vector<60x32xf32>
      %38 = vector.broadcast %1 : vector<1x32xf32> to vector<60x32xf32>
      %39 = arith.addf %37, %38 : vector<60x32xf32>
      %cst_33 = arith.constant 0.000000e+00 : f32
      %40 = vector.broadcast %cst_33 : f32 to vector<60x32xf32>
      %41 = arith.maximumf %39, %40 : vector<60x32xf32>
      %42 = arith.truncf %41 : vector<60x32xf32> to vector<60x32xbf16>
      %c0_34 = arith.constant 0 : index
      %43 = arith.index_cast %arg6 : i32 to index
      %c0_35 = arith.constant 0 : index
      %c0_36 = arith.constant 0 : index
      %44 = vector.load %arg5[%c0_34, %43, %c0_35, %c0_36] : memref<1x45x60x32xbf16, #tpu.memory_space<vmem>>, vector<1x1x60x32xbf16>
      %45 = vector.shape_cast %44 : vector<1x1x60x32xbf16> to vector<60x32xbf16>
      %46 = vector.shape_cast %42 : vector<60x32xbf16> to vector<1x1x60x32xbf16>
      tpu.vector_store %arg5[%c0_34, %43, %c0_35, %c0_36], %46 {strides = array<i32>} : memref<1x45x60x32xbf16, #tpu.memory_space<vmem>>, vector<1x1x60x32xbf16>,
    }
    %c45_i32_3 = arith.constant 45 : i32
    return
  }
  func.func @transform_0(%arg0: i32) -> (i32, i32, i32, i32) {
    %c0_i32 = arith.constant 0 : i32
    %c0_i32_0 = arith.constant 0 : i32
    %c0_i32_1 = arith.constant 0 : i32
    %c0_i32_2 = arith.constant 0 : i32
    return %arg0, %c0_i32, %c0_i32_0, %c0_i32_1 : i32, i32, i32, i32
  }
  func.func @transform_1(%arg0: i32) -> (i32, i32, i32) {
    %c0_i32 = arith.constant 0 : i32
    %c0_i32_0 = arith.constant 0 : i32
    %c0_i32_1 = arith.constant 0 : i32
    %c0_i32_2 = arith.constant 0 : i32
    return %c0_i32, %c0_i32_0, %c0_i32_1 : i32, i32, i32
  }
  func.func @transform_2(%arg0: i32) -> (i32, i32) {
    %c0_i32 = arith.constant 0 : i32
    %c0_i32_0 = arith.constant 0 : i32
    %c0_i32_1 = arith.constant 0 : i32
    return %c0_i32, %c0_i32_0 : i32, i32
  }
  func.func @transform_3(%arg0: i32) -> (i32, i32) {
    %c0_i32 = arith.constant 0 : i32
    %c0_i32_0 = arith.constant 0 : i32
    %c0_i32_1 = arith.constant 0 : i32
    return %c0_i32, %c0_i32_0 : i32, i32
  }
  func.func @transform_4(%arg0: i32) -> (i32, i32, i32, i32) {
    %c0_i32 = arith.constant 0 : i32
    %c0_i32_0 = arith.constant 0 : i32
    %c0_i32_1 = arith.constant 0 : i32
    %c0_i32_2 = arith.constant 0 : i32
    return %arg0, %c0_i32, %c0_i32_0, %c0_i32_1 : i32, i32, i32, i32
  }
}

module attributes {stable_mosaic.version = 11 : i64} {
  func.func @conv_out_cw_kernel(%arg0: i32, %arg1: memref<1x96x32x126xbf16, #tpu.memory_space<vmem>>, %arg2: memref<49x3x32xbf16, #tpu.memory_space<vmem>>, %arg3: memref<3x1xf32, #tpu.memory_space<vmem>>, %arg4: memref<3x1xf32, #tpu.memory_space<vmem>>, %arg5: memref<1x90x3x120xf32, #tpu.memory_space<vmem>>) attributes {dimension_semantics = [#tpu.dimension_semantics<parallel>], iteration_bounds = array<i64: 2>, scalar_prefetch = 0 : i64, scratch_operands = 0 : i64, tpu.core_type = #tpu.core_type<tc>, window_params = [{transform_indices = @transform_0, window_bounds = array<i64: 1, 96, 32, 126>}, {pipeline_mode = #tpu.pipeline_mode<synchronous>, transform_indices = @transform_1, window_bounds = array<i64: 49, 3, 32>}, {pipeline_mode = #tpu.pipeline_mode<synchronous>, transform_indices = @transform_2, window_bounds = array<i64: 3, 1>}, {pipeline_mode = #tpu.pipeline_mode<synchronous>, transform_indices = @transform_3, window_bounds = array<i64: 3, 1>}, {transform_indices = @transform_4, window_bounds = array<i64: 1, 90, 3, 120>}]} {
    %c0 = arith.constant 0 : index
    %c0_0 = arith.constant 0 : index
    %0 = vector.load %arg3[%c0, %c0_0] : memref<3x1xf32, #tpu.memory_space<vmem>>, vector<3x1xf32>
    %c0_1 = arith.constant 0 : index
    %c0_2 = arith.constant 0 : index
    %1 = vector.load %arg4[%c0_1, %c0_2] : memref<3x1xf32, #tpu.memory_space<vmem>>, vector<3x1xf32>
    %c0_i32 = arith.constant 0 : i32
    %c90_i32 = arith.constant 90 : i32
    %2 = arith.addi %c0_i32, %c90_i32 : i32
    %c1_i32 = arith.constant 1 : i32
    scf.for %arg6 = %c0_i32 to %2 step %c1_i32  : i32 {
      %cst = arith.constant 0.000000e+00 : f32
      %3 = vector.broadcast %cst : f32 to vector<3x120xf32>
      %c0_i32_4 = arith.constant 0 : i32
      %4 = arith.addi %arg6, %c0_i32_4 : i32
      %c0_5 = arith.constant 0 : index
      %5 = arith.index_cast %4 : i32 to index
      %c0_6 = arith.constant 0 : index
      %c0_7 = arith.constant 0 : index
      %6 = vector.load %arg1[%c0_5, %5, %c0_6, %c0_7] : memref<1x96x32x126xbf16, #tpu.memory_space<vmem>>, vector<1x1x32x126xbf16>
      %7 = vector.shape_cast %6 : vector<1x1x32x126xbf16> to vector<32x126xbf16>
      %8 = vector.extract_strided_slice %7 {offsets = [0, 0], sizes = [32, 120], strides = [1, 1]} : vector<32x126xbf16> to vector<32x120xbf16>
      %c0_8 = arith.constant 0 : index
      %c0_9 = arith.constant 0 : index
      %c0_10 = arith.constant 0 : index
      %9 = vector.load %arg2[%c0_8, %c0_9, %c0_10] : memref<49x3x32xbf16, #tpu.memory_space<vmem>>, vector<1x3x32xbf16>
      %10 = vector.shape_cast %9 : vector<1x3x32xbf16> to vector<3x32xbf16>
      %cst_11 = arith.constant dense<0.000000e+00> : vector<3x120xf32>
      %11 = tpu.matmul %10, %8, %cst_11 {dimension_numbers = #tpu.dot_dimension_numbers<[1], [0], [0], [1], [0, 0, 1, 1], [], []>} : vector<3x32xbf16>, vector<32x120xbf16>, vector<3x120xf32> -> vector<3x120xf32>
      %12 = arith.addf %3, %11 : vector<3x120xf32>
      %13 = vector.extract_strided_slice %7 {offsets = [0, 1], sizes = [32, 120], strides = [1, 1]} : vector<32x126xbf16> to vector<32x120xbf16>
      %c1 = arith.constant 1 : index
      %c0_12 = arith.constant 0 : index
      %c0_13 = arith.constant 0 : index
      %14 = vector.load %arg2[%c1, %c0_12, %c0_13] : memref<49x3x32xbf16, #tpu.memory_space<vmem>>, vector<1x3x32xbf16>
      %15 = vector.shape_cast %14 : vector<1x3x32xbf16> to vector<3x32xbf16>
      %cst_14 = arith.constant dense<0.000000e+00> : vector<3x120xf32>
      %16 = tpu.matmul %15, %13, %cst_14 {dimension_numbers = #tpu.dot_dimension_numbers<[1], [0], [0], [1], [0, 0, 1, 1], [], []>} : vector<3x32xbf16>, vector<32x120xbf16>, vector<3x120xf32> -> vector<3x120xf32>
      %17 = arith.addf %12, %16 : vector<3x120xf32>
      %18 = vector.extract_strided_slice %7 {offsets = [0, 2], sizes = [32, 120], strides = [1, 1]} : vector<32x126xbf16> to vector<32x120xbf16>
      %c2 = arith.constant 2 : index
      %c0_15 = arith.constant 0 : index
      %c0_16 = arith.constant 0 : index
      %19 = vector.load %arg2[%c2, %c0_15, %c0_16] : memref<49x3x32xbf16, #tpu.memory_space<vmem>>, vector<1x3x32xbf16>
      %20 = vector.shape_cast %19 : vector<1x3x32xbf16> to vector<3x32xbf16>
      %cst_17 = arith.constant dense<0.000000e+00> : vector<3x120xf32>
      %21 = tpu.matmul %20, %18, %cst_17 {dimension_numbers = #tpu.dot_dimension_numbers<[1], [0], [0], [1], [0, 0, 1, 1], [], []>} : vector<3x32xbf16>, vector<32x120xbf16>, vector<3x120xf32> -> vector<3x120xf32>
      %22 = arith.addf %17, %21 : vector<3x120xf32>
      %23 = vector.extract_strided_slice %7 {offsets = [0, 3], sizes = [32, 120], strides = [1, 1]} : vector<32x126xbf16> to vector<32x120xbf16>
      %c3 = arith.constant 3 : index
      %c0_18 = arith.constant 0 : index
      %c0_19 = arith.constant 0 : index
      %24 = vector.load %arg2[%c3, %c0_18, %c0_19] : memref<49x3x32xbf16, #tpu.memory_space<vmem>>, vector<1x3x32xbf16>
      %25 = vector.shape_cast %24 : vector<1x3x32xbf16> to vector<3x32xbf16>
      %cst_20 = arith.constant dense<0.000000e+00> : vector<3x120xf32>
      %26 = tpu.matmul %25, %23, %cst_20 {dimension_numbers = #tpu.dot_dimension_numbers<[1], [0], [0], [1], [0, 0, 1, 1], [], []>} : vector<3x32xbf16>, vector<32x120xbf16>, vector<3x120xf32> -> vector<3x120xf32>
      %27 = arith.addf %22, %26 : vector<3x120xf32>
      %28 = vector.extract_strided_slice %7 {offsets = [0, 4], sizes = [32, 120], strides = [1, 1]} : vector<32x126xbf16> to vector<32x120xbf16>
      %c4 = arith.constant 4 : index
      %c0_21 = arith.constant 0 : index
      %c0_22 = arith.constant 0 : index
      %29 = vector.load %arg2[%c4, %c0_21, %c0_22] : memref<49x3x32xbf16, #tpu.memory_space<vmem>>, vector<1x3x32xbf16>
      %30 = vector.shape_cast %29 : vector<1x3x32xbf16> to vector<3x32xbf16>
      %cst_23 = arith.constant dense<0.000000e+00> : vector<3x120xf32>
      %31 = tpu.matmul %30, %28, %cst_23 {dimension_numbers = #tpu.dot_dimension_numbers<[1], [0], [0], [1], [0, 0, 1, 1], [], []>} : vector<3x32xbf16>, vector<32x120xbf16>, vector<3x120xf32> -> vector<3x120xf32>
      %32 = arith.addf %27, %31 : vector<3x120xf32>
      %33 = vector.extract_strided_slice %7 {offsets = [0, 5], sizes = [32, 120], strides = [1, 1]} : vector<32x126xbf16> to vector<32x120xbf16>
      %c5 = arith.constant 5 : index
      %c0_24 = arith.constant 0 : index
      %c0_25 = arith.constant 0 : index
      %34 = vector.load %arg2[%c5, %c0_24, %c0_25] : memref<49x3x32xbf16, #tpu.memory_space<vmem>>, vector<1x3x32xbf16>
      %35 = vector.shape_cast %34 : vector<1x3x32xbf16> to vector<3x32xbf16>
      %cst_26 = arith.constant dense<0.000000e+00> : vector<3x120xf32>
      %36 = tpu.matmul %35, %33, %cst_26 {dimension_numbers = #tpu.dot_dimension_numbers<[1], [0], [0], [1], [0, 0, 1, 1], [], []>} : vector<3x32xbf16>, vector<32x120xbf16>, vector<3x120xf32> -> vector<3x120xf32>
      %37 = arith.addf %32, %36 : vector<3x120xf32>
      %38 = vector.extract_strided_slice %7 {offsets = [0, 6], sizes = [32, 120], strides = [1, 1]} : vector<32x126xbf16> to vector<32x120xbf16>
      %c6 = arith.constant 6 : index
      %c0_27 = arith.constant 0 : index
      %c0_28 = arith.constant 0 : index
      %39 = vector.load %arg2[%c6, %c0_27, %c0_28] : memref<49x3x32xbf16, #tpu.memory_space<vmem>>, vector<1x3x32xbf16>
      %40 = vector.shape_cast %39 : vector<1x3x32xbf16> to vector<3x32xbf16>
      %cst_29 = arith.constant dense<0.000000e+00> : vector<3x120xf32>
      %41 = tpu.matmul %40, %38, %cst_29 {dimension_numbers = #tpu.dot_dimension_numbers<[1], [0], [0], [1], [0, 0, 1, 1], [], []>} : vector<3x32xbf16>, vector<32x120xbf16>, vector<3x120xf32> -> vector<3x120xf32>
      %42 = arith.addf %37, %41 : vector<3x120xf32>
      %c1_i32_30 = arith.constant 1 : i32
      %43 = arith.addi %arg6, %c1_i32_30 : i32
      %c0_31 = arith.constant 0 : index
      %44 = arith.index_cast %43 : i32 to index
      %c0_32 = arith.constant 0 : index
      %c0_33 = arith.constant 0 : index
      %45 = vector.load %arg1[%c0_31, %44, %c0_32, %c0_33] : memref<1x96x32x126xbf16, #tpu.memory_space<vmem>>, vector<1x1x32x126xbf16>
      %46 = vector.shape_cast %45 : vector<1x1x32x126xbf16> to vector<32x126xbf16>
      %47 = vector.extract_strided_slice %46 {offsets = [0, 0], sizes = [32, 120], strides = [1, 1]} : vector<32x126xbf16> to vector<32x120xbf16>
      %c7 = arith.constant 7 : index
      %c0_34 = arith.constant 0 : index
      %c0_35 = arith.constant 0 : index
      %48 = vector.load %arg2[%c7, %c0_34, %c0_35] : memref<49x3x32xbf16, #tpu.memory_space<vmem>>, vector<1x3x32xbf16>
      %49 = vector.shape_cast %48 : vector<1x3x32xbf16> to vector<3x32xbf16>
      %cst_36 = arith.constant dense<0.000000e+00> : vector<3x120xf32>
      %50 = tpu.matmul %49, %47, %cst_36 {dimension_numbers = #tpu.dot_dimension_numbers<[1], [0], [0], [1], [0, 0, 1, 1], [], []>} : vector<3x32xbf16>, vector<32x120xbf16>, vector<3x120xf32> -> vector<3x120xf32>
      %51 = arith.addf %42, %50 : vector<3x120xf32>
      %52 = vector.extract_strided_slice %46 {offsets = [0, 1], sizes = [32, 120], strides = [1, 1]} : vector<32x126xbf16> to vector<32x120xbf16>
      %c8 = arith.constant 8 : index
      %c0_37 = arith.constant 0 : index
      %c0_38 = arith.constant 0 : index
      %53 = vector.load %arg2[%c8, %c0_37, %c0_38] : memref<49x3x32xbf16, #tpu.memory_space<vmem>>, vector<1x3x32xbf16>
      %54 = vector.shape_cast %53 : vector<1x3x32xbf16> to vector<3x32xbf16>
      %cst_39 = arith.constant dense<0.000000e+00> : vector<3x120xf32>
      %55 = tpu.matmul %54, %52, %cst_39 {dimension_numbers = #tpu.dot_dimension_numbers<[1], [0], [0], [1], [0, 0, 1, 1], [], []>} : vector<3x32xbf16>, vector<32x120xbf16>, vector<3x120xf32> -> vector<3x120xf32>
      %56 = arith.addf %51, %55 : vector<3x120xf32>
      %57 = vector.extract_strided_slice %46 {offsets = [0, 2], sizes = [32, 120], strides = [1, 1]} : vector<32x126xbf16> to vector<32x120xbf16>
      %c9 = arith.constant 9 : index
      %c0_40 = arith.constant 0 : index
      %c0_41 = arith.constant 0 : index
      %58 = vector.load %arg2[%c9, %c0_40, %c0_41] : memref<49x3x32xbf16, #tpu.memory_space<vmem>>, vector<1x3x32xbf16>
      %59 = vector.shape_cast %58 : vector<1x3x32xbf16> to vector<3x32xbf16>
      %cst_42 = arith.constant dense<0.000000e+00> : vector<3x120xf32>
      %60 = tpu.matmul %59, %57, %cst_42 {dimension_numbers = #tpu.dot_dimension_numbers<[1], [0], [0], [1], [0, 0, 1, 1], [], []>} : vector<3x32xbf16>, vector<32x120xbf16>, vector<3x120xf32> -> vector<3x120xf32>
      %61 = arith.addf %56, %60 : vector<3x120xf32>
      %62 = vector.extract_strided_slice %46 {offsets = [0, 3], sizes = [32, 120], strides = [1, 1]} : vector<32x126xbf16> to vector<32x120xbf16>
      %c10 = arith.constant 10 : index
      %c0_43 = arith.constant 0 : index
      %c0_44 = arith.constant 0 : index
      %63 = vector.load %arg2[%c10, %c0_43, %c0_44] : memref<49x3x32xbf16, #tpu.memory_space<vmem>>, vector<1x3x32xbf16>
      %64 = vector.shape_cast %63 : vector<1x3x32xbf16> to vector<3x32xbf16>
      %cst_45 = arith.constant dense<0.000000e+00> : vector<3x120xf32>
      %65 = tpu.matmul %64, %62, %cst_45 {dimension_numbers = #tpu.dot_dimension_numbers<[1], [0], [0], [1], [0, 0, 1, 1], [], []>} : vector<3x32xbf16>, vector<32x120xbf16>, vector<3x120xf32> -> vector<3x120xf32>
      %66 = arith.addf %61, %65 : vector<3x120xf32>
      %67 = vector.extract_strided_slice %46 {offsets = [0, 4], sizes = [32, 120], strides = [1, 1]} : vector<32x126xbf16> to vector<32x120xbf16>
      %c11 = arith.constant 11 : index
      %c0_46 = arith.constant 0 : index
      %c0_47 = arith.constant 0 : index
      %68 = vector.load %arg2[%c11, %c0_46, %c0_47] : memref<49x3x32xbf16, #tpu.memory_space<vmem>>, vector<1x3x32xbf16>
      %69 = vector.shape_cast %68 : vector<1x3x32xbf16> to vector<3x32xbf16>
      %cst_48 = arith.constant dense<0.000000e+00> : vector<3x120xf32>
      %70 = tpu.matmul %69, %67, %cst_48 {dimension_numbers = #tpu.dot_dimension_numbers<[1], [0], [0], [1], [0, 0, 1, 1], [], []>} : vector<3x32xbf16>, vector<32x120xbf16>, vector<3x120xf32> -> vector<3x120xf32>
      %71 = arith.addf %66, %70 : vector<3x120xf32>
      %72 = vector.extract_strided_slice %46 {offsets = [0, 5], sizes = [32, 120], strides = [1, 1]} : vector<32x126xbf16> to vector<32x120xbf16>
      %c12 = arith.constant 12 : index
      %c0_49 = arith.constant 0 : index
      %c0_50 = arith.constant 0 : index
      %73 = vector.load %arg2[%c12, %c0_49, %c0_50] : memref<49x3x32xbf16, #tpu.memory_space<vmem>>, vector<1x3x32xbf16>
      %74 = vector.shape_cast %73 : vector<1x3x32xbf16> to vector<3x32xbf16>
      %cst_51 = arith.constant dense<0.000000e+00> : vector<3x120xf32>
      %75 = tpu.matmul %74, %72, %cst_51 {dimension_numbers = #tpu.dot_dimension_numbers<[1], [0], [0], [1], [0, 0, 1, 1], [], []>} : vector<3x32xbf16>, vector<32x120xbf16>, vector<3x120xf32> -> vector<3x120xf32>
      %76 = arith.addf %71, %75 : vector<3x120xf32>
      %77 = vector.extract_strided_slice %46 {offsets = [0, 6], sizes = [32, 120], strides = [1, 1]} : vector<32x126xbf16> to vector<32x120xbf16>
      %c13 = arith.constant 13 : index
      %c0_52 = arith.constant 0 : index
      %c0_53 = arith.constant 0 : index
      %78 = vector.load %arg2[%c13, %c0_52, %c0_53] : memref<49x3x32xbf16, #tpu.memory_space<vmem>>, vector<1x3x32xbf16>
      %79 = vector.shape_cast %78 : vector<1x3x32xbf16> to vector<3x32xbf16>
      %cst_54 = arith.constant dense<0.000000e+00> : vector<3x120xf32>
      %80 = tpu.matmul %79, %77, %cst_54 {dimension_numbers = #tpu.dot_dimension_numbers<[1], [0], [0], [1], [0, 0, 1, 1], [], []>} : vector<3x32xbf16>, vector<32x120xbf16>, vector<3x120xf32> -> vector<3x120xf32>
      %81 = arith.addf %76, %80 : vector<3x120xf32>
      %c2_i32 = arith.constant 2 : i32
      %82 = arith.addi %arg6, %c2_i32 : i32
      %c0_55 = arith.constant 0 : index
      %83 = arith.index_cast %82 : i32 to index
      %c0_56 = arith.constant 0 : index
      %c0_57 = arith.constant 0 : index
      %84 = vector.load %arg1[%c0_55, %83, %c0_56, %c0_57] : memref<1x96x32x126xbf16, #tpu.memory_space<vmem>>, vector<1x1x32x126xbf16>
      %85 = vector.shape_cast %84 : vector<1x1x32x126xbf16> to vector<32x126xbf16>
      %86 = vector.extract_strided_slice %85 {offsets = [0, 0], sizes = [32, 120], strides = [1, 1]} : vector<32x126xbf16> to vector<32x120xbf16>
      %c14 = arith.constant 14 : index
      %c0_58 = arith.constant 0 : index
      %c0_59 = arith.constant 0 : index
      %87 = vector.load %arg2[%c14, %c0_58, %c0_59] : memref<49x3x32xbf16, #tpu.memory_space<vmem>>, vector<1x3x32xbf16>
      %88 = vector.shape_cast %87 : vector<1x3x32xbf16> to vector<3x32xbf16>
      %cst_60 = arith.constant dense<0.000000e+00> : vector<3x120xf32>
      %89 = tpu.matmul %88, %86, %cst_60 {dimension_numbers = #tpu.dot_dimension_numbers<[1], [0], [0], [1], [0, 0, 1, 1], [], []>} : vector<3x32xbf16>, vector<32x120xbf16>, vector<3x120xf32> -> vector<3x120xf32>
      %90 = arith.addf %81, %89 : vector<3x120xf32>
      %91 = vector.extract_strided_slice %85 {offsets = [0, 1], sizes = [32, 120], strides = [1, 1]} : vector<32x126xbf16> to vector<32x120xbf16>
      %c15 = arith.constant 15 : index
      %c0_61 = arith.constant 0 : index
      %c0_62 = arith.constant 0 : index
      %92 = vector.load %arg2[%c15, %c0_61, %c0_62] : memref<49x3x32xbf16, #tpu.memory_space<vmem>>, vector<1x3x32xbf16>
      %93 = vector.shape_cast %92 : vector<1x3x32xbf16> to vector<3x32xbf16>
      %cst_63 = arith.constant dense<0.000000e+00> : vector<3x120xf32>
      %94 = tpu.matmul %93, %91, %cst_63 {dimension_numbers = #tpu.dot_dimension_numbers<[1], [0], [0], [1], [0, 0, 1, 1], [], []>} : vector<3x32xbf16>, vector<32x120xbf16>, vector<3x120xf32> -> vector<3x120xf32>
      %95 = arith.addf %90, %94 : vector<3x120xf32>
      %96 = vector.extract_strided_slice %85 {offsets = [0, 2], sizes = [32, 120], strides = [1, 1]} : vector<32x126xbf16> to vector<32x120xbf16>
      %c16 = arith.constant 16 : index
      %c0_64 = arith.constant 0 : index
      %c0_65 = arith.constant 0 : index
      %97 = vector.load %arg2[%c16, %c0_64, %c0_65] : memref<49x3x32xbf16, #tpu.memory_space<vmem>>, vector<1x3x32xbf16>
      %98 = vector.shape_cast %97 : vector<1x3x32xbf16> to vector<3x32xbf16>
      %cst_66 = arith.constant dense<0.000000e+00> : vector<3x120xf32>
      %99 = tpu.matmul %98, %96, %cst_66 {dimension_numbers = #tpu.dot_dimension_numbers<[1], [0], [0], [1], [0, 0, 1, 1], [], []>} : vector<3x32xbf16>, vector<32x120xbf16>, vector<3x120xf32> -> vector<3x120xf32>
      %100 = arith.addf %95, %99 : vector<3x120xf32>
      %101 = vector.extract_strided_slice %85 {offsets = [0, 3], sizes = [32, 120], strides = [1, 1]} : vector<32x126xbf16> to vector<32x120xbf16>
      %c17 = arith.constant 17 : index
      %c0_67 = arith.constant 0 : index
      %c0_68 = arith.constant 0 : index
      %102 = vector.load %arg2[%c17, %c0_67, %c0_68] : memref<49x3x32xbf16, #tpu.memory_space<vmem>>, vector<1x3x32xbf16>
      %103 = vector.shape_cast %102 : vector<1x3x32xbf16> to vector<3x32xbf16>
      %cst_69 = arith.constant dense<0.000000e+00> : vector<3x120xf32>
      %104 = tpu.matmul %103, %101, %cst_69 {dimension_numbers = #tpu.dot_dimension_numbers<[1], [0], [0], [1], [0, 0, 1, 1], [], []>} : vector<3x32xbf16>, vector<32x120xbf16>, vector<3x120xf32> -> vector<3x120xf32>
      %105 = arith.addf %100, %104 : vector<3x120xf32>
      %106 = vector.extract_strided_slice %85 {offsets = [0, 4], sizes = [32, 120], strides = [1, 1]} : vector<32x126xbf16> to vector<32x120xbf16>
      %c18 = arith.constant 18 : index
      %c0_70 = arith.constant 0 : index
      %c0_71 = arith.constant 0 : index
      %107 = vector.load %arg2[%c18, %c0_70, %c0_71] : memref<49x3x32xbf16, #tpu.memory_space<vmem>>, vector<1x3x32xbf16>
      %108 = vector.shape_cast %107 : vector<1x3x32xbf16> to vector<3x32xbf16>
      %cst_72 = arith.constant dense<0.000000e+00> : vector<3x120xf32>
      %109 = tpu.matmul %108, %106, %cst_72 {dimension_numbers = #tpu.dot_dimension_numbers<[1], [0], [0], [1], [0, 0, 1, 1], [], []>} : vector<3x32xbf16>, vector<32x120xbf16>, vector<3x120xf32> -> vector<3x120xf32>
      %110 = arith.addf %105, %109 : vector<3x120xf32>
      %111 = vector.extract_strided_slice %85 {offsets = [0, 5], sizes = [32, 120], strides = [1, 1]} : vector<32x126xbf16> to vector<32x120xbf16>
      %c19 = arith.constant 19 : index
      %c0_73 = arith.constant 0 : index
      %c0_74 = arith.constant 0 : index
      %112 = vector.load %arg2[%c19, %c0_73, %c0_74] : memref<49x3x32xbf16, #tpu.memory_space<vmem>>, vector<1x3x32xbf16>
      %113 = vector.shape_cast %112 : vector<1x3x32xbf16> to vector<3x32xbf16>
      %cst_75 = arith.constant dense<0.000000e+00> : vector<3x120xf32>
      %114 = tpu.matmul %113, %111, %cst_75 {dimension_numbers = #tpu.dot_dimension_numbers<[1], [0], [0], [1], [0, 0, 1, 1], [], []>} : vector<3x32xbf16>, vector<32x120xbf16>, vector<3x120xf32> -> vector<3x120xf32>
      %115 = arith.addf %110, %114 : vector<3x120xf32>
      %116 = vector.extract_strided_slice %85 {offsets = [0, 6], sizes = [32, 120], strides = [1, 1]} : vector<32x126xbf16> to vector<32x120xbf16>
      %c20 = arith.constant 20 : index
      %c0_76 = arith.constant 0 : index
      %c0_77 = arith.constant 0 : index
      %117 = vector.load %arg2[%c20, %c0_76, %c0_77] : memref<49x3x32xbf16, #tpu.memory_space<vmem>>, vector<1x3x32xbf16>
      %118 = vector.shape_cast %117 : vector<1x3x32xbf16> to vector<3x32xbf16>
      %cst_78 = arith.constant dense<0.000000e+00> : vector<3x120xf32>
      %119 = tpu.matmul %118, %116, %cst_78 {dimension_numbers = #tpu.dot_dimension_numbers<[1], [0], [0], [1], [0, 0, 1, 1], [], []>} : vector<3x32xbf16>, vector<32x120xbf16>, vector<3x120xf32> -> vector<3x120xf32>
      %120 = arith.addf %115, %119 : vector<3x120xf32>
      %c3_i32 = arith.constant 3 : i32
      %121 = arith.addi %arg6, %c3_i32 : i32
      %c0_79 = arith.constant 0 : index
      %122 = arith.index_cast %121 : i32 to index
      %c0_80 = arith.constant 0 : index
      %c0_81 = arith.constant 0 : index
      %123 = vector.load %arg1[%c0_79, %122, %c0_80, %c0_81] : memref<1x96x32x126xbf16, #tpu.memory_space<vmem>>, vector<1x1x32x126xbf16>
      %124 = vector.shape_cast %123 : vector<1x1x32x126xbf16> to vector<32x126xbf16>
      %125 = vector.extract_strided_slice %124 {offsets = [0, 0], sizes = [32, 120], strides = [1, 1]} : vector<32x126xbf16> to vector<32x120xbf16>
      %c21 = arith.constant 21 : index
      %c0_82 = arith.constant 0 : index
      %c0_83 = arith.constant 0 : index
      %126 = vector.load %arg2[%c21, %c0_82, %c0_83] : memref<49x3x32xbf16, #tpu.memory_space<vmem>>, vector<1x3x32xbf16>
      %127 = vector.shape_cast %126 : vector<1x3x32xbf16> to vector<3x32xbf16>
      %cst_84 = arith.constant dense<0.000000e+00> : vector<3x120xf32>
      %128 = tpu.matmul %127, %125, %cst_84 {dimension_numbers = #tpu.dot_dimension_numbers<[1], [0], [0], [1], [0, 0, 1, 1], [], []>} : vector<3x32xbf16>, vector<32x120xbf16>, vector<3x120xf32> -> vector<3x120xf32>
      %129 = arith.addf %120, %128 : vector<3x120xf32>
      %130 = vector.extract_strided_slice %124 {offsets = [0, 1], sizes = [32, 120], strides = [1, 1]} : vector<32x126xbf16> to vector<32x120xbf16>
      %c22 = arith.constant 22 : index
      %c0_85 = arith.constant 0 : index
      %c0_86 = arith.constant 0 : index
      %131 = vector.load %arg2[%c22, %c0_85, %c0_86] : memref<49x3x32xbf16, #tpu.memory_space<vmem>>, vector<1x3x32xbf16>
      %132 = vector.shape_cast %131 : vector<1x3x32xbf16> to vector<3x32xbf16>
      %cst_87 = arith.constant dense<0.000000e+00> : vector<3x120xf32>
      %133 = tpu.matmul %132, %130, %cst_87 {dimension_numbers = #tpu.dot_dimension_numbers<[1], [0], [0], [1], [0, 0, 1, 1], [], []>} : vector<3x32xbf16>, vector<32x120xbf16>, vector<3x120xf32> -> vector<3x120xf32>
      %134 = arith.addf %129, %133 : vector<3x120xf32>
      %135 = vector.extract_strided_slice %124 {offsets = [0, 2], sizes = [32, 120], strides = [1, 1]} : vector<32x126xbf16> to vector<32x120xbf16>
      %c23 = arith.constant 23 : index
      %c0_88 = arith.constant 0 : index
      %c0_89 = arith.constant 0 : index
      %136 = vector.load %arg2[%c23, %c0_88, %c0_89] : memref<49x3x32xbf16, #tpu.memory_space<vmem>>, vector<1x3x32xbf16>
      %137 = vector.shape_cast %136 : vector<1x3x32xbf16> to vector<3x32xbf16>
      %cst_90 = arith.constant dense<0.000000e+00> : vector<3x120xf32>
      %138 = tpu.matmul %137, %135, %cst_90 {dimension_numbers = #tpu.dot_dimension_numbers<[1], [0], [0], [1], [0, 0, 1, 1], [], []>} : vector<3x32xbf16>, vector<32x120xbf16>, vector<3x120xf32> -> vector<3x120xf32>
      %139 = arith.addf %134, %138 : vector<3x120xf32>
      %140 = vector.extract_strided_slice %124 {offsets = [0, 3], sizes = [32, 120], strides = [1, 1]} : vector<32x126xbf16> to vector<32x120xbf16>
      %c24 = arith.constant 24 : index
      %c0_91 = arith.constant 0 : index
      %c0_92 = arith.constant 0 : index
      %141 = vector.load %arg2[%c24, %c0_91, %c0_92] : memref<49x3x32xbf16, #tpu.memory_space<vmem>>, vector<1x3x32xbf16>
      %142 = vector.shape_cast %141 : vector<1x3x32xbf16> to vector<3x32xbf16>
      %cst_93 = arith.constant dense<0.000000e+00> : vector<3x120xf32>
      %143 = tpu.matmul %142, %140, %cst_93 {dimension_numbers = #tpu.dot_dimension_numbers<[1], [0], [0], [1], [0, 0, 1, 1], [], []>} : vector<3x32xbf16>, vector<32x120xbf16>, vector<3x120xf32> -> vector<3x120xf32>
      %144 = arith.addf %139, %143 : vector<3x120xf32>
      %145 = vector.extract_strided_slice %124 {offsets = [0, 4], sizes = [32, 120], strides = [1, 1]} : vector<32x126xbf16> to vector<32x120xbf16>
      %c25 = arith.constant 25 : index
      %c0_94 = arith.constant 0 : index
      %c0_95 = arith.constant 0 : index
      %146 = vector.load %arg2[%c25, %c0_94, %c0_95] : memref<49x3x32xbf16, #tpu.memory_space<vmem>>, vector<1x3x32xbf16>
      %147 = vector.shape_cast %146 : vector<1x3x32xbf16> to vector<3x32xbf16>
      %cst_96 = arith.constant dense<0.000000e+00> : vector<3x120xf32>
      %148 = tpu.matmul %147, %145, %cst_96 {dimension_numbers = #tpu.dot_dimension_numbers<[1], [0], [0], [1], [0, 0, 1, 1], [], []>} : vector<3x32xbf16>, vector<32x120xbf16>, vector<3x120xf32> -> vector<3x120xf32>
      %149 = arith.addf %144, %148 : vector<3x120xf32>
      %150 = vector.extract_strided_slice %124 {offsets = [0, 5], sizes = [32, 120], strides = [1, 1]} : vector<32x126xbf16> to vector<32x120xbf16>
      %c26 = arith.constant 26 : index
      %c0_97 = arith.constant 0 : index
      %c0_98 = arith.constant 0 : index
      %151 = vector.load %arg2[%c26, %c0_97, %c0_98] : memref<49x3x32xbf16, #tpu.memory_space<vmem>>, vector<1x3x32xbf16>
      %152 = vector.shape_cast %151 : vector<1x3x32xbf16> to vector<3x32xbf16>
      %cst_99 = arith.constant dense<0.000000e+00> : vector<3x120xf32>
      %153 = tpu.matmul %152, %150, %cst_99 {dimension_numbers = #tpu.dot_dimension_numbers<[1], [0], [0], [1], [0, 0, 1, 1], [], []>} : vector<3x32xbf16>, vector<32x120xbf16>, vector<3x120xf32> -> vector<3x120xf32>
      %154 = arith.addf %149, %153 : vector<3x120xf32>
      %155 = vector.extract_strided_slice %124 {offsets = [0, 6], sizes = [32, 120], strides = [1, 1]} : vector<32x126xbf16> to vector<32x120xbf16>
      %c27 = arith.constant 27 : index
      %c0_100 = arith.constant 0 : index
      %c0_101 = arith.constant 0 : index
      %156 = vector.load %arg2[%c27, %c0_100, %c0_101] : memref<49x3x32xbf16, #tpu.memory_space<vmem>>, vector<1x3x32xbf16>
      %157 = vector.shape_cast %156 : vector<1x3x32xbf16> to vector<3x32xbf16>
      %cst_102 = arith.constant dense<0.000000e+00> : vector<3x120xf32>
      %158 = tpu.matmul %157, %155, %cst_102 {dimension_numbers = #tpu.dot_dimension_numbers<[1], [0], [0], [1], [0, 0, 1, 1], [], []>} : vector<3x32xbf16>, vector<32x120xbf16>, vector<3x120xf32> -> vector<3x120xf32>
      %159 = arith.addf %154, %158 : vector<3x120xf32>
      %c4_i32 = arith.constant 4 : i32
      %160 = arith.addi %arg6, %c4_i32 : i32
      %c0_103 = arith.constant 0 : index
      %161 = arith.index_cast %160 : i32 to index
      %c0_104 = arith.constant 0 : index
      %c0_105 = arith.constant 0 : index
      %162 = vector.load %arg1[%c0_103, %161, %c0_104, %c0_105] : memref<1x96x32x126xbf16, #tpu.memory_space<vmem>>, vector<1x1x32x126xbf16>
      %163 = vector.shape_cast %162 : vector<1x1x32x126xbf16> to vector<32x126xbf16>
      %164 = vector.extract_strided_slice %163 {offsets = [0, 0], sizes = [32, 120], strides = [1, 1]} : vector<32x126xbf16> to vector<32x120xbf16>
      %c28 = arith.constant 28 : index
      %c0_106 = arith.constant 0 : index
      %c0_107 = arith.constant 0 : index
      %165 = vector.load %arg2[%c28, %c0_106, %c0_107] : memref<49x3x32xbf16, #tpu.memory_space<vmem>>, vector<1x3x32xbf16>
      %166 = vector.shape_cast %165 : vector<1x3x32xbf16> to vector<3x32xbf16>
      %cst_108 = arith.constant dense<0.000000e+00> : vector<3x120xf32>
      %167 = tpu.matmul %166, %164, %cst_108 {dimension_numbers = #tpu.dot_dimension_numbers<[1], [0], [0], [1], [0, 0, 1, 1], [], []>} : vector<3x32xbf16>, vector<32x120xbf16>, vector<3x120xf32> -> vector<3x120xf32>
      %168 = arith.addf %159, %167 : vector<3x120xf32>
      %169 = vector.extract_strided_slice %163 {offsets = [0, 1], sizes = [32, 120], strides = [1, 1]} : vector<32x126xbf16> to vector<32x120xbf16>
      %c29 = arith.constant 29 : index
      %c0_109 = arith.constant 0 : index
      %c0_110 = arith.constant 0 : index
      %170 = vector.load %arg2[%c29, %c0_109, %c0_110] : memref<49x3x32xbf16, #tpu.memory_space<vmem>>, vector<1x3x32xbf16>
      %171 = vector.shape_cast %170 : vector<1x3x32xbf16> to vector<3x32xbf16>
      %cst_111 = arith.constant dense<0.000000e+00> : vector<3x120xf32>
      %172 = tpu.matmul %171, %169, %cst_111 {dimension_numbers = #tpu.dot_dimension_numbers<[1], [0], [0], [1], [0, 0, 1, 1], [], []>} : vector<3x32xbf16>, vector<32x120xbf16>, vector<3x120xf32> -> vector<3x120xf32>
      %173 = arith.addf %168, %172 : vector<3x120xf32>
      %174 = vector.extract_strided_slice %163 {offsets = [0, 2], sizes = [32, 120], strides = [1, 1]} : vector<32x126xbf16> to vector<32x120xbf16>
      %c30 = arith.constant 30 : index
      %c0_112 = arith.constant 0 : index
      %c0_113 = arith.constant 0 : index
      %175 = vector.load %arg2[%c30, %c0_112, %c0_113] : memref<49x3x32xbf16, #tpu.memory_space<vmem>>, vector<1x3x32xbf16>
      %176 = vector.shape_cast %175 : vector<1x3x32xbf16> to vector<3x32xbf16>
      %cst_114 = arith.constant dense<0.000000e+00> : vector<3x120xf32>
      %177 = tpu.matmul %176, %174, %cst_114 {dimension_numbers = #tpu.dot_dimension_numbers<[1], [0], [0], [1], [0, 0, 1, 1], [], []>} : vector<3x32xbf16>, vector<32x120xbf16>, vector<3x120xf32> -> vector<3x120xf32>
      %178 = arith.addf %173, %177 : vector<3x120xf32>
      %179 = vector.extract_strided_slice %163 {offsets = [0, 3], sizes = [32, 120], strides = [1, 1]} : vector<32x126xbf16> to vector<32x120xbf16>
      %c31 = arith.constant 31 : index
      %c0_115 = arith.constant 0 : index
      %c0_116 = arith.constant 0 : index
      %180 = vector.load %arg2[%c31, %c0_115, %c0_116] : memref<49x3x32xbf16, #tpu.memory_space<vmem>>, vector<1x3x32xbf16>
      %181 = vector.shape_cast %180 : vector<1x3x32xbf16> to vector<3x32xbf16>
      %cst_117 = arith.constant dense<0.000000e+00> : vector<3x120xf32>
      %182 = tpu.matmul %181, %179, %cst_117 {dimension_numbers = #tpu.dot_dimension_numbers<[1], [0], [0], [1], [0, 0, 1, 1], [], []>} : vector<3x32xbf16>, vector<32x120xbf16>, vector<3x120xf32> -> vector<3x120xf32>
      %183 = arith.addf %178, %182 : vector<3x120xf32>
      %184 = vector.extract_strided_slice %163 {offsets = [0, 4], sizes = [32, 120], strides = [1, 1]} : vector<32x126xbf16> to vector<32x120xbf16>
      %c32 = arith.constant 32 : index
      %c0_118 = arith.constant 0 : index
      %c0_119 = arith.constant 0 : index
      %185 = vector.load %arg2[%c32, %c0_118, %c0_119] : memref<49x3x32xbf16, #tpu.memory_space<vmem>>, vector<1x3x32xbf16>
      %186 = vector.shape_cast %185 : vector<1x3x32xbf16> to vector<3x32xbf16>
      %cst_120 = arith.constant dense<0.000000e+00> : vector<3x120xf32>
      %187 = tpu.matmul %186, %184, %cst_120 {dimension_numbers = #tpu.dot_dimension_numbers<[1], [0], [0], [1], [0, 0, 1, 1], [], []>} : vector<3x32xbf16>, vector<32x120xbf16>, vector<3x120xf32> -> vector<3x120xf32>
      %188 = arith.addf %183, %187 : vector<3x120xf32>
      %189 = vector.extract_strided_slice %163 {offsets = [0, 5], sizes = [32, 120], strides = [1, 1]} : vector<32x126xbf16> to vector<32x120xbf16>
      %c33 = arith.constant 33 : index
      %c0_121 = arith.constant 0 : index
      %c0_122 = arith.constant 0 : index
      %190 = vector.load %arg2[%c33, %c0_121, %c0_122] : memref<49x3x32xbf16, #tpu.memory_space<vmem>>, vector<1x3x32xbf16>
      %191 = vector.shape_cast %190 : vector<1x3x32xbf16> to vector<3x32xbf16>
      %cst_123 = arith.constant dense<0.000000e+00> : vector<3x120xf32>
      %192 = tpu.matmul %191, %189, %cst_123 {dimension_numbers = #tpu.dot_dimension_numbers<[1], [0], [0], [1], [0, 0, 1, 1], [], []>} : vector<3x32xbf16>, vector<32x120xbf16>, vector<3x120xf32> -> vector<3x120xf32>
      %193 = arith.addf %188, %192 : vector<3x120xf32>
      %194 = vector.extract_strided_slice %163 {offsets = [0, 6], sizes = [32, 120], strides = [1, 1]} : vector<32x126xbf16> to vector<32x120xbf16>
      %c34 = arith.constant 34 : index
      %c0_124 = arith.constant 0 : index
      %c0_125 = arith.constant 0 : index
      %195 = vector.load %arg2[%c34, %c0_124, %c0_125] : memref<49x3x32xbf16, #tpu.memory_space<vmem>>, vector<1x3x32xbf16>
      %196 = vector.shape_cast %195 : vector<1x3x32xbf16> to vector<3x32xbf16>
      %cst_126 = arith.constant dense<0.000000e+00> : vector<3x120xf32>
      %197 = tpu.matmul %196, %194, %cst_126 {dimension_numbers = #tpu.dot_dimension_numbers<[1], [0], [0], [1], [0, 0, 1, 1], [], []>} : vector<3x32xbf16>, vector<32x120xbf16>, vector<3x120xf32> -> vector<3x120xf32>
      %198 = arith.addf %193, %197 : vector<3x120xf32>
      %c5_i32 = arith.constant 5 : i32
      %199 = arith.addi %arg6, %c5_i32 : i32
      %c0_127 = arith.constant 0 : index
      %200 = arith.index_cast %199 : i32 to index
      %c0_128 = arith.constant 0 : index
      %c0_129 = arith.constant 0 : index
      %201 = vector.load %arg1[%c0_127, %200, %c0_128, %c0_129] : memref<1x96x32x126xbf16, #tpu.memory_space<vmem>>, vector<1x1x32x126xbf16>
      %202 = vector.shape_cast %201 : vector<1x1x32x126xbf16> to vector<32x126xbf16>
      %203 = vector.extract_strided_slice %202 {offsets = [0, 0], sizes = [32, 120], strides = [1, 1]} : vector<32x126xbf16> to vector<32x120xbf16>
      %c35 = arith.constant 35 : index
      %c0_130 = arith.constant 0 : index
      %c0_131 = arith.constant 0 : index
      %204 = vector.load %arg2[%c35, %c0_130, %c0_131] : memref<49x3x32xbf16, #tpu.memory_space<vmem>>, vector<1x3x32xbf16>
      %205 = vector.shape_cast %204 : vector<1x3x32xbf16> to vector<3x32xbf16>
      %cst_132 = arith.constant dense<0.000000e+00> : vector<3x120xf32>
      %206 = tpu.matmul %205, %203, %cst_132 {dimension_numbers = #tpu.dot_dimension_numbers<[1], [0], [0], [1], [0, 0, 1, 1], [], []>} : vector<3x32xbf16>, vector<32x120xbf16>, vector<3x120xf32> -> vector<3x120xf32>
      %207 = arith.addf %198, %206 : vector<3x120xf32>
      %208 = vector.extract_strided_slice %202 {offsets = [0, 1], sizes = [32, 120], strides = [1, 1]} : vector<32x126xbf16> to vector<32x120xbf16>
      %c36 = arith.constant 36 : index
      %c0_133 = arith.constant 0 : index
      %c0_134 = arith.constant 0 : index
      %209 = vector.load %arg2[%c36, %c0_133, %c0_134] : memref<49x3x32xbf16, #tpu.memory_space<vmem>>, vector<1x3x32xbf16>
      %210 = vector.shape_cast %209 : vector<1x3x32xbf16> to vector<3x32xbf16>
      %cst_135 = arith.constant dense<0.000000e+00> : vector<3x120xf32>
      %211 = tpu.matmul %210, %208, %cst_135 {dimension_numbers = #tpu.dot_dimension_numbers<[1], [0], [0], [1], [0, 0, 1, 1], [], []>} : vector<3x32xbf16>, vector<32x120xbf16>, vector<3x120xf32> -> vector<3x120xf32>
      %212 = arith.addf %207, %211 : vector<3x120xf32>
      %213 = vector.extract_strided_slice %202 {offsets = [0, 2], sizes = [32, 120], strides = [1, 1]} : vector<32x126xbf16> to vector<32x120xbf16>
      %c37 = arith.constant 37 : index
      %c0_136 = arith.constant 0 : index
      %c0_137 = arith.constant 0 : index
      %214 = vector.load %arg2[%c37, %c0_136, %c0_137] : memref<49x3x32xbf16, #tpu.memory_space<vmem>>, vector<1x3x32xbf16>
      %215 = vector.shape_cast %214 : vector<1x3x32xbf16> to vector<3x32xbf16>
      %cst_138 = arith.constant dense<0.000000e+00> : vector<3x120xf32>
      %216 = tpu.matmul %215, %213, %cst_138 {dimension_numbers = #tpu.dot_dimension_numbers<[1], [0], [0], [1], [0, 0, 1, 1], [], []>} : vector<3x32xbf16>, vector<32x120xbf16>, vector<3x120xf32> -> vector<3x120xf32>
      %217 = arith.addf %212, %216 : vector<3x120xf32>
      %218 = vector.extract_strided_slice %202 {offsets = [0, 3], sizes = [32, 120], strides = [1, 1]} : vector<32x126xbf16> to vector<32x120xbf16>
      %c38 = arith.constant 38 : index
      %c0_139 = arith.constant 0 : index
      %c0_140 = arith.constant 0 : index
      %219 = vector.load %arg2[%c38, %c0_139, %c0_140] : memref<49x3x32xbf16, #tpu.memory_space<vmem>>, vector<1x3x32xbf16>
      %220 = vector.shape_cast %219 : vector<1x3x32xbf16> to vector<3x32xbf16>
      %cst_141 = arith.constant dense<0.000000e+00> : vector<3x120xf32>
      %221 = tpu.matmul %220, %218, %cst_141 {dimension_numbers = #tpu.dot_dimension_numbers<[1], [0], [0], [1], [0, 0, 1, 1], [], []>} : vector<3x32xbf16>, vector<32x120xbf16>, vector<3x120xf32> -> vector<3x120xf32>
      %222 = arith.addf %217, %221 : vector<3x120xf32>
      %223 = vector.extract_strided_slice %202 {offsets = [0, 4], sizes = [32, 120], strides = [1, 1]} : vector<32x126xbf16> to vector<32x120xbf16>
      %c39 = arith.constant 39 : index
      %c0_142 = arith.constant 0 : index
      %c0_143 = arith.constant 0 : index
      %224 = vector.load %arg2[%c39, %c0_142, %c0_143] : memref<49x3x32xbf16, #tpu.memory_space<vmem>>, vector<1x3x32xbf16>
      %225 = vector.shape_cast %224 : vector<1x3x32xbf16> to vector<3x32xbf16>
      %cst_144 = arith.constant dense<0.000000e+00> : vector<3x120xf32>
      %226 = tpu.matmul %225, %223, %cst_144 {dimension_numbers = #tpu.dot_dimension_numbers<[1], [0], [0], [1], [0, 0, 1, 1], [], []>} : vector<3x32xbf16>, vector<32x120xbf16>, vector<3x120xf32> -> vector<3x120xf32>
      %227 = arith.addf %222, %226 : vector<3x120xf32>
      %228 = vector.extract_strided_slice %202 {offsets = [0, 5], sizes = [32, 120], strides = [1, 1]} : vector<32x126xbf16> to vector<32x120xbf16>
      %c40 = arith.constant 40 : index
      %c0_145 = arith.constant 0 : index
      %c0_146 = arith.constant 0 : index
      %229 = vector.load %arg2[%c40, %c0_145, %c0_146] : memref<49x3x32xbf16, #tpu.memory_space<vmem>>, vector<1x3x32xbf16>
      %230 = vector.shape_cast %229 : vector<1x3x32xbf16> to vector<3x32xbf16>
      %cst_147 = arith.constant dense<0.000000e+00> : vector<3x120xf32>
      %231 = tpu.matmul %230, %228, %cst_147 {dimension_numbers = #tpu.dot_dimension_numbers<[1], [0], [0], [1], [0, 0, 1, 1], [], []>} : vector<3x32xbf16>, vector<32x120xbf16>, vector<3x120xf32> -> vector<3x120xf32>
      %232 = arith.addf %227, %231 : vector<3x120xf32>
      %233 = vector.extract_strided_slice %202 {offsets = [0, 6], sizes = [32, 120], strides = [1, 1]} : vector<32x126xbf16> to vector<32x120xbf16>
      %c41 = arith.constant 41 : index
      %c0_148 = arith.constant 0 : index
      %c0_149 = arith.constant 0 : index
      %234 = vector.load %arg2[%c41, %c0_148, %c0_149] : memref<49x3x32xbf16, #tpu.memory_space<vmem>>, vector<1x3x32xbf16>
      %235 = vector.shape_cast %234 : vector<1x3x32xbf16> to vector<3x32xbf16>
      %cst_150 = arith.constant dense<0.000000e+00> : vector<3x120xf32>
      %236 = tpu.matmul %235, %233, %cst_150 {dimension_numbers = #tpu.dot_dimension_numbers<[1], [0], [0], [1], [0, 0, 1, 1], [], []>} : vector<3x32xbf16>, vector<32x120xbf16>, vector<3x120xf32> -> vector<3x120xf32>
      %237 = arith.addf %232, %236 : vector<3x120xf32>
      %c6_i32 = arith.constant 6 : i32
      %238 = arith.addi %arg6, %c6_i32 : i32
      %c0_151 = arith.constant 0 : index
      %239 = arith.index_cast %238 : i32 to index
      %c0_152 = arith.constant 0 : index
      %c0_153 = arith.constant 0 : index
      %240 = vector.load %arg1[%c0_151, %239, %c0_152, %c0_153] : memref<1x96x32x126xbf16, #tpu.memory_space<vmem>>, vector<1x1x32x126xbf16>
      %241 = vector.shape_cast %240 : vector<1x1x32x126xbf16> to vector<32x126xbf16>
      %242 = vector.extract_strided_slice %241 {offsets = [0, 0], sizes = [32, 120], strides = [1, 1]} : vector<32x126xbf16> to vector<32x120xbf16>
      %c42 = arith.constant 42 : index
      %c0_154 = arith.constant 0 : index
      %c0_155 = arith.constant 0 : index
      %243 = vector.load %arg2[%c42, %c0_154, %c0_155] : memref<49x3x32xbf16, #tpu.memory_space<vmem>>, vector<1x3x32xbf16>
      %244 = vector.shape_cast %243 : vector<1x3x32xbf16> to vector<3x32xbf16>
      %cst_156 = arith.constant dense<0.000000e+00> : vector<3x120xf32>
      %245 = tpu.matmul %244, %242, %cst_156 {dimension_numbers = #tpu.dot_dimension_numbers<[1], [0], [0], [1], [0, 0, 1, 1], [], []>} : vector<3x32xbf16>, vector<32x120xbf16>, vector<3x120xf32> -> vector<3x120xf32>
      %246 = arith.addf %237, %245 : vector<3x120xf32>
      %247 = vector.extract_strided_slice %241 {offsets = [0, 1], sizes = [32, 120], strides = [1, 1]} : vector<32x126xbf16> to vector<32x120xbf16>
      %c43 = arith.constant 43 : index
      %c0_157 = arith.constant 0 : index
      %c0_158 = arith.constant 0 : index
      %248 = vector.load %arg2[%c43, %c0_157, %c0_158] : memref<49x3x32xbf16, #tpu.memory_space<vmem>>, vector<1x3x32xbf16>
      %249 = vector.shape_cast %248 : vector<1x3x32xbf16> to vector<3x32xbf16>
      %cst_159 = arith.constant dense<0.000000e+00> : vector<3x120xf32>
      %250 = tpu.matmul %249, %247, %cst_159 {dimension_numbers = #tpu.dot_dimension_numbers<[1], [0], [0], [1], [0, 0, 1, 1], [], []>} : vector<3x32xbf16>, vector<32x120xbf16>, vector<3x120xf32> -> vector<3x120xf32>
      %251 = arith.addf %246, %250 : vector<3x120xf32>
      %252 = vector.extract_strided_slice %241 {offsets = [0, 2], sizes = [32, 120], strides = [1, 1]} : vector<32x126xbf16> to vector<32x120xbf16>
      %c44 = arith.constant 44 : index
      %c0_160 = arith.constant 0 : index
      %c0_161 = arith.constant 0 : index
      %253 = vector.load %arg2[%c44, %c0_160, %c0_161] : memref<49x3x32xbf16, #tpu.memory_space<vmem>>, vector<1x3x32xbf16>
      %254 = vector.shape_cast %253 : vector<1x3x32xbf16> to vector<3x32xbf16>
      %cst_162 = arith.constant dense<0.000000e+00> : vector<3x120xf32>
      %255 = tpu.matmul %254, %252, %cst_162 {dimension_numbers = #tpu.dot_dimension_numbers<[1], [0], [0], [1], [0, 0, 1, 1], [], []>} : vector<3x32xbf16>, vector<32x120xbf16>, vector<3x120xf32> -> vector<3x120xf32>
      %256 = arith.addf %251, %255 : vector<3x120xf32>
      %257 = vector.extract_strided_slice %241 {offsets = [0, 3], sizes = [32, 120], strides = [1, 1]} : vector<32x126xbf16> to vector<32x120xbf16>
      %c45 = arith.constant 45 : index
      %c0_163 = arith.constant 0 : index
      %c0_164 = arith.constant 0 : index
      %258 = vector.load %arg2[%c45, %c0_163, %c0_164] : memref<49x3x32xbf16, #tpu.memory_space<vmem>>, vector<1x3x32xbf16>
      %259 = vector.shape_cast %258 : vector<1x3x32xbf16> to vector<3x32xbf16>
      %cst_165 = arith.constant dense<0.000000e+00> : vector<3x120xf32>
      %260 = tpu.matmul %259, %257, %cst_165 {dimension_numbers = #tpu.dot_dimension_numbers<[1], [0], [0], [1], [0, 0, 1, 1], [], []>} : vector<3x32xbf16>, vector<32x120xbf16>, vector<3x120xf32> -> vector<3x120xf32>
      %261 = arith.addf %256, %260 : vector<3x120xf32>
      %262 = vector.extract_strided_slice %241 {offsets = [0, 4], sizes = [32, 120], strides = [1, 1]} : vector<32x126xbf16> to vector<32x120xbf16>
      %c46 = arith.constant 46 : index
      %c0_166 = arith.constant 0 : index
      %c0_167 = arith.constant 0 : index
      %263 = vector.load %arg2[%c46, %c0_166, %c0_167] : memref<49x3x32xbf16, #tpu.memory_space<vmem>>, vector<1x3x32xbf16>
      %264 = vector.shape_cast %263 : vector<1x3x32xbf16> to vector<3x32xbf16>
      %cst_168 = arith.constant dense<0.000000e+00> : vector<3x120xf32>
      %265 = tpu.matmul %264, %262, %cst_168 {dimension_numbers = #tpu.dot_dimension_numbers<[1], [0], [0], [1], [0, 0, 1, 1], [], []>} : vector<3x32xbf16>, vector<32x120xbf16>, vector<3x120xf32> -> vector<3x120xf32>
      %266 = arith.addf %261, %265 : vector<3x120xf32>
      %267 = vector.extract_strided_slice %241 {offsets = [0, 5], sizes = [32, 120], strides = [1, 1]} : vector<32x126xbf16> to vector<32x120xbf16>
      %c47 = arith.constant 47 : index
      %c0_169 = arith.constant 0 : index
      %c0_170 = arith.constant 0 : index
      %268 = vector.load %arg2[%c47, %c0_169, %c0_170] : memref<49x3x32xbf16, #tpu.memory_space<vmem>>, vector<1x3x32xbf16>
      %269 = vector.shape_cast %268 : vector<1x3x32xbf16> to vector<3x32xbf16>
      %cst_171 = arith.constant dense<0.000000e+00> : vector<3x120xf32>
      %270 = tpu.matmul %269, %267, %cst_171 {dimension_numbers = #tpu.dot_dimension_numbers<[1], [0], [0], [1], [0, 0, 1, 1], [], []>} : vector<3x32xbf16>, vector<32x120xbf16>, vector<3x120xf32> -> vector<3x120xf32>
      %271 = arith.addf %266, %270 : vector<3x120xf32>
      %272 = vector.extract_strided_slice %241 {offsets = [0, 6], sizes = [32, 120], strides = [1, 1]} : vector<32x126xbf16> to vector<32x120xbf16>
      %c48 = arith.constant 48 : index
      %c0_172 = arith.constant 0 : index
      %c0_173 = arith.constant 0 : index
      %273 = vector.load %arg2[%c48, %c0_172, %c0_173] : memref<49x3x32xbf16, #tpu.memory_space<vmem>>, vector<1x3x32xbf16>
      %274 = vector.shape_cast %273 : vector<1x3x32xbf16> to vector<3x32xbf16>
      %cst_174 = arith.constant dense<0.000000e+00> : vector<3x120xf32>
      %275 = tpu.matmul %274, %272, %cst_174 {dimension_numbers = #tpu.dot_dimension_numbers<[1], [0], [0], [1], [0, 0, 1, 1], [], []>} : vector<3x32xbf16>, vector<32x120xbf16>, vector<3x120xf32> -> vector<3x120xf32>
      %276 = arith.addf %271, %275 : vector<3x120xf32>
      %277 = vector.broadcast %0 : vector<3x1xf32> to vector<3x120xf32>
      %278 = arith.mulf %276, %277 : vector<3x120xf32>
      %279 = vector.broadcast %1 : vector<3x1xf32> to vector<3x120xf32>
      %280 = arith.addf %278, %279 : vector<3x120xf32>
      %cst_175 = arith.constant 0.000000e+00 : f32
      %281 = vector.broadcast %cst_175 : f32 to vector<3x120xf32>
      %282 = arith.subf %281, %280 : vector<3x120xf32>
      %283 = math.exp %282 : vector<3x120xf32>
      %cst_176 = arith.constant 1.000000e+00 : f32
      %284 = vector.broadcast %cst_176 : f32 to vector<3x120xf32>
      %285 = arith.addf %284, %283 : vector<3x120xf32>
      %286 = tpu.reciprocal %285 {approx = true} : vector<3x120xf32> -> vector<3x120xf32>
      %c0_177 = arith.constant 0 : index
      %287 = arith.index_cast %arg6 : i32 to index
      %c0_178 = arith.constant 0 : index
      %c0_179 = arith.constant 0 : index
      %288 = vector.load %arg5[%c0_177, %287, %c0_178, %c0_179] : memref<1x90x3x120xf32, #tpu.memory_space<vmem>>, vector<1x1x3x120xf32>
      %289 = vector.shape_cast %288 : vector<1x1x3x120xf32> to vector<3x120xf32>
      %290 = vector.shape_cast %286 : vector<3x120xf32> to vector<1x1x3x120xf32>
      tpu.vector_store %arg5[%c0_177, %287, %c0_178, %c0_179], %290 {strides = array<i32>} : memref<1x90x3x120xf32, #tpu.memory_space<vmem>>, vector<1x1x3x120xf32>,
    }
    %c90_i32_3 = arith.constant 90 : i32
    return
  }
  func.func @transform_0(%arg0: i32) -> (i32, i32, i32, i32) {
    %c0_i32 = arith.constant 0 : i32
    %c0_i32_0 = arith.constant 0 : i32
    %c0_i32_1 = arith.constant 0 : i32
    %c0_i32_2 = arith.constant 0 : i32
    return %arg0, %c0_i32, %c0_i32_0, %c0_i32_1 : i32, i32, i32, i32
  }
  func.func @transform_1(%arg0: i32) -> (i32, i32, i32) {
    %c0_i32 = arith.constant 0 : i32
    %c0_i32_0 = arith.constant 0 : i32
    %c0_i32_1 = arith.constant 0 : i32
    %c0_i32_2 = arith.constant 0 : i32
    return %c0_i32, %c0_i32_0, %c0_i32_1 : i32, i32, i32
  }
  func.func @transform_2(%arg0: i32) -> (i32, i32) {
    %c0_i32 = arith.constant 0 : i32
    %c0_i32_0 = arith.constant 0 : i32
    %c0_i32_1 = arith.constant 0 : i32
    return %c0_i32, %c0_i32_0 : i32, i32
  }
  func.func @transform_3(%arg0: i32) -> (i32, i32) {
    %c0_i32 = arith.constant 0 : i32
    %c0_i32_0 = arith.constant 0 : i32
    %c0_i32_1 = arith.constant 0 : i32
    return %c0_i32, %c0_i32_0 : i32, i32
  }
  func.func @transform_4(%arg0: i32) -> (i32, i32, i32, i32) {
    %c0_i32 = arith.constant 0 : i32
    %c0_i32_0 = arith.constant 0 : i32
    %c0_i32_1 = arith.constant 0 : i32
    %c0_i32_2 = arith.constant 0 : i32
    return %arg0, %c0_i32, %c0_i32_0, %c0_i32_1 : i32, i32, i32, i32
  }
}

</mosaic_0001>

<llo_original>
// kernel: generator_deconv_pallas.11
$region0: #{generator_deconv_pallas.11}
  #allocation0 [shape = 'u32[]', space=smem, size = 0x4, offset = 0x4, fixed_abs, tag = 'smem constant byte address 0x4 - core index']
  #allocation1 [shape = 'u32[144,128]{1,0:T(1,128)}', space=vmem, size = 0x12000, scoped, tag = 'internal scratch']
  %s0 = inlined_call_operand.vmem [shape: bf16[2,1920], index: 0, kind: input, shape index: {}]
  %s1 = inlined_call_operand.vmem [shape: bf16[1920,192], index: 1, kind: input, shape index: {}]
  %s2 = inlined_call_operand.vmem [shape: f32[1,192], index: 2, kind: input, shape index: {}]
  %s3 = inlined_call_operand.vmem [shape: f32[1,192], index: 3, kind: input, shape index: {}]
  %s4 = inlined_call_operand.vmem [shape: bf16[2,192], index: 4, kind: output, shape index: {}]
  %s5 = sld [smem:[#allocation0]]
  $region26: #{generator_deconv_pallas.11} parent=0
    _
  %s7 = ssub.s32 1, %s5
  %s8 = scalar_select 0, %s7, %s5
  // Predicated region
  $region2: #{generator_deconv_pallas.11} parent=0 // pred_check
    _
  $region3: #{generator_deconv_pallas.11} parent=0 // pred_check_branch
    %10 = sbr.rel (0) target = $region5
  $region4: #{generator_deconv_pallas.11} parent=0 // pred_region
    _
  $region5: #{generator_deconv_pallas.11} parent=0 // pred_fallthru
    _
  // Predicated region
  $region6: #{generator_deconv_pallas.11} parent=0 // pred_check
    _
  $region7: #{generator_deconv_pallas.11} parent=0 // pred_check_branch
    %12 = sbr.rel (0) target = $region9
  $region8: #{generator_deconv_pallas.11} parent=0 // pred_region
    _
  $region9: #{generator_deconv_pallas.11} parent=0 // pred_fallthru
    _
  // Predicated region
  $region10: #{generator_deconv_pallas.11} parent=0 // pred_check
    _
  $region11: #{generator_deconv_pallas.11} parent=0 // pred_check_branch
    %14 = sbr.rel (0) target = $region13
  $region12: #{generator_deconv_pallas.11} parent=0 // pred_region
    _
  $region13: #{generator_deconv_pallas.11} parent=0 // pred_fallthru
    _
  // Predicated region
  $region14: #{generator_deconv_pallas.11} parent=0 // pred_check
    _
  $region15: #{generator_deconv_pallas.11} parent=0 // pred_check_branch
    %16 = sbr.rel (0) target = $region17
  $region16: #{generator_deconv_pallas.11} parent=0 // pred_region
    _
  $region17: #{generator_deconv_pallas.11} parent=0 // pred_fallthru
    _
  %v18 = vld [vmem:[%s0] sm:$0xff]
  %v19 = vld [vmem:[%s0 + $0x8] sm:$0x7f]
  %v20 = vld [vmem:[%s1] sm:$0xff]
  %v21 = vld [vmem:[%s1 + $0x8] sm:$0xff]
  %v22 = vld [vmem:[%s1 + $0x10] sm:$0xff]
  %v23 = vld [vmem:[%s1 + $0x18] sm:$0xff]
  %v24 = vld [vmem:[%s1 + $0x20] sm:$0xff]
  %v25 = vld [vmem:[%s1 + $0x28] sm:$0xff]
  %v26 = vld [vmem:[%s1 + $0x30] sm:$0xff]
  %v27 = vld [vmem:[%s1 + $0x38] sm:$0xff]
  %v28 = vld [vmem:[%s1 + $0x40] sm:$0xff]
  %v29 = vld [vmem:[%s1 + $0x48] sm:$0xff]
  %v30 = vld [vmem:[%s1 + $0x50] sm:$0xff]
  %v31 = vld [vmem:[%s1 + $0x58] sm:$0xff]
  %v32 = vld [vmem:[%s1 + $0x60] sm:$0xff]
  %v33 = vld [vmem:[%s1 + $0x68] sm:$0xff]
  %v34 = vld [vmem:[%s1 + $0x70] sm:$0xff]
  %v35 = vld [vmem:[%s1 + $0x78] sm:$0xff]
  %v36 = vld [vmem:[%s1 + $0x80] sm:$0xff]
  %v37 = vld [vmem:[%s1 + $0x88] sm:$0xff]
  %v38 = vld [vmem:[%s1 + $0x90] sm:$0xff]
  %v39 = vld [vmem:[%s1 + $0x98] sm:$0xff]
  %v40 = vld [vmem:[%s1 + $0xa0] sm:$0xff]
  %v41 = vld [vmem:[%s1 + $0xa8] sm:$0xff]
  %v42 = vld [vmem:[%s1 + $0xb0] sm:$0xff]
  %v43 = vld [vmem:[%s1 + $0xb8] sm:$0xff]
  %v44 = vld [vmem:[%s1 + $0xc0] sm:$0xff]
  %v45 = vld [vmem:[%s1 + $0xc8] sm:$0xff]
  %v46 = vld [vmem:[%s1 + $0xd0] sm:$0xff]
  %v47 = vld [vmem:[%s1 + $0xd8] sm:$0xff]
  %v48 = vld [vmem:[%s1 + $0xe0] sm:$0xff]
  %v49 = vld [vmem:[%s1 + $0xe8] sm:$0xff]
  %v50 = vld [vmem:[%s1 + $0xf0] sm:$0xff]
  %v51 = vld [vmem:[%s1 + $0xf8] sm:$0xff]
  %v52 = vld [vmem:[%s1 + $0x100] sm:$0xff]
  %v53 = vld [vmem:[%s1 + $0x108] sm:$0xff]
  %v54 = vld [vmem:[%s1 + $0x110] sm:$0xff]
  %v55 = vld [vmem:[%s1 + $0x118] sm:$0xff]
  %v56 = vld [vmem:[%s1 + $0x120] sm:$0xff]
  %v57 = vld [vmem:[%s1 + $0x128] sm:$0xff]
  %v58 = vld [vmem:[%s1 + $0x130] sm:$0xff]
  %v59 = vld [vmem:[%s1 + $0x138] sm:$0xff]
  %v60 = vld [vmem:[%s1 + $0x140] sm:$0xff]
  %v61 = vld [vmem:[%s1 + $0x148] sm:$0xff]
  %v62 = vld [vmem:[%s1 + $0x150] sm:$0xff]
  %v63 = vld [vmem:[%s1 + $0x158] sm:$0xff]
  %v64 = vld [vmem:[%s1 + $0x160] sm:$0xff]
  %v65 = vld [vmem:[%s1 + $0x168] sm:$0xff]
  %v66 = vld [vmem:[%s1 + $0x170] sm:$0xff]
  %v67 = vld [vmem:[%s1 + $0x178] sm:$0xff]
  %v68 = vld [vmem:[%s1 + $0x180] sm:$0xff]
  %v69 = vld [vmem:[%s1 + $0x188] sm:$0xff]
  %v70 = vld [vmem:[%s1 + $0x190] sm:$0xff]
  %v71 = vld [vmem:[%s1 + $0x198] sm:$0xff]
  %v72 = vld [vmem:[%s1 + $0x1a0] sm:$0xff]
  %v73 = vld [vmem:[%s1 + $0x1a8] sm:$0xff]
  %v74 = vld [vmem:[%s1 + $0x1b0] sm:$0xff]
  %v75 = vld [vmem:[%s1 + $0x1b8] sm:$0xff]
  %v76 = vld [vmem:[%s1 + $0x1c0] sm:$0xff]
  %v77 = vld [vmem:[%s1 + $0x1c8] sm:$0xff]
  %v78 = vld [vmem:[%s1 + $0x1d0] sm:$0xff]
  %v79 = vld [vmem:[%s1 + $0x1d8] sm:$0xff]
  %v80 = vld [vmem:[%s1 + $0x1e0] sm:$0xff]
  %v81 = vld [vmem:[%s1 + $0x1e8] sm:$0xff]
  %v82 = vld [vmem:[%s1 + $0x1f0] sm:$0xff]
  %v83 = vld [vmem:[%s1 + $0x1f8] sm:$0xff]
  %v84 = vld [vmem:[%s1 + $0x200] sm:$0xff]
  %v85 = vld [vmem:[%s1 + $0x208] sm:$0xff]
  %v86 = vld [vmem:[%s1 + $0x210] sm:$0xff]
  %v87 = vld [vmem:[%s1 + $0x218] sm:$0xff]
  %v88 = vld [vmem:[%s1 + $0x220] sm:$0xff]
  %v89 = vld [vmem:[%s1 + $0x228] sm:$0xff]
  %v90 = vld [vmem:[%s1 + $0x230] sm:$0xff]
  %v91 = vld [vmem:[%s1 + $0x238] sm:$0xff]
  %v92 = vld [vmem:[%s1 + $0x240] sm:$0xff]
  %v93 = vld [vmem:[%s1 + $0x248] sm:$0xff]
  %v94 = vld [vmem:[%s1 + $0x250] sm:$0xff]
  %v95 = vld [vmem:[%s1 + $0x258] sm:$0xff]
  %v96 = vld [vmem:[%s1 + $0x260] sm:$0xff]
  %v97 = vld [vmem:[%s1 + $0x268] sm:$0xff]
  %v98 = vld [vmem:[%s1 + $0x270] sm:$0xff]
  %v99 = vld [vmem:[%s1 + $0x278] sm:$0xff]
  %v100 = vld [vmem:[%s1 + $0x280] sm:$0xff]
  %v101 = vld [vmem:[%s1 + $0x288] sm:$0xff]
  %v102 = vld [vmem:[%s1 + $0x290] sm:$0xff]
  %v103 = vld [vmem:[%s1 + $0x298] sm:$0xff]
  %v104 = vld [vmem:[%s1 + $0x2a0] sm:$0xff]
  %v105 = vld [vmem:[%s1 + $0x2a8] sm:$0xff]
  %v106 = vld [vmem:[%s1 + $0x2b0] sm:$0xff]
  %v107 = vld [vmem:[%s1 + $0x2b8] sm:$0xff]
  %v108 = vld [vmem:[%s1 + $0x2c0] sm:$0xff]
  %v109 = vld [vmem:[%s1 + $0x2c8] sm:$0xff]
  %v110 = vld [vmem:[%s1 + $0x2d0] sm:$0xff]
  %v111 = vld [vmem:[%s1 + $0x2d8] sm:$0xff]
  %v112 = vld [vmem:[%s1 + $0x2e0] sm:$0xff]
  %v113 = vld [vmem:[%s1 + $0x2e8] sm:$0xff]
  %v114 = vld [vmem:[%s1 + $0x2f0] sm:$0xff]
  %v115 = vld [vmem:[%s1 + $0x2f8] sm:$0xff]
  %v116 = vld [vmem:[%s1 + $0x300] sm:$0xff]
  %v117 = vld [vmem:[%s1 + $0x308] sm:$0xff]
  %v118 = vld [vmem:[%s1 + $0x310] sm:$0xff]
  %v119 = vld [vmem:[%s1 + $0x318] sm:$0xff]
  %v120 = vld [vmem:[%s1 + $0x320] sm:$0xff]
  %v121 = vld [vmem:[%s1 + $0x328] sm:$0xff]
  %v122 = vld [vmem:[%s1 + $0x330] sm:$0xff]
  %v123 = vld [vmem:[%s1 + $0x338] sm:$0xff]
  %v124 = vld [vmem:[%s1 + $0x340] sm:$0xff]
  %v125 = vld [vmem:[%s1 + $0x348] sm:$0xff]
  %v126 = vld [vmem:[%s1 + $0x350] sm:$0xff]
  %v127 = vld [vmem:[%s1 + $0x358] sm:$0xff]
  %v128 = vld [vmem:[%s1 + $0x360] sm:$0xff]
  %v129 = vld [vmem:[%s1 + $0x368] sm:$0xff]
  %v130 = vld [vmem:[%s1 + $0x370] sm:$0xff]
  %v131 = vld [vmem:[%s1 + $0x378] sm:$0xff]
  %v132 = vld [vmem:[%s1 + $0x380] sm:$0xff]
  %v133 = vld [vmem:[%s1 + $0x388] sm:$0xff]
  %v134 = vld [vmem:[%s1 + $0x390] sm:$0xff]
  %v135 = vld [vmem:[%s1 + $0x398] sm:$0xff]
  %v136 = vld [vmem:[%s1 + $0x3a0] sm:$0xff]
  %v137 = vld [vmem:[%s1 + $0x3a8] sm:$0xff]
  %v138 = vld [vmem:[%s1 + $0x3b0] sm:$0xff]
  %v139 = vld [vmem:[%s1 + $0x3b8] sm:$0xff]
  %v140 = vld [vmem:[%s1 + $0x3c0] sm:$0xff]
  %v141 = vld [vmem:[%s1 + $0x3c8] sm:$0xff]
  %v142 = vld [vmem:[%s1 + $0x3d0] sm:$0xff]
  %v143 = vld [vmem:[%s1 + $0x3d8] sm:$0xff]
  %v144 = vld [vmem:[%s1 + $0x3e0] sm:$0xff]
  %v145 = vld [vmem:[%s1 + $0x3e8] sm:$0xff]
  %v146 = vld [vmem:[%s1 + $0x3f0] sm:$0xff]
  %v147 = vld [vmem:[%s1 + $0x3f8] sm:$0xff]
  %v148 = vld [vmem:[%s1 + $0x400] sm:$0xff]
  %v149 = vld [vmem:[%s1 + $0x408] sm:$0xff]
  %v150 = vld [vmem:[%s1 + $0x410] sm:$0xff]
  %v151 = vld [vmem:[%s1 + $0x418] sm:$0xff]
  %v152 = vld [vmem:[%s1 + $0x420] sm:$0xff]
  %v153 = vld [vmem:[%s1 + $0x428] sm:$0xff]
  %v154 = vld [vmem:[%s1 + $0x430] sm:$0xff]
  %v155 = vld [vmem:[%s1 + $0x438] sm:$0xff]
  %v156 = vld [vmem:[%s1 + $0x440] sm:$0xff]
  %v157 = vld [vmem:[%s1 + $0x448] sm:$0xff]
  %v158 = vld [vmem:[%s1 + $0x450] sm:$0xff]
  %v159 = vld [vmem:[%s1 + $0x458] sm:$0xff]
  %v160 = vld [vmem:[%s1 + $0x460] sm:$0xff]
  %v161 = vld [vmem:[%s1 + $0x468] sm:$0xff]
  %v162 = vld [vmem:[%s1 + $0x470] sm:$0xff]
  %v163 = vld [vmem:[%s1 + $0x478] sm:$0xff]
  %v164 = vld [vmem:[%s1 + $0x480] sm:$0xff]
  %v165 = vld [vmem:[%s1 + $0x488] sm:$0xff]
  %v166 = vld [vmem:[%s1 + $0x490] sm:$0xff]
  %v167 = vld [vmem:[%s1 + $0x498] sm:$0xff]
  %v168 = vld [vmem:[%s1 + $0x4a0] sm:$0xff]
  %v169 = vld [vmem:[%s1 + $0x4a8] sm:$0xff]
  %v170 = vld [vmem:[%s1 + $0x4b0] sm:$0xff]
  %v171 = vld [vmem:[%s1 + $0x4b8] sm:$0xff]
  %v172 = vld [vmem:[%s1 + $0x4c0] sm:$0xff]
  %v173 = vld [vmem:[%s1 + $0x4c8] sm:$0xff]
  %v174 = vld [vmem:[%s1 + $0x4d0] sm:$0xff]
  %v175 = vld [vmem:[%s1 + $0x4d8] sm:$0xff]
  %v176 = vld [vmem:[%s1 + $0x4e0] sm:$0xff]
  %v177 = vld [vmem:[%s1 + $0x4e8] sm:$0xff]
  %v178 = vld [vmem:[%s1 + $0x4f0] sm:$0xff]
  %v179 = vld [vmem:[%s1 + $0x4f8] sm:$0xff]
  %v180 = vld [vmem:[%s1 + $0x500] sm:$0xff]
  %v181 = vld [vmem:[%s1 + $0x508] sm:$0xff]
  %v182 = vld [vmem:[%s1 + $0x510] sm:$0xff]
  %v183 = vld [vmem:[%s1 + $0x518] sm:$0xff]
  %v184 = vld [vmem:[%s1 + $0x520] sm:$0xff]
  %v185 = vld [vmem:[%s1 + $0x528] sm:$0xff]
  %v186 = vld [vmem:[%s1 + $0x530] sm:$0xff]
  %v187 = vld [vmem:[%s1 + $0x538] sm:$0xff]
  %v188 = vld [vmem:[%s1 + $0x540] sm:$0xff]
  %v189 = vld [vmem:[%s1 + $0x548] sm:$0xff]
  %v190 = vld [vmem:[%s1 + $0x550] sm:$0xff]
  %v191 = vld [vmem:[%s1 + $0x558] sm:$0xff]
  %v192 = vld [vmem:[%s1 + $0x560] sm:$0xff]
  %v193 = vld [vmem:[%s1 + $0x568] sm:$0xff]
  %v194 = vld [vmem:[%s1 + $0x570] sm:$0xff]
  %v195 = vld [vmem:[%s1 + $0x578] sm:$0xff]
  %v196 = vld [vmem:[%s1 + $0x580] sm:$0xff]
  %v197 = vld [vmem:[%s1 + $0x588] sm:$0xff]
  %v198 = vld [vmem:[%s1 + $0x590] sm:$0xff]
  %v199 = vld [vmem:[%s1 + $0x598] sm:$0xff]
  %v200 = vld [vmem:[%s1 + $0x5a0] sm:$0xff]
  %v201 = vld [vmem:[%s1 + $0x5a8] sm:$0xff]
  %v202 = vld [vmem:[%s1 + $0x5b0] sm:$0xff]
  %v203 = vld [vmem:[%s1 + $0x5b8] sm:$0xff]
  %v204 = vld [vmem:[%s1 + $0x5c0] sm:$0xff]
  %v205 = vld [vmem:[%s1 + $0x5c8] sm:$0xff]
  %v206 = vld [vmem:[%s1 + $0x5d0] sm:$0xff]
  %v207 = vld [vmem:[%s1 + $0x5d8] sm:$0xff]
  %v208 = vld [vmem:[%s1 + $0x5e0] sm:$0xff]
  %v209 = vld [vmem:[%s1 + $0x5e8] sm:$0xff]
  %v210 = vld [vmem:[%s1 + $0x5f0] sm:$0xff]
  %v211 = vld [vmem:[%s1 + $0x5f8] sm:$0xff]
  %v212 = vld [vmem:[%s1 + $0x600] sm:$0xff]
  %v213 = vld [vmem:[%s1 + $0x608] sm:$0xff]
  %v214 = vld [vmem:[%s1 + $0x610] sm:$0xff]
  %v215 = vld [vmem:[%s1 + $0x618] sm:$0xff]
  %v216 = vld [vmem:[%s1 + $0x620] sm:$0xff]
  %v217 = vld [vmem:[%s1 + $0x628] sm:$0xff]
  %v218 = vld [vmem:[%s1 + $0x630] sm:$0xff]
  %v219 = vld [vmem:[%s1 + $0x638] sm:$0xff]
  %v220 = vld [vmem:[%s1 + $0x640] sm:$0xff]
  %v221 = vld [vmem:[%s1 + $0x648] sm:$0xff]
  %v222 = vld [vmem:[%s1 + $0x650] sm:$0xff]
  %v223 = vld [vmem:[%s1 + $0x658] sm:$0xff]
  %v224 = vld [vmem:[%s1 + $0x660] sm:$0xff]
  %v225 = vld [vmem:[%s1 + $0x668] sm:$0xff]
  %v226 = vld [vmem:[%s1 + $0x670] sm:$0xff]
  %v227 = vld [vmem:[%s1 + $0x678] sm:$0xff]
  %v228 = vld [vmem:[%s1 + $0x680] sm:$0xff]
  %v229 = vld [vmem:[%s1 + $0x688] sm:$0xff]
  %v230 = vld [vmem:[%s1 + $0x690] sm:$0xff]
  %v231 = vld [vmem:[%s1 + $0x698] sm:$0xff]
  %v232 = vld [vmem:[%s1 + $0x6a0] sm:$0xff]
  %v233 = vld [vmem:[%s1 + $0x6a8] sm:$0xff]
  %v234 = vld [vmem:[%s1 + $0x6b0] sm:$0xff]
  %v235 = vld [vmem:[%s1 + $0x6b8] sm:$0xff]
  %v236 = vld [vmem:[%s1 + $0x6c0] sm:$0xff]
  %v237 = vld [vmem:[%s1 + $0x6c8] sm:$0xff]
  %v238 = vld [vmem:[%s1 + $0x6d0] sm:$0xff]
  %v239 = vld [vmem:[%s1 + $0x6d8] sm:$0xff]
  %v240 = vld [vmem:[%s1 + $0x6e0] sm:$0xff]
  %v241 = vld [vmem:[%s1 + $0x6e8] sm:$0xff]
  %v242 = vld [vmem:[%s1 + $0x6f0] sm:$0xff]
  %v243 = vld [vmem:[%s1 + $0x6f8] sm:$0xff]
  %v244 = vld [vmem:[%s1 + $0x700] sm:$0xff]
  %v245 = vld [vmem:[%s1 + $0x708] sm:$0xff]
  %v246 = vld [vmem:[%s1 + $0x710] sm:$0xff]
  %v247 = vld [vmem:[%s1 + $0x718] sm:$0xff]
  %v248 = vld [vmem:[%s1 + $0x720] sm:$0xff]
  %v249 = vld [vmem:[%s1 + $0x728] sm:$0xff]
  %v250 = vld [vmem:[%s1 + $0x730] sm:$0xff]
  %v251 = vld [vmem:[%s1 + $0x738] sm:$0xff]
  %v252 = vld [vmem:[%s1 + $0x740] sm:$0xff]
  %v253 = vld [vmem:[%s1 + $0x748] sm:$0xff]
  %v254 = vld [vmem:[%s1 + $0x750] sm:$0xff]
  %v255 = vld [vmem:[%s1 + $0x758] sm:$0xff]
  %v256 = vld [vmem:[%s1 + $0x760] sm:$0xff]
  %v257 = vld [vmem:[%s1 + $0x768] sm:$0xff]
  %v258 = vld [vmem:[%s1 + $0x770] sm:$0xff]
  %v259 = vld [vmem:[%s1 + $0x778] sm:$0xff]
  %v262 = vcombine.high %v18, %v18
  %v264 = vunpack.c.l.s4 1966171168
  %v265 = vunpack.c.0.s8 %v264
  %v266 = vlaneseq
  %v267 = vshrl.u32 %v266, 7
  %v268 = vsub.s32 %v265, %v267
  %v269 = vrot.slane %v18, %v268
  %v271 = vunpack.c.l.s4 1966171168
  %v272 = vunpack.c.0.s8 %v271
  %v273 = vlaneseq
  %v274 = vshrl.u32 %v273, 7
  %v275 = vsub.s32 %v272, %v274
  %v276 = vrot.slane %v262, %v275
  %v277 = vcombine.high %v269, %v269
  %v278 = vcombine.high %v276, %v276
  %v280 = vunpack.c.l.s4 1966171168
  %v281 = vunpack.c.0.s8 %v280
  %v282 = vlaneseq
  %v283 = vshrl.u32 %v282, 7
  %v284 = vsub.s32 %v281, %v283
  %v285 = vrot.slane %v269, %v284
  %v287 = vunpack.c.l.s4 1966171168
  %v288 = vunpack.c.0.s8 %v287
  %v289 = vlaneseq
  %v290 = vshrl.u32 %v289, 7
  %v291 = vsub.s32 %v288, %v290
  %v292 = vrot.slane %v276, %v291
  %v294 = vunpack.c.l.s4 1966171168
  %v295 = vunpack.c.0.s8 %v294
  %v296 = vlaneseq
  %v297 = vshrl.u32 %v296, 7
  %v298 = vsub.s32 %v295, %v297
  %v299 = vrot.slane %v277, %v298
  %v301 = vunpack.c.l.s4 1966171168
  %v302 = vunpack.c.0.s8 %v301
  %v303 = vlaneseq
  %v304 = vshrl.u32 %v303, 7
  %v305 = vsub.s32 %v302, %v304
  %v306 = vrot.slane %v278, %v305
  %v307 = vcombine.high %v285, %v285
  %v308 = vcombine.high %v292, %v292
  %v309 = vcombine.high %v299, %v299
  %v310 = vcombine.high %v306, %v306
  %v311 = vcombine.high %v19, %v19
  %v313 = vunpack.c.l.s4 1966171168
  %v314 = vunpack.c.0.s8 %v313
  %v315 = vlaneseq
  %v316 = vshrl.u32 %v315, 7
  %v317 = vsub.s32 %v314, %v316
  %v318 = vrot.slane %v19, %v317
  %v320 = vunpack.c.l.s4 1966171168
  %v321 = vunpack.c.0.s8 %v320
  %v322 = vlaneseq
  %v323 = vshrl.u32 %v322, 7
  %v324 = vsub.s32 %v321, %v323
  %v325 = vrot.slane %v311, %v324
  %v326 = vcombine.high %v318, %v318
  %v327 = vcombine.high %v325, %v325
  %v329 = vunpack.c.l.s4 1966171168
  %v330 = vunpack.c.0.s8 %v329
  %v331 = vlaneseq
  %v332 = vshrl.u32 %v331, 7
  %v333 = vsub.s32 %v330, %v332
  %v334 = vrot.slane %v318, %v333
  %v336 = vunpack.c.l.s4 1966171168
  %v337 = vunpack.c.0.s8 %v336
  %v338 = vlaneseq
  %v339 = vshrl.u32 %v338, 7
  %v340 = vsub.s32 %v337, %v339
  %v341 = vrot.slane %v325, %v340
  %v343 = vunpack.c.l.s4 1966171168
  %v344 = vunpack.c.0.s8 %v343
  %v345 = vlaneseq
  %v346 = vshrl.u32 %v345, 7
  %v347 = vsub.s32 %v344, %v346
  %v348 = vrot.slane %v326, %v347
  %v350 = vunpack.c.l.s4 1966171168
  %v351 = vunpack.c.0.s8 %v350
  %v352 = vlaneseq
  %v353 = vshrl.u32 %v352, 7
  %v354 = vsub.s32 %v351, %v353
  %v355 = vrot.slane %v327, %v354
  %v356 = vcombine.high %v334, %v334
  %v357 = vcombine.high %v341, %v341
  %v358 = vcombine.high %v348, %v348
  %v614 = vunpack.c.l.b16 %v20
  %v615 = vunpack.c.h.b16 %v20
  %v616 = vunpack.c.l.b16 %v21
  %v617 = vunpack.c.h.b16 %v21
  %v618 = vunpack.c.l.b16 %v22
  %v619 = vunpack.c.h.b16 %v22
  %v620 = vunpack.c.l.b16 %v23
  %v621 = vunpack.c.h.b16 %v23
  %v622 = vunpack.c.l.b16 %v24
  %v623 = vunpack.c.h.b16 %v24
  %v624 = vunpack.c.l.b16 %v25
  %v625 = vunpack.c.h.b16 %v25
  %v626 = vunpack.c.l.b16 %v26
  %v627 = vunpack.c.h.b16 %v26
  %v628 = vunpack.c.l.b16 %v27
  %v629 = vunpack.c.h.b16 %v27
  %v630 = vunpack.c.l.b16 %v28
  %v631 = vunpack.c.h.b16 %v28
  %v632 = vunpack.c.l.b16 %v29
  %v633 = vunpack.c.h.b16 %v29
  %v634 = vunpack.c.l.b16 %v30
  %v635 = vunpack.c.h.b16 %v30
  %v636 = vunpack.c.l.b16 %v31
  %v637 = vunpack.c.h.b16 %v31
  %v638 = vunpack.c.l.b16 %v32
  %v639 = vunpack.c.h.b16 %v32
  %v640 = vunpack.c.l.b16 %v33
  %v641 = vunpack.c.h.b16 %v33
  %v642 = vunpack.c.l.b16 %v34
  %v643 = vunpack.c.h.b16 %v34
  %v644 = vunpack.c.l.b16 %v35
  %v645 = vunpack.c.h.b16 %v35
  %v646 = vunpack.c.l.b16 %v36
  %v647 = vunpack.c.h.b16 %v36
  %v648 = vunpack.c.l.b16 %v37
  %v649 = vunpack.c.h.b16 %v37
  %v650 = vunpack.c.l.b16 %v38
  %v651 = vunpack.c.h.b16 %v38
  %v652 = vunpack.c.l.b16 %v39
  %v653 = vunpack.c.h.b16 %v39
  %v654 = vunpack.c.l.b16 %v40
  %v655 = vunpack.c.h.b16 %v40
  %v656 = vunpack.c.l.b16 %v41
  %v657 = vunpack.c.h.b16 %v41
  %v658 = vunpack.c.l.b16 %v42
  %v659 = vunpack.c.h.b16 %v42
  %v660 = vunpack.c.l.b16 %v43
  %v661 = vunpack.c.h.b16 %v43
  %v662 = vunpack.c.l.b16 %v44
  %v663 = vunpack.c.h.b16 %v44
  %v664 = vunpack.c.l.b16 %v45
  %v665 = vunpack.c.h.b16 %v45
  %v666 = vunpack.c.l.b16 %v46
  %v667 = vunpack.c.h.b16 %v46
  %v668 = vunpack.c.l.b16 %v47
  %v669 = vunpack.c.h.b16 %v47
  %v670 = vunpack.c.l.b16 %v48
  %v671 = vunpack.c.h.b16 %v48
  %v672 = vunpack.c.l.b16 %v49
  %v673 = vunpack.c.h.b16 %v49
  %v674 = vunpack.c.l.b16 %v50
  %v675 = vunpack.c.h.b16 %v50
  %v676 = vunpack.c.l.b16 %v51
  %v677 = vunpack.c.h.b16 %v51
  %v678 = vunpack.c.l.b16 %v52
  %v679 = vunpack.c.h.b16 %v52
  %v680 = vunpack.c.l.b16 %v53
  %v681 = vunpack.c.h.b16 %v53
  %v682 = vunpack.c.l.b16 %v54
  %v683 = vunpack.c.h.b16 %v54
  %v684 = vunpack.c.l.b16 %v55
  %v685 = vunpack.c.h.b16 %v55
  %v686 = vunpack.c.l.b16 %v56
  %v687 = vunpack.c.h.b16 %v56
  %v688 = vunpack.c.l.b16 %v57
  %v689 = vunpack.c.h.b16 %v57
  %v690 = vunpack.c.l.b16 %v58
  %v691 = vunpack.c.h.b16 %v58
  %v692 = vunpack.c.l.b16 %v59
  %v693 = vunpack.c.h.b16 %v59
  %v694 = vunpack.c.l.b16 %v60
  %v695 = vunpack.c.h.b16 %v60
  %v696 = vunpack.c.l.b16 %v61
  %v697 = vunpack.c.h.b16 %v61
  %v698 = vunpack.c.l.b16 %v62
  %v699 = vunpack.c.h.b16 %v62
  %v700 = vunpack.c.l.b16 %v63
  %v701 = vunpack.c.h.b16 %v63
  %v702 = vunpack.c.l.b16 %v64
  %v703 = vunpack.c.h.b16 %v64
  %v704 = vunpack.c.l.b16 %v65
  %v705 = vunpack.c.h.b16 %v65
  %v706 = vunpack.c.l.b16 %v66
  %v707 = vunpack.c.h.b16 %v66
  %v708 = vunpack.c.l.b16 %v67
  %v709 = vunpack.c.h.b16 %v67
  %v710 = vunpack.c.l.b16 %v68
  %v711 = vunpack.c.h.b16 %v68
  %v712 = vunpack.c.l.b16 %v69
  %v713 = vunpack.c.h.b16 %v69
  %v714 = vunpack.c.l.b16 %v70
  %v715 = vunpack.c.h.b16 %v70
  %v716 = vunpack.c.l.b16 %v71
  %v717 = vunpack.c.h.b16 %v71
  %v718 = vunpack.c.l.b16 %v72
  %v719 = vunpack.c.h.b16 %v72
  %v720 = vunpack.c.l.b16 %v73
  %v721 = vunpack.c.h.b16 %v73
  %v722 = vunpack.c.l.b16 %v74
  %v723 = vunpack.c.h.b16 %v74
  %v724 = vunpack.c.l.b16 %v75
  %v725 = vunpack.c.h.b16 %v75
  %v726 = vunpack.c.l.b16 %v76
  %v727 = vunpack.c.h.b16 %v76
  %v728 = vunpack.c.l.b16 %v77
  %v729 = vunpack.c.h.b16 %v77
  %v730 = vunpack.c.l.b16 %v78
  %v731 = vunpack.c.h.b16 %v78
  %v732 = vunpack.c.l.b16 %v79
  %v733 = vunpack.c.h.b16 %v79
  %v734 = vunpack.c.l.b16 %v80
  %v735 = vunpack.c.h.b16 %v80
  %v736 = vunpack.c.l.b16 %v81
  %v737 = vunpack.c.h.b16 %v81
  %v738 = vunpack.c.l.b16 %v82
  %v739 = vunpack.c.h.b16 %v82
  %v740 = vunpack.c.l.b16 %v83
  %v741 = vunpack.c.h.b16 %v83
  %v742 = vunpack.c.l.b16 %v84
  %v743 = vunpack.c.h.b16 %v84
  %v744 = vunpack.c.l.b16 %v85
  %v745 = vunpack.c.h.b16 %v85
  %v746 = vunpack.c.l.b16 %v86
  %v747 = vunpack.c.h.b16 %v86
  %v748 = vunpack.c.l.b16 %v87
  %v749 = vunpack.c.h.b16 %v87
  %v750 = vunpack.c.l.b16 %v88
  %v751 = vunpack.c.h.b16 %v88
  %v752 = vunpack.c.l.b16 %v89
  %v753 = vunpack.c.h.b16 %v89
  %v754 = vunpack.c.l.b16 %v90
  %v755 = vunpack.c.h.b16 %v90
  %v756 = vunpack.c.l.b16 %v91
  %v757 = vunpack.c.h.b16 %v91
  %v758 = vunpack.c.l.b16 %v92
  %v759 = vunpack.c.h.b16 %v92
  %v760 = vunpack.c.l.b16 %v93
  %v761 = vunpack.c.h.b16 %v93
  %v762 = vunpack.c.l.b16 %v94
  %v763 = vunpack.c.h.b16 %v94
  %v764 = vunpack.c.l.b16 %v95
  %v765 = vunpack.c.h.b16 %v95
  %v766 = vunpack.c.l.b16 %v96
  %v767 = vunpack.c.h.b16 %v96
  %v768 = vunpack.c.l.b16 %v97
  %v769 = vunpack.c.h.b16 %v97
  %v770 = vunpack.c.l.b16 %v98
  %v771 = vunpack.c.h.b16 %v98
  %v772 = vunpack.c.l.b16 %v99
  %v773 = vunpack.c.h.b16 %v99
  %v774 = vunpack.c.l.b16 %v100
  %v775 = vunpack.c.h.b16 %v100
  %v776 = vunpack.c.l.b16 %v101
  %v777 = vunpack.c.h.b16 %v101
  %v778 = vunpack.c.l.b16 %v102
  %v779 = vunpack.c.h.b16 %v102
  %v780 = vunpack.c.l.b16 %v103
  %v781 = vunpack.c.h.b16 %v103
  %v782 = vunpack.c.l.b16 %v104
  %v783 = vunpack.c.h.b16 %v104
  %v784 = vunpack.c.l.b16 %v105
  %v785 = vunpack.c.h.b16 %v105
  %v786 = vunpack.c.l.b16 %v106
  %v787 = vunpack.c.h.b16 %v106
  %v788 = vunpack.c.l.b16 %v107
  %v789 = vunpack.c.h.b16 %v107
  %v790 = vunpack.c.l.b16 %v108
  %v791 = vunpack.c.h.b16 %v108
  %v792 = vunpack.c.l.b16 %v109
  %v793 = vunpack.c.h.b16 %v109
  %v794 = vunpack.c.l.b16 %v110
  %v795 = vunpack.c.h.b16 %v110
  %v796 = vunpack.c.l.b16 %v111
  %v797 = vunpack.c.h.b16 %v111
  %v798 = vunpack.c.l.b16 %v112
  %v799 = vunpack.c.h.b16 %v112
  %v800 = vunpack.c.l.b16 %v113
  %v801 = vunpack.c.h.b16 %v113
  %v802 = vunpack.c.l.b16 %v114
  %v803 = vunpack.c.h.b16 %v114
  %v804 = vunpack.c.l.b16 %v115
  %v805 = vunpack.c.h.b16 %v115
  %v806 = vunpack.c.l.b16 %v116
  %v807 = vunpack.c.h.b16 %v116
  %v808 = vunpack.c.l.b16 %v117
  %v809 = vunpack.c.h.b16 %v117
  %v810 = vunpack.c.l.b16 %v118
  %v811 = vunpack.c.h.b16 %v118
  %v812 = vunpack.c.l.b16 %v119
  %v813 = vunpack.c.h.b16 %v119
  %v814 = vunpack.c.l.b16 %v120
  %v815 = vunpack.c.h.b16 %v120
  %v816 = vunpack.c.l.b16 %v121
  %v817 = vunpack.c.h.b16 %v121
  %v818 = vunpack.c.l.b16 %v122
  %v819 = vunpack.c.h.b16 %v122
  %v820 = vunpack.c.l.b16 %v123
  %v821 = vunpack.c.h.b16 %v123
  %v822 = vunpack.c.l.b16 %v124
  %v823 = vunpack.c.h.b16 %v124
  %v824 = vunpack.c.l.b16 %v125
  %v825 = vunpack.c.h.b16 %v125
  %v826 = vunpack.c.l.b16 %v126
  %v827 = vunpack.c.h.b16 %v126
  %v828 = vunpack.c.l.b16 %v127
  %v829 = vunpack.c.h.b16 %v127
  %v830 = vunpack.c.l.b16 %v128
  %v831 = vunpack.c.h.b16 %v128
  %v832 = vunpack.c.l.b16 %v129
  %v833 = vunpack.c.h.b16 %v129
  %v834 = vunpack.c.l.b16 %v130
  %v835 = vunpack.c.h.b16 %v130
  %v836 = vunpack.c.l.b16 %v131
  %v837 = vunpack.c.h.b16 %v131
  %v838 = vunpack.c.l.b16 %v132
  %v839 = vunpack.c.h.b16 %v132
  %v840 = vunpack.c.l.b16 %v133
  %v841 = vunpack.c.h.b16 %v133
  %v842 = vunpack.c.l.b16 %v134
  %v843 = vunpack.c.h.b16 %v134
  %v844 = vunpack.c.l.b16 %v135
  %v845 = vunpack.c.h.b16 %v135
  %v846 = vunpack.c.l.b16 %v136
  %v847 = vunpack.c.h.b16 %v136
  %v848 = vunpack.c.l.b16 %v137
  %v849 = vunpack.c.h.b16 %v137
  %v850 = vunpack.c.l.b16 %v138
  %v851 = vunpack.c.h.b16 %v138
  %v852 = vunpack.c.l.b16 %v139
  %v853 = vunpack.c.h.b16 %v139
  %v854 = vunpack.c.l.b16 %v140
  %v855 = vunpack.c.h.b16 %v140
  %v856 = vunpack.c.l.b16 %v141
  %v857 = vunpack.c.h.b16 %v141
  %v858 = vunpack.c.l.b16 %v142
  %v859 = vunpack.c.h.b16 %v142
  %v860 = vunpack.c.l.b16 %v143
  %v861 = vunpack.c.h.b16 %v143
  %v862 = vunpack.c.l.b16 %v144
  %v863 = vunpack.c.h.b16 %v144
  %v864 = vunpack.c.l.b16 %v145
  %v865 = vunpack.c.h.b16 %v145
  %v866 = vunpack.c.l.b16 %v146
  %v867 = vunpack.c.h.b16 %v146
  %v868 = vunpack.c.l.b16 %v147
  %v869 = vunpack.c.h.b16 %v147
  %v870 = vunpack.c.l.b16 %v148
  %v871 = vunpack.c.h.b16 %v148
  %v872 = vunpack.c.l.b16 %v149
  %v873 = vunpack.c.h.b16 %v149
  %v874 = vunpack.c.l.b16 %v150
  %v875 = vunpack.c.h.b16 %v150
  %v876 = vunpack.c.l.b16 %v151
  %v877 = vunpack.c.h.b16 %v151
  %v878 = vunpack.c.l.b16 %v152
  %v879 = vunpack.c.h.b16 %v152
  %v880 = vunpack.c.l.b16 %v153
  %v881 = vunpack.c.h.b16 %v153
  %v882 = vunpack.c.l.b16 %v154
  %v883 = vunpack.c.h.b16 %v154
  %v884 = vunpack.c.l.b16 %v155
  %v885 = vunpack.c.h.b16 %v155
  %v886 = vunpack.c.l.b16 %v156
  %v887 = vunpack.c.h.b16 %v156
  %v888 = vunpack.c.l.b16 %v157
  %v889 = vunpack.c.h.b16 %v157
  %v890 = vunpack.c.l.b16 %v158
  %v891 = vunpack.c.h.b16 %v158
  %v892 = vunpack.c.l.b16 %v159
  %v893 = vunpack.c.h.b16 %v159
  %v894 = vunpack.c.l.b16 %v160
  %v895 = vunpack.c.h.b16 %v160
  %v896 = vunpack.c.l.b16 %v161
  %v897 = vunpack.c.h.b16 %v161
  %v898 = vunpack.c.l.b16 %v162
  %v899 = vunpack.c.h.b16 %v162
  %v900 = vunpack.c.l.b16 %v163
  %v901 = vunpack.c.h.b16 %v163
  %v902 = vunpack.c.l.b16 %v164
  %v903 = vunpack.c.h.b16 %v164
  %v904 = vunpack.c.l.b16 %v165
  %v905 = vunpack.c.h.b16 %v165
  %v906 = vunpack.c.l.b16 %v166
  %v907 = vunpack.c.h.b16 %v166
  %v908 = vunpack.c.l.b16 %v167
  %v909 = vunpack.c.h.b16 %v167
  %v910 = vunpack.c.l.b16 %v168
  %v911 = vunpack.c.h.b16 %v168
  %v912 = vunpack.c.l.b16 %v169
  %v913 = vunpack.c.h.b16 %v169
  %v914 = vunpack.c.l.b16 %v170
  %v915 = vunpack.c.h.b16 %v170
  %v916 = vunpack.c.l.b16 %v171
  %v917 = vunpack.c.h.b16 %v171
  %v918 = vunpack.c.l.b16 %v172
  %v919 = vunpack.c.h.b16 %v172
  %v920 = vunpack.c.l.b16 %v173
  %v921 = vunpack.c.h.b16 %v173
  %v922 = vunpack.c.l.b16 %v174
  %v923 = vunpack.c.h.b16 %v174
  %v924 = vunpack.c.l.b16 %v175
  %v925 = vunpack.c.h.b16 %v175
  %v926 = vunpack.c.l.b16 %v176
  %v927 = vunpack.c.h.b16 %v176
  %v928 = vunpack.c.l.b16 %v177
  %v929 = vunpack.c.h.b16 %v177
  %v930 = vunpack.c.l.b16 %v178
  %v931 = vunpack.c.h.b16 %v178
  %v932 = vunpack.c.l.b16 %v179
  %v933 = vunpack.c.h.b16 %v179
  %v934 = vunpack.c.l.b16 %v180
  %v935 = vunpack.c.h.b16 %v180
  %v936 = vunpack.c.l.b16 %v181
  %v937 = vunpack.c.h.b16 %v181
  %v938 = vunpack.c.l.b16 %v182
  %v939 = vunpack.c.h.b16 %v182
  %v940 = vunpack.c.l.b16 %v183
  %v941 = vunpack.c.h.b16 %v183
  %v942 = vunpack.c.l.b16 %v184
  %v943 = vunpack.c.h.b16 %v184
  %v944 = vunpack.c.l.b16 %v185
  %v945 = vunpack.c.h.b16 %v185
  %v946 = vunpack.c.l.b16 %v186
  %v947 = vunpack.c.h.b16 %v186
  %v948 = vunpack.c.l.b16 %v187
  %v949 = vunpack.c.h.b16 %v187
  %v950 = vunpack.c.l.b16 %v188
  %v951 = vunpack.c.h.b16 %v188
  %v952 = vunpack.c.l.b16 %v189
  %v953 = vunpack.c.h.b16 %v189
  %v954 = vunpack.c.l.b16 %v190
  %v955 = vunpack.c.h.b16 %v190
  %v956 = vunpack.c.l.b16 %v191
  %v957 = vunpack.c.h.b16 %v191
  %v958 = vunpack.c.l.b16 %v192
  %v959 = vunpack.c.h.b16 %v192
  %v960 = vunpack.c.l.b16 %v193
  %v961 = vunpack.c.h.b16 %v193
  %v962 = vunpack.c.l.b16 %v194
  %v963 = vunpack.c.h.b16 %v194
  %v964 = vunpack.c.l.b16 %v195
  %v965 = vunpack.c.h.b16 %v195
  %v966 = vunpack.c.l.b16 %v196
  %v967 = vunpack.c.h.b16 %v196
  %v968 = vunpack.c.l.b16 %v197
  %v969 = vunpack.c.h.b16 %v197
  %v970 = vunpack.c.l.b16 %v198
  %v971 = vunpack.c.h.b16 %v198
  %v972 = vunpack.c.l.b16 %v199
  %v973 = vunpack.c.h.b16 %v199
  %v974 = vunpack.c.l.b16 %v200
  %v975 = vunpack.c.h.b16 %v200
  %v976 = vunpack.c.l.b16 %v201
  %v977 = vunpack.c.h.b16 %v201
  %v978 = vunpack.c.l.b16 %v202
  %v979 = vunpack.c.h.b16 %v202
  %v980 = vunpack.c.l.b16 %v203
  %v981 = vunpack.c.h.b16 %v203
  %v982 = vunpack.c.l.b16 %v204
  %v983 = vunpack.c.h.b16 %v204
  %v984 = vunpack.c.l.b16 %v205
  %v985 = vunpack.c.h.b16 %v205
  %v986 = vunpack.c.l.b16 %v206
  %v987 = vunpack.c.h.b16 %v206
  %v988 = vunpack.c.l.b16 %v207
  %v989 = vunpack.c.h.b16 %v207
  %v990 = vunpack.c.l.b16 %v208
  %v991 = vunpack.c.h.b16 %v208
  %v992 = vunpack.c.l.b16 %v209
  %v993 = vunpack.c.h.b16 %v209
  %v994 = vunpack.c.l.b16 %v210
  %v995 = vunpack.c.h.b16 %v210
  %v996 = vunpack.c.l.b16 %v211
  %v997 = vunpack.c.h.b16 %v211
  %v998 = vunpack.c.l.b16 %v212
  %v999 = vunpack.c.h.b16 %v212
  %v1000 = vunpack.c.l.b16 %v213
  %v1001 = vunpack.c.h.b16 %v213
  %v1002 = vunpack.c.l.b16 %v214
  %v1003 = vunpack.c.h.b16 %v214
  %v1004 = vunpack.c.l.b16 %v215
  %v1005 = vunpack.c.h.b16 %v215
  %v1006 = vunpack.c.l.b16 %v216
  %v1007 = vunpack.c.h.b16 %v216
  %v1008 = vunpack.c.l.b16 %v217
  %v1009 = vunpack.c.h.b16 %v217
  %v1010 = vunpack.c.l.b16 %v218
  %v1011 = vunpack.c.h.b16 %v218
  %v1012 = vunpack.c.l.b16 %v219
  %v1013 = vunpack.c.h.b16 %v219
  %v1014 = vunpack.c.l.b16 %v220
  %v1015 = vunpack.c.h.b16 %v220
  %v1016 = vunpack.c.l.b16 %v221
  %v1017 = vunpack.c.h.b16 %v221
  %v1018 = vunpack.c.l.b16 %v222
  %v1019 = vunpack.c.h.b16 %v222
  %v1020 = vunpack.c.l.b16 %v223
  %v1021 = vunpack.c.h.b16 %v223
  %v1022 = vunpack.c.l.b16 %v224
  %v1023 = vunpack.c.h.b16 %v224
  %v1024 = vunpack.c.l.b16 %v225
  %v1025 = vunpack.c.h.b16 %v225
  %v1026 = vunpack.c.l.b16 %v226
  %v1027 = vunpack.c.h.b16 %v226
  %v1028 = vunpack.c.l.b16 %v227
  %v1029 = vunpack.c.h.b16 %v227
  %v1030 = vunpack.c.l.b16 %v228
  %v1031 = vunpack.c.h.b16 %v228
  %v1032 = vunpack.c.l.b16 %v229
  %v1033 = vunpack.c.h.b16 %v229
  %v1034 = vunpack.c.l.b16 %v230
  %v1035 = vunpack.c.h.b16 %v230
  %v1036 = vunpack.c.l.b16 %v231
  %v1037 = vunpack.c.h.b16 %v231
  %v1038 = vunpack.c.l.b16 %v232
  %v1039 = vunpack.c.h.b16 %v232
  %v1040 = vunpack.c.l.b16 %v233
  %v1041 = vunpack.c.h.b16 %v233
  %v1042 = vunpack.c.l.b16 %v234
  %v1043 = vunpack.c.h.b16 %v234
  %v1044 = vunpack.c.l.b16 %v235
  %v1045 = vunpack.c.h.b16 %v235
  %v1046 = vunpack.c.l.b16 %v236
  %v1047 = vunpack.c.h.b16 %v236
  %v1048 = vunpack.c.l.b16 %v237
  %v1049 = vunpack.c.h.b16 %v237
  %v1050 = vunpack.c.l.b16 %v238
  %v1051 = vunpack.c.h.b16 %v238
  %v1052 = vunpack.c.l.b16 %v239
  %v1053 = vunpack.c.h.b16 %v239
  %v1054 = vunpack.c.l.b16 %v240
  %v1055 = vunpack.c.h.b16 %v240
  %v1056 = vunpack.c.l.b16 %v241
  %v1057 = vunpack.c.h.b16 %v241
  %v1058 = vunpack.c.l.b16 %v242
  %v1059 = vunpack.c.h.b16 %v242
  %v1060 = vunpack.c.l.b16 %v243
  %v1061 = vunpack.c.h.b16 %v243
  %v1062 = vunpack.c.l.b16 %v244
  %v1063 = vunpack.c.h.b16 %v244
  %v1064 = vunpack.c.l.b16 %v245
  %v1065 = vunpack.c.h.b16 %v245
  %v1066 = vunpack.c.l.b16 %v246
  %v1067 = vunpack.c.h.b16 %v246
  %v1068 = vunpack.c.l.b16 %v247
  %v1069 = vunpack.c.h.b16 %v247
  %v1070 = vunpack.c.l.b16 %v248
  %v1071 = vunpack.c.h.b16 %v248
  %v1072 = vunpack.c.l.b16 %v249
  %v1073 = vunpack.c.h.b16 %v249
  %v1074 = vunpack.c.l.b16 %v250
  %v1075 = vunpack.c.h.b16 %v250
  %v1076 = vunpack.c.l.b16 %v251
  %v1077 = vunpack.c.h.b16 %v251
  %v1078 = vunpack.c.l.b16 %v252
  %v1079 = vunpack.c.h.b16 %v252
  %v1080 = vunpack.c.l.b16 %v253
  %v1081 = vunpack.c.h.b16 %v253
  %v1082 = vunpack.c.l.b16 %v254
  %v1083 = vunpack.c.h.b16 %v254
  %v1084 = vunpack.c.l.b16 %v255
  %v1085 = vunpack.c.h.b16 %v255
  %v1086 = vunpack.c.l.b16 %v256
  %v1087 = vunpack.c.h.b16 %v256
  %v1088 = vunpack.c.l.b16 %v257
  %v1089 = vunpack.c.h.b16 %v257
  %v1090 = vunpack.c.l.b16 %v258
  %v1091 = vunpack.c.h.b16 %v258
  %v1092 = vunpack.c.l.b16 %v259
  %v1093 = vunpack.c.h.b16 %v259
  %v1094 = vpack.c.b16 %v616, %v614
  %v1095 = vpack.c.b16 %v617, %v615
  %v1096 = vpack.c.b16 %v620, %v618
  %v1097 = vpack.c.b16 %v621, %v619
  %v1098 = vpack.c.b16 %v624, %v622
  %v1099 = vpack.c.b16 %v625, %v623
  %v1100 = vpack.c.b16 %v628, %v626
  %v1101 = vpack.c.b16 %v629, %v627
  %v1102 = vpack.c.b16 %v632, %v630
  %v1103 = vpack.c.b16 %v633, %v631
  %v1104 = vpack.c.b16 %v636, %v634
  %v1105 = vpack.c.b16 %v637, %v635
  %v1106 = vpack.c.b16 %v640, %v638
  %v1107 = vpack.c.b16 %v641, %v639
  %v1108 = vpack.c.b16 %v644, %v642
  %v1109 = vpack.c.b16 %v645, %v643
  %v1110 = vpack.c.b16 %v648, %v646
  %v1111 = vpack.c.b16 %v649, %v647
  %v1112 = vpack.c.b16 %v652, %v650
  %v1113 = vpack.c.b16 %v653, %v651
  %v1114 = vpack.c.b16 %v656, %v654
  %v1115 = vpack.c.b16 %v657, %v655
  %v1116 = vpack.c.b16 %v660, %v658
  %v1117 = vpack.c.b16 %v661, %v659
  %v1118 = vpack.c.b16 %v664, %v662
  %v1119 = vpack.c.b16 %v665, %v663
  %v1120 = vpack.c.b16 %v668, %v666
  %v1121 = vpack.c.b16 %v669, %v667
  %v1122 = vpack.c.b16 %v672, %v670
  %v1123 = vpack.c.b16 %v673, %v671
  %v1124 = vpack.c.b16 %v676, %v674
  %v1125 = vpack.c.b16 %v677, %v675
  %v1126 = vpack.c.b16 %v680, %v678
  %v1127 = vpack.c.b16 %v681, %v679
  %v1128 = vpack.c.b16 %v684, %v682
  %v1129 = vpack.c.b16 %v685, %v683
  %v1130 = vpack.c.b16 %v688, %v686
  %v1131 = vpack.c.b16 %v689, %v687
  %v1132 = vpack.c.b16 %v692, %v690
  %v1133 = vpack.c.b16 %v693, %v691
  %v1134 = vpack.c.b16 %v696, %v694
  %v1135 = vpack.c.b16 %v697, %v695
  %v1136 = vpack.c.b16 %v700, %v698
  %v1137 = vpack.c.b16 %v701, %v699
  %v1138 = vpack.c.b16 %v704, %v702
  %v1139 = vpack.c.b16 %v705, %v703
  %v1140 = vpack.c.b16 %v708, %v706
  %v1141 = vpack.c.b16 %v709, %v707
  %v1142 = vpack.c.b16 %v712, %v710
  %v1143 = vpack.c.b16 %v713, %v711
  %v1144 = vpack.c.b16 %v716, %v714
  %v1145 = vpack.c.b16 %v717, %v715
  %v1146 = vpack.c.b16 %v720, %v718
  %v1147 = vpack.c.b16 %v721, %v719
  %v1148 = vpack.c.b16 %v724, %v722
  %v1149 = vpack.c.b16 %v725, %v723
  %v1150 = vpack.c.b16 %v728, %v726
  %v1151 = vpack.c.b16 %v729, %v727
  %v1152 = vpack.c.b16 %v732, %v730
  %v1153 = vpack.c.b16 %v733, %v731
  %v1154 = vpack.c.b16 %v736, %v734
  %v1155 = vpack.c.b16 %v737, %v735
  %v1156 = vpack.c.b16 %v740, %v738
  %v1157 = vpack.c.b16 %v741, %v739
  %v1158 = vpack.c.b16 %v744, %v742
  %v1159 = vpack.c.b16 %v745, %v743
  %v1160 = vpack.c.b16 %v748, %v746
  %v1161 = vpack.c.b16 %v749, %v747
  %v1162 = vpack.c.b16 %v752, %v750
  %v1163 = vpack.c.b16 %v753, %v751
  %v1164 = vpack.c.b16 %v756, %v754
  %v1165 = vpack.c.b16 %v757, %v755
  %v1166 = vpack.c.b16 %v760, %v758
  %v1167 = vpack.c.b16 %v761, %v759
  %v1168 = vpack.c.b16 %v764, %v762
  %v1169 = vpack.c.b16 %v765, %v763
  %v1170 = vpack.c.b16 %v768, %v766
  %v1171 = vpack.c.b16 %v769, %v767
  %v1172 = vpack.c.b16 %v772, %v770
  %v1173 = vpack.c.b16 %v773, %v771
  %v1174 = vpack.c.b16 %v776, %v774
  %v1175 = vpack.c.b16 %v777, %v775
  %v1176 = vpack.c.b16 %v780, %v778
  %v1177 = vpack.c.b16 %v781, %v779
  %v1178 = vpack.c.b16 %v784, %v782
  %v1179 = vpack.c.b16 %v785, %v783
  %v1180 = vpack.c.b16 %v788, %v786
  %v1181 = vpack.c.b16 %v789, %v787
  %v1182 = vpack.c.b16 %v792, %v790
  %v1183 = vpack.c.b16 %v793, %v791
  %v1184 = vpack.c.b16 %v796, %v794
  %v1185 = vpack.c.b16 %v797, %v795
  %v1186 = vpack.c.b16 %v800, %v798
  %v1187 = vpack.c.b16 %v801, %v799
  %v1188 = vpack.c.b16 %v804, %v802
  %v1189 = vpack.c.b16 %v805, %v803
  %v1190 = vpack.c.b16 %v808, %v806
  %v1191 = vpack.c.b16 %v809, %v807
  %v1192 = vpack.c.b16 %v812, %v810
  %v1193 = vpack.c.b16 %v813, %v811
  %v1194 = vpack.c.b16 %v816, %v814
  %v1195 = vpack.c.b16 %v817, %v815
  %v1196 = vpack.c.b16 %v820, %v818
  %v1197 = vpack.c.b16 %v821, %v819
  %v1198 = vpack.c.b16 %v824, %v822
  %v1199 = vpack.c.b16 %v825, %v823
  %v1200 = vpack.c.b16 %v828, %v826
  %v1201 = vpack.c.b16 %v829, %v827
  %v1202 = vpack.c.b16 %v832, %v830
  %v1203 = vpack.c.b16 %v833, %v831
  %v1204 = vpack.c.b16 %v836, %v834
  %v1205 = vpack.c.b16 %v837, %v835
  %v1206 = vpack.c.b16 %v840, %v838
  %v1207 = vpack.c.b16 %v841, %v839
  %v1208 = vpack.c.b16 %v844, %v842
  %v1209 = vpack.c.b16 %v845, %v843
  %v1210 = vpack.c.b16 %v848, %v846
  %v1211 = vpack.c.b16 %v849, %v847
  %v1212 = vpack.c.b16 %v852, %v850
  %v1213 = vpack.c.b16 %v853, %v851
  %v1214 = vpack.c.b16 %v856, %v854
  %v1215 = vpack.c.b16 %v857, %v855
  %v1216 = vpack.c.b16 %v860, %v858
  %v1217 = vpack.c.b16 %v861, %v859
  %v1218 = vpack.c.b16 %v864, %v862
  %v1219 = vpack.c.b16 %v865, %v863
  %v1220 = vpack.c.b16 %v868, %v866
  %v1221 = vpack.c.b16 %v869, %v867
  %v1222 = vpack.c.b16 %v872, %v870
  %v1223 = vpack.c.b16 %v873, %v871
  %v1224 = vpack.c.b16 %v876, %v874
  %v1225 = vpack.c.b16 %v877, %v875
  %v1226 = vpack.c.b16 %v880, %v878
  %v1227 = vpack.c.b16 %v881, %v879
  %v1228 = vpack.c.b16 %v884, %v882
  %v1229 = vpack.c.b16 %v885, %v883
  %v1230 = vpack.c.b16 %v888, %v886
  %v1231 = vpack.c.b16 %v889, %v887
  %v1232 = vpack.c.b16 %v892, %v890
  %v1233 = vpack.c.b16 %v893, %v891
  %v1234 = vpack.c.b16 %v896, %v894
  %v1235 = vpack.c.b16 %v897, %v895
  %v1236 = vpack.c.b16 %v900, %v898
  %v1237 = vpack.c.b16 %v901, %v899
  %v1238 = vpack.c.b16 %v904, %v902
  %v1239 = vpack.c.b16 %v905, %v903
  %v1240 = vpack.c.b16 %v908, %v906
  %v1241 = vpack.c.b16 %v909, %v907
  %v1242 = vpack.c.b16 %v912, %v910
  %v1243 = vpack.c.b16 %v913, %v911
  %v1244 = vpack.c.b16 %v916, %v914
  %v1245 = vpack.c.b16 %v917, %v915
  %v1246 = vpack.c.b16 %v920, %v918
  %v1247 = vpack.c.b16 %v921, %v919
  %v1248 = vpack.c.b16 %v924, %v922
  %v1249 = vpack.c.b16 %v925, %v923
  %v1250 = vpack.c.b16 %v928, %v926
  %v1251 = vpack.c.b16 %v929, %v927
  %v1252 = vpack.c.b16 %v932, %v930
  %v1253 = vpack.c.b16 %v933, %v931
  %v1254 = vpack.c.b16 %v936, %v934
  %v1255 = vpack.c.b16 %v937, %v935
  %v1256 = vpack.c.b16 %v940, %v938
  %v1257 = vpack.c.b16 %v941, %v939
  %v1258 = vpack.c.b16 %v944, %v942
  %v1259 = vpack.c.b16 %v945, %v943
  %v1260 = vpack.c.b16 %v948, %v946
  %v1261 = vpack.c.b16 %v949, %v947
  %v1262 = vpack.c.b16 %v952, %v950
  %v1263 = vpack.c.b16 %v953, %v951
  %v1264 = vpack.c.b16 %v956, %v954
  %v1265 = vpack.c.b16 %v957, %v955
  %v1266 = vpack.c.b16 %v960, %v958
  %v1267 = vpack.c.b16 %v961, %v959
  %v1268 = vpack.c.b16 %v964, %v962
  %v1269 = vpack.c.b16 %v965, %v963
  %v1270 = vpack.c.b16 %v968, %v966
  %v1271 = vpack.c.b16 %v969, %v967
  %v1272 = vpack.c.b16 %v972, %v970
  %v1273 = vpack.c.b16 %v973, %v971
  %v1274 = vpack.c.b16 %v976, %v974
  %v1275 = vpack.c.b16 %v977, %v975
  %v1276 = vpack.c.b16 %v980, %v978
  %v1277 = vpack.c.b16 %v981, %v979
  %v1278 = vpack.c.b16 %v984, %v982
  %v1279 = vpack.c.b16 %v985, %v983
  %v1280 = vpack.c.b16 %v988, %v986
  %v1281 = vpack.c.b16 %v989, %v987
  %v1282 = vpack.c.b16 %v992, %v990
  %v1283 = vpack.c.b16 %v993, %v991
  %v1284 = vpack.c.b16 %v996, %v994
  %v1285 = vpack.c.b16 %v997, %v995
  %v1286 = vpack.c.b16 %v1000, %v998
  %v1287 = vpack.c.b16 %v1001, %v999
  %v1288 = vpack.c.b16 %v1004, %v1002
  %v1289 = vpack.c.b16 %v1005, %v1003
  %v1290 = vpack.c.b16 %v1008, %v1006
  %v1291 = vpack.c.b16 %v1009, %v1007
  %v1292 = vpack.c.b16 %v1012, %v1010
  %v1293 = vpack.c.b16 %v1013, %v1011
  %v1294 = vpack.c.b16 %v1016, %v1014
  %v1295 = vpack.c.b16 %v1017, %v1015
  %v1296 = vpack.c.b16 %v1020, %v1018
  %v1297 = vpack.c.b16 %v1021, %v1019
  %v1298 = vpack.c.b16 %v1024, %v1022
  %v1299 = vpack.c.b16 %v1025, %v1023
  %v1300 = vpack.c.b16 %v1028, %v1026
  %v1301 = vpack.c.b16 %v1029, %v1027
  %v1302 = vpack.c.b16 %v1032, %v1030
  %v1303 = vpack.c.b16 %v1033, %v1031
  %v1304 = vpack.c.b16 %v1036, %v1034
  %v1305 = vpack.c.b16 %v1037, %v1035
  %v1306 = vpack.c.b16 %v1040, %v1038
  %v1307 = vpack.c.b16 %v1041, %v1039
  %v1308 = vpack.c.b16 %v1044, %v1042
  %v1309 = vpack.c.b16 %v1045, %v1043
  %v1310 = vpack.c.b16 %v1048, %v1046
  %v1311 = vpack.c.b16 %v1049, %v1047
  %v1312 = vpack.c.b16 %v1052, %v1050
  %v1313 = vpack.c.b16 %v1053, %v1051
  %v1314 = vpack.c.b16 %v1056, %v1054
  %v1315 = vpack.c.b16 %v1057, %v1055
  %v1316 = vpack.c.b16 %v1060, %v1058
  %v1317 = vpack.c.b16 %v1061, %v1059
  %v1318 = vpack.c.b16 %v1064, %v1062
  %v1319 = vpack.c.b16 %v1065, %v1063
  %v1320 = vpack.c.b16 %v1068, %v1066
  %v1321 = vpack.c.b16 %v1069, %v1067
  %v1322 = vpack.c.b16 %v1072, %v1070
  %v1323 = vpack.c.b16 %v1073, %v1071
  %v1324 = vpack.c.b16 %v1076, %v1074
  %v1325 = vpack.c.b16 %v1077, %v1075
  %v1326 = vpack.c.b16 %v1080, %v1078
  %v1327 = vpack.c.b16 %v1081, %v1079
  %v1328 = vpack.c.b16 %v1084, %v1082
  %v1329 = vpack.c.b16 %v1085, %v1083
  %v1330 = vpack.c.b16 %v1088, %v1086
  %v1331 = vpack.c.b16 %v1089, %v1087
  %v1332 = vpack.c.b16 %v1092, %v1090
  %v1333 = vpack.c.b16 %v1093, %v1091
  %1574 = vmatprep.subr.bf16.mxu0 %v1109
  %1575 = vmatpush1.bf16.msra.mxu0 %v1108
  %1576 = vmatprep.subr.bf16.mxu0 %v1107
  %1577 = vmatpush1.bf16.msra.mxu0 %v1106
  %1578 = vmatprep.subr.bf16.mxu0 %v1105
  %1579 = vmatpush1.bf16.msra.mxu0 %v1104
  %1580 = vmatprep.subr.bf16.mxu0 %v1103
  %1581 = vmatpush1.bf16.msra.mxu0 %v1102
  %1582 = vmatprep.subr.bf16.mxu0 %v1101
  %1583 = vmatpush1.bf16.msra.mxu0 %v1100
  %1584 = vmatprep.subr.bf16.mxu0 %v1099
  %1585 = vmatpush1.bf16.msra.mxu0 %v1098
  %1586 = vmatprep.subr.bf16.mxu0 %v1097
  %1587 = vmatpush1.bf16.msra.mxu0 %v1096
  %1588 = vmatprep.subr.bf16.mxu0 %v1095
  %1589 = vmatpush1.bf16.msra.mxu0 %v1094
  %1590 = vmatprep.subr.bf16.mxu0 %v1125
  %1591 = vmatpush2.bf16.msra.mxu0 %v1124
  %1592 = vmatprep.subr.bf16.mxu0 %v1123
  %1593 = vmatpush2.bf16.msra.mxu0 %v1122
  %1594 = vmatprep.subr.bf16.mxu0 %v1121
  %1595 = vmatpush2.bf16.msra.mxu0 %v1120
  %1596 = vmatprep.subr.bf16.mxu0 %v1119
  %1597 = vmatpush2.bf16.msra.mxu0 %v1118
  %1598 = vmatprep.subr.bf16.mxu0 %v1117
  %1599 = vmatpush2.bf16.msra.mxu0 %v1116
  %1600 = vmatprep.subr.bf16.mxu0 %v1115
  %1601 = vmatpush2.bf16.msra.mxu0 %v1114
  %1602 = vmatprep.subr.bf16.mxu0 %v1113
  %1603 = vmatpush2.bf16.msra.mxu0 %v1112
  %1604 = vmatprep.subr.bf16.mxu0 %v1111
  %1605 = vmatpush2.bf16.msra.mxu0 %v1110
  %1606 = vmatprep.mubr.bf16.mxu0 %v299
  %1607 = vmatmul.mubr.bf16.gmra.mxu0 %v285
  %v1608 = vpop.f32.mrf.mxu0
  %v1609 = vadd.f32 0.0, %v1608
  %v1610 = vpop.f32.mrf.mxu0
  %v1611 = vadd.f32 0.0, %v1610
  %v1612 = vpop.f32.mrf.mxu0
  %v1613 = vpop.f32.mrf.mxu0
  %1614 = vdwg.mxu0
  %1615 = vmatprep.subr.bf16.mxu0 %v1141
  %1616 = vmatpush1.bf16.msra.mxu0 %v1140
  %1617 = vmatprep.subr.bf16.mxu0 %v1139
  %1618 = vmatpush1.bf16.msra.mxu0 %v1138
  %1619 = vmatprep.subr.bf16.mxu0 %v1137
  %1620 = vmatpush1.bf16.msra.mxu0 %v1136
  %1621 = vmatprep.subr.bf16.mxu0 %v1135
  %1622 = vmatpush1.bf16.msra.mxu0 %v1134
  %1623 = vmatprep.subr.bf16.mxu0 %v1133
  %1624 = vmatpush1.bf16.msra.mxu0 %v1132
  %1625 = vmatprep.subr.bf16.mxu0 %v1131
  %1626 = vmatpush1.bf16.msra.mxu0 %v1130
  %1627 = vmatprep.subr.bf16.mxu0 %v1129
  %1628 = vmatpush1.bf16.msra.mxu0 %v1128
  %1629 = vmatprep.subr.bf16.mxu0 %v1127
  %1630 = vmatpush1.bf16.msra.mxu0 %v1126
  %1631 = vmatprep.subr.bf16.mxu0 %v1157
  %1632 = vmatpush2.bf16.msra.mxu0 %v1156
  %1633 = vmatprep.subr.bf16.mxu0 %v1155
  %1634 = vmatpush2.bf16.msra.mxu0 %v1154
  %1635 = vmatprep.subr.bf16.mxu0 %v1153
  %1636 = vmatpush2.bf16.msra.mxu0 %v1152
  %1637 = vmatprep.subr.bf16.mxu0 %v1151
  %1638 = vmatpush2.bf16.msra.mxu0 %v1150
  %1639 = vmatprep.subr.bf16.mxu0 %v1149
  %1640 = vmatpush2.bf16.msra.mxu0 %v1148
  %1641 = vmatprep.subr.bf16.mxu0 %v1147
  %1642 = vmatpush2.bf16.msra.mxu0 %v1146
  %1643 = vmatprep.subr.bf16.mxu0 %v1145
  %1644 = vmatpush2.bf16.msra.mxu0 %v1144
  %1645 = vmatprep.subr.bf16.mxu0 %v1143
  %1646 = vmatpush2.bf16.msra.mxu0 %v1142
  %1647 = vmatprep.mubr.bf16.mxu0 %v309
  %1648 = vmatmul.mubr.bf16.gmra.mxu0 %v307
  %v1649 = vpop.f32.mrf.mxu0
  %v1650 = vadd.f32 %v1609, %v1649
  %v1651 = vpop.f32.mrf.mxu0
  %v1652 = vadd.f32 %v1611, %v1651
  %v1653 = vpop.f32.mrf.mxu0
  %v1654 = vpop.f32.mrf.mxu0
  %1655 = vdwg.mxu0
  %1656 = vmatprep.subr.bf16.mxu0 %v1173
  %1657 = vmatpush1.bf16.msra.mxu0 %v1172
  %1658 = vmatprep.subr.bf16.mxu0 %v1171
  %1659 = vmatpush1.bf16.msra.mxu0 %v1170
  %1660 = vmatprep.subr.bf16.mxu0 %v1169
  %1661 = vmatpush1.bf16.msra.mxu0 %v1168
  %1662 = vmatprep.subr.bf16.mxu0 %v1167
  %1663 = vmatpush1.bf16.msra.mxu0 %v1166
  %1664 = vmatprep.subr.bf16.mxu0 %v1165
  %1665 = vmatpush1.bf16.msra.mxu0 %v1164
  %1666 = vmatprep.subr.bf16.mxu0 %v1163
  %1667 = vmatpush1.bf16.msra.mxu0 %v1162
  %1668 = vmatprep.subr.bf16.mxu0 %v1161
  %1669 = vmatpush1.bf16.msra.mxu0 %v1160
  %1670 = vmatprep.subr.bf16.mxu0 %v1159
  %1671 = vmatpush1.bf16.msra.mxu0 %v1158
  %1672 = vmatprep.subr.bf16.mxu0 %v1189
  %1673 = vmatpush2.bf16.msra.mxu0 %v1188
  %1674 = vmatprep.subr.bf16.mxu0 %v1187
  %1675 = vmatpush2.bf16.msra.mxu0 %v1186
  %1676 = vmatprep.subr.bf16.mxu0 %v1185
  %1677 = vmatpush2.bf16.msra.mxu0 %v1184
  %1678 = vmatprep.subr.bf16.mxu0 %v1183
  %1679 = vmatpush2.bf16.msra.mxu0 %v1182
  %1680 = vmatprep.subr.bf16.mxu0 %v1181
  %1681 = vmatpush2.bf16.msra.mxu0 %v1180
  %1682 = vmatprep.subr.bf16.mxu0 %v1179
  %1683 = vmatpush2.bf16.msra.mxu0 %v1178
  %1684 = vmatprep.subr.bf16.mxu0 %v1177
  %1685 = vmatpush2.bf16.msra.mxu0 %v1176
  %1686 = vmatprep.subr.bf16.mxu0 %v1175
  %1687 = vmatpush2.bf16.msra.mxu0 %v1174
  %1688 = vmatprep.mubr.bf16.mxu0 %v306
  %1689 = vmatmul.mubr.bf16.gmra.mxu0 %v292
  %v1690 = vpop.f32.mrf.mxu0
  %v1691 = vadd.f32 %v1650, %v1690
  %v1692 = vpop.f32.mrf.mxu0
  %v1693 = vadd.f32 %v1652, %v1692
  %v1694 = vpop.f32.mrf.mxu0
  %v1695 = vpop.f32.mrf.mxu0
  %1696 = vdwg.mxu0
  %1697 = vmatprep.subr.bf16.mxu0 %v1205
  %1698 = vmatpush1.bf16.msra.mxu0 %v1204
  %1699 = vmatprep.subr.bf16.mxu0 %v1203
  %1700 = vmatpush1.bf16.msra.mxu0 %v1202
  %1701 = vmatprep.subr.bf16.mxu0 %v1201
  %1702 = vmatpush1.bf16.msra.mxu0 %v1200
  %1703 = vmatprep.subr.bf16.mxu0 %v1199
  %1704 = vmatpush1.bf16.msra.mxu0 %v1198
  %1705 = vmatprep.subr.bf16.mxu0 %v1197
  %1706 = vmatpush1.bf16.msra.mxu0 %v1196
  %1707 = vmatprep.subr.bf16.mxu0 %v1195
  %1708 = vmatpush1.bf16.msra.mxu0 %v1194
  %1709 = vmatprep.subr.bf16.mxu0 %v1193
  %1710 = vmatpush1.bf16.msra.mxu0 %v1192
  %1711 = vmatprep.subr.bf16.mxu0 %v1191
  %1712 = vmatpush1.bf16.msra.mxu0 %v1190
  %1713 = vmatprep.subr.bf16.mxu0 %v1221
  %1714 = vmatpush2.bf16.msra.mxu0 %v1220
  %1715 = vmatprep.subr.bf16.mxu0 %v1219
  %1716 = vmatpush2.bf16.msra.mxu0 %v1218
  %1717 = vmatprep.subr.bf16.mxu0 %v1217
  %1718 = vmatpush2.bf16.msra.mxu0 %v1216
  %1719 = vmatprep.subr.bf16.mxu0 %v1215
  %1720 = vmatpush2.bf16.msra.mxu0 %v1214
  %1721 = vmatprep.subr.bf16.mxu0 %v1213
  %1722 = vmatpush2.bf16.msra.mxu0 %v1212
  %1723 = vmatprep.subr.bf16.mxu0 %v1211
  %1724 = vmatpush2.bf16.msra.mxu0 %v1210
  %1725 = vmatprep.subr.bf16.mxu0 %v1209
  %1726 = vmatpush2.bf16.msra.mxu0 %v1208
  %1727 = vmatprep.subr.bf16.mxu0 %v1207
  %1728 = vmatpush2.bf16.msra.mxu0 %v1206
  %1729 = vmatprep.mubr.bf16.mxu0 %v310
  %1730 = vmatmul.mubr.bf16.gmra.mxu0 %v308
  %v1731 = vpop.f32.mrf.mxu0
  %v1732 = vadd.f32 %v1691, %v1731
  %v1733 = vpop.f32.mrf.mxu0
  %v1734 = vadd.f32 %v1693, %v1733
  %v1735 = vpop.f32.mrf.mxu0
  %v1736 = vpop.f32.mrf.mxu0
  %1737 = vdwg.mxu0
  %1738 = vmatprep.subr.bf16.mxu0 %v1237
  %1739 = vmatpush1.bf16.msra.mxu0 %v1236
  %1740 = vmatprep.subr.bf16.mxu0 %v1235
  %1741 = vmatpush1.bf16.msra.mxu0 %v1234
  %1742 = vmatprep.subr.bf16.mxu0 %v1233
  %1743 = vmatpush1.bf16.msra.mxu0 %v1232
  %1744 = vmatprep.subr.bf16.mxu0 %v1231
  %1745 = vmatpush1.bf16.msra.mxu0 %v1230
  %1746 = vmatprep.subr.bf16.mxu0 %v1229
  %1747 = vmatpush1.bf16.msra.mxu0 %v1228
  %1748 = vmatprep.subr.bf16.mxu0 %v1227
  %1749 = vmatpush1.bf16.msra.mxu0 %v1226
  %1750 = vmatprep.subr.bf16.mxu0 %v1225
  %1751 = vmatpush1.bf16.msra.mxu0 %v1224
  %1752 = vmatprep.subr.bf16.mxu0 %v1223
  %1753 = vmatpush1.bf16.msra.mxu0 %v1222
  %1754 = vmatprep.subr.bf16.mxu0 %v1253
  %1755 = vmatpush2.bf16.msra.mxu0 %v1252
  %1756 = vmatprep.subr.bf16.mxu0 %v1251
  %1757 = vmatpush2.bf16.msra.mxu0 %v1250
  %1758 = vmatprep.subr.bf16.mxu0 %v1249
  %1759 = vmatpush2.bf16.msra.mxu0 %v1248
  %1760 = vmatprep.subr.bf16.mxu0 %v1247
  %1761 = vmatpush2.bf16.msra.mxu0 %v1246
  %1762 = vmatprep.subr.bf16.mxu0 %v1245
  %1763 = vmatpush2.bf16.msra.mxu0 %v1244
  %1764 = vmatprep.subr.bf16.mxu0 %v1243
  %1765 = vmatpush2.bf16.msra.mxu0 %v1242
  %1766 = vmatprep.subr.bf16.mxu0 %v1241
  %1767 = vmatpush2.bf16.msra.mxu0 %v1240
  %1768 = vmatprep.subr.bf16.mxu0 %v1239
  %1769 = vmatpush2.bf16.msra.mxu0 %v1238
  %1770 = vmatprep.mubr.bf16.mxu0 %v348
  %1771 = vmatmul.mubr.bf16.gmra.mxu0 %v334
  %v1772 = vpop.f32.mrf.mxu0
  %v1773 = vadd.f32 %v1732, %v1772
  %v1774 = vpop.f32.mrf.mxu0
  %v1775 = vadd.f32 %v1734, %v1774
  %v1776 = vpop.f32.mrf.mxu0
  %v1777 = vpop.f32.mrf.mxu0
  %1778 = vdwg.mxu0
  %1779 = vmatprep.subr.bf16.mxu0 %v1269
  %1780 = vmatpush1.bf16.msra.mxu0 %v1268
  %1781 = vmatprep.subr.bf16.mxu0 %v1267
  %1782 = vmatpush1.bf16.msra.mxu0 %v1266
  %1783 = vmatprep.subr.bf16.mxu0 %v1265
  %1784 = vmatpush1.bf16.msra.mxu0 %v1264
  %1785 = vmatprep.subr.bf16.mxu0 %v1263
  %1786 = vmatpush1.bf16.msra.mxu0 %v1262
  %1787 = vmatprep.subr.bf16.mxu0 %v1261
  %1788 = vmatpush1.bf16.msra.mxu0 %v1260
  %1789 = vmatprep.subr.bf16.mxu0 %v1259
  %1790 = vmatpush1.bf16.msra.mxu0 %v1258
  %1791 = vmatprep.subr.bf16.mxu0 %v1257
  %1792 = vmatpush1.bf16.msra.mxu0 %v1256
  %1793 = vmatprep.subr.bf16.mxu0 %v1255
  %1794 = vmatpush1.bf16.msra.mxu0 %v1254
  %1795 = vmatprep.subr.bf16.mxu0 %v1285
  %1796 = vmatpush2.bf16.msra.mxu0 %v1284
  %1797 = vmatprep.subr.bf16.mxu0 %v1283
  %1798 = vmatpush2.bf16.msra.mxu0 %v1282
  %1799 = vmatprep.subr.bf16.mxu0 %v1281
  %1800 = vmatpush2.bf16.msra.mxu0 %v1280
  %1801 = vmatprep.subr.bf16.mxu0 %v1279
  %1802 = vmatpush2.bf16.msra.mxu0 %v1278
  %1803 = vmatprep.subr.bf16.mxu0 %v1277
  %1804 = vmatpush2.bf16.msra.mxu0 %v1276
  %1805 = vmatprep.subr.bf16.mxu0 %v1275
  %1806 = vmatpush2.bf16.msra.mxu0 %v1274
  %1807 = vmatprep.subr.bf16.mxu0 %v1273
  %1808 = vmatpush2.bf16.msra.mxu0 %v1272
  %1809 = vmatprep.subr.bf16.mxu0 %v1271
  %1810 = vmatpush2.bf16.msra.mxu0 %v1270
  %1811 = vmatprep.mubr.bf16.mxu0 %v358
  %1812 = vmatmul.mubr.bf16.gmra.mxu0 %v356
  %v1813 = vpop.f32.mrf.mxu0
  %v1814 = vadd.f32 %v1773, %v1813
  %v1815 = vpop.f32.mrf.mxu0
  %v1816 = vadd.f32 %v1775, %v1815
  %v1817 = vpop.f32.mrf.mxu0
  %v1818 = vpop.f32.mrf.mxu0
  %1819 = vdwg.mxu0
  %1820 = vmatprep.subr.bf16.mxu0 %v1301
  %1821 = vmatpush1.bf16.msra.mxu0 %v1300
  %1822 = vmatprep.subr.bf16.mxu0 %v1299
  %1823 = vmatpush1.bf16.msra.mxu0 %v1298
  %1824 = vmatprep.subr.bf16.mxu0 %v1297
  %1825 = vmatpush1.bf16.msra.mxu0 %v1296
  %1826 = vmatprep.subr.bf16.mxu0 %v1295
  %1827 = vmatpush1.bf16.msra.mxu0 %v1294
  %1828 = vmatprep.subr.bf16.mxu0 %v1293
  %1829 = vmatpush1.bf16.msra.mxu0 %v1292
  %1830 = vmatprep.subr.bf16.mxu0 %v1291
  %1831 = vmatpush1.bf16.msra.mxu0 %v1290
  %1832 = vmatprep.subr.bf16.mxu0 %v1289
  %1833 = vmatpush1.bf16.msra.mxu0 %v1288
  %1834 = vmatprep.subr.bf16.mxu0 %v1287
  %1835 = vmatpush1.bf16.msra.mxu0 %v1286
  %1836 = vmatprep.subr.bf16.mxu0 %v1317
  %1837 = vmatpush2.bf16.msra.mxu0 %v1316
  %1838 = vmatprep.subr.bf16.mxu0 %v1315
  %1839 = vmatpush2.bf16.msra.mxu0 %v1314
  %1840 = vmatprep.subr.bf16.mxu0 %v1313
  %1841 = vmatpush2.bf16.msra.mxu0 %v1312
  %1842 = vmatprep.subr.bf16.mxu0 %v1311
  %1843 = vmatpush2.bf16.msra.mxu0 %v1310
  %1844 = vmatprep.subr.bf16.mxu0 %v1309
  %1845 = vmatpush2.bf16.msra.mxu0 %v1308
  %1846 = vmatprep.subr.bf16.mxu0 %v1307
  %1847 = vmatpush2.bf16.msra.mxu0 %v1306
  %1848 = vmatprep.subr.bf16.mxu0 %v1305
  %1849 = vmatpush2.bf16.msra.mxu0 %v1304
  %1850 = vmatprep.subr.bf16.mxu0 %v1303
  %1851 = vmatpush2.bf16.msra.mxu0 %v1302
  %1852 = vmatprep.mubr.bf16.mxu0 %v355
  %1853 = vmatmul.mubr.bf16.gmra.mxu0 %v341
  %v1854 = vpop.f32.mrf.mxu0
  %v1855 = vadd.f32 %v1814, %v1854
  %v1856 = vpop.f32.mrf.mxu0
  %v1857 = vadd.f32 %v1816, %v1856
  %v1858 = vpop.f32.mrf.mxu0
  %v1859 = vpop.f32.mrf.mxu0
  %1860 = vdwg.mxu0
  %1861 = vmatprep.subr.bf16.mxu0 %v1333
  %1862 = vmatpush1.bf16.msra.mxu0 %v1332
  %1863 = vmatprep.subr.bf16.mxu0 %v1331
  %1864 = vmatpush1.bf16.msra.mxu0 %v1330
  %1865 = vmatprep.subr.bf16.mxu0 %v1329
  %1866 = vmatpush1.bf16.msra.mxu0 %v1328
  %1867 = vmatprep.subr.bf16.mxu0 %v1327
  %1868 = vmatpush1.bf16.msra.mxu0 %v1326
  %1869 = vmatprep.subr.bf16.mxu0 %v1325
  %1870 = vmatpush1.bf16.msra.mxu0 %v1324
  %1871 = vmatprep.subr.bf16.mxu0 %v1323
  %1872 = vmatpush1.bf16.msra.mxu0 %v1322
  %1873 = vmatprep.subr.bf16.mxu0 %v1321
  %1874 = vmatpush1.bf16.msra.mxu0 %v1320
  %1875 = vmatprep.subr.bf16.mxu0 %v1319
  %1876 = vmatpush1.bf16.msra.mxu0 %v1318
  %1877 = vmatprep.subr.bf16.mxu0 0
  %1878 = vmatpush2.bf16.msra.mxu0 0
  %1879 = vmatprep.subr.bf16.mxu0 0
  %1880 = vmatpush2.bf16.msra.mxu0 0
  %1881 = vmatprep.subr.bf16.mxu0 0
  %1882 = vmatpush2.bf16.msra.mxu0 0
  %1883 = vmatprep.subr.bf16.mxu0 0
  %1884 = vmatpush2.bf16.msra.mxu0 0
  %1885 = vmatprep.subr.bf16.mxu0 0
  %1886 = vmatpush2.bf16.msra.mxu0 0
  %1887 = vmatprep.subr.bf16.mxu0 0
  %1888 = vmatpush2.bf16.msra.mxu0 0
  %1889 = vmatprep.subr.bf16.mxu0 0
  %1890 = vmatpush2.bf16.msra.mxu0 0
  %1891 = vmatprep.subr.bf16.mxu0 0
  %1892 = vmatpush2.bf16.msra.mxu0 0
  %1893 = vmatprep.mubr.bf16.mxu0 0
  %1894 = vmatmul.mubr.bf16.gmra.mxu0 %v357
  %v1895 = vpop.f32.mrf.mxu0
  %v1896 = vadd.f32 %v1855, %v1895
  %v1897 = vpop.f32.mrf.mxu0
  %v1898 = vadd.f32 %v1857, %v1897
  %v1899 = vpop.f32.mrf.mxu0
  %v1900 = vpop.f32.mrf.mxu0
  %1901 = vdwg.mxu0
  %v1902 = vld [vmem:[%s2] sm:$0x3]
  %v1904 = vlaneseq
  %v1905 = vshrl.u32 %v1904, 7
  %v1906 = vsub.s32 0, %v1905
  %v1907 = vrot.slane %v1902, %v1906
  %v1908 = vlaneseq
  %v1909 = vshrl.u32 %v1908, 7
  %v1910 = vsub.s32 1, %v1909
  %v1911 = vrot.slane %v1902, %v1910
  %v1914 = vmul.f32 %v1896, %v1907
  %v1915 = vmul.f32 %v1898, %v1911
  %v1916 = vld [vmem:[%s3] sm:$0x3]
  %v1918 = vlaneseq
  %v1919 = vshrl.u32 %v1918, 7
  %v1920 = vsub.s32 0, %v1919
  %v1921 = vrot.slane %v1916, %v1920
  %v1922 = vlaneseq
  %v1923 = vshrl.u32 %v1922, 7
  %v1924 = vsub.s32 1, %v1923
  %v1925 = vrot.slane %v1916, %v1924
  %v1928 = vadd.f32 %v1914, %v1921
  %v1929 = vadd.f32 %v1915, %v1925
  %v1930 = vmax.f32 %v1928, 0.0
  %v1931 = vmax.f32 %v1929, 0.0
  %v1932 = vpack.c.bf16 %v1930, %v1930
  %v1933 = vpack.c.bf16 %v1931, %v1931
  %v1936 = vcombine.low %v1932, %v1933
  %v1938 = vunpack.c.l.s4 1966171168
  %v1939 = vunpack.c.0.s8 %v1938
  %v1940 = vlaneseq
  %v1941 = vshrl.u32 %v1940, 7
  %v1942 = vsub.s32 %v1939, %v1941
  %v1943 = vrot.slane %v1936, %v1942
  %v1945 = vunpack.c.l.s4 1966171168
  %v1946 = vunpack.c.0.s8 %v1945
  %v1947 = vlaneseq
  %v1948 = vshrl.u32 %v1947, 7
  %v1949 = vsub.s32 %v1946, %v1948
  %v1950 = vrot.slane %v1943, %v1949
  %vm1952 = vcmask 1040384
  %vm1953 = vcmask 517121
  %vm1954 = vmor %vm1953, %vm1952
  %1955 = vst.msk [vmem:[%s4] sm:$0x3] %vm1954, %v1950
  // Predicated region
  $region18: #{generator_deconv_pallas.11} parent=0 // pred_check
    _
  $region19: #{generator_deconv_pallas.11} parent=0 // pred_check_branch
    %1957 = sbr.rel (0) target = $region21
  $region20: #{generator_deconv_pallas.11} parent=0 // pred_region
    _
  $region21: #{generator_deconv_pallas.11} parent=0 // pred_fallthru
    _
  // Predicated region
  $region22: #{generator_deconv_pallas.11} parent=0 // pred_check
    _
  $region23: #{generator_deconv_pallas.11} parent=0 // pred_check_branch
    %1959 = sbr.rel (0) target = $region25
  $region24: #{generator_deconv_pallas.11} parent=0 // pred_region
    _
  $region25: #{generator_deconv_pallas.11} parent=0 // pred_fallthru
    _

// kernel: generator_deconv_pallas.12
$region0: #{generator_deconv_pallas.12}
  #allocation0 [shape = 'u32[]', space=smem, size = 0x4, offset = 0x4, fixed_abs, tag = 'smem constant byte address 0x4 - core index']
  #allocation1 [shape = 'u32[144,128]{1,0:T(1,128)}', space=vmem, size = 0x12000, scoped, tag = 'internal scratch']
  %s0 = inlined_call_operand.vmem [shape: bf16[2,23,31,1], index: 0, kind: input, shape index: {}]
  %s1 = inlined_call_operand.vmem [shape: bf16[9,1,128], index: 1, kind: input, shape index: {}]
  %s2 = inlined_call_operand.vmem [shape: f32[1,128], index: 2, kind: input, shape index: {}]
  %s3 = inlined_call_operand.vmem [shape: f32[1,128], index: 3, kind: input, shape index: {}]
  %s4 = inlined_call_operand.vmem [shape: bf16[2,21,29,128], index: 4, kind: output, shape index: {}]
  %s5 = sld [smem:[#allocation0]]
  $region56: #{generator_deconv_pallas.12} parent=0
    _
  %s7 = ssub.s32 1, %s5
  %s8 = scalar_select 0, %s7, %s5
  loop: start=0, step=1, limit=4
  $region2: #{generator_deconv_pallas.12} parent=0 // loop_pre_header
    _
  $region3: #{generator_deconv_pallas.12} parent=0 // loop_header
    %s10 = sphi 0, %s14
    %p11 = scmp.ge.s32.totalorder %s10, 4
    %s20 = sphi 0, %s22
    %s23 = sphi 0, %s20
    %s24 = sphi 0, %s23
    %s40 = sphi 0, %s24
    %s44 = sphi 0, %s44
    %s46 = sphi 0, %s44
    %s47 = sphi 0, %s46
    %s61 = sphi 0, %s47
    %s65 = sphi 0, %s65
    %s67 = sphi 0, %s65
    %s68 = sphi 0, %s67
    %s82 = sphi 0, %s68
    %s86 = sphi 0, %s86
    %s88 = sphi 0, %s86
    %s89 = sphi 0, %s88
    %s103 = sphi 0, %s89
    %s109 = sphi 0, %s111
    %s112 = sphi 0, %s109
    %s113 = sphi 0, %s112
    %s129 = sphi 0, %s113
  $region4: #{generator_deconv_pallas.12} parent=0 // loop_header_branch
    %13 = sbr.rel (%p11) target = $region8
  $region5: #{generator_deconv_pallas.12} parent=0 // loop_body
    %s15 = ssub.s32 %s10, 1
    %s16 = ssub.s32 %s10, 2
    %s17 = sadd.s32 %s10, 1
    %s18 = ssub.s32 %s10, %s17
    %p19 = scmp.eq.s32.totalorder %s18, 0
    %s21 = sadd.s32 %s20, 1
    %s22 = scalar_select %p19, %s20, %s21
    %p25 = pneg %p19
    %p26 = scmp.eq.s32.totalorder %s10, 1
    %p27 = por %p25, %p26
    %p28 = scmp.ne.s32.totalorder %s20, %s23
    %p29 = scmp.eq.s32.totalorder %s10, 0
    %p30 = por %p28, %p29
    %p31 = scmp.ne.s32.totalorder %s20, %s23
    %p32 = scmp.eq.s32.totalorder %s15, 1
    %p33 = por %p31, %p32
    %p34 = scmp.ne.s32.totalorder %s23, %s24
    %p35 = scmp.eq.s32.totalorder %s15, 0
    %p36 = por %p34, %p35
    %p37 = scmp.ne.s32.totalorder %s23, %s24
    %p38 = scmp.eq.s32.totalorder %s16, 1
    %p39 = por %p37, %p38
    %p41 = scmp.ne.s32.totalorder %s24, %s40
    %p42 = scmp.eq.s32.totalorder %s16, 0
    %p43 = por %p41, %p42
    %s45 = sadd.s32 %s44, 1
    %p48 = scmp.eq.s32.totalorder %s10, 1
    %p49 = scmp.ne.s32.totalorder %s44, %s46
    %p50 = scmp.eq.s32.totalorder %s10, 0
    %p51 = por %p49, %p50
    %p52 = scmp.ne.s32.totalorder %s44, %s46
    %p53 = scmp.eq.s32.totalorder %s15, 1
    %p54 = por %p52, %p53
    %p55 = scmp.ne.s32.totalorder %s46, %s47
    %p56 = scmp.eq.s32.totalorder %s15, 0
    %p57 = por %p55, %p56
    %p58 = scmp.ne.s32.totalorder %s46, %s47
    %p59 = scmp.eq.s32.totalorder %s16, 1
    %p60 = por %p58, %p59
    %p62 = scmp.ne.s32.totalorder %s47, %s61
    %p63 = scmp.eq.s32.totalorder %s16, 0
    %p64 = por %p62, %p63
    %s66 = sadd.s32 %s65, 1
    %p69 = scmp.eq.s32.totalorder %s10, 1
    %p70 = scmp.ne.s32.totalorder %s65, %s67
    %p71 = scmp.eq.s32.totalorder %s10, 0
    %p72 = por %p70, %p71
    %p73 = scmp.ne.s32.totalorder %s65, %s67
    %p74 = scmp.eq.s32.totalorder %s15, 1
    %p75 = por %p73, %p74
    %p76 = scmp.ne.s32.totalorder %s67, %s68
    %p77 = scmp.eq.s32.totalorder %s15, 0
    %p78 = por %p76, %p77
    %p79 = scmp.ne.s32.totalorder %s67, %s68
    %p80 = scmp.eq.s32.totalorder %s16, 1
    %p81 = por %p79, %p80
    %p83 = scmp.ne.s32.totalorder %s68, %s82
    %p84 = scmp.eq.s32.totalorder %s16, 0
    %p85 = por %p83, %p84
    %s87 = sadd.s32 %s86, 1
    %p90 = scmp.eq.s32.totalorder %s10, 1
    %p91 = scmp.ne.s32.totalorder %s86, %s88
    %p92 = scmp.eq.s32.totalorder %s10, 0
    %p93 = por %p91, %p92
    %p94 = scmp.ne.s32.totalorder %s86, %s88
    %p95 = scmp.eq.s32.totalorder %s15, 1
    %p96 = por %p94, %p95
    %p97 = scmp.ne.s32.totalorder %s88, %s89
    %p98 = scmp.eq.s32.totalorder %s15, 0
    %p99 = por %p97, %p98
    %p100 = scmp.ne.s32.totalorder %s88, %s89
    %p101 = scmp.eq.s32.totalorder %s16, 1
    %p102 = por %p100, %p101
    %p104 = scmp.ne.s32.totalorder %s89, %s103
    %p105 = scmp.eq.s32.totalorder %s16, 0
    %p106 = por %p104, %p105
    %s107 = ssub.s32 %s10, %s17
    %p108 = scmp.eq.s32.totalorder %s107, 0
    %s110 = sadd.s32 %s109, 1
    %s111 = scalar_select %p108, %s109, %s110
    %p114 = pneg %p108
    %p115 = scmp.eq.s32.totalorder %s10, 1
    %p116 = por %p114, %p115
    %p117 = scmp.ne.s32.totalorder %s109, %s112
    %p118 = scmp.eq.s32.totalorder %s10, 0
    %p119 = por %p117, %p118
    %p120 = scmp.ne.s32.totalorder %s109, %s112
    %p121 = scmp.eq.s32.totalorder %s15, 1
    %p122 = por %p120, %p121
    %p123 = scmp.ne.s32.totalorder %s112, %s113
    %p124 = scmp.eq.s32.totalorder %s15, 0
    %p125 = por %p123, %p124
    %p126 = scmp.ne.s32.totalorder %s112, %s113
    %p127 = scmp.eq.s32.totalorder %s16, 1
    %p128 = por %p126, %p127
    %p130 = scmp.ne.s32.totalorder %s113, %s129
    %p131 = scmp.eq.s32.totalorder %s16, 0
    %p132 = por %p130, %p131
    %p133 = scmp.le.s32.totalorder 1, %s10
    %p134 = scmp.lt.s32.totalorder %s10, 3
    %p135 = pnand %p133, %p134
    %p136 = pneg %p135
    // Predicated region
    $region9: #{generator_deconv_pallas.12} parent=5 // pred_check
      _
    $region10: #{generator_deconv_pallas.12} parent=5 // pred_check_branch
      %138 = sbr.rel (%p135) target = $region12
    $region11: #{generator_deconv_pallas.12} parent=5 // pred_region
      %s139 = ssub.s32 %s10, 1
      // Predicated region
      $region13: #{generator_deconv_pallas.12} parent=11 // pred_check
        %p140 = pneg %p57
      $region14: #{generator_deconv_pallas.12} parent=11 // pred_check_branch
        %142 = sbr.rel (%p140) target = $region16
      $region15: #{generator_deconv_pallas.12} parent=11 // pred_region
        _
      $region16: #{generator_deconv_pallas.12} parent=11 // pred_fallthru
        _
      // Predicated region
      $region17: #{generator_deconv_pallas.12} parent=11 // pred_check
        %p143 = pneg %p78
      $region18: #{generator_deconv_pallas.12} parent=11 // pred_check_branch
        %145 = sbr.rel (%p143) target = $region20
      $region19: #{generator_deconv_pallas.12} parent=11 // pred_region
        _
      $region20: #{generator_deconv_pallas.12} parent=11 // pred_fallthru
        _
      // Predicated region
      $region21: #{generator_deconv_pallas.12} parent=11 // pred_check
        %p146 = pneg %p99
      $region22: #{generator_deconv_pallas.12} parent=11 // pred_check_branch
        %148 = sbr.rel (%p146) target = $region24
      $region23: #{generator_deconv_pallas.12} parent=11 // pred_region
        _
      $region24: #{generator_deconv_pallas.12} parent=11 // pred_fallthru
        _
    $region12: #{generator_deconv_pallas.12} parent=5 // pred_fallthru
      _
    %p149 = scmp.lt.s32.totalorder %s10, 2
    // Predicated region
    $region25: #{generator_deconv_pallas.12} parent=5 // pred_check
      %p150 = pneg %p149
    $region26: #{generator_deconv_pallas.12} parent=5 // pred_check_branch
      %152 = sbr.rel (%p150) target = $region28
    $region27: #{generator_deconv_pallas.12} parent=5 // pred_region
      // Predicated region
      $region29: #{generator_deconv_pallas.12} parent=27 // pred_check
        %p153 = pneg %p30
      $region30: #{generator_deconv_pallas.12} parent=27 // pred_check_branch
        %155 = sbr.rel (%p153) target = $region32
      $region31: #{generator_deconv_pallas.12} parent=27 // pred_region
        %p156 = scmp.lt.s32.totalorder %s10, 1
        %s157 = scalar_select %p156, %s10, 1
        %s158 = smul.addr %s157, 92
        %s159 = smul.addr %s158, 4
        %s160 = scalar_lea.vmem %s0, %s159
      $region32: #{generator_deconv_pallas.12} parent=27 // pred_fallthru
        _
    $region28: #{generator_deconv_pallas.12} parent=5 // pred_fallthru
      _
    %p161 = scmp.le.s32.totalorder 1, %s10
    %p162 = scmp.lt.s32.totalorder %s10, 3
    %p163 = pnand %p161, %p162
    %p164 = pneg %p163
    // Predicated region
    $region33: #{generator_deconv_pallas.12} parent=5 // pred_check
      _
    $region34: #{generator_deconv_pallas.12} parent=5 // pred_check_branch
      %166 = sbr.rel (%p163) target = $region36
    $region35: #{generator_deconv_pallas.12} parent=5 // pred_region
      %s167 = ssub.s32 %s10, 1
      %p168 = scmp.lt.s32.totalorder %s15, 1
      %s169 = scalar_select %p168, %s15, 1
      %s170 = smul.addr %s169, 92
      %s171 = smul.addr %s170, 4
      %s172 = scalar_lea.vmem %s0, %s171
      %p173 = pneg %p36
      %p174 = pneg %p33
      %p175 = pneg %p57
      %p176 = pneg %p54
      %p177 = pneg %p78
      %p178 = pneg %p75
      %p179 = pneg %p99
      %p180 = pneg %p96
      %p181 = pneg %p125
      %p182 = pneg %p122
      %p183 = scmp.lt.s32.totalorder %s15, 1
      %s184 = scalar_select %p183, %s15, 1
      %s185 = smul.addr %s184, 84
      %s186 = smul.addr %s185, 4
      %s187 = scalar_lea.vmem %s4, %s186
      %p188 = scmp.lt.s32.totalorder %s15, 1
      %s189 = scalar_select %p188, %s15, 1
      %s190 = smul.addr %s189, 92
      %s191 = smul.addr %s190, 4
      %s192 = scalar_lea.vmem %s0, %s191
      %p193 = scmp.lt.s32.totalorder %s15, 1
      %s194 = scalar_select %p193, %s15, 1
      %s195 = smul.addr %s194, 84
      %s196 = smul.addr %s195, 4
      %s197 = scalar_lea.vmem %s4, %s196
      %v198 = vld [vmem:[%s2] sm:$0x1]
      %v199 = vld [vmem:[%s3] sm:$0x1]
      loop: start=0, step=1, limit=21
      $region37: #{generator_deconv_pallas.12} parent=35 // loop_pre_header
        _
      $region38: #{generator_deconv_pallas.12} parent=35 // loop_header
        %s201 = sphi 0, %s205
        %p202 = scmp.ge.s32.totalorder %s201, 21
      $region39: #{generator_deconv_pallas.12} parent=35 // loop_header_branch
        %204 = sbr.rel (%p202) target = $region43
      $region40: #{generator_deconv_pallas.12} parent=35 // loop_body
        %s206 = smul.u32 %s201, 4
        %s207 = smul.addr %s206, 4
        %s208 = scalar_lea.vmem %s192, %s207
        %v209 = vld [vmem:[%s208] sm:$0xf]
        %v210 = vld [vmem:[%s208 + $0x4] sm:$0xf]
        %v211 = vld [vmem:[%s208 + $0x8] sm:$0xf]
        %v212 = vld [vmem:[%s208 + $0xc] sm:$0x7]
        %v213 = vld [vmem:[%s1] sm:$0x1]
        %v214 = vunpack.c.l.bf16 %v209
        %v215 = vunpack.c.l.bf16 %v210
        %v216 = vunpack.c.l.bf16 %v211
        %v217 = vunpack.c.l.bf16 %v212
        %v218 = vunpack.c.l.bf16 %v213
        %220 = vset.pattern.permute.xlu0 0
        %221 = vperm.xlu0 %220, %v214
        %v222 = vpop.permute.xlu0 %221
        %225 = vset.pattern.permute.xlu0 0
        %226 = vperm.xlu0 %225, %v215
        %v227 = vpop.permute.xlu0 %226
        %230 = vset.pattern.permute.xlu0 0
        %231 = vperm.xlu0 %230, %v216
        %v232 = vpop.permute.xlu0 %231
        %235 = vset.pattern.permute.xlu0 0
        %236 = vperm.xlu0 %235, %v217
        %v237 = vpop.permute.xlu0 %236
        %v239 = vlaneseq
        %v240 = vshrl.u32 %v239, 7
        %v241 = vsub.s32 0, %v240
        %v242 = vrot.slane %v218, %v241
        %v243 = vmul.f32 %v222, %v242
        %v244 = vmul.f32 %v227, %v242
        %v245 = vmul.f32 %v232, %v242
        %v246 = vmul.f32 %v237, %v242
        %v247 = vadd.f32 %v243, 0.0
        %v248 = vadd.f32 %v244, 0.0
        %v249 = vadd.f32 %v245, 0.0
        %v250 = vadd.f32 %v246, 0.0
        %s251 = scalar_lea.vmem %s1, 1
        %v252 = vld [vmem:[%s251] sm:$0x1]
        %v253 = vunpack.c.l.bf16 %v252
        %v254 = vlaneseq
        %v255 = vshrl.u32 %v254, 7
        %v256 = vsub.s32 0, %v255
        %v257 = vrot.slane %v253, %v256
        %v258 = vmul.f32 %v222, %v257
        %v259 = vmul.f32 %v227, %v257
        %v260 = vmul.f32 %v232, %v257
        %v261 = vmul.f32 %v237, %v257
        %vm266 = vcmask 1046528
        %v267 = vrot.slane %v258, 1
        %v268 = vrot.slane %v259, 1
        %v269 = vsel %vm266, %v267, %v268
        %v270 = vrot.slane %v260, 1
        %v271 = vsel %vm266, %v268, %v270
        %v272 = vrot.slane %v261, 1
        %v273 = vsel %vm266, %v270, %v272
        %v278 = vadd.f32 %v247, %v269
        %v279 = vadd.f32 %v248, %v271
        %v280 = vadd.f32 %v249, %v273
        %v281 = vadd.f32 %v250, %v272
        %v282 = vld [vmem:[%s208] sm:$0xe]
        %v283 = vld [vmem:[%s208 + $0xc] sm:$0xf]
        %s284 = scalar_lea.vmem %s1, 2
        %v285 = vld [vmem:[%s284] sm:$0x1]
        %v286 = vunpack.c.l.bf16 %v282
        %v287 = vunpack.c.l.bf16 %v283
        %v288 = vunpack.c.l.bf16 %v285
        %290 = vset.pattern.permute.xlu0 0
        %291 = vperm.xlu0 %290, %v286
        %v292 = vpop.permute.xlu0 %291
        %295 = vset.pattern.permute.xlu0 0
        %296 = vperm.xlu0 %295, %v287
        %v297 = vpop.permute.xlu0 %296
        %v299 = vlaneseq
        %v300 = vshrl.u32 %v299, 7
        %v301 = vsub.s32 0, %v300
        %v302 = vrot.slane %v288, %v301
        %v303 = vmul.f32 %v292, %v302
        %v304 = vmul.f32 %v227, %v302
        %v305 = vmul.f32 %v232, %v302
        %v306 = vmul.f32 %v297, %v302
        %vm311 = vcmask 1045504
        %v312 = vrot.slane %v303, 2
        %v313 = vrot.slane %v304, 2
        %v314 = vsel %vm311, %v312, %v313
        %v315 = vrot.slane %v305, 2
        %v316 = vsel %vm311, %v313, %v315
        %v317 = vrot.slane %v306, 2
        %v318 = vsel %vm311, %v315, %v317
        %v323 = vadd.f32 %v278, %v314
        %v324 = vadd.f32 %v279, %v316
        %v325 = vadd.f32 %v280, %v318
        %v326 = vadd.f32 %v281, %v317
        %s327 = sadd.s32 %s201, 1
        %s328 = smul.u32 %s327, 4
        %s329 = smul.addr %s328, 4
        %s330 = scalar_lea.vmem %s192, %s329
        %v331 = vld [vmem:[%s330] sm:$0xf]
        %v332 = vld [vmem:[%s330 + $0x4] sm:$0xf]
        %v333 = vld [vmem:[%s330 + $0x8] sm:$0xf]
        %v334 = vld [vmem:[%s330 + $0xc] sm:$0x7]
        %s335 = scalar_lea.vmem %s1, 3
        %v336 = vld [vmem:[%s335] sm:$0x1]
        %v337 = vunpack.c.l.bf16 %v331
        %v338 = vunpack.c.l.bf16 %v332
        %v339 = vunpack.c.l.bf16 %v333
        %v340 = vunpack.c.l.bf16 %v334
        %v341 = vunpack.c.l.bf16 %v336
        %343 = vset.pattern.permute.xlu0 0
        %344 = vperm.xlu0 %343, %v337
        %v345 = vpop.permute.xlu0 %344
        %348 = vset.pattern.permute.xlu0 0
        %349 = vperm.xlu0 %348, %v338
        %v350 = vpop.permute.xlu0 %349
        %353 = vset.pattern.permute.xlu0 0
        %354 = vperm.xlu0 %353, %v339
        %v355 = vpop.permute.xlu0 %354
        %358 = vset.pattern.permute.xlu0 0
        %359 = vperm.xlu0 %358, %v340
        %v360 = vpop.permute.xlu0 %359
        %v362 = vlaneseq
        %v363 = vshrl.u32 %v362, 7
        %v364 = vsub.s32 0, %v363
        %v365 = vrot.slane %v341, %v364
        %v366 = vmul.f32 %v345, %v365
        %v367 = vmul.f32 %v350, %v365
        %v368 = vmul.f32 %v355, %v365
        %v369 = vmul.f32 %v360, %v365
        %v370 = vadd.f32 %v323, %v366
        %v371 = vadd.f32 %v324, %v367
        %v372 = vadd.f32 %v325, %v368
        %v373 = vadd.f32 %v326, %v369
        %s374 = scalar_lea.vmem %s1, 4
        %v375 = vld [vmem:[%s374] sm:$0x1]
        %v376 = vunpack.c.l.bf16 %v375
        %v377 = vlaneseq
        %v378 = vshrl.u32 %v377, 7
        %v379 = vsub.s32 0, %v378
        %v380 = vrot.slane %v376, %v379
        %v381 = vmul.f32 %v345, %v380
        %v382 = vmul.f32 %v350, %v380
        %v383 = vmul.f32 %v355, %v380
        %v384 = vmul.f32 %v360, %v380
        %v389 = vrot.slane %v381, 1
        %v390 = vrot.slane %v382, 1
        %v391 = vsel %vm266, %v389, %v390
        %v392 = vrot.slane %v383, 1
        %v393 = vsel %vm266, %v390, %v392
        %v394 = vrot.slane %v384, 1
        %v395 = vsel %vm266, %v392, %v394
        %v400 = vadd.f32 %v370, %v391
        %v401 = vadd.f32 %v371, %v393
        %v402 = vadd.f32 %v372, %v395
        %v403 = vadd.f32 %v373, %v394
        %v404 = vld [vmem:[%s330] sm:$0xe]
        %v405 = vld [vmem:[%s330 + $0xc] sm:$0xf]
        %s406 = scalar_lea.vmem %s1, 5
        %v407 = vld [vmem:[%s406] sm:$0x1]
        %v408 = vunpack.c.l.bf16 %v404
        %v409 = vunpack.c.l.bf16 %v405
        %v410 = vunpack.c.l.bf16 %v407
        %412 = vset.pattern.permute.xlu0 0
        %413 = vperm.xlu0 %412, %v408
        %v414 = vpop.permute.xlu0 %413
        %417 = vset.pattern.permute.xlu0 0
        %418 = vperm.xlu0 %417, %v409
        %v419 = vpop.permute.xlu0 %418
        %v421 = vlaneseq
        %v422 = vshrl.u32 %v421, 7
        %v423 = vsub.s32 0, %v422
        %v424 = vrot.slane %v410, %v423
        %v425 = vmul.f32 %v414, %v424
        %v426 = vmul.f32 %v350, %v424
        %v427 = vmul.f32 %v355, %v424
        %v428 = vmul.f32 %v419, %v424
        %v433 = vrot.slane %v425, 2
        %v434 = vrot.slane %v426, 2
        %v435 = vsel %vm311, %v433, %v434
        %v436 = vrot.slane %v427, 2
        %v437 = vsel %vm311, %v434, %v436
        %v438 = vrot.slane %v428, 2
        %v439 = vsel %vm311, %v436, %v438
        %v444 = vadd.f32 %v400, %v435
        %v445 = vadd.f32 %v401, %v437
        %v446 = vadd.f32 %v402, %v439
        %v447 = vadd.f32 %v403, %v438
        %s448 = sadd.s32 %s201, 2
        %s449 = smul.u32 %s448, 4
        %s450 = smul.addr %s449, 4
        %s451 = scalar_lea.vmem %s192, %s450
        %v452 = vld [vmem:[%s451] sm:$0xf]
        %v453 = vld [vmem:[%s451 + $0x4] sm:$0xf]
        %v454 = vld [vmem:[%s451 + $0x8] sm:$0xf]
        %v455 = vld [vmem:[%s451 + $0xc] sm:$0x7]
        %s456 = scalar_lea.vmem %s1, 6
        %v457 = vld [vmem:[%s456] sm:$0x1]
        %v458 = vunpack.c.l.bf16 %v452
        %v459 = vunpack.c.l.bf16 %v453
        %v460 = vunpack.c.l.bf16 %v454
        %v461 = vunpack.c.l.bf16 %v455
        %v462 = vunpack.c.l.bf16 %v457
        %464 = vset.pattern.permute.xlu0 0
        %465 = vperm.xlu0 %464, %v458
        %v466 = vpop.permute.xlu0 %465
        %469 = vset.pattern.permute.xlu0 0
        %470 = vperm.xlu0 %469, %v459
        %v471 = vpop.permute.xlu0 %470
        %474 = vset.pattern.permute.xlu0 0
        %475 = vperm.xlu0 %474, %v460
        %v476 = vpop.permute.xlu0 %475
        %479 = vset.pattern.permute.xlu0 0
        %480 = vperm.xlu0 %479, %v461
        %v481 = vpop.permute.xlu0 %480
        %v483 = vlaneseq
        %v484 = vshrl.u32 %v483, 7
        %v485 = vsub.s32 0, %v484
        %v486 = vrot.slane %v462, %v485
        %v487 = vmul.f32 %v466, %v486
        %v488 = vmul.f32 %v471, %v486
        %v489 = vmul.f32 %v476, %v486
        %v490 = vmul.f32 %v481, %v486
        %v491 = vadd.f32 %v444, %v487
        %v492 = vadd.f32 %v445, %v488
        %v493 = vadd.f32 %v446, %v489
        %v494 = vadd.f32 %v447, %v490
        %s495 = scalar_lea.vmem %s1, 7
        %v496 = vld [vmem:[%s495] sm:$0x1]
        %v497 = vunpack.c.l.bf16 %v496
        %v498 = vlaneseq
        %v499 = vshrl.u32 %v498, 7
        %v500 = vsub.s32 0, %v499
        %v501 = vrot.slane %v497, %v500
        %v502 = vmul.f32 %v466, %v501
        %v503 = vmul.f32 %v471, %v501
        %v504 = vmul.f32 %v476, %v501
        %v505 = vmul.f32 %v481, %v501
        %v510 = vrot.slane %v502, 1
        %v511 = vrot.slane %v503, 1
        %v512 = vsel %vm266, %v510, %v511
        %v513 = vrot.slane %v504, 1
        %v514 = vsel %vm266, %v511, %v513
        %v515 = vrot.slane %v505, 1
        %v516 = vsel %vm266, %v513, %v515
        %v521 = vadd.f32 %v491, %v512
        %v522 = vadd.f32 %v492, %v514
        %v523 = vadd.f32 %v493, %v516
        %v524 = vadd.f32 %v494, %v515
        %v525 = vld [vmem:[%s451] sm:$0xe]
        %v526 = vld [vmem:[%s451 + $0xc] sm:$0xf]
        %s527 = scalar_lea.vmem %s1, 8
        %v528 = vld [vmem:[%s527] sm:$0x1]
        %v529 = vunpack.c.l.bf16 %v525
        %v530 = vunpack.c.l.bf16 %v526
        %v531 = vunpack.c.l.bf16 %v528
        %533 = vset.pattern.permute.xlu0 0
        %534 = vperm.xlu0 %533, %v529
        %v535 = vpop.permute.xlu0 %534
        %538 = vset.pattern.permute.xlu0 0
        %539 = vperm.xlu0 %538, %v530
        %v540 = vpop.permute.xlu0 %539
        %v542 = vlaneseq
        %v543 = vshrl.u32 %v542, 7
        %v544 = vsub.s32 0, %v543
        %v545 = vrot.slane %v531, %v544
        %v546 = vmul.f32 %v535, %v545
        %v547 = vmul.f32 %v471, %v545
        %v548 = vmul.f32 %v476, %v545
        %v549 = vmul.f32 %v540, %v545
        %v554 = vrot.slane %v546, 2
        %v555 = vrot.slane %v547, 2
        %v556 = vsel %vm311, %v554, %v555
        %v557 = vrot.slane %v548, 2
        %v558 = vsel %vm311, %v555, %v557
        %v559 = vrot.slane %v549, 2
        %v560 = vsel %vm311, %v557, %v559
        %v565 = vadd.f32 %v521, %v556
        %v566 = vadd.f32 %v522, %v558
        %v567 = vadd.f32 %v523, %v560
        %v568 = vadd.f32 %v524, %v559
        %v570 = vlaneseq
        %v571 = vshrl.u32 %v570, 7
        %v572 = vsub.s32 0, %v571
        %v573 = vrot.slane %v198, %v572
        %v575 = vmul.f32 %v565, %v573
        %v576 = vmul.f32 %v566, %v573
        %v577 = vmul.f32 %v567, %v573
        %v578 = vmul.f32 %v568, %v573
        %v580 = vlaneseq
        %v581 = vshrl.u32 %v580, 7
        %v582 = vsub.s32 0, %v581
        %v583 = vrot.slane %v199, %v582
        %v585 = vadd.f32 %v575, %v583
        %v586 = vadd.f32 %v576, %v583
        %v587 = vadd.f32 %v577, %v583
        %v588 = vadd.f32 %v578, %v583
        %v589 = vmax.f32 %v585, 0.0
        %v590 = vmax.f32 %v586, 0.0
        %v591 = vmax.f32 %v587, 0.0
        %v592 = vmax.f32 %v588, 0.0
        %v593 = vpack.c.bf16 %v590, %v589
        %v594 = vpack.c.bf16 %v592, %v591
        %v597 = vunpack.c.l.b16 %v593
        %v598 = vunpack.c.h.b16 %v593
        %v599 = vunpack.c.l.b16 %v594
        %v600 = vunpack.c.h.b16 %v594
        %v601 = vpack.c.b16 %v597, %v597
        %v602 = vpack.c.b16 %v598, %v598
        %v603 = vpack.c.b16 %v599, %v599
        %v604 = vpack.c.b16 %v600, %v600
        %s609 = smul.addr %s206, 4
        %s610 = scalar_lea.vmem %s197, %s609
        %611 = vst [vmem:[%s610] sm:$0xf] %v601
        %612 = vst [vmem:[%s610 + $0x4] sm:$0xf] %v602
        %613 = vst [vmem:[%s610 + $0x8] sm:$0xf] %v603
        %vm614 = vcmask 1042432
        %vm615 = vsmask.f32 2304
        %vm616 = vmand %vm614, %vm615
        %v617 = vld [vmem:[%s610 + $0xc] sm:$0x7]
        %v618 = vsel %vm616, %v604, %v617
        %619 = vst [vmem:[%s610 + $0xc] sm:$0x7] %v618
      $region41: #{generator_deconv_pallas.12} parent=35 // loop_footer
        %s205 = sadd.s32 1, %s201
      $region42: #{generator_deconv_pallas.12} parent=35 // loop_footer_branch
        %200 = sbr.rel target = $region38
      $region43: #{generator_deconv_pallas.12} parent=35 // loop_exit
        _
      %p620 = scmp.lt.s32.totalorder %s15, 1
      %s621 = scalar_select %p620, %s15, 1
      %s622 = smul.addr %s621, 84
      %s623 = smul.addr %s622, 4
      %s624 = scalar_lea.vmem %s4, %s623
      // Predicated region
      $region44: #{generator_deconv_pallas.12} parent=35 // pred_check
        %p625 = pneg %p122
      $region45: #{generator_deconv_pallas.12} parent=35 // pred_check_branch
        %627 = sbr.rel (%p625) target = $region47
      $region46: #{generator_deconv_pallas.12} parent=35 // pred_region
        _
      $region47: #{generator_deconv_pallas.12} parent=35 // pred_fallthru
        _
    $region36: #{generator_deconv_pallas.12} parent=5 // pred_fallthru
      _
    %p628 = scmp.le.s32.totalorder 2, %s10
    // Predicated region
    $region48: #{generator_deconv_pallas.12} parent=5 // pred_check
      %p629 = pneg %p628
    $region49: #{generator_deconv_pallas.12} parent=5 // pred_check_branch
      %631 = sbr.rel (%p629) target = $region51
    $region50: #{generator_deconv_pallas.12} parent=5 // pred_region
      %s632 = ssub.s32 %s10, 2
      // Predicated region
      $region52: #{generator_deconv_pallas.12} parent=50 // pred_check
        %p633 = pneg %p128
      $region53: #{generator_deconv_pallas.12} parent=50 // pred_check_branch
        %635 = sbr.rel (%p633) target = $region55
      $region54: #{generator_deconv_pallas.12} parent=50 // pred_region
        %p636 = scmp.lt.s32.totalorder %s16, 1
        %s637 = scalar_select %p636, %s16, 1
        %s638 = smul.addr %s637, 84
        %s639 = smul.addr %s638, 4
        %s640 = scalar_lea.vmem %s4, %s639
      $region55: #{generator_deconv_pallas.12} parent=50 // pred_fallthru
        _
    $region51: #{generator_deconv_pallas.12} parent=5 // pred_fallthru
      _
  $region6: #{generator_deconv_pallas.12} parent=0 // loop_footer
    %s14 = sadd.s32 1, %s10
  $region7: #{generator_deconv_pallas.12} parent=0 // loop_footer_branch
    %9 = sbr.rel target = $region3
  $region8: #{generator_deconv_pallas.12} parent=0 // loop_exit
    _

// kernel: generator_deconv_pallas.16
$region0: #{generator_deconv_pallas.16}
  #allocation0 [shape = 'u32[]', space=smem, size = 0x4, offset = 0x4, fixed_abs, tag = 'smem constant byte address 0x4 - core index']
  #allocation1 [shape = 'u32[144,128]{1,0:T(1,128)}', space=vmem, size = 0x12000, scoped, tag = 'internal scratch']
  %s0 = inlined_call_operand.vmem [shape: bf16[2,23,31,128], index: 0, kind: input, shape index: {}]
  %s1 = inlined_call_operand.vmem [shape: bf16[4,128,64], index: 1, kind: input, shape index: {}]
  %s2 = inlined_call_operand.vmem [shape: f32[1,64], index: 2, kind: input, shape index: {}]
  %s3 = inlined_call_operand.vmem [shape: f32[1,64], index: 3, kind: input, shape index: {}]
  %s4 = inlined_call_operand.vmem [shape: bf16[2,22,30,64], index: 4, kind: output, shape index: {}]
  %s5 = sld [smem:[#allocation0]]
  $region56: #{generator_deconv_pallas.16} parent=0
    _
  %s7 = ssub.s32 1, %s5
  %s8 = scalar_select 0, %s7, %s5
  loop: start=0, step=1, limit=4
  $region2: #{generator_deconv_pallas.16} parent=0 // loop_pre_header
    _
  $region3: #{generator_deconv_pallas.16} parent=0 // loop_header
    %s10 = sphi 0, %s14
    %p11 = scmp.ge.s32.totalorder %s10, 4
    %s20 = sphi 0, %s22
    %s23 = sphi 0, %s20
    %s24 = sphi 0, %s23
    %s40 = sphi 0, %s24
    %s44 = sphi 0, %s44
    %s46 = sphi 0, %s44
    %s47 = sphi 0, %s46
    %s61 = sphi 0, %s47
    %s65 = sphi 0, %s65
    %s67 = sphi 0, %s65
    %s68 = sphi 0, %s67
    %s82 = sphi 0, %s68
    %s86 = sphi 0, %s86
    %s88 = sphi 0, %s86
    %s89 = sphi 0, %s88
    %s103 = sphi 0, %s89
    %s109 = sphi 0, %s111
    %s112 = sphi 0, %s109
    %s113 = sphi 0, %s112
    %s129 = sphi 0, %s113
  $region4: #{generator_deconv_pallas.16} parent=0 // loop_header_branch
    %13 = sbr.rel (%p11) target = $region8
  $region5: #{generator_deconv_pallas.16} parent=0 // loop_body
    %s15 = ssub.s32 %s10, 1
    %s16 = ssub.s32 %s10, 2
    %s17 = sadd.s32 %s10, 1
    %s18 = ssub.s32 %s10, %s17
    %p19 = scmp.eq.s32.totalorder %s18, 0
    %s21 = sadd.s32 %s20, 1
    %s22 = scalar_select %p19, %s20, %s21
    %p25 = pneg %p19
    %p26 = scmp.eq.s32.totalorder %s10, 1
    %p27 = por %p25, %p26
    %p28 = scmp.ne.s32.totalorder %s20, %s23
    %p29 = scmp.eq.s32.totalorder %s10, 0
    %p30 = por %p28, %p29
    %p31 = scmp.ne.s32.totalorder %s20, %s23
    %p32 = scmp.eq.s32.totalorder %s15, 1
    %p33 = por %p31, %p32
    %p34 = scmp.ne.s32.totalorder %s23, %s24
    %p35 = scmp.eq.s32.totalorder %s15, 0
    %p36 = por %p34, %p35
    %p37 = scmp.ne.s32.totalorder %s23, %s24
    %p38 = scmp.eq.s32.totalorder %s16, 1
    %p39 = por %p37, %p38
    %p41 = scmp.ne.s32.totalorder %s24, %s40
    %p42 = scmp.eq.s32.totalorder %s16, 0
    %p43 = por %p41, %p42
    %s45 = sadd.s32 %s44, 1
    %p48 = scmp.eq.s32.totalorder %s10, 1
    %p49 = scmp.ne.s32.totalorder %s44, %s46
    %p50 = scmp.eq.s32.totalorder %s10, 0
    %p51 = por %p49, %p50
    %p52 = scmp.ne.s32.totalorder %s44, %s46
    %p53 = scmp.eq.s32.totalorder %s15, 1
    %p54 = por %p52, %p53
    %p55 = scmp.ne.s32.totalorder %s46, %s47
    %p56 = scmp.eq.s32.totalorder %s15, 0
    %p57 = por %p55, %p56
    %p58 = scmp.ne.s32.totalorder %s46, %s47
    %p59 = scmp.eq.s32.totalorder %s16, 1
    %p60 = por %p58, %p59
    %p62 = scmp.ne.s32.totalorder %s47, %s61
    %p63 = scmp.eq.s32.totalorder %s16, 0
    %p64 = por %p62, %p63
    %s66 = sadd.s32 %s65, 1
    %p69 = scmp.eq.s32.totalorder %s10, 1
    %p70 = scmp.ne.s32.totalorder %s65, %s67
    %p71 = scmp.eq.s32.totalorder %s10, 0
    %p72 = por %p70, %p71
    %p73 = scmp.ne.s32.totalorder %s65, %s67
    %p74 = scmp.eq.s32.totalorder %s15, 1
    %p75 = por %p73, %p74
    %p76 = scmp.ne.s32.totalorder %s67, %s68
    %p77 = scmp.eq.s32.totalorder %s15, 0
    %p78 = por %p76, %p77
    %p79 = scmp.ne.s32.totalorder %s67, %s68
    %p80 = scmp.eq.s32.totalorder %s16, 1
    %p81 = por %p79, %p80
    %p83 = scmp.ne.s32.totalorder %s68, %s82
    %p84 = scmp.eq.s32.totalorder %s16, 0
    %p85 = por %p83, %p84
    %s87 = sadd.s32 %s86, 1
    %p90 = scmp.eq.s32.totalorder %s10, 1
    %p91 = scmp.ne.s32.totalorder %s86, %s88
    %p92 = scmp.eq.s32.totalorder %s10, 0
    %p93 = por %p91, %p92
    %p94 = scmp.ne.s32.totalorder %s86, %s88
    %p95 = scmp.eq.s32.totalorder %s15, 1
    %p96 = por %p94, %p95
    %p97 = scmp.ne.s32.totalorder %s88, %s89
    %p98 = scmp.eq.s32.totalorder %s15, 0
    %p99 = por %p97, %p98
    %p100 = scmp.ne.s32.totalorder %s88, %s89
    %p101 = scmp.eq.s32.totalorder %s16, 1
    %p102 = por %p100, %p101
    %p104 = scmp.ne.s32.totalorder %s89, %s103
    %p105 = scmp.eq.s32.totalorder %s16, 0
    %p106 = por %p104, %p105
    %s107 = ssub.s32 %s10, %s17
    %p108 = scmp.eq.s32.totalorder %s107, 0
    %s110 = sadd.s32 %s109, 1
    %s111 = scalar_select %p108, %s109, %s110
    %p114 = pneg %p108
    %p115 = scmp.eq.s32.totalorder %s10, 1
    %p116 = por %p114, %p115
    %p117 = scmp.ne.s32.totalorder %s109, %s112
    %p118 = scmp.eq.s32.totalorder %s10, 0
    %p119 = por %p117, %p118
    %p120 = scmp.ne.s32.totalorder %s109, %s112
    %p121 = scmp.eq.s32.totalorder %s15, 1
    %p122 = por %p120, %p121
    %p123 = scmp.ne.s32.totalorder %s112, %s113
    %p124 = scmp.eq.s32.totalorder %s15, 0
    %p125 = por %p123, %p124
    %p126 = scmp.ne.s32.totalorder %s112, %s113
    %p127 = scmp.eq.s32.totalorder %s16, 1
    %p128 = por %p126, %p127
    %p130 = scmp.ne.s32.totalorder %s113, %s129
    %p131 = scmp.eq.s32.totalorder %s16, 0
    %p132 = por %p130, %p131
    %p133 = scmp.le.s32.totalorder 1, %s10
    %p134 = scmp.lt.s32.totalorder %s10, 3
    %p135 = pnand %p133, %p134
    %p136 = pneg %p135
    // Predicated region
    $region9: #{generator_deconv_pallas.16} parent=5 // pred_check
      _
    $region10: #{generator_deconv_pallas.16} parent=5 // pred_check_branch
      %138 = sbr.rel (%p135) target = $region12
    $region11: #{generator_deconv_pallas.16} parent=5 // pred_region
      %s139 = ssub.s32 %s10, 1
      // Predicated region
      $region13: #{generator_deconv_pallas.16} parent=11 // pred_check
        %p140 = pneg %p57
      $region14: #{generator_deconv_pallas.16} parent=11 // pred_check_branch
        %142 = sbr.rel (%p140) target = $region16
      $region15: #{generator_deconv_pallas.16} parent=11 // pred_region
        _
      $region16: #{generator_deconv_pallas.16} parent=11 // pred_fallthru
        _
      // Predicated region
      $region17: #{generator_deconv_pallas.16} parent=11 // pred_check
        %p143 = pneg %p78
      $region18: #{generator_deconv_pallas.16} parent=11 // pred_check_branch
        %145 = sbr.rel (%p143) target = $region20
      $region19: #{generator_deconv_pallas.16} parent=11 // pred_region
        _
      $region20: #{generator_deconv_pallas.16} parent=11 // pred_fallthru
        _
      // Predicated region
      $region21: #{generator_deconv_pallas.16} parent=11 // pred_check
        %p146 = pneg %p99
      $region22: #{generator_deconv_pallas.16} parent=11 // pred_check_branch
        %148 = sbr.rel (%p146) target = $region24
      $region23: #{generator_deconv_pallas.16} parent=11 // pred_region
        _
      $region24: #{generator_deconv_pallas.16} parent=11 // pred_fallthru
        _
    $region12: #{generator_deconv_pallas.16} parent=5 // pred_fallthru
      _
    %p149 = scmp.lt.s32.totalorder %s10, 2
    // Predicated region
    $region25: #{generator_deconv_pallas.16} parent=5 // pred_check
      %p150 = pneg %p149
    $region26: #{generator_deconv_pallas.16} parent=5 // pred_check_branch
      %152 = sbr.rel (%p150) target = $region28
    $region27: #{generator_deconv_pallas.16} parent=5 // pred_region
      // Predicated region
      $region29: #{generator_deconv_pallas.16} parent=27 // pred_check
        %p153 = pneg %p30
      $region30: #{generator_deconv_pallas.16} parent=27 // pred_check_branch
        %155 = sbr.rel (%p153) target = $region32
      $region31: #{generator_deconv_pallas.16} parent=27 // pred_region
        %p156 = scmp.lt.s32.totalorder %s10, 1
        %s157 = scalar_select %p156, %s10, 1
        %s158 = smul.addr %s157, 92
        %s159 = smul.addr %s158, 4
        %s160 = scalar_lea.vmem %s0, %s159
      $region32: #{generator_deconv_pallas.16} parent=27 // pred_fallthru
        _
    $region28: #{generator_deconv_pallas.16} parent=5 // pred_fallthru
      _
    %p161 = scmp.le.s32.totalorder 1, %s10
    %p162 = scmp.lt.s32.totalorder %s10, 3
    %p163 = pnand %p161, %p162
    %p164 = pneg %p163
    // Predicated region
    $region33: #{generator_deconv_pallas.16} parent=5 // pred_check
      _
    $region34: #{generator_deconv_pallas.16} parent=5 // pred_check_branch
      %166 = sbr.rel (%p163) target = $region36
    $region35: #{generator_deconv_pallas.16} parent=5 // pred_region
      %s167 = ssub.s32 %s10, 1
      %p168 = scmp.lt.s32.totalorder %s15, 1
      %s169 = scalar_select %p168, %s15, 1
      %s170 = smul.addr %s169, 92
      %s171 = smul.addr %s170, 4
      %s172 = scalar_lea.vmem %s0, %s171
      %p173 = pneg %p36
      %p174 = pneg %p33
      %p175 = pneg %p57
      %p176 = pneg %p54
      %p177 = pneg %p78
      %p178 = pneg %p75
      %p179 = pneg %p99
      %p180 = pneg %p96
      %p181 = pneg %p125
      %p182 = pneg %p122
      %p183 = scmp.lt.s32.totalorder %s15, 1
      %s184 = scalar_select %p183, %s15, 1
      %s185 = smul.addr %s184, 88
      %s186 = smul.addr %s185, 4
      %s187 = scalar_lea.vmem %s4, %s186
      %p188 = scmp.lt.s32.totalorder %s15, 1
      %s189 = scalar_select %p188, %s15, 1
      %s190 = smul.addr %s189, 92
      %s191 = smul.addr %s190, 4
      %s192 = scalar_lea.vmem %s0, %s191
      %p193 = scmp.lt.s32.totalorder %s15, 1
      %s194 = scalar_select %p193, %s15, 1
      %s195 = smul.addr %s194, 88
      %s196 = smul.addr %s195, 4
      %s197 = scalar_lea.vmem %s4, %s196
      %v199 = vld [vmem:[%s2] sm:$0x1]
      %v200 = vld [vmem:[%s3] sm:$0x1]
      loop: start=0, step=1, limit=22
      $region37: #{generator_deconv_pallas.16} parent=35 // loop_pre_header
        _
      $region38: #{generator_deconv_pallas.16} parent=35 // loop_header
        %s202 = sphi 0, %s206
        %p203 = scmp.ge.s32.totalorder %s202, 22
      $region39: #{generator_deconv_pallas.16} parent=35 // loop_header_branch
        %205 = sbr.rel (%p203) target = $region43
      $region40: #{generator_deconv_pallas.16} parent=35 // loop_body
        %s207 = smul.u32 %s202, 4
        %s208 = smul.addr %s207, 4
        %s209 = scalar_lea.vmem %s192, %s208
        %v210 = vld [vmem:[%s209] sm:$0xf]
        %v211 = vld [vmem:[%s209 + $0x4] sm:$0xf]
        %v212 = vld [vmem:[%s209 + $0x8] sm:$0xf]
        %v213 = vld [vmem:[%s209 + $0xc] sm:$0x7]
        %v214 = vld [vmem:[%s1] sm:$0xf]
        %v215 = vld [vmem:[%s1 + $0x4] sm:$0xf]
        %v216 = vld [vmem:[%s1 + $0x8] sm:$0xf]
        %v217 = vld [vmem:[%s1 + $0xc] sm:$0xf]
        %v218 = vld [vmem:[%s1 + $0x10] sm:$0xf]
        %v219 = vld [vmem:[%s1 + $0x14] sm:$0xf]
        %v220 = vld [vmem:[%s1 + $0x18] sm:$0xf]
        %v221 = vld [vmem:[%s1 + $0x1c] sm:$0xf]
        %v222 = vld [vmem:[%s1 + $0x20] sm:$0xf]
        %v223 = vld [vmem:[%s1 + $0x24] sm:$0xf]
        %v224 = vld [vmem:[%s1 + $0x28] sm:$0xf]
        %v225 = vld [vmem:[%s1 + $0x2c] sm:$0xf]
        %v226 = vld [vmem:[%s1 + $0x30] sm:$0xf]
        %v227 = vld [vmem:[%s1 + $0x34] sm:$0xf]
        %v228 = vld [vmem:[%s1 + $0x38] sm:$0xf]
        %v229 = vld [vmem:[%s1 + $0x3c] sm:$0xf]
        %v230 = vld [vmem:[%s209 + $0xc] sm:$0xf]
        %s231 = scalar_lea.vmem %s1, 64
        %v232 = vld [vmem:[%s231] sm:$0xf]
        %v233 = vld [vmem:[%s231 + $0x4] sm:$0xf]
        %v234 = vld [vmem:[%s231 + $0x8] sm:$0xf]
        %v235 = vld [vmem:[%s231 + $0xc] sm:$0xf]
        %v236 = vld [vmem:[%s231 + $0x10] sm:$0xf]
        %v237 = vld [vmem:[%s231 + $0x14] sm:$0xf]
        %v238 = vld [vmem:[%s231 + $0x18] sm:$0xf]
        %v239 = vld [vmem:[%s231 + $0x1c] sm:$0xf]
        %v240 = vld [vmem:[%s231 + $0x20] sm:$0xf]
        %v241 = vld [vmem:[%s231 + $0x24] sm:$0xf]
        %v242 = vld [vmem:[%s231 + $0x28] sm:$0xf]
        %v243 = vld [vmem:[%s231 + $0x2c] sm:$0xf]
        %v244 = vld [vmem:[%s231 + $0x30] sm:$0xf]
        %v245 = vld [vmem:[%s231 + $0x34] sm:$0xf]
        %v246 = vld [vmem:[%s231 + $0x38] sm:$0xf]
        %v247 = vld [vmem:[%s231 + $0x3c] sm:$0xf]
        %v252 = vunpack.c.l.b16 %v210
        %v253 = vunpack.c.l.b16 %v211
        %v254 = vunpack.c.l.b16 %v212
        %v255 = vunpack.c.l.b16 %v230
        %v256 = vpack.c.b16 %v253, %v252
        %v257 = vpack.c.b16 %v255, %v254
        %vm258 = vsmask.f32 7424
        %v260 = vshrl.u32 %v256, 16
        %v262 = vshll.u32 %v256, 16
        %v264 = vrot.slane %v262, 1
        %v265 = vor.u32 %v260, %v264
        %v267 = vshll.u32 %v257, 16
        %v269 = vrot.slane %v267, 1
        %v270 = vsel %vm258, %v265, %v269
        %v271 = vshrl.u32 %v257, 16
        %v273 = vor.u32 %v271, %v269
        %v292 = vunpack.c.l.b16 %v232
        %v293 = vunpack.c.l.b16 %v233
        %v294 = vunpack.c.l.b16 %v234
        %v295 = vunpack.c.l.b16 %v235
        %v296 = vunpack.c.l.b16 %v236
        %v297 = vunpack.c.l.b16 %v237
        %v298 = vunpack.c.l.b16 %v238
        %v299 = vunpack.c.l.b16 %v239
        %v300 = vunpack.c.l.b16 %v240
        %v301 = vunpack.c.l.b16 %v241
        %v302 = vunpack.c.l.b16 %v242
        %v303 = vunpack.c.l.b16 %v243
        %v304 = vunpack.c.l.b16 %v244
        %v305 = vunpack.c.l.b16 %v245
        %v306 = vunpack.c.l.b16 %v246
        %v307 = vunpack.c.l.b16 %v247
        %v308 = vpack.c.b16 %v293, %v292
        %v309 = vpack.c.b16 %v295, %v294
        %v310 = vpack.c.b16 %v297, %v296
        %v311 = vpack.c.b16 %v299, %v298
        %v312 = vpack.c.b16 %v301, %v300
        %v313 = vpack.c.b16 %v303, %v302
        %v314 = vpack.c.b16 %v305, %v304
        %v315 = vpack.c.b16 %v307, %v306
        %324 = vmatprep.subr.bf16.mxu0 0
        %325 = vmatpush1.bf16.msra.mxu0 %v315
        %326 = vmatprep.subr.bf16.mxu0 0
        %327 = vmatpush1.bf16.msra.mxu0 %v314
        %328 = vmatprep.subr.bf16.mxu0 0
        %329 = vmatpush1.bf16.msra.mxu0 %v313
        %330 = vmatprep.subr.bf16.mxu0 0
        %331 = vmatpush1.bf16.msra.mxu0 %v312
        %332 = vmatprep.subr.bf16.mxu0 0
        %333 = vmatpush1.bf16.msra.mxu0 %v311
        %334 = vmatprep.subr.bf16.mxu0 0
        %335 = vmatpush1.bf16.msra.mxu0 %v310
        %336 = vmatprep.subr.bf16.mxu0 0
        %337 = vmatpush1.bf16.msra.mxu0 %v309
        %338 = vmatprep.subr.bf16.mxu0 0
        %339 = vmatpush1.bf16.msra.mxu0 %v308
        %340 = vmatprep.subr.bf16.mxu0 0
        %341 = vmatpush2.bf16.msra.mxu0 0
        %342 = vmatprep.subr.bf16.mxu0 0
        %343 = vmatpush2.bf16.msra.mxu0 0
        %344 = vmatprep.subr.bf16.mxu0 0
        %345 = vmatpush2.bf16.msra.mxu0 0
        %346 = vmatprep.subr.bf16.mxu0 0
        %347 = vmatpush2.bf16.msra.mxu0 0
        %348 = vmatprep.subr.bf16.mxu0 0
        %349 = vmatpush2.bf16.msra.mxu0 0
        %350 = vmatprep.subr.bf16.mxu0 0
        %351 = vmatpush2.bf16.msra.mxu0 0
        %352 = vmatprep.subr.bf16.mxu0 0
        %353 = vmatpush2.bf16.msra.mxu0 0
        %354 = vmatprep.subr.bf16.mxu0 0
        %355 = vmatpush2.bf16.msra.mxu0 0
        %356 = vmatprep.mubr.bf16.mxu0 0
        %357 = vmatmul.mubr.bf16.gmra.mxu0 %v270
        %v358 = vpop.f32.mrf.mxu0
        %v359 = vadd.f32 0.0, %v358
        %v360 = vpop.f32.mrf.mxu0
        %v361 = vpop.f32.mrf.mxu0
        %v362 = vadd.f32 0.0, %v361
        %v363 = vpop.f32.mrf.mxu0
        %364 = vmatprep.mubr.bf16.mxu0 0
        %365 = vmatmul.mubr.bf16.gmra.mxu0 %v273
        %v366 = vpop.f32.mrf.mxu0
        %v367 = vadd.f32 0.0, %v366
        %v368 = vpop.f32.mrf.mxu0
        %v369 = vpop.f32.mrf.mxu0
        %v370 = vadd.f32 0.0, %v369
        %v371 = vpop.f32.mrf.mxu0
        %372 = vdwg.mxu0
        %v374 = vunpack.c.l.b16 %v213
        %v375 = vpack.c.b16 %v374, %v254
        %v394 = vunpack.c.l.b16 %v214
        %v395 = vunpack.c.l.b16 %v215
        %v396 = vunpack.c.l.b16 %v216
        %v397 = vunpack.c.l.b16 %v217
        %v398 = vunpack.c.l.b16 %v218
        %v399 = vunpack.c.l.b16 %v219
        %v400 = vunpack.c.l.b16 %v220
        %v401 = vunpack.c.l.b16 %v221
        %v402 = vunpack.c.l.b16 %v222
        %v403 = vunpack.c.l.b16 %v223
        %v404 = vunpack.c.l.b16 %v224
        %v405 = vunpack.c.l.b16 %v225
        %v406 = vunpack.c.l.b16 %v226
        %v407 = vunpack.c.l.b16 %v227
        %v408 = vunpack.c.l.b16 %v228
        %v409 = vunpack.c.l.b16 %v229
        %v410 = vpack.c.b16 %v395, %v394
        %v411 = vpack.c.b16 %v397, %v396
        %v412 = vpack.c.b16 %v399, %v398
        %v413 = vpack.c.b16 %v401, %v400
        %v414 = vpack.c.b16 %v403, %v402
        %v415 = vpack.c.b16 %v405, %v404
        %v416 = vpack.c.b16 %v407, %v406
        %v417 = vpack.c.b16 %v409, %v408
        %426 = vmatprep.subr.bf16.mxu0 0
        %427 = vmatpush1.bf16.msra.mxu0 %v417
        %428 = vmatprep.subr.bf16.mxu0 0
        %429 = vmatpush1.bf16.msra.mxu0 %v416
        %430 = vmatprep.subr.bf16.mxu0 0
        %431 = vmatpush1.bf16.msra.mxu0 %v415
        %432 = vmatprep.subr.bf16.mxu0 0
        %433 = vmatpush1.bf16.msra.mxu0 %v414
        %434 = vmatprep.subr.bf16.mxu0 0
        %435 = vmatpush1.bf16.msra.mxu0 %v413
        %436 = vmatprep.subr.bf16.mxu0 0
        %437 = vmatpush1.bf16.msra.mxu0 %v412
        %438 = vmatprep.subr.bf16.mxu0 0
        %439 = vmatpush1.bf16.msra.mxu0 %v411
        %440 = vmatprep.subr.bf16.mxu0 0
        %441 = vmatpush1.bf16.msra.mxu0 %v410
        %442 = vmatprep.subr.bf16.mxu0 0
        %443 = vmatpush2.bf16.msra.mxu0 0
        %444 = vmatprep.subr.bf16.mxu0 0
        %445 = vmatpush2.bf16.msra.mxu0 0
        %446 = vmatprep.subr.bf16.mxu0 0
        %447 = vmatpush2.bf16.msra.mxu0 0
        %448 = vmatprep.subr.bf16.mxu0 0
        %449 = vmatpush2.bf16.msra.mxu0 0
        %450 = vmatprep.subr.bf16.mxu0 0
        %451 = vmatpush2.bf16.msra.mxu0 0
        %452 = vmatprep.subr.bf16.mxu0 0
        %453 = vmatpush2.bf16.msra.mxu0 0
        %454 = vmatprep.subr.bf16.mxu0 0
        %455 = vmatpush2.bf16.msra.mxu0 0
        %456 = vmatprep.subr.bf16.mxu0 0
        %457 = vmatpush2.bf16.msra.mxu0 0
        %458 = vmatprep.mubr.bf16.mxu0 0
        %459 = vmatmul.mubr.bf16.gmra.mxu0 %v256
        %v460 = vpop.f32.mrf.mxu0
        %v461 = vadd.f32 %v359, %v460
        %v462 = vpop.f32.mrf.mxu0
        %v463 = vpop.f32.mrf.mxu0
        %v464 = vadd.f32 %v362, %v463
        %v465 = vpop.f32.mrf.mxu0
        %466 = vmatprep.mubr.bf16.mxu0 0
        %467 = vmatmul.mubr.bf16.gmra.mxu0 %v375
        %v468 = vpop.f32.mrf.mxu0
        %v469 = vadd.f32 %v367, %v468
        %v470 = vpop.f32.mrf.mxu0
        %v471 = vpop.f32.mrf.mxu0
        %v472 = vadd.f32 %v370, %v471
        %v473 = vpop.f32.mrf.mxu0
        %474 = vdwg.mxu0
        %s475 = sadd.s32 %s202, 1
        %s476 = smul.u32 %s475, 4
        %s477 = smul.addr %s476, 4
        %s478 = scalar_lea.vmem %s192, %s477
        %v479 = vld [vmem:[%s478] sm:$0xf]
        %v480 = vld [vmem:[%s478 + $0x4] sm:$0xf]
        %v481 = vld [vmem:[%s478 + $0x8] sm:$0xf]
        %v482 = vld [vmem:[%s478 + $0xc] sm:$0x7]
        %s483 = scalar_lea.vmem %s1, 128
        %v484 = vld [vmem:[%s483] sm:$0xf]
        %v485 = vld [vmem:[%s483 + $0x4] sm:$0xf]
        %v486 = vld [vmem:[%s483 + $0x8] sm:$0xf]
        %v487 = vld [vmem:[%s483 + $0xc] sm:$0xf]
        %v488 = vld [vmem:[%s483 + $0x10] sm:$0xf]
        %v489 = vld [vmem:[%s483 + $0x14] sm:$0xf]
        %v490 = vld [vmem:[%s483 + $0x18] sm:$0xf]
        %v491 = vld [vmem:[%s483 + $0x1c] sm:$0xf]
        %v492 = vld [vmem:[%s483 + $0x20] sm:$0xf]
        %v493 = vld [vmem:[%s483 + $0x24] sm:$0xf]
        %v494 = vld [vmem:[%s483 + $0x28] sm:$0xf]
        %v495 = vld [vmem:[%s483 + $0x2c] sm:$0xf]
        %v496 = vld [vmem:[%s483 + $0x30] sm:$0xf]
        %v497 = vld [vmem:[%s483 + $0x34] sm:$0xf]
        %v498 = vld [vmem:[%s483 + $0x38] sm:$0xf]
        %v499 = vld [vmem:[%s483 + $0x3c] sm:$0xf]
        %v504 = vunpack.c.l.b16 %v479
        %v505 = vunpack.c.l.b16 %v480
        %v506 = vunpack.c.l.b16 %v481
        %v507 = vunpack.c.l.b16 %v482
        %v508 = vpack.c.b16 %v505, %v504
        %v509 = vpack.c.b16 %v507, %v506
        %v528 = vunpack.c.l.b16 %v484
        %v529 = vunpack.c.l.b16 %v485
        %v530 = vunpack.c.l.b16 %v486
        %v531 = vunpack.c.l.b16 %v487
        %v532 = vunpack.c.l.b16 %v488
        %v533 = vunpack.c.l.b16 %v489
        %v534 = vunpack.c.l.b16 %v490
        %v535 = vunpack.c.l.b16 %v491
        %v536 = vunpack.c.l.b16 %v492
        %v537 = vunpack.c.l.b16 %v493
        %v538 = vunpack.c.l.b16 %v494
        %v539 = vunpack.c.l.b16 %v495
        %v540 = vunpack.c.l.b16 %v496
        %v541 = vunpack.c.l.b16 %v497
        %v542 = vunpack.c.l.b16 %v498
        %v543 = vunpack.c.l.b16 %v499
        %v544 = vpack.c.b16 %v529, %v528
        %v545 = vpack.c.b16 %v531, %v530
        %v546 = vpack.c.b16 %v533, %v532
        %v547 = vpack.c.b16 %v535, %v534
        %v548 = vpack.c.b16 %v537, %v536
        %v549 = vpack.c.b16 %v539, %v538
        %v550 = vpack.c.b16 %v541, %v540
        %v551 = vpack.c.b16 %v543, %v542
        %560 = vmatprep.subr.bf16.mxu0 0
        %561 = vmatpush1.bf16.msra.mxu0 %v551
        %562 = vmatprep.subr.bf16.mxu0 0
        %563 = vmatpush1.bf16.msra.mxu0 %v550
        %564 = vmatprep.subr.bf16.mxu0 0
        %565 = vmatpush1.bf16.msra.mxu0 %v549
        %566 = vmatprep.subr.bf16.mxu0 0
        %567 = vmatpush1.bf16.msra.mxu0 %v548
        %568 = vmatprep.subr.bf16.mxu0 0
        %569 = vmatpush1.bf16.msra.mxu0 %v547
        %570 = vmatprep.subr.bf16.mxu0 0
        %571 = vmatpush1.bf16.msra.mxu0 %v546
        %572 = vmatprep.subr.bf16.mxu0 0
        %573 = vmatpush1.bf16.msra.mxu0 %v545
        %574 = vmatprep.subr.bf16.mxu0 0
        %575 = vmatpush1.bf16.msra.mxu0 %v544
        %576 = vmatprep.subr.bf16.mxu0 0
        %577 = vmatpush2.bf16.msra.mxu0 0
        %578 = vmatprep.subr.bf16.mxu0 0
        %579 = vmatpush2.bf16.msra.mxu0 0
        %580 = vmatprep.subr.bf16.mxu0 0
        %581 = vmatpush2.bf16.msra.mxu0 0
        %582 = vmatprep.subr.bf16.mxu0 0
        %583 = vmatpush2.bf16.msra.mxu0 0
        %584 = vmatprep.subr.bf16.mxu0 0
        %585 = vmatpush2.bf16.msra.mxu0 0
        %586 = vmatprep.subr.bf16.mxu0 0
        %587 = vmatpush2.bf16.msra.mxu0 0
        %588 = vmatprep.subr.bf16.mxu0 0
        %589 = vmatpush2.bf16.msra.mxu0 0
        %590 = vmatprep.subr.bf16.mxu0 0
        %591 = vmatpush2.bf16.msra.mxu0 0
        %592 = vmatprep.mubr.bf16.mxu0 0
        %593 = vmatmul.mubr.bf16.gmra.mxu0 %v508
        %v594 = vpop.f32.mrf.mxu0
        %v595 = vadd.f32 0.0, %v594
        %v596 = vpop.f32.mrf.mxu0
        %v597 = vpop.f32.mrf.mxu0
        %v598 = vadd.f32 0.0, %v597
        %v599 = vpop.f32.mrf.mxu0
        %600 = vmatprep.mubr.bf16.mxu0 0
        %601 = vmatmul.mubr.bf16.gmra.mxu0 %v509
        %v602 = vpop.f32.mrf.mxu0
        %v603 = vadd.f32 0.0, %v602
        %v604 = vpop.f32.mrf.mxu0
        %v605 = vpop.f32.mrf.mxu0
        %v606 = vadd.f32 0.0, %v605
        %v607 = vpop.f32.mrf.mxu0
        %608 = vdwg.mxu0
        %v609 = vadd.f32 %v461, %v595
        %v610 = vadd.f32 %v464, %v598
        %v611 = vadd.f32 %v469, %v603
        %v612 = vadd.f32 %v472, %v606
        %v613 = vld [vmem:[%s478 + $0xc] sm:$0xf]
        %s614 = scalar_lea.vmem %s1, 192
        %v615 = vld [vmem:[%s614] sm:$0xf]
        %v616 = vld [vmem:[%s614 + $0x4] sm:$0xf]
        %v617 = vld [vmem:[%s614 + $0x8] sm:$0xf]
        %v618 = vld [vmem:[%s614 + $0xc] sm:$0xf]
        %v619 = vld [vmem:[%s614 + $0x10] sm:$0xf]
        %v620 = vld [vmem:[%s614 + $0x14] sm:$0xf]
        %v621 = vld [vmem:[%s614 + $0x18] sm:$0xf]
        %v622 = vld [vmem:[%s614 + $0x1c] sm:$0xf]
        %v623 = vld [vmem:[%s614 + $0x20] sm:$0xf]
        %v624 = vld [vmem:[%s614 + $0x24] sm:$0xf]
        %v625 = vld [vmem:[%s614 + $0x28] sm:$0xf]
        %v626 = vld [vmem:[%s614 + $0x2c] sm:$0xf]
        %v627 = vld [vmem:[%s614 + $0x30] sm:$0xf]
        %v628 = vld [vmem:[%s614 + $0x34] sm:$0xf]
        %v629 = vld [vmem:[%s614 + $0x38] sm:$0xf]
        %v630 = vld [vmem:[%s614 + $0x3c] sm:$0xf]
        %v632 = vunpack.c.l.b16 %v613
        %v633 = vpack.c.b16 %v632, %v506
        %v635 = vshrl.u32 %v508, 16
        %v637 = vshll.u32 %v508, 16
        %v639 = vrot.slane %v637, 1
        %v640 = vor.u32 %v635, %v639
        %v642 = vshll.u32 %v633, 16
        %v644 = vrot.slane %v642, 1
        %v645 = vsel %vm258, %v640, %v644
        %v646 = vshrl.u32 %v633, 16
        %v648 = vor.u32 %v646, %v644
        %v667 = vunpack.c.l.b16 %v615
        %v668 = vunpack.c.l.b16 %v616
        %v669 = vunpack.c.l.b16 %v617
        %v670 = vunpack.c.l.b16 %v618
        %v671 = vunpack.c.l.b16 %v619
        %v672 = vunpack.c.l.b16 %v620
        %v673 = vunpack.c.l.b16 %v621
        %v674 = vunpack.c.l.b16 %v622
        %v675 = vunpack.c.l.b16 %v623
        %v676 = vunpack.c.l.b16 %v624
        %v677 = vunpack.c.l.b16 %v625
        %v678 = vunpack.c.l.b16 %v626
        %v679 = vunpack.c.l.b16 %v627
        %v680 = vunpack.c.l.b16 %v628
        %v681 = vunpack.c.l.b16 %v629
        %v682 = vunpack.c.l.b16 %v630
        %v683 = vpack.c.b16 %v668, %v667
        %v684 = vpack.c.b16 %v670, %v669
        %v685 = vpack.c.b16 %v672, %v671
        %v686 = vpack.c.b16 %v674, %v673
        %v687 = vpack.c.b16 %v676, %v675
        %v688 = vpack.c.b16 %v678, %v677
        %v689 = vpack.c.b16 %v680, %v679
        %v690 = vpack.c.b16 %v682, %v681
        %699 = vmatprep.subr.bf16.mxu0 0
        %700 = vmatpush1.bf16.msra.mxu0 %v690
        %701 = vmatprep.subr.bf16.mxu0 0
        %702 = vmatpush1.bf16.msra.mxu0 %v689
        %703 = vmatprep.subr.bf16.mxu0 0
        %704 = vmatpush1.bf16.msra.mxu0 %v688
        %705 = vmatprep.subr.bf16.mxu0 0
        %706 = vmatpush1.bf16.msra.mxu0 %v687
        %707 = vmatprep.subr.bf16.mxu0 0
        %708 = vmatpush1.bf16.msra.mxu0 %v686
        %709 = vmatprep.subr.bf16.mxu0 0
        %710 = vmatpush1.bf16.msra.mxu0 %v685
        %711 = vmatprep.subr.bf16.mxu0 0
        %712 = vmatpush1.bf16.msra.mxu0 %v684
        %713 = vmatprep.subr.bf16.mxu0 0
        %714 = vmatpush1.bf16.msra.mxu0 %v683
        %715 = vmatprep.subr.bf16.mxu0 0
        %716 = vmatpush2.bf16.msra.mxu0 0
        %717 = vmatprep.subr.bf16.mxu0 0
        %718 = vmatpush2.bf16.msra.mxu0 0
        %719 = vmatprep.subr.bf16.mxu0 0
        %720 = vmatpush2.bf16.msra.mxu0 0
        %721 = vmatprep.subr.bf16.mxu0 0
        %722 = vmatpush2.bf16.msra.mxu0 0
        %723 = vmatprep.subr.bf16.mxu0 0
        %724 = vmatpush2.bf16.msra.mxu0 0
        %725 = vmatprep.subr.bf16.mxu0 0
        %726 = vmatpush2.bf16.msra.mxu0 0
        %727 = vmatprep.subr.bf16.mxu0 0
        %728 = vmatpush2.bf16.msra.mxu0 0
        %729 = vmatprep.subr.bf16.mxu0 0
        %730 = vmatpush2.bf16.msra.mxu0 0
        %731 = vmatprep.mubr.bf16.mxu0 0
        %732 = vmatmul.mubr.bf16.gmra.mxu0 %v645
        %v733 = vpop.f32.mrf.mxu0
        %v734 = vadd.f32 0.0, %v733
        %v735 = vpop.f32.mrf.mxu0
        %v736 = vpop.f32.mrf.mxu0
        %v737 = vadd.f32 0.0, %v736
        %v738 = vpop.f32.mrf.mxu0
        %739 = vmatprep.mubr.bf16.mxu0 0
        %740 = vmatmul.mubr.bf16.gmra.mxu0 %v648
        %v741 = vpop.f32.mrf.mxu0
        %v742 = vadd.f32 0.0, %v741
        %v743 = vpop.f32.mrf.mxu0
        %v744 = vpop.f32.mrf.mxu0
        %v745 = vadd.f32 0.0, %v744
        %v746 = vpop.f32.mrf.mxu0
        %747 = vdwg.mxu0
        %v748 = vadd.f32 %v609, %v734
        %v749 = vadd.f32 %v610, %v737
        %v750 = vadd.f32 %v611, %v742
        %v751 = vadd.f32 %v612, %v745
        %v753 = vlaneseq
        %v754 = vshrl.u32 %v753, 7
        %v755 = vsub.s32 0, %v754
        %v756 = vrot.slane %v199, %v755
        %v758 = vmul.f32 %v748, %v756
        %v759 = vmul.f32 %v749, %v756
        %v760 = vmul.f32 %v750, %v756
        %v761 = vmul.f32 %v751, %v756
        %v763 = vlaneseq
        %v764 = vshrl.u32 %v763, 7
        %v765 = vsub.s32 0, %v764
        %v766 = vrot.slane %v200, %v765
        %v768 = vadd.f32 %v758, %v766
        %v769 = vadd.f32 %v759, %v766
        %v770 = vadd.f32 %v760, %v766
        %v771 = vadd.f32 %v761, %v766
        %v772 = vmax.f32 %v768, 0.0
        %v773 = vmax.f32 %v769, 0.0
        %v774 = vmax.f32 %v770, 0.0
        %v775 = vmax.f32 %v771, 0.0
        %v776 = vpack.c.bf16 %v773, %v772
        %v777 = vpack.c.bf16 %v775, %v774
        %v780 = vunpack.c.l.b16 %v776
        %v781 = vunpack.c.h.b16 %v776
        %v782 = vunpack.c.l.b16 %v777
        %v783 = vunpack.c.h.b16 %v777
        %v784 = vpack.c.b16 %v780, %v780
        %v785 = vpack.c.b16 %v781, %v781
        %v786 = vpack.c.b16 %v782, %v782
        %v787 = vpack.c.b16 %v783, %v783
        %s792 = smul.addr %s207, 4
        %s793 = scalar_lea.vmem %s197, %s792
        %vm794 = vcmask 519168
        %795 = vst.msk [vmem:[%s793] sm:$0xf] %vm794, %v784
        %796 = vst.msk [vmem:[%s793 + $0x4] sm:$0xf] %vm794, %v785
        %797 = vst.msk [vmem:[%s793 + $0x8] sm:$0xf] %vm794, %v786
        %vm798 = vcmask 518144
        %799 = vst.msk [vmem:[%s793 + $0xc] sm:$0x7] %vm798, %v787
      $region41: #{generator_deconv_pallas.16} parent=35 // loop_footer
        %s206 = sadd.s32 1, %s202
      $region42: #{generator_deconv_pallas.16} parent=35 // loop_footer_branch
        %201 = sbr.rel target = $region38
      $region43: #{generator_deconv_pallas.16} parent=35 // loop_exit
        _
      %p800 = scmp.lt.s32.totalorder %s15, 1
      %s801 = scalar_select %p800, %s15, 1
      %s802 = smul.addr %s801, 88
      %s803 = smul.addr %s802, 4
      %s804 = scalar_lea.vmem %s4, %s803
      // Predicated region
      $region44: #{generator_deconv_pallas.16} parent=35 // pred_check
        %p805 = pneg %p122
      $region45: #{generator_deconv_pallas.16} parent=35 // pred_check_branch
        %807 = sbr.rel (%p805) target = $region47
      $region46: #{generator_deconv_pallas.16} parent=35 // pred_region
        _
      $region47: #{generator_deconv_pallas.16} parent=35 // pred_fallthru
        _
    $region36: #{generator_deconv_pallas.16} parent=5 // pred_fallthru
      _
    %p808 = scmp.le.s32.totalorder 2, %s10
    // Predicated region
    $region48: #{generator_deconv_pallas.16} parent=5 // pred_check
      %p809 = pneg %p808
    $region49: #{generator_deconv_pallas.16} parent=5 // pred_check_branch
      %811 = sbr.rel (%p809) target = $region51
    $region50: #{generator_deconv_pallas.16} parent=5 // pred_region
      %s812 = ssub.s32 %s10, 2
      // Predicated region
      $region52: #{generator_deconv_pallas.16} parent=50 // pred_check
        %p813 = pneg %p128
      $region53: #{generator_deconv_pallas.16} parent=50 // pred_check_branch
        %815 = sbr.rel (%p813) target = $region55
      $region54: #{generator_deconv_pallas.16} parent=50 // pred_region
        %p816 = scmp.lt.s32.totalorder %s16, 1
        %s817 = scalar_select %p816, %s16, 1
        %s818 = smul.addr %s817, 88
        %s819 = smul.addr %s818, 4
        %s820 = scalar_lea.vmem %s4, %s819
      $region55: #{generator_deconv_pallas.16} parent=50 // pred_fallthru
        _
    $region51: #{generator_deconv_pallas.16} parent=5 // pred_fallthru
      _
  $region6: #{generator_deconv_pallas.16} parent=0 // loop_footer
    %s14 = sadd.s32 1, %s10
  $region7: #{generator_deconv_pallas.16} parent=0 // loop_footer_branch
    %9 = sbr.rel target = $region3
  $region8: #{generator_deconv_pallas.16} parent=0 // loop_exit
    _

// kernel: generator_deconv_pallas.19
$region0: #{generator_deconv_pallas.19}
  #allocation0 [shape = 'u32[]', space=smem, size = 0x4, offset = 0x4, fixed_abs, tag = 'smem constant byte address 0x4 - core index']
  #allocation1 [shape = 'u32[144,128]{1,0:T(1,128)}', space=vmem, size = 0x12000, scoped, tag = 'internal scratch']
  %s0 = inlined_call_operand.vmem [shape: bf16[2,46,61,64], index: 0, kind: input, shape index: {}]
  %s1 = inlined_call_operand.vmem [shape: bf16[4,64,32], index: 1, kind: input, shape index: {}]
  %s2 = inlined_call_operand.vmem [shape: f32[1,32], index: 2, kind: input, shape index: {}]
  %s3 = inlined_call_operand.vmem [shape: f32[1,32], index: 3, kind: input, shape index: {}]
  %s4 = inlined_call_operand.vmem [shape: bf16[2,45,60,32], index: 4, kind: output, shape index: {}]
  %s5 = sld [smem:[#allocation0]]
  $region56: #{generator_deconv_pallas.19} parent=0
    _
  %s7 = ssub.s32 1, %s5
  %s8 = scalar_select 0, %s7, %s5
  loop: start=0, step=1, limit=4
  $region2: #{generator_deconv_pallas.19} parent=0 // loop_pre_header
    _
  $region3: #{generator_deconv_pallas.19} parent=0 // loop_header
    %s10 = sphi 0, %s14
    %p11 = scmp.ge.s32.totalorder %s10, 4
    %s20 = sphi 0, %s22
    %s23 = sphi 0, %s20
    %s24 = sphi 0, %s23
    %s40 = sphi 0, %s24
    %s44 = sphi 0, %s44
    %s46 = sphi 0, %s44
    %s47 = sphi 0, %s46
    %s61 = sphi 0, %s47
    %s65 = sphi 0, %s65
    %s67 = sphi 0, %s65
    %s68 = sphi 0, %s67
    %s82 = sphi 0, %s68
    %s86 = sphi 0, %s86
    %s88 = sphi 0, %s86
    %s89 = sphi 0, %s88
    %s103 = sphi 0, %s89
    %s109 = sphi 0, %s111
    %s112 = sphi 0, %s109
    %s113 = sphi 0, %s112
    %s129 = sphi 0, %s113
  $region4: #{generator_deconv_pallas.19} parent=0 // loop_header_branch
    %13 = sbr.rel (%p11) target = $region8
  $region5: #{generator_deconv_pallas.19} parent=0 // loop_body
    %s15 = ssub.s32 %s10, 1
    %s16 = ssub.s32 %s10, 2
    %s17 = sadd.s32 %s10, 1
    %s18 = ssub.s32 %s10, %s17
    %p19 = scmp.eq.s32.totalorder %s18, 0
    %s21 = sadd.s32 %s20, 1
    %s22 = scalar_select %p19, %s20, %s21
    %p25 = pneg %p19
    %p26 = scmp.eq.s32.totalorder %s10, 1
    %p27 = por %p25, %p26
    %p28 = scmp.ne.s32.totalorder %s20, %s23
    %p29 = scmp.eq.s32.totalorder %s10, 0
    %p30 = por %p28, %p29
    %p31 = scmp.ne.s32.totalorder %s20, %s23
    %p32 = scmp.eq.s32.totalorder %s15, 1
    %p33 = por %p31, %p32
    %p34 = scmp.ne.s32.totalorder %s23, %s24
    %p35 = scmp.eq.s32.totalorder %s15, 0
    %p36 = por %p34, %p35
    %p37 = scmp.ne.s32.totalorder %s23, %s24
    %p38 = scmp.eq.s32.totalorder %s16, 1
    %p39 = por %p37, %p38
    %p41 = scmp.ne.s32.totalorder %s24, %s40
    %p42 = scmp.eq.s32.totalorder %s16, 0
    %p43 = por %p41, %p42
    %s45 = sadd.s32 %s44, 1
    %p48 = scmp.eq.s32.totalorder %s10, 1
    %p49 = scmp.ne.s32.totalorder %s44, %s46
    %p50 = scmp.eq.s32.totalorder %s10, 0
    %p51 = por %p49, %p50
    %p52 = scmp.ne.s32.totalorder %s44, %s46
    %p53 = scmp.eq.s32.totalorder %s15, 1
    %p54 = por %p52, %p53
    %p55 = scmp.ne.s32.totalorder %s46, %s47
    %p56 = scmp.eq.s32.totalorder %s15, 0
    %p57 = por %p55, %p56
    %p58 = scmp.ne.s32.totalorder %s46, %s47
    %p59 = scmp.eq.s32.totalorder %s16, 1
    %p60 = por %p58, %p59
    %p62 = scmp.ne.s32.totalorder %s47, %s61
    %p63 = scmp.eq.s32.totalorder %s16, 0
    %p64 = por %p62, %p63
    %s66 = sadd.s32 %s65, 1
    %p69 = scmp.eq.s32.totalorder %s10, 1
    %p70 = scmp.ne.s32.totalorder %s65, %s67
    %p71 = scmp.eq.s32.totalorder %s10, 0
    %p72 = por %p70, %p71
    %p73 = scmp.ne.s32.totalorder %s65, %s67
    %p74 = scmp.eq.s32.totalorder %s15, 1
    %p75 = por %p73, %p74
    %p76 = scmp.ne.s32.totalorder %s67, %s68
    %p77 = scmp.eq.s32.totalorder %s15, 0
    %p78 = por %p76, %p77
    %p79 = scmp.ne.s32.totalorder %s67, %s68
    %p80 = scmp.eq.s32.totalorder %s16, 1
    %p81 = por %p79, %p80
    %p83 = scmp.ne.s32.totalorder %s68, %s82
    %p84 = scmp.eq.s32.totalorder %s16, 0
    %p85 = por %p83, %p84
    %s87 = sadd.s32 %s86, 1
    %p90 = scmp.eq.s32.totalorder %s10, 1
    %p91 = scmp.ne.s32.totalorder %s86, %s88
    %p92 = scmp.eq.s32.totalorder %s10, 0
    %p93 = por %p91, %p92
    %p94 = scmp.ne.s32.totalorder %s86, %s88
    %p95 = scmp.eq.s32.totalorder %s15, 1
    %p96 = por %p94, %p95
    %p97 = scmp.ne.s32.totalorder %s88, %s89
    %p98 = scmp.eq.s32.totalorder %s15, 0
    %p99 = por %p97, %p98
    %p100 = scmp.ne.s32.totalorder %s88, %s89
    %p101 = scmp.eq.s32.totalorder %s16, 1
    %p102 = por %p100, %p101
    %p104 = scmp.ne.s32.totalorder %s89, %s103
    %p105 = scmp.eq.s32.totalorder %s16, 0
    %p106 = por %p104, %p105
    %s107 = ssub.s32 %s10, %s17
    %p108 = scmp.eq.s32.totalorder %s107, 0
    %s110 = sadd.s32 %s109, 1
    %s111 = scalar_select %p108, %s109, %s110
    %p114 = pneg %p108
    %p115 = scmp.eq.s32.totalorder %s10, 1
    %p116 = por %p114, %p115
    %p117 = scmp.ne.s32.totalorder %s109, %s112
    %p118 = scmp.eq.s32.totalorder %s10, 0
    %p119 = por %p117, %p118
    %p120 = scmp.ne.s32.totalorder %s109, %s112
    %p121 = scmp.eq.s32.totalorder %s15, 1
    %p122 = por %p120, %p121
    %p123 = scmp.ne.s32.totalorder %s112, %s113
    %p124 = scmp.eq.s32.totalorder %s15, 0
    %p125 = por %p123, %p124
    %p126 = scmp.ne.s32.totalorder %s112, %s113
    %p127 = scmp.eq.s32.totalorder %s16, 1
    %p128 = por %p126, %p127
    %p130 = scmp.ne.s32.totalorder %s113, %s129
    %p131 = scmp.eq.s32.totalorder %s16, 0
    %p132 = por %p130, %p131
    %p133 = scmp.le.s32.totalorder 1, %s10
    %p134 = scmp.lt.s32.totalorder %s10, 3
    %p135 = pnand %p133, %p134
    %p136 = pneg %p135
    // Predicated region
    $region9: #{generator_deconv_pallas.19} parent=5 // pred_check
      _
    $region10: #{generator_deconv_pallas.19} parent=5 // pred_check_branch
      %138 = sbr.rel (%p135) target = $region12
    $region11: #{generator_deconv_pallas.19} parent=5 // pred_region
      %s139 = ssub.s32 %s10, 1
      // Predicated region
      $region13: #{generator_deconv_pallas.19} parent=11 // pred_check
        %p140 = pneg %p57
      $region14: #{generator_deconv_pallas.19} parent=11 // pred_check_branch
        %142 = sbr.rel (%p140) target = $region16
      $region15: #{generator_deconv_pallas.19} parent=11 // pred_region
        _
      $region16: #{generator_deconv_pallas.19} parent=11 // pred_fallthru
        _
      // Predicated region
      $region17: #{generator_deconv_pallas.19} parent=11 // pred_check
        %p143 = pneg %p78
      $region18: #{generator_deconv_pallas.19} parent=11 // pred_check_branch
        %145 = sbr.rel (%p143) target = $region20
      $region19: #{generator_deconv_pallas.19} parent=11 // pred_region
        _
      $region20: #{generator_deconv_pallas.19} parent=11 // pred_fallthru
        _
      // Predicated region
      $region21: #{generator_deconv_pallas.19} parent=11 // pred_check
        %p146 = pneg %p99
      $region22: #{generator_deconv_pallas.19} parent=11 // pred_check_branch
        %148 = sbr.rel (%p146) target = $region24
      $region23: #{generator_deconv_pallas.19} parent=11 // pred_region
        _
      $region24: #{generator_deconv_pallas.19} parent=11 // pred_fallthru
        _
    $region12: #{generator_deconv_pallas.19} parent=5 // pred_fallthru
      _
    %p149 = scmp.lt.s32.totalorder %s10, 2
    // Predicated region
    $region25: #{generator_deconv_pallas.19} parent=5 // pred_check
      %p150 = pneg %p149
    $region26: #{generator_deconv_pallas.19} parent=5 // pred_check_branch
      %152 = sbr.rel (%p150) target = $region28
    $region27: #{generator_deconv_pallas.19} parent=5 // pred_region
      // Predicated region
      $region29: #{generator_deconv_pallas.19} parent=27 // pred_check
        %p153 = pneg %p30
      $region30: #{generator_deconv_pallas.19} parent=27 // pred_check_branch
        %155 = sbr.rel (%p153) target = $region32
      $region31: #{generator_deconv_pallas.19} parent=27 // pred_region
        %p156 = scmp.lt.s32.totalorder %s10, 1
        %s157 = scalar_select %p156, %s10, 1
        %s158 = smul.addr %s157, 368
        %s159 = smul.addr %s158, 4
        %s160 = scalar_lea.vmem %s0, %s159
      $region32: #{generator_deconv_pallas.19} parent=27 // pred_fallthru
        _
    $region28: #{generator_deconv_pallas.19} parent=5 // pred_fallthru
      _
    %p161 = scmp.le.s32.totalorder 1, %s10
    %p162 = scmp.lt.s32.totalorder %s10, 3
    %p163 = pnand %p161, %p162
    %p164 = pneg %p163
    // Predicated region
    $region33: #{generator_deconv_pallas.19} parent=5 // pred_check
      _
    $region34: #{generator_deconv_pallas.19} parent=5 // pred_check_branch
      %166 = sbr.rel (%p163) target = $region36
    $region35: #{generator_deconv_pallas.19} parent=5 // pred_region
      %s167 = ssub.s32 %s10, 1
      %p168 = scmp.lt.s32.totalorder %s15, 1
      %s169 = scalar_select %p168, %s15, 1
      %s170 = smul.addr %s169, 368
      %s171 = smul.addr %s170, 4
      %s172 = scalar_lea.vmem %s0, %s171
      %p173 = pneg %p36
      %p174 = pneg %p33
      %p175 = pneg %p57
      %p176 = pneg %p54
      %p177 = pneg %p78
      %p178 = pneg %p75
      %p179 = pneg %p99
      %p180 = pneg %p96
      %p181 = pneg %p125
      %p182 = pneg %p122
      %p183 = scmp.lt.s32.totalorder %s15, 1
      %s184 = scalar_select %p183, %s15, 1
      %s185 = smul.addr %s184, 360
      %s186 = smul.addr %s185, 4
      %s187 = scalar_lea.vmem %s4, %s186
      %p188 = scmp.lt.s32.totalorder %s15, 1
      %s189 = scalar_select %p188, %s15, 1
      %s190 = smul.addr %s189, 368
      %s191 = smul.addr %s190, 4
      %s192 = scalar_lea.vmem %s0, %s191
      %p193 = scmp.lt.s32.totalorder %s15, 1
      %s194 = scalar_select %p193, %s15, 1
      %s195 = smul.addr %s194, 360
      %s196 = smul.addr %s195, 4
      %s197 = scalar_lea.vmem %s4, %s196
      %v199 = vld [vmem:[%s2] sm:$0x1]
      %v200 = vld [vmem:[%s3] sm:$0x1]
      loop: start=0, step=1, limit=45
      $region37: #{generator_deconv_pallas.19} parent=35 // loop_pre_header
        _
      $region38: #{generator_deconv_pallas.19} parent=35 // loop_header
        %s202 = sphi 0, %s206
        %p203 = scmp.ge.s32.totalorder %s202, 45
      $region39: #{generator_deconv_pallas.19} parent=35 // loop_header_branch
        %205 = sbr.rel (%p203) target = $region43
      $region40: #{generator_deconv_pallas.19} parent=35 // loop_body
        %s207 = smul.u32 %s202, 8
        %s208 = smul.addr %s207, 4
        %s209 = scalar_lea.vmem %s192, %s208
        %v210 = vld [vmem:[%s209] sm:$0xf]
        %v211 = vld [vmem:[%s209 + $0x4] sm:$0xf]
        %v212 = vld [vmem:[%s209 + $0x8] sm:$0xf]
        %v213 = vld [vmem:[%s209 + $0xc] sm:$0xf]
        %v214 = vld [vmem:[%s209 + $0x10] sm:$0xf]
        %v215 = vld [vmem:[%s209 + $0x14] sm:$0xf]
        %v216 = vld [vmem:[%s209 + $0x18] sm:$0xf]
        %v217 = vld [vmem:[%s209 + $0x1c] sm:$0x3]
        %v218 = vld [vmem:[%s1] sm:$0xf]
        %v219 = vld [vmem:[%s1 + $0x4] sm:$0xf]
        %v220 = vld [vmem:[%s1 + $0x8] sm:$0xf]
        %v221 = vld [vmem:[%s1 + $0xc] sm:$0xf]
        %v222 = vld [vmem:[%s1 + $0x10] sm:$0xf]
        %v223 = vld [vmem:[%s1 + $0x14] sm:$0xf]
        %v224 = vld [vmem:[%s1 + $0x18] sm:$0xf]
        %v225 = vld [vmem:[%s1 + $0x1c] sm:$0xf]
        %v226 = vld [vmem:[%s209 + $0x1c] sm:$0x7]
        %s227 = scalar_lea.vmem %s1, 32
        %v228 = vld [vmem:[%s227] sm:$0xf]
        %v229 = vld [vmem:[%s227 + $0x4] sm:$0xf]
        %v230 = vld [vmem:[%s227 + $0x8] sm:$0xf]
        %v231 = vld [vmem:[%s227 + $0xc] sm:$0xf]
        %v232 = vld [vmem:[%s227 + $0x10] sm:$0xf]
        %v233 = vld [vmem:[%s227 + $0x14] sm:$0xf]
        %v234 = vld [vmem:[%s227 + $0x18] sm:$0xf]
        %v235 = vld [vmem:[%s227 + $0x1c] sm:$0xf]
        %v244 = vunpack.c.l.b16 %v210
        %v245 = vunpack.c.l.b16 %v211
        %v246 = vunpack.c.l.b16 %v212
        %v247 = vunpack.c.l.b16 %v213
        %v248 = vunpack.c.l.b16 %v214
        %v249 = vunpack.c.l.b16 %v215
        %v250 = vunpack.c.l.b16 %v216
        %v251 = vunpack.c.l.b16 %v226
        %v252 = vpack.c.b16 %v245, %v244
        %v253 = vpack.c.b16 %v247, %v246
        %v254 = vpack.c.b16 %v249, %v248
        %v255 = vpack.c.b16 %v251, %v250
        %vm256 = vsmask.f32 7424
        %v258 = vshrl.u32 %v252, 16
        %v260 = vshll.u32 %v252, 16
        %v262 = vrot.slane %v260, 1
        %v263 = vor.u32 %v258, %v262
        %v265 = vshll.u32 %v253, 16
        %v267 = vrot.slane %v265, 1
        %v268 = vsel %vm256, %v263, %v267
        %v269 = vshrl.u32 %v253, 16
        %v271 = vor.u32 %v269, %v267
        %v273 = vshll.u32 %v254, 16
        %v275 = vrot.slane %v273, 1
        %v276 = vsel %vm256, %v271, %v275
        %v277 = vshrl.u32 %v254, 16
        %v279 = vor.u32 %v277, %v275
        %v281 = vshll.u32 %v255, 16
        %v283 = vrot.slane %v281, 1
        %v284 = vsel %vm256, %v279, %v283
        %v285 = vshrl.u32 %v255, 16
        %v287 = vor.u32 %v285, %v283
        %v296 = vunpack.c.l.b16 %v228
        %v297 = vunpack.c.l.b16 %v229
        %v298 = vunpack.c.l.b16 %v230
        %v299 = vunpack.c.l.b16 %v231
        %v300 = vunpack.c.l.b16 %v232
        %v301 = vunpack.c.l.b16 %v233
        %v302 = vunpack.c.l.b16 %v234
        %v303 = vunpack.c.l.b16 %v235
        %v304 = vpack.c.b16 %v297, %v296
        %v305 = vpack.c.b16 %v299, %v298
        %v306 = vpack.c.b16 %v301, %v300
        %v307 = vpack.c.b16 %v303, %v302
        %vm312 = vcmask 523264
        %v314 = vsel %vm312, %v268, 0
        %v317 = vsel %vm312, %v276, 0
        %v320 = vsel %vm312, %v284, 0
        %v323 = vsel %vm312, %v287, 0
        %325 = vmatprep.subr.bf16.mxu0 0
        %326 = vmatpush1.bf16.msra.mxu0 0
        %327 = vmatprep.subr.bf16.mxu0 0
        %328 = vmatpush1.bf16.msra.mxu0 0
        %329 = vmatprep.subr.bf16.mxu0 0
        %330 = vmatpush1.bf16.msra.mxu0 0
        %331 = vmatprep.subr.bf16.mxu0 0
        %332 = vmatpush1.bf16.msra.mxu0 0
        %333 = vmatprep.subr.bf16.mxu0 0
        %334 = vmatpush1.bf16.msra.mxu0 %v307
        %335 = vmatprep.subr.bf16.mxu0 0
        %336 = vmatpush1.bf16.msra.mxu0 %v306
        %337 = vmatprep.subr.bf16.mxu0 0
        %338 = vmatpush1.bf16.msra.mxu0 %v305
        %339 = vmatprep.subr.bf16.mxu0 0
        %340 = vmatpush1.bf16.msra.mxu0 %v304
        %341 = vmatprep.subr.bf16.mxu0 0
        %342 = vmatpush2.bf16.msra.mxu0 0
        %343 = vmatprep.subr.bf16.mxu0 0
        %344 = vmatpush2.bf16.msra.mxu0 0
        %345 = vmatprep.subr.bf16.mxu0 0
        %346 = vmatpush2.bf16.msra.mxu0 0
        %347 = vmatprep.subr.bf16.mxu0 0
        %348 = vmatpush2.bf16.msra.mxu0 0
        %349 = vmatprep.subr.bf16.mxu0 0
        %350 = vmatpush2.bf16.msra.mxu0 0
        %351 = vmatprep.subr.bf16.mxu0 0
        %352 = vmatpush2.bf16.msra.mxu0 0
        %353 = vmatprep.subr.bf16.mxu0 0
        %354 = vmatpush2.bf16.msra.mxu0 0
        %355 = vmatprep.subr.bf16.mxu0 0
        %356 = vmatpush2.bf16.msra.mxu0 0
        %357 = vmatprep.mubr.bf16.mxu0 0
        %358 = vmatmul.mubr.bf16.gmra.mxu0 %v314
        %v359 = vpop.f32.mrf.mxu0
        %v360 = vadd.f32 0.0, %v359
        %v361 = vpop.f32.mrf.mxu0
        %v362 = vpop.f32.mrf.mxu0
        %v363 = vadd.f32 0.0, %v362
        %v364 = vpop.f32.mrf.mxu0
        %365 = vmatprep.mubr.bf16.mxu0 0
        %366 = vmatmul.mubr.bf16.gmra.mxu0 %v317
        %v367 = vpop.f32.mrf.mxu0
        %v368 = vadd.f32 0.0, %v367
        %v369 = vpop.f32.mrf.mxu0
        %v370 = vpop.f32.mrf.mxu0
        %v371 = vadd.f32 0.0, %v370
        %v372 = vpop.f32.mrf.mxu0
        %373 = vmatprep.mubr.bf16.mxu0 0
        %374 = vmatmul.mubr.bf16.gmra.mxu0 %v320
        %v375 = vpop.f32.mrf.mxu0
        %v376 = vadd.f32 0.0, %v375
        %v377 = vpop.f32.mrf.mxu0
        %v378 = vpop.f32.mrf.mxu0
        %v379 = vadd.f32 0.0, %v378
        %v380 = vpop.f32.mrf.mxu0
        %381 = vmatprep.mubr.bf16.mxu0 0
        %382 = vmatmul.mubr.bf16.gmra.mxu0 %v323
        %v383 = vpop.f32.mrf.mxu0
        %v384 = vadd.f32 0.0, %v383
        %v385 = vpop.f32.mrf.mxu0
        %v386 = vpop.f32.mrf.mxu0
        %v387 = vadd.f32 0.0, %v386
        %v388 = vpop.f32.mrf.mxu0
        %389 = vdwg.mxu0
        %v391 = vunpack.c.l.b16 %v217
        %v392 = vpack.c.b16 %v391, %v250
        %v401 = vunpack.c.l.b16 %v218
        %v402 = vunpack.c.l.b16 %v219
        %v403 = vunpack.c.l.b16 %v220
        %v404 = vunpack.c.l.b16 %v221
        %v405 = vunpack.c.l.b16 %v222
        %v406 = vunpack.c.l.b16 %v223
        %v407 = vunpack.c.l.b16 %v224
        %v408 = vunpack.c.l.b16 %v225
        %v409 = vpack.c.b16 %v402, %v401
        %v410 = vpack.c.b16 %v404, %v403
        %v411 = vpack.c.b16 %v406, %v405
        %v412 = vpack.c.b16 %v408, %v407
        %v417 = vsel %vm312, %v252, 0
        %v419 = vsel %vm312, %v253, 0
        %v421 = vsel %vm312, %v254, 0
        %v424 = vsel %vm312, %v392, 0
        %426 = vmatprep.subr.bf16.mxu0 0
        %427 = vmatpush1.bf16.msra.mxu0 0
        %428 = vmatprep.subr.bf16.mxu0 0
        %429 = vmatpush1.bf16.msra.mxu0 0
        %430 = vmatprep.subr.bf16.mxu0 0
        %431 = vmatpush1.bf16.msra.mxu0 0
        %432 = vmatprep.subr.bf16.mxu0 0
        %433 = vmatpush1.bf16.msra.mxu0 0
        %434 = vmatprep.subr.bf16.mxu0 0
        %435 = vmatpush1.bf16.msra.mxu0 %v412
        %436 = vmatprep.subr.bf16.mxu0 0
        %437 = vmatpush1.bf16.msra.mxu0 %v411
        %438 = vmatprep.subr.bf16.mxu0 0
        %439 = vmatpush1.bf16.msra.mxu0 %v410
        %440 = vmatprep.subr.bf16.mxu0 0
        %441 = vmatpush1.bf16.msra.mxu0 %v409
        %442 = vmatprep.subr.bf16.mxu0 0
        %443 = vmatpush2.bf16.msra.mxu0 0
        %444 = vmatprep.subr.bf16.mxu0 0
        %445 = vmatpush2.bf16.msra.mxu0 0
        %446 = vmatprep.subr.bf16.mxu0 0
        %447 = vmatpush2.bf16.msra.mxu0 0
        %448 = vmatprep.subr.bf16.mxu0 0
        %449 = vmatpush2.bf16.msra.mxu0 0
        %450 = vmatprep.subr.bf16.mxu0 0
        %451 = vmatpush2.bf16.msra.mxu0 0
        %452 = vmatprep.subr.bf16.mxu0 0
        %453 = vmatpush2.bf16.msra.mxu0 0
        %454 = vmatprep.subr.bf16.mxu0 0
        %455 = vmatpush2.bf16.msra.mxu0 0
        %456 = vmatprep.subr.bf16.mxu0 0
        %457 = vmatpush2.bf16.msra.mxu0 0
        %458 = vmatprep.mubr.bf16.mxu0 0
        %459 = vmatmul.mubr.bf16.gmra.mxu0 %v417
        %v460 = vpop.f32.mrf.mxu0
        %v461 = vadd.f32 %v360, %v460
        %v462 = vpop.f32.mrf.mxu0
        %v463 = vpop.f32.mrf.mxu0
        %v464 = vadd.f32 %v363, %v463
        %v465 = vpop.f32.mrf.mxu0
        %466 = vmatprep.mubr.bf16.mxu0 0
        %467 = vmatmul.mubr.bf16.gmra.mxu0 %v419
        %v468 = vpop.f32.mrf.mxu0
        %v469 = vadd.f32 %v368, %v468
        %v470 = vpop.f32.mrf.mxu0
        %v471 = vpop.f32.mrf.mxu0
        %v472 = vadd.f32 %v371, %v471
        %v473 = vpop.f32.mrf.mxu0
        %474 = vmatprep.mubr.bf16.mxu0 0
        %475 = vmatmul.mubr.bf16.gmra.mxu0 %v421
        %v476 = vpop.f32.mrf.mxu0
        %v477 = vadd.f32 %v376, %v476
        %v478 = vpop.f32.mrf.mxu0
        %v479 = vpop.f32.mrf.mxu0
        %v480 = vadd.f32 %v379, %v479
        %v481 = vpop.f32.mrf.mxu0
        %482 = vmatprep.mubr.bf16.mxu0 0
        %483 = vmatmul.mubr.bf16.gmra.mxu0 %v424
        %v484 = vpop.f32.mrf.mxu0
        %v485 = vadd.f32 %v384, %v484
        %v486 = vpop.f32.mrf.mxu0
        %v487 = vpop.f32.mrf.mxu0
        %v488 = vadd.f32 %v387, %v487
        %v489 = vpop.f32.mrf.mxu0
        %490 = vdwg.mxu0
        %s491 = sadd.s32 %s202, 1
        %s492 = smul.u32 %s491, 8
        %s493 = smul.addr %s492, 4
        %s494 = scalar_lea.vmem %s192, %s493
        %v495 = vld [vmem:[%s494] sm:$0xf]
        %v496 = vld [vmem:[%s494 + $0x4] sm:$0xf]
        %v497 = vld [vmem:[%s494 + $0x8] sm:$0xf]
        %v498 = vld [vmem:[%s494 + $0xc] sm:$0xf]
        %v499 = vld [vmem:[%s494 + $0x10] sm:$0xf]
        %v500 = vld [vmem:[%s494 + $0x14] sm:$0xf]
        %v501 = vld [vmem:[%s494 + $0x18] sm:$0xf]
        %v502 = vld [vmem:[%s494 + $0x1c] sm:$0x3]
        %s503 = scalar_lea.vmem %s1, 64
        %v504 = vld [vmem:[%s503] sm:$0xf]
        %v505 = vld [vmem:[%s503 + $0x4] sm:$0xf]
        %v506 = vld [vmem:[%s503 + $0x8] sm:$0xf]
        %v507 = vld [vmem:[%s503 + $0xc] sm:$0xf]
        %v508 = vld [vmem:[%s503 + $0x10] sm:$0xf]
        %v509 = vld [vmem:[%s503 + $0x14] sm:$0xf]
        %v510 = vld [vmem:[%s503 + $0x18] sm:$0xf]
        %v511 = vld [vmem:[%s503 + $0x1c] sm:$0xf]
        %v520 = vunpack.c.l.b16 %v495
        %v521 = vunpack.c.l.b16 %v496
        %v522 = vunpack.c.l.b16 %v497
        %v523 = vunpack.c.l.b16 %v498
        %v524 = vunpack.c.l.b16 %v499
        %v525 = vunpack.c.l.b16 %v500
        %v526 = vunpack.c.l.b16 %v501
        %v527 = vunpack.c.l.b16 %v502
        %v528 = vpack.c.b16 %v521, %v520
        %v529 = vpack.c.b16 %v523, %v522
        %v530 = vpack.c.b16 %v525, %v524
        %v531 = vpack.c.b16 %v527, %v526
        %v540 = vunpack.c.l.b16 %v504
        %v541 = vunpack.c.l.b16 %v505
        %v542 = vunpack.c.l.b16 %v506
        %v543 = vunpack.c.l.b16 %v507
        %v544 = vunpack.c.l.b16 %v508
        %v545 = vunpack.c.l.b16 %v509
        %v546 = vunpack.c.l.b16 %v510
        %v547 = vunpack.c.l.b16 %v511
        %v548 = vpack.c.b16 %v541, %v540
        %v549 = vpack.c.b16 %v543, %v542
        %v550 = vpack.c.b16 %v545, %v544
        %v551 = vpack.c.b16 %v547, %v546
        %v557 = vsel %vm312, %v528, 0
        %v560 = vsel %vm312, %v529, 0
        %v563 = vsel %vm312, %v530, 0
        %v566 = vsel %vm312, %v531, 0
        %568 = vmatprep.subr.bf16.mxu0 0
        %569 = vmatpush1.bf16.msra.mxu0 0
        %570 = vmatprep.subr.bf16.mxu0 0
        %571 = vmatpush1.bf16.msra.mxu0 0
        %572 = vmatprep.subr.bf16.mxu0 0
        %573 = vmatpush1.bf16.msra.mxu0 0
        %574 = vmatprep.subr.bf16.mxu0 0
        %575 = vmatpush1.bf16.msra.mxu0 0
        %576 = vmatprep.subr.bf16.mxu0 0
        %577 = vmatpush1.bf16.msra.mxu0 %v551
        %578 = vmatprep.subr.bf16.mxu0 0
        %579 = vmatpush1.bf16.msra.mxu0 %v550
        %580 = vmatprep.subr.bf16.mxu0 0
        %581 = vmatpush1.bf16.msra.mxu0 %v549
        %582 = vmatprep.subr.bf16.mxu0 0
        %583 = vmatpush1.bf16.msra.mxu0 %v548
        %584 = vmatprep.subr.bf16.mxu0 0
        %585 = vmatpush2.bf16.msra.mxu0 0
        %586 = vmatprep.subr.bf16.mxu0 0
        %587 = vmatpush2.bf16.msra.mxu0 0
        %588 = vmatprep.subr.bf16.mxu0 0
        %589 = vmatpush2.bf16.msra.mxu0 0
        %590 = vmatprep.subr.bf16.mxu0 0
        %591 = vmatpush2.bf16.msra.mxu0 0
        %592 = vmatprep.subr.bf16.mxu0 0
        %593 = vmatpush2.bf16.msra.mxu0 0
        %594 = vmatprep.subr.bf16.mxu0 0
        %595 = vmatpush2.bf16.msra.mxu0 0
        %596 = vmatprep.subr.bf16.mxu0 0
        %597 = vmatpush2.bf16.msra.mxu0 0
        %598 = vmatprep.subr.bf16.mxu0 0
        %599 = vmatpush2.bf16.msra.mxu0 0
        %600 = vmatprep.mubr.bf16.mxu0 0
        %601 = vmatmul.mubr.bf16.gmra.mxu0 %v557
        %v602 = vpop.f32.mrf.mxu0
        %v603 = vadd.f32 0.0, %v602
        %v604 = vpop.f32.mrf.mxu0
        %v605 = vpop.f32.mrf.mxu0
        %v606 = vadd.f32 0.0, %v605
        %v607 = vpop.f32.mrf.mxu0
        %608 = vmatprep.mubr.bf16.mxu0 0
        %609 = vmatmul.mubr.bf16.gmra.mxu0 %v560
        %v610 = vpop.f32.mrf.mxu0
        %v611 = vadd.f32 0.0, %v610
        %v612 = vpop.f32.mrf.mxu0
        %v613 = vpop.f32.mrf.mxu0
        %v614 = vadd.f32 0.0, %v613
        %v615 = vpop.f32.mrf.mxu0
        %616 = vmatprep.mubr.bf16.mxu0 0
        %617 = vmatmul.mubr.bf16.gmra.mxu0 %v563
        %v618 = vpop.f32.mrf.mxu0
        %v619 = vadd.f32 0.0, %v618
        %v620 = vpop.f32.mrf.mxu0
        %v621 = vpop.f32.mrf.mxu0
        %v622 = vadd.f32 0.0, %v621
        %v623 = vpop.f32.mrf.mxu0
        %624 = vmatprep.mubr.bf16.mxu0 0
        %625 = vmatmul.mubr.bf16.gmra.mxu0 %v566
        %v626 = vpop.f32.mrf.mxu0
        %v627 = vadd.f32 0.0, %v626
        %v628 = vpop.f32.mrf.mxu0
        %v629 = vpop.f32.mrf.mxu0
        %v630 = vadd.f32 0.0, %v629
        %v631 = vpop.f32.mrf.mxu0
        %632 = vdwg.mxu0
        %v633 = vadd.f32 %v461, %v603
        %v634 = vadd.f32 %v464, %v606
        %v635 = vadd.f32 %v469, %v611
        %v636 = vadd.f32 %v472, %v614
        %v637 = vadd.f32 %v477, %v619
        %v638 = vadd.f32 %v480, %v622
        %v639 = vadd.f32 %v485, %v627
        %v640 = vadd.f32 %v488, %v630
        %v641 = vld [vmem:[%s494 + $0x1c] sm:$0x7]
        %s642 = scalar_lea.vmem %s1, 96
        %v643 = vld [vmem:[%s642] sm:$0xf]
        %v644 = vld [vmem:[%s642 + $0x4] sm:$0xf]
        %v645 = vld [vmem:[%s642 + $0x8] sm:$0xf]
        %v646 = vld [vmem:[%s642 + $0xc] sm:$0xf]
        %v647 = vld [vmem:[%s642 + $0x10] sm:$0xf]
        %v648 = vld [vmem:[%s642 + $0x14] sm:$0xf]
        %v649 = vld [vmem:[%s642 + $0x18] sm:$0xf]
        %v650 = vld [vmem:[%s642 + $0x1c] sm:$0xf]
        %v652 = vunpack.c.l.b16 %v641
        %v653 = vpack.c.b16 %v652, %v526
        %v654 = vshrl.u32 %v528, 16
        %v656 = vshll.u32 %v528, 16
        %v658 = vrot.slane %v656, 1
        %v659 = vor.u32 %v654, %v658
        %v660 = vshll.u32 %v529, 16
        %v662 = vrot.slane %v660, 1
        %v663 = vsel %vm256, %v659, %v662
        %v664 = vshrl.u32 %v529, 16
        %v666 = vor.u32 %v664, %v662
        %v667 = vshll.u32 %v530, 16
        %v669 = vrot.slane %v667, 1
        %v670 = vsel %vm256, %v666, %v669
        %v671 = vshrl.u32 %v530, 16
        %v673 = vor.u32 %v671, %v669
        %v675 = vshll.u32 %v653, 16
        %v677 = vrot.slane %v675, 1
        %v678 = vsel %vm256, %v673, %v677
        %v679 = vshrl.u32 %v653, 16
        %v681 = vor.u32 %v679, %v677
        %v690 = vunpack.c.l.b16 %v643
        %v691 = vunpack.c.l.b16 %v644
        %v692 = vunpack.c.l.b16 %v645
        %v693 = vunpack.c.l.b16 %v646
        %v694 = vunpack.c.l.b16 %v647
        %v695 = vunpack.c.l.b16 %v648
        %v696 = vunpack.c.l.b16 %v649
        %v697 = vunpack.c.l.b16 %v650
        %v698 = vpack.c.b16 %v691, %v690
        %v699 = vpack.c.b16 %v693, %v692
        %v700 = vpack.c.b16 %v695, %v694
        %v701 = vpack.c.b16 %v697, %v696
        %v707 = vsel %vm312, %v663, 0
        %v710 = vsel %vm312, %v670, 0
        %v713 = vsel %vm312, %v678, 0
        %v716 = vsel %vm312, %v681, 0
        %718 = vmatprep.subr.bf16.mxu0 0
        %719 = vmatpush1.bf16.msra.mxu0 0
        %720 = vmatprep.subr.bf16.mxu0 0
        %721 = vmatpush1.bf16.msra.mxu0 0
        %722 = vmatprep.subr.bf16.mxu0 0
        %723 = vmatpush1.bf16.msra.mxu0 0
        %724 = vmatprep.subr.bf16.mxu0 0
        %725 = vmatpush1.bf16.msra.mxu0 0
        %726 = vmatprep.subr.bf16.mxu0 0
        %727 = vmatpush1.bf16.msra.mxu0 %v701
        %728 = vmatprep.subr.bf16.mxu0 0
        %729 = vmatpush1.bf16.msra.mxu0 %v700
        %730 = vmatprep.subr.bf16.mxu0 0
        %731 = vmatpush1.bf16.msra.mxu0 %v699
        %732 = vmatprep.subr.bf16.mxu0 0
        %733 = vmatpush1.bf16.msra.mxu0 %v698
        %734 = vmatprep.subr.bf16.mxu0 0
        %735 = vmatpush2.bf16.msra.mxu0 0
        %736 = vmatprep.subr.bf16.mxu0 0
        %737 = vmatpush2.bf16.msra.mxu0 0
        %738 = vmatprep.subr.bf16.mxu0 0
        %739 = vmatpush2.bf16.msra.mxu0 0
        %740 = vmatprep.subr.bf16.mxu0 0
        %741 = vmatpush2.bf16.msra.mxu0 0
        %742 = vmatprep.subr.bf16.mxu0 0
        %743 = vmatpush2.bf16.msra.mxu0 0
        %744 = vmatprep.subr.bf16.mxu0 0
        %745 = vmatpush2.bf16.msra.mxu0 0
        %746 = vmatprep.subr.bf16.mxu0 0
        %747 = vmatpush2.bf16.msra.mxu0 0
        %748 = vmatprep.subr.bf16.mxu0 0
        %749 = vmatpush2.bf16.msra.mxu0 0
        %750 = vmatprep.mubr.bf16.mxu0 0
        %751 = vmatmul.mubr.bf16.gmra.mxu0 %v707
        %v752 = vpop.f32.mrf.mxu0
        %v753 = vadd.f32 0.0, %v752
        %v754 = vpop.f32.mrf.mxu0
        %v755 = vpop.f32.mrf.mxu0
        %v756 = vadd.f32 0.0, %v755
        %v757 = vpop.f32.mrf.mxu0
        %758 = vmatprep.mubr.bf16.mxu0 0
        %759 = vmatmul.mubr.bf16.gmra.mxu0 %v710
        %v760 = vpop.f32.mrf.mxu0
        %v761 = vadd.f32 0.0, %v760
        %v762 = vpop.f32.mrf.mxu0
        %v763 = vpop.f32.mrf.mxu0
        %v764 = vadd.f32 0.0, %v763
        %v765 = vpop.f32.mrf.mxu0
        %766 = vmatprep.mubr.bf16.mxu0 0
        %767 = vmatmul.mubr.bf16.gmra.mxu0 %v713
        %v768 = vpop.f32.mrf.mxu0
        %v769 = vadd.f32 0.0, %v768
        %v770 = vpop.f32.mrf.mxu0
        %v771 = vpop.f32.mrf.mxu0
        %v772 = vadd.f32 0.0, %v771
        %v773 = vpop.f32.mrf.mxu0
        %774 = vmatprep.mubr.bf16.mxu0 0
        %775 = vmatmul.mubr.bf16.gmra.mxu0 %v716
        %v776 = vpop.f32.mrf.mxu0
        %v777 = vadd.f32 0.0, %v776
        %v778 = vpop.f32.mrf.mxu0
        %v779 = vpop.f32.mrf.mxu0
        %v780 = vadd.f32 0.0, %v779
        %v781 = vpop.f32.mrf.mxu0
        %782 = vdwg.mxu0
        %v783 = vadd.f32 %v633, %v753
        %v784 = vadd.f32 %v634, %v756
        %v785 = vadd.f32 %v635, %v761
        %v786 = vadd.f32 %v636, %v764
        %v787 = vadd.f32 %v637, %v769
        %v788 = vadd.f32 %v638, %v772
        %v789 = vadd.f32 %v639, %v777
        %v790 = vadd.f32 %v640, %v780
        %v792 = vlaneseq
        %v793 = vshrl.u32 %v792, 7
        %v794 = vsub.s32 0, %v793
        %v795 = vrot.slane %v199, %v794
        %v797 = vmul.f32 %v783, %v795
        %v798 = vmul.f32 %v784, %v795
        %v799 = vmul.f32 %v785, %v795
        %v800 = vmul.f32 %v786, %v795
        %v801 = vmul.f32 %v787, %v795
        %v802 = vmul.f32 %v788, %v795
        %v803 = vmul.f32 %v789, %v795
        %v804 = vmul.f32 %v790, %v795
        %v806 = vlaneseq
        %v807 = vshrl.u32 %v806, 7
        %v808 = vsub.s32 0, %v807
        %v809 = vrot.slane %v200, %v808
        %v811 = vadd.f32 %v797, %v809
        %v812 = vadd.f32 %v798, %v809
        %v813 = vadd.f32 %v799, %v809
        %v814 = vadd.f32 %v800, %v809
        %v815 = vadd.f32 %v801, %v809
        %v816 = vadd.f32 %v802, %v809
        %v817 = vadd.f32 %v803, %v809
        %v818 = vadd.f32 %v804, %v809
        %v819 = vmax.f32 %v811, 0.0
        %v820 = vmax.f32 %v812, 0.0
        %v821 = vmax.f32 %v813, 0.0
        %v822 = vmax.f32 %v814, 0.0
        %v823 = vmax.f32 %v815, 0.0
        %v824 = vmax.f32 %v816, 0.0
        %v825 = vmax.f32 %v817, 0.0
        %v826 = vmax.f32 %v818, 0.0
        %v827 = vpack.c.bf16 %v820, %v819
        %v828 = vpack.c.bf16 %v822, %v821
        %v829 = vpack.c.bf16 %v824, %v823
        %v830 = vpack.c.bf16 %v826, %v825
        %v835 = vunpack.c.l.b16 %v827
        %v836 = vunpack.c.h.b16 %v827
        %v837 = vunpack.c.l.b16 %v828
        %v838 = vunpack.c.h.b16 %v828
        %v839 = vunpack.c.l.b16 %v829
        %v840 = vunpack.c.h.b16 %v829
        %v841 = vunpack.c.l.b16 %v830
        %v842 = vunpack.c.h.b16 %v830
        %v843 = vpack.c.b16 %v835, %v835
        %v844 = vpack.c.b16 %v836, %v836
        %v845 = vpack.c.b16 %v837, %v837
        %v846 = vpack.c.b16 %v838, %v838
        %v847 = vpack.c.b16 %v839, %v839
        %v848 = vpack.c.b16 %v840, %v840
        %v849 = vpack.c.b16 %v841, %v841
        %v850 = vpack.c.b16 %v842, %v842
        %s859 = smul.addr %s207, 4
        %s860 = scalar_lea.vmem %s197, %s859
        %vm861 = vcmask 257024
        %862 = vst.msk [vmem:[%s860] sm:$0xf] %vm861, %v843
        %863 = vst.msk [vmem:[%s860 + $0x4] sm:$0xf] %vm861, %v844
        %864 = vst.msk [vmem:[%s860 + $0x8] sm:$0xf] %vm861, %v845
        %865 = vst.msk [vmem:[%s860 + $0xc] sm:$0xf] %vm861, %v846
        %866 = vst.msk [vmem:[%s860 + $0x10] sm:$0xf] %vm861, %v847
        %867 = vst.msk [vmem:[%s860 + $0x14] sm:$0xf] %vm861, %v848
        %868 = vst.msk [vmem:[%s860 + $0x18] sm:$0xf] %vm861, %v849
        %vm869 = vcmask 254976
        %870 = vst.msk [vmem:[%s860 + $0x1c] sm:$0x3] %vm869, %v850
      $region41: #{generator_deconv_pallas.19} parent=35 // loop_footer
        %s206 = sadd.s32 1, %s202
      $region42: #{generator_deconv_pallas.19} parent=35 // loop_footer_branch
        %201 = sbr.rel target = $region38
      $region43: #{generator_deconv_pallas.19} parent=35 // loop_exit
        _
      %p871 = scmp.lt.s32.totalorder %s15, 1
      %s872 = scalar_select %p871, %s15, 1
      %s873 = smul.addr %s872, 360
      %s874 = smul.addr %s873, 4
      %s875 = scalar_lea.vmem %s4, %s874
      // Predicated region
      $region44: #{generator_deconv_pallas.19} parent=35 // pred_check
        %p876 = pneg %p122
      $region45: #{generator_deconv_pallas.19} parent=35 // pred_check_branch
        %878 = sbr.rel (%p876) target = $region47
      $region46: #{generator_deconv_pallas.19} parent=35 // pred_region
        _
      $region47: #{generator_deconv_pallas.19} parent=35 // pred_fallthru
        _
    $region36: #{generator_deconv_pallas.19} parent=5 // pred_fallthru
      _
    %p879 = scmp.le.s32.totalorder 2, %s10
    // Predicated region
    $region48: #{generator_deconv_pallas.19} parent=5 // pred_check
      %p880 = pneg %p879
    $region49: #{generator_deconv_pallas.19} parent=5 // pred_check_branch
      %882 = sbr.rel (%p880) target = $region51
    $region50: #{generator_deconv_pallas.19} parent=5 // pred_region
      %s883 = ssub.s32 %s10, 2
      // Predicated region
      $region52: #{generator_deconv_pallas.19} parent=50 // pred_check
        %p884 = pneg %p128
      $region53: #{generator_deconv_pallas.19} parent=50 // pred_check_branch
        %886 = sbr.rel (%p884) target = $region55
      $region54: #{generator_deconv_pallas.19} parent=50 // pred_region
        %p887 = scmp.lt.s32.totalorder %s16, 1
        %s888 = scalar_select %p887, %s16, 1
        %s889 = smul.addr %s888, 360
        %s890 = smul.addr %s889, 4
        %s891 = scalar_lea.vmem %s4, %s890
      $region55: #{generator_deconv_pallas.19} parent=50 // pred_fallthru
        _
    $region51: #{generator_deconv_pallas.19} parent=5 // pred_fallthru
      _
  $region6: #{generator_deconv_pallas.19} parent=0 // loop_footer
    %s14 = sadd.s32 1, %s10
  $region7: #{generator_deconv_pallas.19} parent=0 // loop_footer_branch
    %9 = sbr.rel target = $region3
  $region8: #{generator_deconv_pallas.19} parent=0 // loop_exit
    _

// kernel: generator_deconv_pallas.21
$region0: #{generator_deconv_pallas.21}
  #allocation0 [shape = 'u32[]', space=smem, size = 0x4, offset = 0x4, fixed_abs, tag = 'smem constant byte address 0x4 - core index']
  #allocation1 [shape = 'u32[144,128]{1,0:T(1,128)}', space=vmem, size = 0x12000, scoped, tag = 'internal scratch']
  %s0 = inlined_call_operand.vmem [shape: bf16[2,96,32,126], index: 0, kind: input, shape index: {}]
  %s1 = inlined_call_operand.vmem [shape: bf16[49,3,32], index: 1, kind: input, shape index: {}]
  %s2 = inlined_call_operand.vmem [shape: f32[3,1], index: 2, kind: input, shape index: {}]
  %s3 = inlined_call_operand.vmem [shape: f32[3,1], index: 3, kind: input, shape index: {}]
  %s4 = inlined_call_operand.vmem [shape: f32[2,90,3,120], index: 4, kind: output, shape index: {}]
  %s5 = sld [smem:[#allocation0]]
  $region56: #{generator_deconv_pallas.21} parent=0
    _
  %s7 = ssub.s32 1, %s5
  %s8 = scalar_select 0, %s7, %s5
  loop: start=0, step=1, limit=4
  $region2: #{generator_deconv_pallas.21} parent=0 // loop_pre_header
    _
  $region3: #{generator_deconv_pallas.21} parent=0 // loop_header
    %s10 = sphi 0, %s14
    %p11 = scmp.ge.s32.totalorder %s10, 4
    %s20 = sphi 0, %s22
    %s23 = sphi 0, %s20
    %s24 = sphi 0, %s23
    %s40 = sphi 0, %s24
    %s44 = sphi 0, %s44
    %s46 = sphi 0, %s44
    %s47 = sphi 0, %s46
    %s61 = sphi 0, %s47
    %s65 = sphi 0, %s65
    %s67 = sphi 0, %s65
    %s68 = sphi 0, %s67
    %s82 = sphi 0, %s68
    %s86 = sphi 0, %s86
    %s88 = sphi 0, %s86
    %s89 = sphi 0, %s88
    %s103 = sphi 0, %s89
    %s109 = sphi 0, %s111
    %s112 = sphi 0, %s109
    %s113 = sphi 0, %s112
    %s129 = sphi 0, %s113
  $region4: #{generator_deconv_pallas.21} parent=0 // loop_header_branch
    %13 = sbr.rel (%p11) target = $region8
  $region5: #{generator_deconv_pallas.21} parent=0 // loop_body
    %s15 = ssub.s32 %s10, 1
    %s16 = ssub.s32 %s10, 2
    %s17 = sadd.s32 %s10, 1
    %s18 = ssub.s32 %s10, %s17
    %p19 = scmp.eq.s32.totalorder %s18, 0
    %s21 = sadd.s32 %s20, 1
    %s22 = scalar_select %p19, %s20, %s21
    %p25 = pneg %p19
    %p26 = scmp.eq.s32.totalorder %s10, 1
    %p27 = por %p25, %p26
    %p28 = scmp.ne.s32.totalorder %s20, %s23
    %p29 = scmp.eq.s32.totalorder %s10, 0
    %p30 = por %p28, %p29
    %p31 = scmp.ne.s32.totalorder %s20, %s23
    %p32 = scmp.eq.s32.totalorder %s15, 1
    %p33 = por %p31, %p32
    %p34 = scmp.ne.s32.totalorder %s23, %s24
    %p35 = scmp.eq.s32.totalorder %s15, 0
    %p36 = por %p34, %p35
    %p37 = scmp.ne.s32.totalorder %s23, %s24
    %p38 = scmp.eq.s32.totalorder %s16, 1
    %p39 = por %p37, %p38
    %p41 = scmp.ne.s32.totalorder %s24, %s40
    %p42 = scmp.eq.s32.totalorder %s16, 0
    %p43 = por %p41, %p42
    %s45 = sadd.s32 %s44, 1
    %p48 = scmp.eq.s32.totalorder %s10, 1
    %p49 = scmp.ne.s32.totalorder %s44, %s46
    %p50 = scmp.eq.s32.totalorder %s10, 0
    %p51 = por %p49, %p50
    %p52 = scmp.ne.s32.totalorder %s44, %s46
    %p53 = scmp.eq.s32.totalorder %s15, 1
    %p54 = por %p52, %p53
    %p55 = scmp.ne.s32.totalorder %s46, %s47
    %p56 = scmp.eq.s32.totalorder %s15, 0
    %p57 = por %p55, %p56
    %p58 = scmp.ne.s32.totalorder %s46, %s47
    %p59 = scmp.eq.s32.totalorder %s16, 1
    %p60 = por %p58, %p59
    %p62 = scmp.ne.s32.totalorder %s47, %s61
    %p63 = scmp.eq.s32.totalorder %s16, 0
    %p64 = por %p62, %p63
    %s66 = sadd.s32 %s65, 1
    %p69 = scmp.eq.s32.totalorder %s10, 1
    %p70 = scmp.ne.s32.totalorder %s65, %s67
    %p71 = scmp.eq.s32.totalorder %s10, 0
    %p72 = por %p70, %p71
    %p73 = scmp.ne.s32.totalorder %s65, %s67
    %p74 = scmp.eq.s32.totalorder %s15, 1
    %p75 = por %p73, %p74
    %p76 = scmp.ne.s32.totalorder %s67, %s68
    %p77 = scmp.eq.s32.totalorder %s15, 0
    %p78 = por %p76, %p77
    %p79 = scmp.ne.s32.totalorder %s67, %s68
    %p80 = scmp.eq.s32.totalorder %s16, 1
    %p81 = por %p79, %p80
    %p83 = scmp.ne.s32.totalorder %s68, %s82
    %p84 = scmp.eq.s32.totalorder %s16, 0
    %p85 = por %p83, %p84
    %s87 = sadd.s32 %s86, 1
    %p90 = scmp.eq.s32.totalorder %s10, 1
    %p91 = scmp.ne.s32.totalorder %s86, %s88
    %p92 = scmp.eq.s32.totalorder %s10, 0
    %p93 = por %p91, %p92
    %p94 = scmp.ne.s32.totalorder %s86, %s88
    %p95 = scmp.eq.s32.totalorder %s15, 1
    %p96 = por %p94, %p95
    %p97 = scmp.ne.s32.totalorder %s88, %s89
    %p98 = scmp.eq.s32.totalorder %s15, 0
    %p99 = por %p97, %p98
    %p100 = scmp.ne.s32.totalorder %s88, %s89
    %p101 = scmp.eq.s32.totalorder %s16, 1
    %p102 = por %p100, %p101
    %p104 = scmp.ne.s32.totalorder %s89, %s103
    %p105 = scmp.eq.s32.totalorder %s16, 0
    %p106 = por %p104, %p105
    %s107 = ssub.s32 %s10, %s17
    %p108 = scmp.eq.s32.totalorder %s107, 0
    %s110 = sadd.s32 %s109, 1
    %s111 = scalar_select %p108, %s109, %s110
    %p114 = pneg %p108
    %p115 = scmp.eq.s32.totalorder %s10, 1
    %p116 = por %p114, %p115
    %p117 = scmp.ne.s32.totalorder %s109, %s112
    %p118 = scmp.eq.s32.totalorder %s10, 0
    %p119 = por %p117, %p118
    %p120 = scmp.ne.s32.totalorder %s109, %s112
    %p121 = scmp.eq.s32.totalorder %s15, 1
    %p122 = por %p120, %p121
    %p123 = scmp.ne.s32.totalorder %s112, %s113
    %p124 = scmp.eq.s32.totalorder %s15, 0
    %p125 = por %p123, %p124
    %p126 = scmp.ne.s32.totalorder %s112, %s113
    %p127 = scmp.eq.s32.totalorder %s16, 1
    %p128 = por %p126, %p127
    %p130 = scmp.ne.s32.totalorder %s113, %s129
    %p131 = scmp.eq.s32.totalorder %s16, 0
    %p132 = por %p130, %p131
    %p133 = scmp.le.s32.totalorder 1, %s10
    %p134 = scmp.lt.s32.totalorder %s10, 3
    %p135 = pnand %p133, %p134
    %p136 = pneg %p135
    // Predicated region
    $region9: #{generator_deconv_pallas.21} parent=5 // pred_check
      _
    $region10: #{generator_deconv_pallas.21} parent=5 // pred_check_branch
      %138 = sbr.rel (%p135) target = $region12
    $region11: #{generator_deconv_pallas.21} parent=5 // pred_region
      %s139 = ssub.s32 %s10, 1
      // Predicated region
      $region13: #{generator_deconv_pallas.21} parent=11 // pred_check
        %p140 = pneg %p57
      $region14: #{generator_deconv_pallas.21} parent=11 // pred_check_branch
        %142 = sbr.rel (%p140) target = $region16
      $region15: #{generator_deconv_pallas.21} parent=11 // pred_region
        _
      $region16: #{generator_deconv_pallas.21} parent=11 // pred_fallthru
        _
      // Predicated region
      $region17: #{generator_deconv_pallas.21} parent=11 // pred_check
        %p143 = pneg %p78
      $region18: #{generator_deconv_pallas.21} parent=11 // pred_check_branch
        %145 = sbr.rel (%p143) target = $region20
      $region19: #{generator_deconv_pallas.21} parent=11 // pred_region
        _
      $region20: #{generator_deconv_pallas.21} parent=11 // pred_fallthru
        _
      // Predicated region
      $region21: #{generator_deconv_pallas.21} parent=11 // pred_check
        %p146 = pneg %p99
      $region22: #{generator_deconv_pallas.21} parent=11 // pred_check_branch
        %148 = sbr.rel (%p146) target = $region24
      $region23: #{generator_deconv_pallas.21} parent=11 // pred_region
        _
      $region24: #{generator_deconv_pallas.21} parent=11 // pred_fallthru
        _
    $region12: #{generator_deconv_pallas.21} parent=5 // pred_fallthru
      _
    %p149 = scmp.lt.s32.totalorder %s10, 2
    // Predicated region
    $region25: #{generator_deconv_pallas.21} parent=5 // pred_check
      %p150 = pneg %p149
    $region26: #{generator_deconv_pallas.21} parent=5 // pred_check_branch
      %152 = sbr.rel (%p150) target = $region28
    $region27: #{generator_deconv_pallas.21} parent=5 // pred_region
      // Predicated region
      $region29: #{generator_deconv_pallas.21} parent=27 // pred_check
        %p153 = pneg %p30
      $region30: #{generator_deconv_pallas.21} parent=27 // pred_check_branch
        %155 = sbr.rel (%p153) target = $region32
      $region31: #{generator_deconv_pallas.21} parent=27 // pred_region
        %p156 = scmp.lt.s32.totalorder %s10, 1
        %s157 = scalar_select %p156, %s10, 1
        %s158 = smul.addr %s157, 384
        %s159 = smul.addr %s158, 4
        %s160 = scalar_lea.vmem %s0, %s159
      $region32: #{generator_deconv_pallas.21} parent=27 // pred_fallthru
        _
    $region28: #{generator_deconv_pallas.21} parent=5 // pred_fallthru
      _
    %p161 = scmp.le.s32.totalorder 1, %s10
    %p162 = scmp.lt.s32.totalorder %s10, 3
    %p163 = pnand %p161, %p162
    %p164 = pneg %p163
    // Predicated region
    $region33: #{generator_deconv_pallas.21} parent=5 // pred_check
      _
    $region34: #{generator_deconv_pallas.21} parent=5 // pred_check_branch
      %166 = sbr.rel (%p163) target = $region36
    $region35: #{generator_deconv_pallas.21} parent=5 // pred_region
      %s167 = ssub.s32 %s10, 1
      %p168 = scmp.lt.s32.totalorder %s15, 1
      %s169 = scalar_select %p168, %s15, 1
      %s170 = smul.addr %s169, 384
      %s171 = smul.addr %s170, 4
      %s172 = scalar_lea.vmem %s0, %s171
      %p173 = pneg %p36
      %p174 = pneg %p33
      %p175 = pneg %p57
      %p176 = pneg %p54
      %p177 = pneg %p78
      %p178 = pneg %p75
      %p179 = pneg %p99
      %p180 = pneg %p96
      %p181 = pneg %p125
      %p182 = pneg %p122
      %p183 = scmp.lt.s32.totalorder %s15, 1
      %s184 = scalar_select %p183, %s15, 1
      %s185 = smul.addr %s184, 90
      %s186 = smul.addr %s185, 4
      %s187 = scalar_lea.vmem %s4, %s186
      %p188 = scmp.lt.s32.totalorder %s15, 1
      %s189 = scalar_select %p188, %s15, 1
      %s190 = smul.addr %s189, 384
      %s191 = smul.addr %s190, 4
      %s192 = scalar_lea.vmem %s0, %s191
      %p193 = scmp.lt.s32.totalorder %s15, 1
      %s194 = scalar_select %p193, %s15, 1
      %s195 = smul.addr %s194, 90
      %s196 = smul.addr %s195, 4
      %s197 = scalar_lea.vmem %s4, %s196
      %v199 = vld [vmem:[%s2] sm:$0x7]
      %v200 = vld [vmem:[%s3] sm:$0x7]
      loop: start=0, step=1, limit=90
      $region37: #{generator_deconv_pallas.21} parent=35 // loop_pre_header
        _
      $region38: #{generator_deconv_pallas.21} parent=35 // loop_header
        %s202 = sphi 0, %s206
        %p203 = scmp.ge.s32.totalorder %s202, 90
      $region39: #{generator_deconv_pallas.21} parent=35 // loop_header_branch
        %205 = sbr.rel (%p203) target = $region43
      $region40: #{generator_deconv_pallas.21} parent=35 // loop_body
        %s207 = smul.u32 %s202, 4
        %s208 = smul.addr %s207, 4
        %s209 = scalar_lea.vmem %s192, %s208
        %v210 = vld [vmem:[%s209] sm:$0xf]
        %v211 = vld [vmem:[%s209 + $0x4] sm:$0xf]
        %v212 = vld [vmem:[%s209 + $0x8] sm:$0xf]
        %v213 = vld [vmem:[%s209 + $0xc] sm:$0xf]
        %v214 = vld [vmem:[%s1] sm:$0x3]
        %s215 = scalar_lea.vmem %s1, 2
        %v216 = vld [vmem:[%s215] sm:$0x3]
        %v221 = vunpack.c.l.b16 %v210
        %v222 = vunpack.c.l.b16 %v211
        %v223 = vunpack.c.l.b16 %v212
        %v224 = vunpack.c.l.b16 %v213
        %v225 = vpack.c.b16 %v222, %v221
        %v226 = vpack.c.b16 %v224, %v223
        %227 = vrot.lane.b32.xlu0 %v225, 127
        %v228 = vpop.permute.xlu0 %227
        %229 = vrot.lane.b32.xlu0 %v226, 127
        %v230 = vpop.permute.xlu0 %229
        %vm233 = vcmask 261120
        %v235 = vsel %vm233, %v216, 0
        %237 = vmatprep.subr.bf16.mxu0 0
        %238 = vmatpush1.bf16.msra.mxu0 0
        %239 = vmatprep.subr.bf16.mxu0 0
        %240 = vmatpush1.bf16.msra.mxu0 0
        %241 = vmatprep.subr.bf16.mxu0 0
        %242 = vmatpush1.bf16.msra.mxu0 0
        %243 = vmatprep.subr.bf16.mxu0 0
        %244 = vmatpush1.bf16.msra.mxu0 0
        %245 = vmatprep.subr.bf16.mxu0 0
        %246 = vmatpush1.bf16.msra.mxu0 0
        %247 = vmatprep.subr.bf16.mxu0 0
        %248 = vmatpush1.bf16.msra.mxu0 0
        %249 = vmatprep.subr.bf16.mxu0 0
        %250 = vmatpush1.bf16.msra.mxu0 %v230
        %251 = vmatprep.subr.bf16.mxu0 0
        %252 = vmatpush1.bf16.msra.mxu0 %v228
        %253 = vmatprep.subr.bf16.mxu0 0
        %254 = vmatpush2.bf16.msra.mxu0 0
        %255 = vmatprep.subr.bf16.mxu0 0
        %256 = vmatpush2.bf16.msra.mxu0 0
        %257 = vmatprep.subr.bf16.mxu0 0
        %258 = vmatpush2.bf16.msra.mxu0 0
        %259 = vmatprep.subr.bf16.mxu0 0
        %260 = vmatpush2.bf16.msra.mxu0 0
        %261 = vmatprep.subr.bf16.mxu0 0
        %262 = vmatpush2.bf16.msra.mxu0 0
        %263 = vmatprep.subr.bf16.mxu0 0
        %264 = vmatpush2.bf16.msra.mxu0 0
        %265 = vmatprep.subr.bf16.mxu0 0
        %266 = vmatpush2.bf16.msra.mxu0 0
        %267 = vmatprep.subr.bf16.mxu0 0
        %268 = vmatpush2.bf16.msra.mxu0 0
        %269 = vmatprep.mubr.bf16.mxu0 0
        %270 = vmatmul.mubr.bf16.gmra.mxu0 %v235
        %v271 = vpop.f32.mrf.mxu0
        %v272 = vadd.f32 0.0, %v271
        %v273 = vpop.f32.mrf.mxu0
        %v274 = vpop.f32.mrf.mxu0
        %v275 = vpop.f32.mrf.mxu0
        %276 = vdwg.mxu0
        %v280 = vsel %vm233, %v214, 0
        %282 = vmatprep.subr.bf16.mxu0 0
        %283 = vmatpush1.bf16.msra.mxu0 0
        %284 = vmatprep.subr.bf16.mxu0 0
        %285 = vmatpush1.bf16.msra.mxu0 0
        %286 = vmatprep.subr.bf16.mxu0 0
        %287 = vmatpush1.bf16.msra.mxu0 0
        %288 = vmatprep.subr.bf16.mxu0 0
        %289 = vmatpush1.bf16.msra.mxu0 0
        %290 = vmatprep.subr.bf16.mxu0 0
        %291 = vmatpush1.bf16.msra.mxu0 0
        %292 = vmatprep.subr.bf16.mxu0 0
        %293 = vmatpush1.bf16.msra.mxu0 0
        %294 = vmatprep.subr.bf16.mxu0 0
        %295 = vmatpush1.bf16.msra.mxu0 %v226
        %296 = vmatprep.subr.bf16.mxu0 0
        %297 = vmatpush1.bf16.msra.mxu0 %v225
        %298 = vmatprep.subr.bf16.mxu0 0
        %299 = vmatpush2.bf16.msra.mxu0 0
        %300 = vmatprep.subr.bf16.mxu0 0
        %301 = vmatpush2.bf16.msra.mxu0 0
        %302 = vmatprep.subr.bf16.mxu0 0
        %303 = vmatpush2.bf16.msra.mxu0 0
        %304 = vmatprep.subr.bf16.mxu0 0
        %305 = vmatpush2.bf16.msra.mxu0 0
        %306 = vmatprep.subr.bf16.mxu0 0
        %307 = vmatpush2.bf16.msra.mxu0 0
        %308 = vmatprep.subr.bf16.mxu0 0
        %309 = vmatpush2.bf16.msra.mxu0 0
        %310 = vmatprep.subr.bf16.mxu0 0
        %311 = vmatpush2.bf16.msra.mxu0 0
        %312 = vmatprep.subr.bf16.mxu0 0
        %313 = vmatpush2.bf16.msra.mxu0 0
        %314 = vmatprep.mubr.bf16.mxu0 0
        %315 = vmatmul.mubr.bf16.gmra.mxu0 %v280
        %v316 = vpop.f32.mrf.mxu0
        %v317 = vadd.f32 %v272, %v316
        %v318 = vpop.f32.mrf.mxu0
        %v319 = vpop.f32.mrf.mxu0
        %v320 = vpop.f32.mrf.mxu0
        %321 = vdwg.mxu0
        %s322 = scalar_lea.vmem %s1, 4
        %v323 = vld [vmem:[%s322] sm:$0x3]
        %324 = vrot.lane.b32.xlu0 %v225, 126
        %v325 = vpop.permute.xlu0 %324
        %326 = vrot.lane.b32.xlu0 %v226, 126
        %v327 = vpop.permute.xlu0 %326
        %v331 = vsel %vm233, %v323, 0
        %333 = vmatprep.subr.bf16.mxu0 0
        %334 = vmatpush1.bf16.msra.mxu0 0
        %335 = vmatprep.subr.bf16.mxu0 0
        %336 = vmatpush1.bf16.msra.mxu0 0
        %337 = vmatprep.subr.bf16.mxu0 0
        %338 = vmatpush1.bf16.msra.mxu0 0
        %339 = vmatprep.subr.bf16.mxu0 0
        %340 = vmatpush1.bf16.msra.mxu0 0
        %341 = vmatprep.subr.bf16.mxu0 0
        %342 = vmatpush1.bf16.msra.mxu0 0
        %343 = vmatprep.subr.bf16.mxu0 0
        %344 = vmatpush1.bf16.msra.mxu0 0
        %345 = vmatprep.subr.bf16.mxu0 0
        %346 = vmatpush1.bf16.msra.mxu0 %v327
        %347 = vmatprep.subr.bf16.mxu0 0
        %348 = vmatpush1.bf16.msra.mxu0 %v325
        %349 = vmatprep.subr.bf16.mxu0 0
        %350 = vmatpush2.bf16.msra.mxu0 0
        %351 = vmatprep.subr.bf16.mxu0 0
        %352 = vmatpush2.bf16.msra.mxu0 0
        %353 = vmatprep.subr.bf16.mxu0 0
        %354 = vmatpush2.bf16.msra.mxu0 0
        %355 = vmatprep.subr.bf16.mxu0 0
        %356 = vmatpush2.bf16.msra.mxu0 0
        %357 = vmatprep.subr.bf16.mxu0 0
        %358 = vmatpush2.bf16.msra.mxu0 0
        %359 = vmatprep.subr.bf16.mxu0 0
        %360 = vmatpush2.bf16.msra.mxu0 0
        %361 = vmatprep.subr.bf16.mxu0 0
        %362 = vmatpush2.bf16.msra.mxu0 0
        %363 = vmatprep.subr.bf16.mxu0 0
        %364 = vmatpush2.bf16.msra.mxu0 0
        %365 = vmatprep.mubr.bf16.mxu0 0
        %366 = vmatmul.mubr.bf16.gmra.mxu0 %v331
        %v367 = vpop.f32.mrf.mxu0
        %v368 = vadd.f32 0.0, %v367
        %v369 = vpop.f32.mrf.mxu0
        %v370 = vpop.f32.mrf.mxu0
        %v371 = vpop.f32.mrf.mxu0
        %372 = vdwg.mxu0
        %v373 = vadd.f32 %v317, %v368
        %s374 = scalar_lea.vmem %s1, 6
        %v375 = vld [vmem:[%s374] sm:$0x3]
        %376 = vrot.lane.b32.xlu0 %v225, 125
        %v377 = vpop.permute.xlu0 %376
        %378 = vrot.lane.b32.xlu0 %v226, 125
        %v379 = vpop.permute.xlu0 %378
        %v383 = vsel %vm233, %v375, 0
        %385 = vmatprep.subr.bf16.mxu0 0
        %386 = vmatpush1.bf16.msra.mxu0 0
        %387 = vmatprep.subr.bf16.mxu0 0
        %388 = vmatpush1.bf16.msra.mxu0 0
        %389 = vmatprep.subr.bf16.mxu0 0
        %390 = vmatpush1.bf16.msra.mxu0 0
        %391 = vmatprep.subr.bf16.mxu0 0
        %392 = vmatpush1.bf16.msra.mxu0 0
        %393 = vmatprep.subr.bf16.mxu0 0
        %394 = vmatpush1.bf16.msra.mxu0 0
        %395 = vmatprep.subr.bf16.mxu0 0
        %396 = vmatpush1.bf16.msra.mxu0 0
        %397 = vmatprep.subr.bf16.mxu0 0
        %398 = vmatpush1.bf16.msra.mxu0 %v379
        %399 = vmatprep.subr.bf16.mxu0 0
        %400 = vmatpush1.bf16.msra.mxu0 %v377
        %401 = vmatprep.subr.bf16.mxu0 0
        %402 = vmatpush2.bf16.msra.mxu0 0
        %403 = vmatprep.subr.bf16.mxu0 0
        %404 = vmatpush2.bf16.msra.mxu0 0
        %405 = vmatprep.subr.bf16.mxu0 0
        %406 = vmatpush2.bf16.msra.mxu0 0
        %407 = vmatprep.subr.bf16.mxu0 0
        %408 = vmatpush2.bf16.msra.mxu0 0
        %409 = vmatprep.subr.bf16.mxu0 0
        %410 = vmatpush2.bf16.msra.mxu0 0
        %411 = vmatprep.subr.bf16.mxu0 0
        %412 = vmatpush2.bf16.msra.mxu0 0
        %413 = vmatprep.subr.bf16.mxu0 0
        %414 = vmatpush2.bf16.msra.mxu0 0
        %415 = vmatprep.subr.bf16.mxu0 0
        %416 = vmatpush2.bf16.msra.mxu0 0
        %417 = vmatprep.mubr.bf16.mxu0 0
        %418 = vmatmul.mubr.bf16.gmra.mxu0 %v383
        %v419 = vpop.f32.mrf.mxu0
        %v420 = vadd.f32 0.0, %v419
        %v421 = vpop.f32.mrf.mxu0
        %v422 = vpop.f32.mrf.mxu0
        %v423 = vpop.f32.mrf.mxu0
        %424 = vdwg.mxu0
        %v425 = vadd.f32 %v373, %v420
        %s426 = scalar_lea.vmem %s1, 8
        %v427 = vld [vmem:[%s426] sm:$0x3]
        %428 = vrot.lane.b32.xlu0 %v225, 124
        %v429 = vpop.permute.xlu0 %428
        %430 = vrot.lane.b32.xlu0 %v226, 124
        %v431 = vpop.permute.xlu0 %430
        %v435 = vsel %vm233, %v427, 0
        %437 = vmatprep.subr.bf16.mxu0 0
        %438 = vmatpush1.bf16.msra.mxu0 0
        %439 = vmatprep.subr.bf16.mxu0 0
        %440 = vmatpush1.bf16.msra.mxu0 0
        %441 = vmatprep.subr.bf16.mxu0 0
        %442 = vmatpush1.bf16.msra.mxu0 0
        %443 = vmatprep.subr.bf16.mxu0 0
        %444 = vmatpush1.bf16.msra.mxu0 0
        %445 = vmatprep.subr.bf16.mxu0 0
        %446 = vmatpush1.bf16.msra.mxu0 0
        %447 = vmatprep.subr.bf16.mxu0 0
        %448 = vmatpush1.bf16.msra.mxu0 0
        %449 = vmatprep.subr.bf16.mxu0 0
        %450 = vmatpush1.bf16.msra.mxu0 %v431
        %451 = vmatprep.subr.bf16.mxu0 0
        %452 = vmatpush1.bf16.msra.mxu0 %v429
        %453 = vmatprep.subr.bf16.mxu0 0
        %454 = vmatpush2.bf16.msra.mxu0 0
        %455 = vmatprep.subr.bf16.mxu0 0
        %456 = vmatpush2.bf16.msra.mxu0 0
        %457 = vmatprep.subr.bf16.mxu0 0
        %458 = vmatpush2.bf16.msra.mxu0 0
        %459 = vmatprep.subr.bf16.mxu0 0
        %460 = vmatpush2.bf16.msra.mxu0 0
        %461 = vmatprep.subr.bf16.mxu0 0
        %462 = vmatpush2.bf16.msra.mxu0 0
        %463 = vmatprep.subr.bf16.mxu0 0
        %464 = vmatpush2.bf16.msra.mxu0 0
        %465 = vmatprep.subr.bf16.mxu0 0
        %466 = vmatpush2.bf16.msra.mxu0 0
        %467 = vmatprep.subr.bf16.mxu0 0
        %468 = vmatpush2.bf16.msra.mxu0 0
        %469 = vmatprep.mubr.bf16.mxu0 0
        %470 = vmatmul.mubr.bf16.gmra.mxu0 %v435
        %v471 = vpop.f32.mrf.mxu0
        %v472 = vadd.f32 0.0, %v471
        %v473 = vpop.f32.mrf.mxu0
        %v474 = vpop.f32.mrf.mxu0
        %v475 = vpop.f32.mrf.mxu0
        %476 = vdwg.mxu0
        %v477 = vadd.f32 %v425, %v472
        %s478 = scalar_lea.vmem %s1, 10
        %v479 = vld [vmem:[%s478] sm:$0x3]
        %480 = vrot.lane.b32.xlu0 %v225, 123
        %v481 = vpop.permute.xlu0 %480
        %482 = vrot.lane.b32.xlu0 %v226, 123
        %v483 = vpop.permute.xlu0 %482
        %v487 = vsel %vm233, %v479, 0
        %489 = vmatprep.subr.bf16.mxu0 0
        %490 = vmatpush1.bf16.msra.mxu0 0
        %491 = vmatprep.subr.bf16.mxu0 0
        %492 = vmatpush1.bf16.msra.mxu0 0
        %493 = vmatprep.subr.bf16.mxu0 0
        %494 = vmatpush1.bf16.msra.mxu0 0
        %495 = vmatprep.subr.bf16.mxu0 0
        %496 = vmatpush1.bf16.msra.mxu0 0
        %497 = vmatprep.subr.bf16.mxu0 0
        %498 = vmatpush1.bf16.msra.mxu0 0
        %499 = vmatprep.subr.bf16.mxu0 0
        %500 = vmatpush1.bf16.msra.mxu0 0
        %501 = vmatprep.subr.bf16.mxu0 0
        %502 = vmatpush1.bf16.msra.mxu0 %v483
        %503 = vmatprep.subr.bf16.mxu0 0
        %504 = vmatpush1.bf16.msra.mxu0 %v481
        %505 = vmatprep.subr.bf16.mxu0 0
        %506 = vmatpush2.bf16.msra.mxu0 0
        %507 = vmatprep.subr.bf16.mxu0 0
        %508 = vmatpush2.bf16.msra.mxu0 0
        %509 = vmatprep.subr.bf16.mxu0 0
        %510 = vmatpush2.bf16.msra.mxu0 0
        %511 = vmatprep.subr.bf16.mxu0 0
        %512 = vmatpush2.bf16.msra.mxu0 0
        %513 = vmatprep.subr.bf16.mxu0 0
        %514 = vmatpush2.bf16.msra.mxu0 0
        %515 = vmatprep.subr.bf16.mxu0 0
        %516 = vmatpush2.bf16.msra.mxu0 0
        %517 = vmatprep.subr.bf16.mxu0 0
        %518 = vmatpush2.bf16.msra.mxu0 0
        %519 = vmatprep.subr.bf16.mxu0 0
        %520 = vmatpush2.bf16.msra.mxu0 0
        %521 = vmatprep.mubr.bf16.mxu0 0
        %522 = vmatmul.mubr.bf16.gmra.mxu0 %v487
        %v523 = vpop.f32.mrf.mxu0
        %v524 = vadd.f32 0.0, %v523
        %v525 = vpop.f32.mrf.mxu0
        %v526 = vpop.f32.mrf.mxu0
        %v527 = vpop.f32.mrf.mxu0
        %528 = vdwg.mxu0
        %v529 = vadd.f32 %v477, %v524
        %s530 = scalar_lea.vmem %s1, 12
        %v531 = vld [vmem:[%s530] sm:$0x3]
        %532 = vrot.lane.b32.xlu0 %v225, 122
        %v533 = vpop.permute.xlu0 %532
        %534 = vrot.lane.b32.xlu0 %v226, 122
        %v535 = vpop.permute.xlu0 %534
        %v539 = vsel %vm233, %v531, 0
        %541 = vmatprep.subr.bf16.mxu0 0
        %542 = vmatpush1.bf16.msra.mxu0 0
        %543 = vmatprep.subr.bf16.mxu0 0
        %544 = vmatpush1.bf16.msra.mxu0 0
        %545 = vmatprep.subr.bf16.mxu0 0
        %546 = vmatpush1.bf16.msra.mxu0 0
        %547 = vmatprep.subr.bf16.mxu0 0
        %548 = vmatpush1.bf16.msra.mxu0 0
        %549 = vmatprep.subr.bf16.mxu0 0
        %550 = vmatpush1.bf16.msra.mxu0 0
        %551 = vmatprep.subr.bf16.mxu0 0
        %552 = vmatpush1.bf16.msra.mxu0 0
        %553 = vmatprep.subr.bf16.mxu0 0
        %554 = vmatpush1.bf16.msra.mxu0 %v535
        %555 = vmatprep.subr.bf16.mxu0 0
        %556 = vmatpush1.bf16.msra.mxu0 %v533
        %557 = vmatprep.subr.bf16.mxu0 0
        %558 = vmatpush2.bf16.msra.mxu0 0
        %559 = vmatprep.subr.bf16.mxu0 0
        %560 = vmatpush2.bf16.msra.mxu0 0
        %561 = vmatprep.subr.bf16.mxu0 0
        %562 = vmatpush2.bf16.msra.mxu0 0
        %563 = vmatprep.subr.bf16.mxu0 0
        %564 = vmatpush2.bf16.msra.mxu0 0
        %565 = vmatprep.subr.bf16.mxu0 0
        %566 = vmatpush2.bf16.msra.mxu0 0
        %567 = vmatprep.subr.bf16.mxu0 0
        %568 = vmatpush2.bf16.msra.mxu0 0
        %569 = vmatprep.subr.bf16.mxu0 0
        %570 = vmatpush2.bf16.msra.mxu0 0
        %571 = vmatprep.subr.bf16.mxu0 0
        %572 = vmatpush2.bf16.msra.mxu0 0
        %573 = vmatprep.mubr.bf16.mxu0 0
        %574 = vmatmul.mubr.bf16.gmra.mxu0 %v539
        %v575 = vpop.f32.mrf.mxu0
        %v576 = vadd.f32 0.0, %v575
        %v577 = vpop.f32.mrf.mxu0
        %v578 = vpop.f32.mrf.mxu0
        %v579 = vpop.f32.mrf.mxu0
        %580 = vdwg.mxu0
        %v581 = vadd.f32 %v529, %v576
        %s582 = sadd.s32 %s202, 1
        %s583 = smul.u32 %s582, 4
        %s584 = smul.addr %s583, 4
        %s585 = scalar_lea.vmem %s192, %s584
        %v586 = vld [vmem:[%s585] sm:$0xf]
        %v587 = vld [vmem:[%s585 + $0x4] sm:$0xf]
        %v588 = vld [vmem:[%s585 + $0x8] sm:$0xf]
        %v589 = vld [vmem:[%s585 + $0xc] sm:$0xf]
        %s590 = scalar_lea.vmem %s1, 14
        %v591 = vld [vmem:[%s590] sm:$0x3]
        %v596 = vunpack.c.l.b16 %v586
        %v597 = vunpack.c.l.b16 %v587
        %v598 = vunpack.c.l.b16 %v588
        %v599 = vunpack.c.l.b16 %v589
        %v600 = vpack.c.b16 %v597, %v596
        %v601 = vpack.c.b16 %v599, %v598
        %v605 = vsel %vm233, %v591, 0
        %607 = vmatprep.subr.bf16.mxu0 0
        %608 = vmatpush1.bf16.msra.mxu0 0
        %609 = vmatprep.subr.bf16.mxu0 0
        %610 = vmatpush1.bf16.msra.mxu0 0
        %611 = vmatprep.subr.bf16.mxu0 0
        %612 = vmatpush1.bf16.msra.mxu0 0
        %613 = vmatprep.subr.bf16.mxu0 0
        %614 = vmatpush1.bf16.msra.mxu0 0
        %615 = vmatprep.subr.bf16.mxu0 0
        %616 = vmatpush1.bf16.msra.mxu0 0
        %617 = vmatprep.subr.bf16.mxu0 0
        %618 = vmatpush1.bf16.msra.mxu0 0
        %619 = vmatprep.subr.bf16.mxu0 0
        %620 = vmatpush1.bf16.msra.mxu0 %v601
        %621 = vmatprep.subr.bf16.mxu0 0
        %622 = vmatpush1.bf16.msra.mxu0 %v600
        %623 = vmatprep.subr.bf16.mxu0 0
        %624 = vmatpush2.bf16.msra.mxu0 0
        %625 = vmatprep.subr.bf16.mxu0 0
        %626 = vmatpush2.bf16.msra.mxu0 0
        %627 = vmatprep.subr.bf16.mxu0 0
        %628 = vmatpush2.bf16.msra.mxu0 0
        %629 = vmatprep.subr.bf16.mxu0 0
        %630 = vmatpush2.bf16.msra.mxu0 0
        %631 = vmatprep.subr.bf16.mxu0 0
        %632 = vmatpush2.bf16.msra.mxu0 0
        %633 = vmatprep.subr.bf16.mxu0 0
        %634 = vmatpush2.bf16.msra.mxu0 0
        %635 = vmatprep.subr.bf16.mxu0 0
        %636 = vmatpush2.bf16.msra.mxu0 0
        %637 = vmatprep.subr.bf16.mxu0 0
        %638 = vmatpush2.bf16.msra.mxu0 0
        %639 = vmatprep.mubr.bf16.mxu0 0
        %640 = vmatmul.mubr.bf16.gmra.mxu0 %v605
        %v641 = vpop.f32.mrf.mxu0
        %v642 = vadd.f32 0.0, %v641
        %v643 = vpop.f32.mrf.mxu0
        %v644 = vpop.f32.mrf.mxu0
        %v645 = vpop.f32.mrf.mxu0
        %646 = vdwg.mxu0
        %v647 = vadd.f32 %v581, %v642
        %s648 = scalar_lea.vmem %s1, 16
        %v649 = vld [vmem:[%s648] sm:$0x3]
        %650 = vrot.lane.b32.xlu0 %v600, 127
        %v651 = vpop.permute.xlu0 %650
        %652 = vrot.lane.b32.xlu0 %v601, 127
        %v653 = vpop.permute.xlu0 %652
        %v657 = vsel %vm233, %v649, 0
        %659 = vmatprep.subr.bf16.mxu0 0
        %660 = vmatpush1.bf16.msra.mxu0 0
        %661 = vmatprep.subr.bf16.mxu0 0
        %662 = vmatpush1.bf16.msra.mxu0 0
        %663 = vmatprep.subr.bf16.mxu0 0
        %664 = vmatpush1.bf16.msra.mxu0 0
        %665 = vmatprep.subr.bf16.mxu0 0
        %666 = vmatpush1.bf16.msra.mxu0 0
        %667 = vmatprep.subr.bf16.mxu0 0
        %668 = vmatpush1.bf16.msra.mxu0 0
        %669 = vmatprep.subr.bf16.mxu0 0
        %670 = vmatpush1.bf16.msra.mxu0 0
        %671 = vmatprep.subr.bf16.mxu0 0
        %672 = vmatpush1.bf16.msra.mxu0 %v653
        %673 = vmatprep.subr.bf16.mxu0 0
        %674 = vmatpush1.bf16.msra.mxu0 %v651
        %675 = vmatprep.subr.bf16.mxu0 0
        %676 = vmatpush2.bf16.msra.mxu0 0
        %677 = vmatprep.subr.bf16.mxu0 0
        %678 = vmatpush2.bf16.msra.mxu0 0
        %679 = vmatprep.subr.bf16.mxu0 0
        %680 = vmatpush2.bf16.msra.mxu0 0
        %681 = vmatprep.subr.bf16.mxu0 0
        %682 = vmatpush2.bf16.msra.mxu0 0
        %683 = vmatprep.subr.bf16.mxu0 0
        %684 = vmatpush2.bf16.msra.mxu0 0
        %685 = vmatprep.subr.bf16.mxu0 0
        %686 = vmatpush2.bf16.msra.mxu0 0
        %687 = vmatprep.subr.bf16.mxu0 0
        %688 = vmatpush2.bf16.msra.mxu0 0
        %689 = vmatprep.subr.bf16.mxu0 0
        %690 = vmatpush2.bf16.msra.mxu0 0
        %691 = vmatprep.mubr.bf16.mxu0 0
        %692 = vmatmul.mubr.bf16.gmra.mxu0 %v657
        %v693 = vpop.f32.mrf.mxu0
        %v694 = vadd.f32 0.0, %v693
        %v695 = vpop.f32.mrf.mxu0
        %v696 = vpop.f32.mrf.mxu0
        %v697 = vpop.f32.mrf.mxu0
        %698 = vdwg.mxu0
        %v699 = vadd.f32 %v647, %v694
        %s700 = scalar_lea.vmem %s1, 18
        %v701 = vld [vmem:[%s700] sm:$0x3]
        %702 = vrot.lane.b32.xlu0 %v600, 126
        %v703 = vpop.permute.xlu0 %702
        %704 = vrot.lane.b32.xlu0 %v601, 126
        %v705 = vpop.permute.xlu0 %704
        %v709 = vsel %vm233, %v701, 0
        %711 = vmatprep.subr.bf16.mxu0 0
        %712 = vmatpush1.bf16.msra.mxu0 0
        %713 = vmatprep.subr.bf16.mxu0 0
        %714 = vmatpush1.bf16.msra.mxu0 0
        %715 = vmatprep.subr.bf16.mxu0 0
        %716 = vmatpush1.bf16.msra.mxu0 0
        %717 = vmatprep.subr.bf16.mxu0 0
        %718 = vmatpush1.bf16.msra.mxu0 0
        %719 = vmatprep.subr.bf16.mxu0 0
        %720 = vmatpush1.bf16.msra.mxu0 0
        %721 = vmatprep.subr.bf16.mxu0 0
        %722 = vmatpush1.bf16.msra.mxu0 0
        %723 = vmatprep.subr.bf16.mxu0 0
        %724 = vmatpush1.bf16.msra.mxu0 %v705
        %725 = vmatprep.subr.bf16.mxu0 0
        %726 = vmatpush1.bf16.msra.mxu0 %v703
        %727 = vmatprep.subr.bf16.mxu0 0
        %728 = vmatpush2.bf16.msra.mxu0 0
        %729 = vmatprep.subr.bf16.mxu0 0
        %730 = vmatpush2.bf16.msra.mxu0 0
        %731 = vmatprep.subr.bf16.mxu0 0
        %732 = vmatpush2.bf16.msra.mxu0 0
        %733 = vmatprep.subr.bf16.mxu0 0
        %734 = vmatpush2.bf16.msra.mxu0 0
        %735 = vmatprep.subr.bf16.mxu0 0
        %736 = vmatpush2.bf16.msra.mxu0 0
        %737 = vmatprep.subr.bf16.mxu0 0
        %738 = vmatpush2.bf16.msra.mxu0 0
        %739 = vmatprep.subr.bf16.mxu0 0
        %740 = vmatpush2.bf16.msra.mxu0 0
        %741 = vmatprep.subr.bf16.mxu0 0
        %742 = vmatpush2.bf16.msra.mxu0 0
        %743 = vmatprep.mubr.bf16.mxu0 0
        %744 = vmatmul.mubr.bf16.gmra.mxu0 %v709
        %v745 = vpop.f32.mrf.mxu0
        %v746 = vadd.f32 0.0, %v745
        %v747 = vpop.f32.mrf.mxu0
        %v748 = vpop.f32.mrf.mxu0
        %v749 = vpop.f32.mrf.mxu0
        %750 = vdwg.mxu0
        %v751 = vadd.f32 %v699, %v746
        %s752 = scalar_lea.vmem %s1, 20
        %v753 = vld [vmem:[%s752] sm:$0x3]
        %754 = vrot.lane.b32.xlu0 %v600, 125
        %v755 = vpop.permute.xlu0 %754
        %756 = vrot.lane.b32.xlu0 %v601, 125
        %v757 = vpop.permute.xlu0 %756
        %v761 = vsel %vm233, %v753, 0
        %763 = vmatprep.subr.bf16.mxu0 0
        %764 = vmatpush1.bf16.msra.mxu0 0
        %765 = vmatprep.subr.bf16.mxu0 0
        %766 = vmatpush1.bf16.msra.mxu0 0
        %767 = vmatprep.subr.bf16.mxu0 0
        %768 = vmatpush1.bf16.msra.mxu0 0
        %769 = vmatprep.subr.bf16.mxu0 0
        %770 = vmatpush1.bf16.msra.mxu0 0
        %771 = vmatprep.subr.bf16.mxu0 0
        %772 = vmatpush1.bf16.msra.mxu0 0
        %773 = vmatprep.subr.bf16.mxu0 0
        %774 = vmatpush1.bf16.msra.mxu0 0
        %775 = vmatprep.subr.bf16.mxu0 0
        %776 = vmatpush1.bf16.msra.mxu0 %v757
        %777 = vmatprep.subr.bf16.mxu0 0
        %778 = vmatpush1.bf16.msra.mxu0 %v755
        %779 = vmatprep.subr.bf16.mxu0 0
        %780 = vmatpush2.bf16.msra.mxu0 0
        %781 = vmatprep.subr.bf16.mxu0 0
        %782 = vmatpush2.bf16.msra.mxu0 0
        %783 = vmatprep.subr.bf16.mxu0 0
        %784 = vmatpush2.bf16.msra.mxu0 0
        %785 = vmatprep.subr.bf16.mxu0 0
        %786 = vmatpush2.bf16.msra.mxu0 0
        %787 = vmatprep.subr.bf16.mxu0 0
        %788 = vmatpush2.bf16.msra.mxu0 0
        %789 = vmatprep.subr.bf16.mxu0 0
        %790 = vmatpush2.bf16.msra.mxu0 0
        %791 = vmatprep.subr.bf16.mxu0 0
        %792 = vmatpush2.bf16.msra.mxu0 0
        %793 = vmatprep.subr.bf16.mxu0 0
        %794 = vmatpush2.bf16.msra.mxu0 0
        %795 = vmatprep.mubr.bf16.mxu0 0
        %796 = vmatmul.mubr.bf16.gmra.mxu0 %v761
        %v797 = vpop.f32.mrf.mxu0
        %v798 = vadd.f32 0.0, %v797
        %v799 = vpop.f32.mrf.mxu0
        %v800 = vpop.f32.mrf.mxu0
        %v801 = vpop.f32.mrf.mxu0
        %802 = vdwg.mxu0
        %v803 = vadd.f32 %v751, %v798
        %s804 = scalar_lea.vmem %s1, 22
        %v805 = vld [vmem:[%s804] sm:$0x3]
        %806 = vrot.lane.b32.xlu0 %v600, 124
        %v807 = vpop.permute.xlu0 %806
        %808 = vrot.lane.b32.xlu0 %v601, 124
        %v809 = vpop.permute.xlu0 %808
        %v813 = vsel %vm233, %v805, 0
        %815 = vmatprep.subr.bf16.mxu0 0
        %816 = vmatpush1.bf16.msra.mxu0 0
        %817 = vmatprep.subr.bf16.mxu0 0
        %818 = vmatpush1.bf16.msra.mxu0 0
        %819 = vmatprep.subr.bf16.mxu0 0
        %820 = vmatpush1.bf16.msra.mxu0 0
        %821 = vmatprep.subr.bf16.mxu0 0
        %822 = vmatpush1.bf16.msra.mxu0 0
        %823 = vmatprep.subr.bf16.mxu0 0
        %824 = vmatpush1.bf16.msra.mxu0 0
        %825 = vmatprep.subr.bf16.mxu0 0
        %826 = vmatpush1.bf16.msra.mxu0 0
        %827 = vmatprep.subr.bf16.mxu0 0
        %828 = vmatpush1.bf16.msra.mxu0 %v809
        %829 = vmatprep.subr.bf16.mxu0 0
        %830 = vmatpush1.bf16.msra.mxu0 %v807
        %831 = vmatprep.subr.bf16.mxu0 0
        %832 = vmatpush2.bf16.msra.mxu0 0
        %833 = vmatprep.subr.bf16.mxu0 0
        %834 = vmatpush2.bf16.msra.mxu0 0
        %835 = vmatprep.subr.bf16.mxu0 0
        %836 = vmatpush2.bf16.msra.mxu0 0
        %837 = vmatprep.subr.bf16.mxu0 0
        %838 = vmatpush2.bf16.msra.mxu0 0
        %839 = vmatprep.subr.bf16.mxu0 0
        %840 = vmatpush2.bf16.msra.mxu0 0
        %841 = vmatprep.subr.bf16.mxu0 0
        %842 = vmatpush2.bf16.msra.mxu0 0
        %843 = vmatprep.subr.bf16.mxu0 0
        %844 = vmatpush2.bf16.msra.mxu0 0
        %845 = vmatprep.subr.bf16.mxu0 0
        %846 = vmatpush2.bf16.msra.mxu0 0
        %847 = vmatprep.mubr.bf16.mxu0 0
        %848 = vmatmul.mubr.bf16.gmra.mxu0 %v813
        %v849 = vpop.f32.mrf.mxu0
        %v850 = vadd.f32 0.0, %v849
        %v851 = vpop.f32.mrf.mxu0
        %v852 = vpop.f32.mrf.mxu0
        %v853 = vpop.f32.mrf.mxu0
        %854 = vdwg.mxu0
        %v855 = vadd.f32 %v803, %v850
        %s856 = scalar_lea.vmem %s1, 24
        %v857 = vld [vmem:[%s856] sm:$0x3]
        %858 = vrot.lane.b32.xlu0 %v600, 123
        %v859 = vpop.permute.xlu0 %858
        %860 = vrot.lane.b32.xlu0 %v601, 123
        %v861 = vpop.permute.xlu0 %860
        %v865 = vsel %vm233, %v857, 0
        %867 = vmatprep.subr.bf16.mxu0 0
        %868 = vmatpush1.bf16.msra.mxu0 0
        %869 = vmatprep.subr.bf16.mxu0 0
        %870 = vmatpush1.bf16.msra.mxu0 0
        %871 = vmatprep.subr.bf16.mxu0 0
        %872 = vmatpush1.bf16.msra.mxu0 0
        %873 = vmatprep.subr.bf16.mxu0 0
        %874 = vmatpush1.bf16.msra.mxu0 0
        %875 = vmatprep.subr.bf16.mxu0 0
        %876 = vmatpush1.bf16.msra.mxu0 0
        %877 = vmatprep.subr.bf16.mxu0 0
        %878 = vmatpush1.bf16.msra.mxu0 0
        %879 = vmatprep.subr.bf16.mxu0 0
        %880 = vmatpush1.bf16.msra.mxu0 %v861
        %881 = vmatprep.subr.bf16.mxu0 0
        %882 = vmatpush1.bf16.msra.mxu0 %v859
        %883 = vmatprep.subr.bf16.mxu0 0
        %884 = vmatpush2.bf16.msra.mxu0 0
        %885 = vmatprep.subr.bf16.mxu0 0
        %886 = vmatpush2.bf16.msra.mxu0 0
        %887 = vmatprep.subr.bf16.mxu0 0
        %888 = vmatpush2.bf16.msra.mxu0 0
        %889 = vmatprep.subr.bf16.mxu0 0
        %890 = vmatpush2.bf16.msra.mxu0 0
        %891 = vmatprep.subr.bf16.mxu0 0
        %892 = vmatpush2.bf16.msra.mxu0 0
        %893 = vmatprep.subr.bf16.mxu0 0
        %894 = vmatpush2.bf16.msra.mxu0 0
        %895 = vmatprep.subr.bf16.mxu0 0
        %896 = vmatpush2.bf16.msra.mxu0 0
        %897 = vmatprep.subr.bf16.mxu0 0
        %898 = vmatpush2.bf16.msra.mxu0 0
        %899 = vmatprep.mubr.bf16.mxu0 0
        %900 = vmatmul.mubr.bf16.gmra.mxu0 %v865
        %v901 = vpop.f32.mrf.mxu0
        %v902 = vadd.f32 0.0, %v901
        %v903 = vpop.f32.mrf.mxu0
        %v904 = vpop.f32.mrf.mxu0
        %v905 = vpop.f32.mrf.mxu0
        %906 = vdwg.mxu0
        %v907 = vadd.f32 %v855, %v902
        %s908 = scalar_lea.vmem %s1, 26
        %v909 = vld [vmem:[%s908] sm:$0x3]
        %910 = vrot.lane.b32.xlu0 %v600, 122
        %v911 = vpop.permute.xlu0 %910
        %912 = vrot.lane.b32.xlu0 %v601, 122
        %v913 = vpop.permute.xlu0 %912
        %v917 = vsel %vm233, %v909, 0
        %919 = vmatprep.subr.bf16.mxu0 0
        %920 = vmatpush1.bf16.msra.mxu0 0
        %921 = vmatprep.subr.bf16.mxu0 0
        %922 = vmatpush1.bf16.msra.mxu0 0
        %923 = vmatprep.subr.bf16.mxu0 0
        %924 = vmatpush1.bf16.msra.mxu0 0
        %925 = vmatprep.subr.bf16.mxu0 0
        %926 = vmatpush1.bf16.msra.mxu0 0
        %927 = vmatprep.subr.bf16.mxu0 0
        %928 = vmatpush1.bf16.msra.mxu0 0
        %929 = vmatprep.subr.bf16.mxu0 0
        %930 = vmatpush1.bf16.msra.mxu0 0
        %931 = vmatprep.subr.bf16.mxu0 0
        %932 = vmatpush1.bf16.msra.mxu0 %v913
        %933 = vmatprep.subr.bf16.mxu0 0
        %934 = vmatpush1.bf16.msra.mxu0 %v911
        %935 = vmatprep.subr.bf16.mxu0 0
        %936 = vmatpush2.bf16.msra.mxu0 0
        %937 = vmatprep.subr.bf16.mxu0 0
        %938 = vmatpush2.bf16.msra.mxu0 0
        %939 = vmatprep.subr.bf16.mxu0 0
        %940 = vmatpush2.bf16.msra.mxu0 0
        %941 = vmatprep.subr.bf16.mxu0 0
        %942 = vmatpush2.bf16.msra.mxu0 0
        %943 = vmatprep.subr.bf16.mxu0 0
        %944 = vmatpush2.bf16.msra.mxu0 0
        %945 = vmatprep.subr.bf16.mxu0 0
        %946 = vmatpush2.bf16.msra.mxu0 0
        %947 = vmatprep.subr.bf16.mxu0 0
        %948 = vmatpush2.bf16.msra.mxu0 0
        %949 = vmatprep.subr.bf16.mxu0 0
        %950 = vmatpush2.bf16.msra.mxu0 0
        %951 = vmatprep.mubr.bf16.mxu0 0
        %952 = vmatmul.mubr.bf16.gmra.mxu0 %v917
        %v953 = vpop.f32.mrf.mxu0
        %v954 = vadd.f32 0.0, %v953
        %v955 = vpop.f32.mrf.mxu0
        %v956 = vpop.f32.mrf.mxu0
        %v957 = vpop.f32.mrf.mxu0
        %958 = vdwg.mxu0
        %v959 = vadd.f32 %v907, %v954
        %s960 = sadd.s32 %s202, 2
        %s961 = smul.u32 %s960, 4
        %s962 = smul.addr %s961, 4
        %s963 = scalar_lea.vmem %s192, %s962
        %v964 = vld [vmem:[%s963] sm:$0xf]
        %v965 = vld [vmem:[%s963 + $0x4] sm:$0xf]
        %v966 = vld [vmem:[%s963 + $0x8] sm:$0xf]
        %v967 = vld [vmem:[%s963 + $0xc] sm:$0xf]
        %s968 = scalar_lea.vmem %s1, 28
        %v969 = vld [vmem:[%s968] sm:$0x3]
        %v974 = vunpack.c.l.b16 %v964
        %v975 = vunpack.c.l.b16 %v965
        %v976 = vunpack.c.l.b16 %v966
        %v977 = vunpack.c.l.b16 %v967
        %v978 = vpack.c.b16 %v975, %v974
        %v979 = vpack.c.b16 %v977, %v976
        %v983 = vsel %vm233, %v969, 0
        %985 = vmatprep.subr.bf16.mxu0 0
        %986 = vmatpush1.bf16.msra.mxu0 0
        %987 = vmatprep.subr.bf16.mxu0 0
        %988 = vmatpush1.bf16.msra.mxu0 0
        %989 = vmatprep.subr.bf16.mxu0 0
        %990 = vmatpush1.bf16.msra.mxu0 0
        %991 = vmatprep.subr.bf16.mxu0 0
        %992 = vmatpush1.bf16.msra.mxu0 0
        %993 = vmatprep.subr.bf16.mxu0 0
        %994 = vmatpush1.bf16.msra.mxu0 0
        %995 = vmatprep.subr.bf16.mxu0 0
        %996 = vmatpush1.bf16.msra.mxu0 0
        %997 = vmatprep.subr.bf16.mxu0 0
        %998 = vmatpush1.bf16.msra.mxu0 %v979
        %999 = vmatprep.subr.bf16.mxu0 0
        %1000 = vmatpush1.bf16.msra.mxu0 %v978
        %1001 = vmatprep.subr.bf16.mxu0 0
        %1002 = vmatpush2.bf16.msra.mxu0 0
        %1003 = vmatprep.subr.bf16.mxu0 0
        %1004 = vmatpush2.bf16.msra.mxu0 0
        %1005 = vmatprep.subr.bf16.mxu0 0
        %1006 = vmatpush2.bf16.msra.mxu0 0
        %1007 = vmatprep.subr.bf16.mxu0 0
        %1008 = vmatpush2.bf16.msra.mxu0 0
        %1009 = vmatprep.subr.bf16.mxu0 0
        %1010 = vmatpush2.bf16.msra.mxu0 0
        %1011 = vmatprep.subr.bf16.mxu0 0
        %1012 = vmatpush2.bf16.msra.mxu0 0
        %1013 = vmatprep.subr.bf16.mxu0 0
        %1014 = vmatpush2.bf16.msra.mxu0 0
        %1015 = vmatprep.subr.bf16.mxu0 0
        %1016 = vmatpush2.bf16.msra.mxu0 0
        %1017 = vmatprep.mubr.bf16.mxu0 0
        %1018 = vmatmul.mubr.bf16.gmra.mxu0 %v983
        %v1019 = vpop.f32.mrf.mxu0
        %v1020 = vadd.f32 0.0, %v1019
        %v1021 = vpop.f32.mrf.mxu0
        %v1022 = vpop.f32.mrf.mxu0
        %v1023 = vpop.f32.mrf.mxu0
        %1024 = vdwg.mxu0
        %v1025 = vadd.f32 %v959, %v1020
        %s1026 = scalar_lea.vmem %s1, 30
        %v1027 = vld [vmem:[%s1026] sm:$0x3]
        %1028 = vrot.lane.b32.xlu0 %v978, 127
        %v1029 = vpop.permute.xlu0 %1028
        %1030 = vrot.lane.b32.xlu0 %v979, 127
        %v1031 = vpop.permute.xlu0 %1030
        %v1035 = vsel %vm233, %v1027, 0
        %1037 = vmatprep.subr.bf16.mxu0 0
        %1038 = vmatpush1.bf16.msra.mxu0 0
        %1039 = vmatprep.subr.bf16.mxu0 0
        %1040 = vmatpush1.bf16.msra.mxu0 0
        %1041 = vmatprep.subr.bf16.mxu0 0
        %1042 = vmatpush1.bf16.msra.mxu0 0
        %1043 = vmatprep.subr.bf16.mxu0 0
        %1044 = vmatpush1.bf16.msra.mxu0 0
        %1045 = vmatprep.subr.bf16.mxu0 0
        %1046 = vmatpush1.bf16.msra.mxu0 0
        %1047 = vmatprep.subr.bf16.mxu0 0
        %1048 = vmatpush1.bf16.msra.mxu0 0
        %1049 = vmatprep.subr.bf16.mxu0 0
        %1050 = vmatpush1.bf16.msra.mxu0 %v1031
        %1051 = vmatprep.subr.bf16.mxu0 0
        %1052 = vmatpush1.bf16.msra.mxu0 %v1029
        %1053 = vmatprep.subr.bf16.mxu0 0
        %1054 = vmatpush2.bf16.msra.mxu0 0
        %1055 = vmatprep.subr.bf16.mxu0 0
        %1056 = vmatpush2.bf16.msra.mxu0 0
        %1057 = vmatprep.subr.bf16.mxu0 0
        %1058 = vmatpush2.bf16.msra.mxu0 0
        %1059 = vmatprep.subr.bf16.mxu0 0
        %1060 = vmatpush2.bf16.msra.mxu0 0
        %1061 = vmatprep.subr.bf16.mxu0 0
        %1062 = vmatpush2.bf16.msra.mxu0 0
        %1063 = vmatprep.subr.bf16.mxu0 0
        %1064 = vmatpush2.bf16.msra.mxu0 0
        %1065 = vmatprep.subr.bf16.mxu0 0
        %1066 = vmatpush2.bf16.msra.mxu0 0
        %1067 = vmatprep.subr.bf16.mxu0 0
        %1068 = vmatpush2.bf16.msra.mxu0 0
        %1069 = vmatprep.mubr.bf16.mxu0 0
        %1070 = vmatmul.mubr.bf16.gmra.mxu0 %v1035
        %v1071 = vpop.f32.mrf.mxu0
        %v1072 = vadd.f32 0.0, %v1071
        %v1073 = vpop.f32.mrf.mxu0
        %v1074 = vpop.f32.mrf.mxu0
        %v1075 = vpop.f32.mrf.mxu0
        %1076 = vdwg.mxu0
        %v1077 = vadd.f32 %v1025, %v1072
        %s1078 = scalar_lea.vmem %s1, 32
        %v1079 = vld [vmem:[%s1078] sm:$0x3]
        %1080 = vrot.lane.b32.xlu0 %v978, 126
        %v1081 = vpop.permute.xlu0 %1080
        %1082 = vrot.lane.b32.xlu0 %v979, 126
        %v1083 = vpop.permute.xlu0 %1082
        %v1087 = vsel %vm233, %v1079, 0
        %1089 = vmatprep.subr.bf16.mxu0 0
        %1090 = vmatpush1.bf16.msra.mxu0 0
        %1091 = vmatprep.subr.bf16.mxu0 0
        %1092 = vmatpush1.bf16.msra.mxu0 0
        %1093 = vmatprep.subr.bf16.mxu0 0
        %1094 = vmatpush1.bf16.msra.mxu0 0
        %1095 = vmatprep.subr.bf16.mxu0 0
        %1096 = vmatpush1.bf16.msra.mxu0 0
        %1097 = vmatprep.subr.bf16.mxu0 0
        %1098 = vmatpush1.bf16.msra.mxu0 0
        %1099 = vmatprep.subr.bf16.mxu0 0
        %1100 = vmatpush1.bf16.msra.mxu0 0
        %1101 = vmatprep.subr.bf16.mxu0 0
        %1102 = vmatpush1.bf16.msra.mxu0 %v1083
        %1103 = vmatprep.subr.bf16.mxu0 0
        %1104 = vmatpush1.bf16.msra.mxu0 %v1081
        %1105 = vmatprep.subr.bf16.mxu0 0
        %1106 = vmatpush2.bf16.msra.mxu0 0
        %1107 = vmatprep.subr.bf16.mxu0 0
        %1108 = vmatpush2.bf16.msra.mxu0 0
        %1109 = vmatprep.subr.bf16.mxu0 0
        %1110 = vmatpush2.bf16.msra.mxu0 0
        %1111 = vmatprep.subr.bf16.mxu0 0
        %1112 = vmatpush2.bf16.msra.mxu0 0
        %1113 = vmatprep.subr.bf16.mxu0 0
        %1114 = vmatpush2.bf16.msra.mxu0 0
        %1115 = vmatprep.subr.bf16.mxu0 0
        %1116 = vmatpush2.bf16.msra.mxu0 0
        %1117 = vmatprep.subr.bf16.mxu0 0
        %1118 = vmatpush2.bf16.msra.mxu0 0
        %1119 = vmatprep.subr.bf16.mxu0 0
        %1120 = vmatpush2.bf16.msra.mxu0 0
        %1121 = vmatprep.mubr.bf16.mxu0 0
        %1122 = vmatmul.mubr.bf16.gmra.mxu0 %v1087
        %v1123 = vpop.f32.mrf.mxu0
        %v1124 = vadd.f32 0.0, %v1123
        %v1125 = vpop.f32.mrf.mxu0
        %v1126 = vpop.f32.mrf.mxu0
        %v1127 = vpop.f32.mrf.mxu0
        %1128 = vdwg.mxu0
        %v1129 = vadd.f32 %v1077, %v1124
        %s1130 = scalar_lea.vmem %s1, 34
        %v1131 = vld [vmem:[%s1130] sm:$0x3]
        %1132 = vrot.lane.b32.xlu0 %v978, 125
        %v1133 = vpop.permute.xlu0 %1132
        %1134 = vrot.lane.b32.xlu0 %v979, 125
        %v1135 = vpop.permute.xlu0 %1134
        %v1139 = vsel %vm233, %v1131, 0
        %1141 = vmatprep.subr.bf16.mxu0 0
        %1142 = vmatpush1.bf16.msra.mxu0 0
        %1143 = vmatprep.subr.bf16.mxu0 0
        %1144 = vmatpush1.bf16.msra.mxu0 0
        %1145 = vmatprep.subr.bf16.mxu0 0
        %1146 = vmatpush1.bf16.msra.mxu0 0
        %1147 = vmatprep.subr.bf16.mxu0 0
        %1148 = vmatpush1.bf16.msra.mxu0 0
        %1149 = vmatprep.subr.bf16.mxu0 0
        %1150 = vmatpush1.bf16.msra.mxu0 0
        %1151 = vmatprep.subr.bf16.mxu0 0
        %1152 = vmatpush1.bf16.msra.mxu0 0
        %1153 = vmatprep.subr.bf16.mxu0 0
        %1154 = vmatpush1.bf16.msra.mxu0 %v1135
        %1155 = vmatprep.subr.bf16.mxu0 0
        %1156 = vmatpush1.bf16.msra.mxu0 %v1133
        %1157 = vmatprep.subr.bf16.mxu0 0
        %1158 = vmatpush2.bf16.msra.mxu0 0
        %1159 = vmatprep.subr.bf16.mxu0 0
        %1160 = vmatpush2.bf16.msra.mxu0 0
        %1161 = vmatprep.subr.bf16.mxu0 0
        %1162 = vmatpush2.bf16.msra.mxu0 0
        %1163 = vmatprep.subr.bf16.mxu0 0
        %1164 = vmatpush2.bf16.msra.mxu0 0
        %1165 = vmatprep.subr.bf16.mxu0 0
        %1166 = vmatpush2.bf16.msra.mxu0 0
        %1167 = vmatprep.subr.bf16.mxu0 0
        %1168 = vmatpush2.bf16.msra.mxu0 0
        %1169 = vmatprep.subr.bf16.mxu0 0
        %1170 = vmatpush2.bf16.msra.mxu0 0
        %1171 = vmatprep.subr.bf16.mxu0 0
        %1172 = vmatpush2.bf16.msra.mxu0 0
        %1173 = vmatprep.mubr.bf16.mxu0 0
        %1174 = vmatmul.mubr.bf16.gmra.mxu0 %v1139
        %v1175 = vpop.f32.mrf.mxu0
        %v1176 = vadd.f32 0.0, %v1175
        %v1177 = vpop.f32.mrf.mxu0
        %v1178 = vpop.f32.mrf.mxu0
        %v1179 = vpop.f32.mrf.mxu0
        %1180 = vdwg.mxu0
        %v1181 = vadd.f32 %v1129, %v1176
        %s1182 = scalar_lea.vmem %s1, 36
        %v1183 = vld [vmem:[%s1182] sm:$0x3]
        %1184 = vrot.lane.b32.xlu0 %v978, 124
        %v1185 = vpop.permute.xlu0 %1184
        %1186 = vrot.lane.b32.xlu0 %v979, 124
        %v1187 = vpop.permute.xlu0 %1186
        %v1191 = vsel %vm233, %v1183, 0
        %1193 = vmatprep.subr.bf16.mxu0 0
        %1194 = vmatpush1.bf16.msra.mxu0 0
        %1195 = vmatprep.subr.bf16.mxu0 0
        %1196 = vmatpush1.bf16.msra.mxu0 0
        %1197 = vmatprep.subr.bf16.mxu0 0
        %1198 = vmatpush1.bf16.msra.mxu0 0
        %1199 = vmatprep.subr.bf16.mxu0 0
        %1200 = vmatpush1.bf16.msra.mxu0 0
        %1201 = vmatprep.subr.bf16.mxu0 0
        %1202 = vmatpush1.bf16.msra.mxu0 0
        %1203 = vmatprep.subr.bf16.mxu0 0
        %1204 = vmatpush1.bf16.msra.mxu0 0
        %1205 = vmatprep.subr.bf16.mxu0 0
        %1206 = vmatpush1.bf16.msra.mxu0 %v1187
        %1207 = vmatprep.subr.bf16.mxu0 0
        %1208 = vmatpush1.bf16.msra.mxu0 %v1185
        %1209 = vmatprep.subr.bf16.mxu0 0
        %1210 = vmatpush2.bf16.msra.mxu0 0
        %1211 = vmatprep.subr.bf16.mxu0 0
        %1212 = vmatpush2.bf16.msra.mxu0 0
        %1213 = vmatprep.subr.bf16.mxu0 0
        %1214 = vmatpush2.bf16.msra.mxu0 0
        %1215 = vmatprep.subr.bf16.mxu0 0
        %1216 = vmatpush2.bf16.msra.mxu0 0
        %1217 = vmatprep.subr.bf16.mxu0 0
        %1218 = vmatpush2.bf16.msra.mxu0 0
        %1219 = vmatprep.subr.bf16.mxu0 0
        %1220 = vmatpush2.bf16.msra.mxu0 0
        %1221 = vmatprep.subr.bf16.mxu0 0
        %1222 = vmatpush2.bf16.msra.mxu0 0
        %1223 = vmatprep.subr.bf16.mxu0 0
        %1224 = vmatpush2.bf16.msra.mxu0 0
        %1225 = vmatprep.mubr.bf16.mxu0 0
        %1226 = vmatmul.mubr.bf16.gmra.mxu0 %v1191
        %v1227 = vpop.f32.mrf.mxu0
        %v1228 = vadd.f32 0.0, %v1227
        %v1229 = vpop.f32.mrf.mxu0
        %v1230 = vpop.f32.mrf.mxu0
        %v1231 = vpop.f32.mrf.mxu0
        %1232 = vdwg.mxu0
        %v1233 = vadd.f32 %v1181, %v1228
        %s1234 = scalar_lea.vmem %s1, 38
        %v1235 = vld [vmem:[%s1234] sm:$0x3]
        %1236 = vrot.lane.b32.xlu0 %v978, 123
        %v1237 = vpop.permute.xlu0 %1236
        %1238 = vrot.lane.b32.xlu0 %v979, 123
        %v1239 = vpop.permute.xlu0 %1238
        %v1243 = vsel %vm233, %v1235, 0
        %1245 = vmatprep.subr.bf16.mxu0 0
        %1246 = vmatpush1.bf16.msra.mxu0 0
        %1247 = vmatprep.subr.bf16.mxu0 0
        %1248 = vmatpush1.bf16.msra.mxu0 0
        %1249 = vmatprep.subr.bf16.mxu0 0
        %1250 = vmatpush1.bf16.msra.mxu0 0
        %1251 = vmatprep.subr.bf16.mxu0 0
        %1252 = vmatpush1.bf16.msra.mxu0 0
        %1253 = vmatprep.subr.bf16.mxu0 0
        %1254 = vmatpush1.bf16.msra.mxu0 0
        %1255 = vmatprep.subr.bf16.mxu0 0
        %1256 = vmatpush1.bf16.msra.mxu0 0
        %1257 = vmatprep.subr.bf16.mxu0 0
        %1258 = vmatpush1.bf16.msra.mxu0 %v1239
        %1259 = vmatprep.subr.bf16.mxu0 0
        %1260 = vmatpush1.bf16.msra.mxu0 %v1237
        %1261 = vmatprep.subr.bf16.mxu0 0
        %1262 = vmatpush2.bf16.msra.mxu0 0
        %1263 = vmatprep.subr.bf16.mxu0 0
        %1264 = vmatpush2.bf16.msra.mxu0 0
        %1265 = vmatprep.subr.bf16.mxu0 0
        %1266 = vmatpush2.bf16.msra.mxu0 0
        %1267 = vmatprep.subr.bf16.mxu0 0
        %1268 = vmatpush2.bf16.msra.mxu0 0
        %1269 = vmatprep.subr.bf16.mxu0 0
        %1270 = vmatpush2.bf16.msra.mxu0 0
        %1271 = vmatprep.subr.bf16.mxu0 0
        %1272 = vmatpush2.bf16.msra.mxu0 0
        %1273 = vmatprep.subr.bf16.mxu0 0
        %1274 = vmatpush2.bf16.msra.mxu0 0
        %1275 = vmatprep.subr.bf16.mxu0 0
        %1276 = vmatpush2.bf16.msra.mxu0 0
        %1277 = vmatprep.mubr.bf16.mxu0 0
        %1278 = vmatmul.mubr.bf16.gmra.mxu0 %v1243
        %v1279 = vpop.f32.mrf.mxu0
        %v1280 = vadd.f32 0.0, %v1279
        %v1281 = vpop.f32.mrf.mxu0
        %v1282 = vpop.f32.mrf.mxu0
        %v1283 = vpop.f32.mrf.mxu0
        %1284 = vdwg.mxu0
        %v1285 = vadd.f32 %v1233, %v1280
        %s1286 = scalar_lea.vmem %s1, 40
        %v1287 = vld [vmem:[%s1286] sm:$0x3]
        %1288 = vrot.lane.b32.xlu0 %v978, 122
        %v1289 = vpop.permute.xlu0 %1288
        %1290 = vrot.lane.b32.xlu0 %v979, 122
        %v1291 = vpop.permute.xlu0 %1290
        %v1295 = vsel %vm233, %v1287, 0
        %1297 = vmatprep.subr.bf16.mxu0 0
        %1298 = vmatpush1.bf16.msra.mxu0 0
        %1299 = vmatprep.subr.bf16.mxu0 0
        %1300 = vmatpush1.bf16.msra.mxu0 0
        %1301 = vmatprep.subr.bf16.mxu0 0
        %1302 = vmatpush1.bf16.msra.mxu0 0
        %1303 = vmatprep.subr.bf16.mxu0 0
        %1304 = vmatpush1.bf16.msra.mxu0 0
        %1305 = vmatprep.subr.bf16.mxu0 0
        %1306 = vmatpush1.bf16.msra.mxu0 0
        %1307 = vmatprep.subr.bf16.mxu0 0
        %1308 = vmatpush1.bf16.msra.mxu0 0
        %1309 = vmatprep.subr.bf16.mxu0 0
        %1310 = vmatpush1.bf16.msra.mxu0 %v1291
        %1311 = vmatprep.subr.bf16.mxu0 0
        %1312 = vmatpush1.bf16.msra.mxu0 %v1289
        %1313 = vmatprep.subr.bf16.mxu0 0
        %1314 = vmatpush2.bf16.msra.mxu0 0
        %1315 = vmatprep.subr.bf16.mxu0 0
        %1316 = vmatpush2.bf16.msra.mxu0 0
        %1317 = vmatprep.subr.bf16.mxu0 0
        %1318 = vmatpush2.bf16.msra.mxu0 0
        %1319 = vmatprep.subr.bf16.mxu0 0
        %1320 = vmatpush2.bf16.msra.mxu0 0
        %1321 = vmatprep.subr.bf16.mxu0 0
        %1322 = vmatpush2.bf16.msra.mxu0 0
        %1323 = vmatprep.subr.bf16.mxu0 0
        %1324 = vmatpush2.bf16.msra.mxu0 0
        %1325 = vmatprep.subr.bf16.mxu0 0
        %1326 = vmatpush2.bf16.msra.mxu0 0
        %1327 = vmatprep.subr.bf16.mxu0 0
        %1328 = vmatpush2.bf16.msra.mxu0 0
        %1329 = vmatprep.mubr.bf16.mxu0 0
        %1330 = vmatmul.mubr.bf16.gmra.mxu0 %v1295
        %v1331 = vpop.f32.mrf.mxu0
        %v1332 = vadd.f32 0.0, %v1331
        %v1333 = vpop.f32.mrf.mxu0
        %v1334 = vpop.f32.mrf.mxu0
        %v1335 = vpop.f32.mrf.mxu0
        %1336 = vdwg.mxu0
        %v1337 = vadd.f32 %v1285, %v1332
        %s1338 = sadd.s32 %s202, 3
        %s1339 = smul.u32 %s1338, 4
        %s1340 = smul.addr %s1339, 4
        %s1341 = scalar_lea.vmem %s192, %s1340
        %v1342 = vld [vmem:[%s1341] sm:$0xf]
        %v1343 = vld [vmem:[%s1341 + $0x4] sm:$0xf]
        %v1344 = vld [vmem:[%s1341 + $0x8] sm:$0xf]
        %v1345 = vld [vmem:[%s1341 + $0xc] sm:$0xf]
        %s1346 = scalar_lea.vmem %s1, 42
        %v1347 = vld [vmem:[%s1346] sm:$0x3]
        %v1352 = vunpack.c.l.b16 %v1342
        %v1353 = vunpack.c.l.b16 %v1343
        %v1354 = vunpack.c.l.b16 %v1344
        %v1355 = vunpack.c.l.b16 %v1345
        %v1356 = vpack.c.b16 %v1353, %v1352
        %v1357 = vpack.c.b16 %v1355, %v1354
        %v1361 = vsel %vm233, %v1347, 0
        %1363 = vmatprep.subr.bf16.mxu0 0
        %1364 = vmatpush1.bf16.msra.mxu0 0
        %1365 = vmatprep.subr.bf16.mxu0 0
        %1366 = vmatpush1.bf16.msra.mxu0 0
        %1367 = vmatprep.subr.bf16.mxu0 0
        %1368 = vmatpush1.bf16.msra.mxu0 0
        %1369 = vmatprep.subr.bf16.mxu0 0
        %1370 = vmatpush1.bf16.msra.mxu0 0
        %1371 = vmatprep.subr.bf16.mxu0 0
        %1372 = vmatpush1.bf16.msra.mxu0 0
        %1373 = vmatprep.subr.bf16.mxu0 0
        %1374 = vmatpush1.bf16.msra.mxu0 0
        %1375 = vmatprep.subr.bf16.mxu0 0
        %1376 = vmatpush1.bf16.msra.mxu0 %v1357
        %1377 = vmatprep.subr.bf16.mxu0 0
        %1378 = vmatpush1.bf16.msra.mxu0 %v1356
        %1379 = vmatprep.subr.bf16.mxu0 0
        %1380 = vmatpush2.bf16.msra.mxu0 0
        %1381 = vmatprep.subr.bf16.mxu0 0
        %1382 = vmatpush2.bf16.msra.mxu0 0
        %1383 = vmatprep.subr.bf16.mxu0 0
        %1384 = vmatpush2.bf16.msra.mxu0 0
        %1385 = vmatprep.subr.bf16.mxu0 0
        %1386 = vmatpush2.bf16.msra.mxu0 0
        %1387 = vmatprep.subr.bf16.mxu0 0
        %1388 = vmatpush2.bf16.msra.mxu0 0
        %1389 = vmatprep.subr.bf16.mxu0 0
        %1390 = vmatpush2.bf16.msra.mxu0 0
        %1391 = vmatprep.subr.bf16.mxu0 0
        %1392 = vmatpush2.bf16.msra.mxu0 0
        %1393 = vmatprep.subr.bf16.mxu0 0
        %1394 = vmatpush2.bf16.msra.mxu0 0
        %1395 = vmatprep.mubr.bf16.mxu0 0
        %1396 = vmatmul.mubr.bf16.gmra.mxu0 %v1361
        %v1397 = vpop.f32.mrf.mxu0
        %v1398 = vadd.f32 0.0, %v1397
        %v1399 = vpop.f32.mrf.mxu0
        %v1400 = vpop.f32.mrf.mxu0
        %v1401 = vpop.f32.mrf.mxu0
        %1402 = vdwg.mxu0
        %v1403 = vadd.f32 %v1337, %v1398
        %s1404 = scalar_lea.vmem %s1, 44
        %v1405 = vld [vmem:[%s1404] sm:$0x3]
        %1406 = vrot.lane.b32.xlu0 %v1356, 127
        %v1407 = vpop.permute.xlu0 %1406
        %1408 = vrot.lane.b32.xlu0 %v1357, 127
        %v1409 = vpop.permute.xlu0 %1408
        %v1413 = vsel %vm233, %v1405, 0
        %1415 = vmatprep.subr.bf16.mxu0 0
        %1416 = vmatpush1.bf16.msra.mxu0 0
        %1417 = vmatprep.subr.bf16.mxu0 0
        %1418 = vmatpush1.bf16.msra.mxu0 0
        %1419 = vmatprep.subr.bf16.mxu0 0
        %1420 = vmatpush1.bf16.msra.mxu0 0
        %1421 = vmatprep.subr.bf16.mxu0 0
        %1422 = vmatpush1.bf16.msra.mxu0 0
        %1423 = vmatprep.subr.bf16.mxu0 0
        %1424 = vmatpush1.bf16.msra.mxu0 0
        %1425 = vmatprep.subr.bf16.mxu0 0
        %1426 = vmatpush1.bf16.msra.mxu0 0
        %1427 = vmatprep.subr.bf16.mxu0 0
        %1428 = vmatpush1.bf16.msra.mxu0 %v1409
        %1429 = vmatprep.subr.bf16.mxu0 0
        %1430 = vmatpush1.bf16.msra.mxu0 %v1407
        %1431 = vmatprep.subr.bf16.mxu0 0
        %1432 = vmatpush2.bf16.msra.mxu0 0
        %1433 = vmatprep.subr.bf16.mxu0 0
        %1434 = vmatpush2.bf16.msra.mxu0 0
        %1435 = vmatprep.subr.bf16.mxu0 0
        %1436 = vmatpush2.bf16.msra.mxu0 0
        %1437 = vmatprep.subr.bf16.mxu0 0
        %1438 = vmatpush2.bf16.msra.mxu0 0
        %1439 = vmatprep.subr.bf16.mxu0 0
        %1440 = vmatpush2.bf16.msra.mxu0 0
        %1441 = vmatprep.subr.bf16.mxu0 0
        %1442 = vmatpush2.bf16.msra.mxu0 0
        %1443 = vmatprep.subr.bf16.mxu0 0
        %1444 = vmatpush2.bf16.msra.mxu0 0
        %1445 = vmatprep.subr.bf16.mxu0 0
        %1446 = vmatpush2.bf16.msra.mxu0 0
        %1447 = vmatprep.mubr.bf16.mxu0 0
        %1448 = vmatmul.mubr.bf16.gmra.mxu0 %v1413
        %v1449 = vpop.f32.mrf.mxu0
        %v1450 = vadd.f32 0.0, %v1449
        %v1451 = vpop.f32.mrf.mxu0
        %v1452 = vpop.f32.mrf.mxu0
        %v1453 = vpop.f32.mrf.mxu0
        %1454 = vdwg.mxu0
        %v1455 = vadd.f32 %v1403, %v1450
        %s1456 = scalar_lea.vmem %s1, 46
        %v1457 = vld [vmem:[%s1456] sm:$0x3]
        %1458 = vrot.lane.b32.xlu0 %v1356, 126
        %v1459 = vpop.permute.xlu0 %1458
        %1460 = vrot.lane.b32.xlu0 %v1357, 126
        %v1461 = vpop.permute.xlu0 %1460
        %v1465 = vsel %vm233, %v1457, 0
        %1467 = vmatprep.subr.bf16.mxu0 0
        %1468 = vmatpush1.bf16.msra.mxu0 0
        %1469 = vmatprep.subr.bf16.mxu0 0
        %1470 = vmatpush1.bf16.msra.mxu0 0
        %1471 = vmatprep.subr.bf16.mxu0 0
        %1472 = vmatpush1.bf16.msra.mxu0 0
        %1473 = vmatprep.subr.bf16.mxu0 0
        %1474 = vmatpush1.bf16.msra.mxu0 0
        %1475 = vmatprep.subr.bf16.mxu0 0
        %1476 = vmatpush1.bf16.msra.mxu0 0
        %1477 = vmatprep.subr.bf16.mxu0 0
        %1478 = vmatpush1.bf16.msra.mxu0 0
        %1479 = vmatprep.subr.bf16.mxu0 0
        %1480 = vmatpush1.bf16.msra.mxu0 %v1461
        %1481 = vmatprep.subr.bf16.mxu0 0
        %1482 = vmatpush1.bf16.msra.mxu0 %v1459
        %1483 = vmatprep.subr.bf16.mxu0 0
        %1484 = vmatpush2.bf16.msra.mxu0 0
        %1485 = vmatprep.subr.bf16.mxu0 0
        %1486 = vmatpush2.bf16.msra.mxu0 0
        %1487 = vmatprep.subr.bf16.mxu0 0
        %1488 = vmatpush2.bf16.msra.mxu0 0
        %1489 = vmatprep.subr.bf16.mxu0 0
        %1490 = vmatpush2.bf16.msra.mxu0 0
        %1491 = vmatprep.subr.bf16.mxu0 0
        %1492 = vmatpush2.bf16.msra.mxu0 0
        %1493 = vmatprep.subr.bf16.mxu0 0
        %1494 = vmatpush2.bf16.msra.mxu0 0
        %1495 = vmatprep.subr.bf16.mxu0 0
        %1496 = vmatpush2.bf16.msra.mxu0 0
        %1497 = vmatprep.subr.bf16.mxu0 0
        %1498 = vmatpush2.bf16.msra.mxu0 0
        %1499 = vmatprep.mubr.bf16.mxu0 0
        %1500 = vmatmul.mubr.bf16.gmra.mxu0 %v1465
        %v1501 = vpop.f32.mrf.mxu0
        %v1502 = vadd.f32 0.0, %v1501
        %v1503 = vpop.f32.mrf.mxu0
        %v1504 = vpop.f32.mrf.mxu0
        %v1505 = vpop.f32.mrf.mxu0
        %1506 = vdwg.mxu0
        %v1507 = vadd.f32 %v1455, %v1502
        %s1508 = scalar_lea.vmem %s1, 48
        %v1509 = vld [vmem:[%s1508] sm:$0x3]
        %1510 = vrot.lane.b32.xlu0 %v1356, 125
        %v1511 = vpop.permute.xlu0 %1510
        %1512 = vrot.lane.b32.xlu0 %v1357, 125
        %v1513 = vpop.permute.xlu0 %1512
        %v1517 = vsel %vm233, %v1509, 0
        %1519 = vmatprep.subr.bf16.mxu0 0
        %1520 = vmatpush1.bf16.msra.mxu0 0
        %1521 = vmatprep.subr.bf16.mxu0 0
        %1522 = vmatpush1.bf16.msra.mxu0 0
        %1523 = vmatprep.subr.bf16.mxu0 0
        %1524 = vmatpush1.bf16.msra.mxu0 0
        %1525 = vmatprep.subr.bf16.mxu0 0
        %1526 = vmatpush1.bf16.msra.mxu0 0
        %1527 = vmatprep.subr.bf16.mxu0 0
        %1528 = vmatpush1.bf16.msra.mxu0 0
        %1529 = vmatprep.subr.bf16.mxu0 0
        %1530 = vmatpush1.bf16.msra.mxu0 0
        %1531 = vmatprep.subr.bf16.mxu0 0
        %1532 = vmatpush1.bf16.msra.mxu0 %v1513
        %1533 = vmatprep.subr.bf16.mxu0 0
        %1534 = vmatpush1.bf16.msra.mxu0 %v1511
        %1535 = vmatprep.subr.bf16.mxu0 0
        %1536 = vmatpush2.bf16.msra.mxu0 0
        %1537 = vmatprep.subr.bf16.mxu0 0
        %1538 = vmatpush2.bf16.msra.mxu0 0
        %1539 = vmatprep.subr.bf16.mxu0 0
        %1540 = vmatpush2.bf16.msra.mxu0 0
        %1541 = vmatprep.subr.bf16.mxu0 0
        %1542 = vmatpush2.bf16.msra.mxu0 0
        %1543 = vmatprep.subr.bf16.mxu0 0
        %1544 = vmatpush2.bf16.msra.mxu0 0
        %1545 = vmatprep.subr.bf16.mxu0 0
        %1546 = vmatpush2.bf16.msra.mxu0 0
        %1547 = vmatprep.subr.bf16.mxu0 0
        %1548 = vmatpush2.bf16.msra.mxu0 0
        %1549 = vmatprep.subr.bf16.mxu0 0
        %1550 = vmatpush2.bf16.msra.mxu0 0
        %1551 = vmatprep.mubr.bf16.mxu0 0
        %1552 = vmatmul.mubr.bf16.gmra.mxu0 %v1517
        %v1553 = vpop.f32.mrf.mxu0
        %v1554 = vadd.f32 0.0, %v1553
        %v1555 = vpop.f32.mrf.mxu0
        %v1556 = vpop.f32.mrf.mxu0
        %v1557 = vpop.f32.mrf.mxu0
        %1558 = vdwg.mxu0
        %v1559 = vadd.f32 %v1507, %v1554
        %s1560 = scalar_lea.vmem %s1, 50
        %v1561 = vld [vmem:[%s1560] sm:$0x3]
        %1562 = vrot.lane.b32.xlu0 %v1356, 124
        %v1563 = vpop.permute.xlu0 %1562
        %1564 = vrot.lane.b32.xlu0 %v1357, 124
        %v1565 = vpop.permute.xlu0 %1564
        %v1569 = vsel %vm233, %v1561, 0
        %1571 = vmatprep.subr.bf16.mxu0 0
        %1572 = vmatpush1.bf16.msra.mxu0 0
        %1573 = vmatprep.subr.bf16.mxu0 0
        %1574 = vmatpush1.bf16.msra.mxu0 0
        %1575 = vmatprep.subr.bf16.mxu0 0
        %1576 = vmatpush1.bf16.msra.mxu0 0
        %1577 = vmatprep.subr.bf16.mxu0 0
        %1578 = vmatpush1.bf16.msra.mxu0 0
        %1579 = vmatprep.subr.bf16.mxu0 0
        %1580 = vmatpush1.bf16.msra.mxu0 0
        %1581 = vmatprep.subr.bf16.mxu0 0
        %1582 = vmatpush1.bf16.msra.mxu0 0
        %1583 = vmatprep.subr.bf16.mxu0 0
        %1584 = vmatpush1.bf16.msra.mxu0 %v1565
        %1585 = vmatprep.subr.bf16.mxu0 0
        %1586 = vmatpush1.bf16.msra.mxu0 %v1563
        %1587 = vmatprep.subr.bf16.mxu0 0
        %1588 = vmatpush2.bf16.msra.mxu0 0
        %1589 = vmatprep.subr.bf16.mxu0 0
        %1590 = vmatpush2.bf16.msra.mxu0 0
        %1591 = vmatprep.subr.bf16.mxu0 0
        %1592 = vmatpush2.bf16.msra.mxu0 0
        %1593 = vmatprep.subr.bf16.mxu0 0
        %1594 = vmatpush2.bf16.msra.mxu0 0
        %1595 = vmatprep.subr.bf16.mxu0 0
        %1596 = vmatpush2.bf16.msra.mxu0 0
        %1597 = vmatprep.subr.bf16.mxu0 0
        %1598 = vmatpush2.bf16.msra.mxu0 0
        %1599 = vmatprep.subr.bf16.mxu0 0
        %1600 = vmatpush2.bf16.msra.mxu0 0
        %1601 = vmatprep.subr.bf16.mxu0 0
        %1602 = vmatpush2.bf16.msra.mxu0 0
        %1603 = vmatprep.mubr.bf16.mxu0 0
        %1604 = vmatmul.mubr.bf16.gmra.mxu0 %v1569
        %v1605 = vpop.f32.mrf.mxu0
        %v1606 = vadd.f32 0.0, %v1605
        %v1607 = vpop.f32.mrf.mxu0
        %v1608 = vpop.f32.mrf.mxu0
        %v1609 = vpop.f32.mrf.mxu0
        %1610 = vdwg.mxu0
        %v1611 = vadd.f32 %v1559, %v1606
        %s1612 = scalar_lea.vmem %s1, 52
        %v1613 = vld [vmem:[%s1612] sm:$0x3]
        %1614 = vrot.lane.b32.xlu0 %v1356, 123
        %v1615 = vpop.permute.xlu0 %1614
        %1616 = vrot.lane.b32.xlu0 %v1357, 123
        %v1617 = vpop.permute.xlu0 %1616
        %v1621 = vsel %vm233, %v1613, 0
        %1623 = vmatprep.subr.bf16.mxu0 0
        %1624 = vmatpush1.bf16.msra.mxu0 0
        %1625 = vmatprep.subr.bf16.mxu0 0
        %1626 = vmatpush1.bf16.msra.mxu0 0
        %1627 = vmatprep.subr.bf16.mxu0 0
        %1628 = vmatpush1.bf16.msra.mxu0 0
        %1629 = vmatprep.subr.bf16.mxu0 0
        %1630 = vmatpush1.bf16.msra.mxu0 0
        %1631 = vmatprep.subr.bf16.mxu0 0
        %1632 = vmatpush1.bf16.msra.mxu0 0
        %1633 = vmatprep.subr.bf16.mxu0 0
        %1634 = vmatpush1.bf16.msra.mxu0 0
        %1635 = vmatprep.subr.bf16.mxu0 0
        %1636 = vmatpush1.bf16.msra.mxu0 %v1617
        %1637 = vmatprep.subr.bf16.mxu0 0
        %1638 = vmatpush1.bf16.msra.mxu0 %v1615
        %1639 = vmatprep.subr.bf16.mxu0 0
        %1640 = vmatpush2.bf16.msra.mxu0 0
        %1641 = vmatprep.subr.bf16.mxu0 0
        %1642 = vmatpush2.bf16.msra.mxu0 0
        %1643 = vmatprep.subr.bf16.mxu0 0
        %1644 = vmatpush2.bf16.msra.mxu0 0
        %1645 = vmatprep.subr.bf16.mxu0 0
        %1646 = vmatpush2.bf16.msra.mxu0 0
        %1647 = vmatprep.subr.bf16.mxu0 0
        %1648 = vmatpush2.bf16.msra.mxu0 0
        %1649 = vmatprep.subr.bf16.mxu0 0
        %1650 = vmatpush2.bf16.msra.mxu0 0
        %1651 = vmatprep.subr.bf16.mxu0 0
        %1652 = vmatpush2.bf16.msra.mxu0 0
        %1653 = vmatprep.subr.bf16.mxu0 0
        %1654 = vmatpush2.bf16.msra.mxu0 0
        %1655 = vmatprep.mubr.bf16.mxu0 0
        %1656 = vmatmul.mubr.bf16.gmra.mxu0 %v1621
        %v1657 = vpop.f32.mrf.mxu0
        %v1658 = vadd.f32 0.0, %v1657
        %v1659 = vpop.f32.mrf.mxu0
        %v1660 = vpop.f32.mrf.mxu0
        %v1661 = vpop.f32.mrf.mxu0
        %1662 = vdwg.mxu0
        %v1663 = vadd.f32 %v1611, %v1658
        %s1664 = scalar_lea.vmem %s1, 54
        %v1665 = vld [vmem:[%s1664] sm:$0x3]
        %1666 = vrot.lane.b32.xlu0 %v1356, 122
        %v1667 = vpop.permute.xlu0 %1666
        %1668 = vrot.lane.b32.xlu0 %v1357, 122
        %v1669 = vpop.permute.xlu0 %1668
        %v1673 = vsel %vm233, %v1665, 0
        %1675 = vmatprep.subr.bf16.mxu0 0
        %1676 = vmatpush1.bf16.msra.mxu0 0
        %1677 = vmatprep.subr.bf16.mxu0 0
        %1678 = vmatpush1.bf16.msra.mxu0 0
        %1679 = vmatprep.subr.bf16.mxu0 0
        %1680 = vmatpush1.bf16.msra.mxu0 0
        %1681 = vmatprep.subr.bf16.mxu0 0
        %1682 = vmatpush1.bf16.msra.mxu0 0
        %1683 = vmatprep.subr.bf16.mxu0 0
        %1684 = vmatpush1.bf16.msra.mxu0 0
        %1685 = vmatprep.subr.bf16.mxu0 0
        %1686 = vmatpush1.bf16.msra.mxu0 0
        %1687 = vmatprep.subr.bf16.mxu0 0
        %1688 = vmatpush1.bf16.msra.mxu0 %v1669
        %1689 = vmatprep.subr.bf16.mxu0 0
        %1690 = vmatpush1.bf16.msra.mxu0 %v1667
        %1691 = vmatprep.subr.bf16.mxu0 0
        %1692 = vmatpush2.bf16.msra.mxu0 0
        %1693 = vmatprep.subr.bf16.mxu0 0
        %1694 = vmatpush2.bf16.msra.mxu0 0
        %1695 = vmatprep.subr.bf16.mxu0 0
        %1696 = vmatpush2.bf16.msra.mxu0 0
        %1697 = vmatprep.subr.bf16.mxu0 0
        %1698 = vmatpush2.bf16.msra.mxu0 0
        %1699 = vmatprep.subr.bf16.mxu0 0
        %1700 = vmatpush2.bf16.msra.mxu0 0
        %1701 = vmatprep.subr.bf16.mxu0 0
        %1702 = vmatpush2.bf16.msra.mxu0 0
        %1703 = vmatprep.subr.bf16.mxu0 0
        %1704 = vmatpush2.bf16.msra.mxu0 0
        %1705 = vmatprep.subr.bf16.mxu0 0
        %1706 = vmatpush2.bf16.msra.mxu0 0
        %1707 = vmatprep.mubr.bf16.mxu0 0
        %1708 = vmatmul.mubr.bf16.gmra.mxu0 %v1673
        %v1709 = vpop.f32.mrf.mxu0
        %v1710 = vadd.f32 0.0, %v1709
        %v1711 = vpop.f32.mrf.mxu0
        %v1712 = vpop.f32.mrf.mxu0
        %v1713 = vpop.f32.mrf.mxu0
        %1714 = vdwg.mxu0
        %v1715 = vadd.f32 %v1663, %v1710
        %s1716 = sadd.s32 %s202, 4
        %s1717 = smul.u32 %s1716, 4
        %s1718 = smul.addr %s1717, 4
        %s1719 = scalar_lea.vmem %s192, %s1718
        %v1720 = vld [vmem:[%s1719] sm:$0xf]
        %v1721 = vld [vmem:[%s1719 + $0x4] sm:$0xf]
        %v1722 = vld [vmem:[%s1719 + $0x8] sm:$0xf]
        %v1723 = vld [vmem:[%s1719 + $0xc] sm:$0xf]
        %s1724 = scalar_lea.vmem %s1, 56
        %v1725 = vld [vmem:[%s1724] sm:$0x3]
        %v1730 = vunpack.c.l.b16 %v1720
        %v1731 = vunpack.c.l.b16 %v1721
        %v1732 = vunpack.c.l.b16 %v1722
        %v1733 = vunpack.c.l.b16 %v1723
        %v1734 = vpack.c.b16 %v1731, %v1730
        %v1735 = vpack.c.b16 %v1733, %v1732
        %v1739 = vsel %vm233, %v1725, 0
        %1741 = vmatprep.subr.bf16.mxu0 0
        %1742 = vmatpush1.bf16.msra.mxu0 0
        %1743 = vmatprep.subr.bf16.mxu0 0
        %1744 = vmatpush1.bf16.msra.mxu0 0
        %1745 = vmatprep.subr.bf16.mxu0 0
        %1746 = vmatpush1.bf16.msra.mxu0 0
        %1747 = vmatprep.subr.bf16.mxu0 0
        %1748 = vmatpush1.bf16.msra.mxu0 0
        %1749 = vmatprep.subr.bf16.mxu0 0
        %1750 = vmatpush1.bf16.msra.mxu0 0
        %1751 = vmatprep.subr.bf16.mxu0 0
        %1752 = vmatpush1.bf16.msra.mxu0 0
        %1753 = vmatprep.subr.bf16.mxu0 0
        %1754 = vmatpush1.bf16.msra.mxu0 %v1735
        %1755 = vmatprep.subr.bf16.mxu0 0
        %1756 = vmatpush1.bf16.msra.mxu0 %v1734
        %1757 = vmatprep.subr.bf16.mxu0 0
        %1758 = vmatpush2.bf16.msra.mxu0 0
        %1759 = vmatprep.subr.bf16.mxu0 0
        %1760 = vmatpush2.bf16.msra.mxu0 0
        %1761 = vmatprep.subr.bf16.mxu0 0
        %1762 = vmatpush2.bf16.msra.mxu0 0
        %1763 = vmatprep.subr.bf16.mxu0 0
        %1764 = vmatpush2.bf16.msra.mxu0 0
        %1765 = vmatprep.subr.bf16.mxu0 0
        %1766 = vmatpush2.bf16.msra.mxu0 0
        %1767 = vmatprep.subr.bf16.mxu0 0
        %1768 = vmatpush2.bf16.msra.mxu0 0
        %1769 = vmatprep.subr.bf16.mxu0 0
        %1770 = vmatpush2.bf16.msra.mxu0 0
        %1771 = vmatprep.subr.bf16.mxu0 0
        %1772 = vmatpush2.bf16.msra.mxu0 0
        %1773 = vmatprep.mubr.bf16.mxu0 0
        %1774 = vmatmul.mubr.bf16.gmra.mxu0 %v1739
        %v1775 = vpop.f32.mrf.mxu0
        %v1776 = vadd.f32 0.0, %v1775
        %v1777 = vpop.f32.mrf.mxu0
        %v1778 = vpop.f32.mrf.mxu0
        %v1779 = vpop.f32.mrf.mxu0
        %1780 = vdwg.mxu0
        %v1781 = vadd.f32 %v1715, %v1776
        %s1782 = scalar_lea.vmem %s1, 58
        %v1783 = vld [vmem:[%s1782] sm:$0x3]
        %1784 = vrot.lane.b32.xlu0 %v1734, 127
        %v1785 = vpop.permute.xlu0 %1784
        %1786 = vrot.lane.b32.xlu0 %v1735, 127
        %v1787 = vpop.permute.xlu0 %1786
        %v1791 = vsel %vm233, %v1783, 0
        %1793 = vmatprep.subr.bf16.mxu0 0
        %1794 = vmatpush1.bf16.msra.mxu0 0
        %1795 = vmatprep.subr.bf16.mxu0 0
        %1796 = vmatpush1.bf16.msra.mxu0 0
        %1797 = vmatprep.subr.bf16.mxu0 0
        %1798 = vmatpush1.bf16.msra.mxu0 0
        %1799 = vmatprep.subr.bf16.mxu0 0
        %1800 = vmatpush1.bf16.msra.mxu0 0
        %1801 = vmatprep.subr.bf16.mxu0 0
        %1802 = vmatpush1.bf16.msra.mxu0 0
        %1803 = vmatprep.subr.bf16.mxu0 0
        %1804 = vmatpush1.bf16.msra.mxu0 0
        %1805 = vmatprep.subr.bf16.mxu0 0
        %1806 = vmatpush1.bf16.msra.mxu0 %v1787
        %1807 = vmatprep.subr.bf16.mxu0 0
        %1808 = vmatpush1.bf16.msra.mxu0 %v1785
        %1809 = vmatprep.subr.bf16.mxu0 0
        %1810 = vmatpush2.bf16.msra.mxu0 0
        %1811 = vmatprep.subr.bf16.mxu0 0
        %1812 = vmatpush2.bf16.msra.mxu0 0
        %1813 = vmatprep.subr.bf16.mxu0 0
        %1814 = vmatpush2.bf16.msra.mxu0 0
        %1815 = vmatprep.subr.bf16.mxu0 0
        %1816 = vmatpush2.bf16.msra.mxu0 0
        %1817 = vmatprep.subr.bf16.mxu0 0
        %1818 = vmatpush2.bf16.msra.mxu0 0
        %1819 = vmatprep.subr.bf16.mxu0 0
        %1820 = vmatpush2.bf16.msra.mxu0 0
        %1821 = vmatprep.subr.bf16.mxu0 0
        %1822 = vmatpush2.bf16.msra.mxu0 0
        %1823 = vmatprep.subr.bf16.mxu0 0
        %1824 = vmatpush2.bf16.msra.mxu0 0
        %1825 = vmatprep.mubr.bf16.mxu0 0
        %1826 = vmatmul.mubr.bf16.gmra.mxu0 %v1791
        %v1827 = vpop.f32.mrf.mxu0
        %v1828 = vadd.f32 0.0, %v1827
        %v1829 = vpop.f32.mrf.mxu0
        %v1830 = vpop.f32.mrf.mxu0
        %v1831 = vpop.f32.mrf.mxu0
        %1832 = vdwg.mxu0
        %v1833 = vadd.f32 %v1781, %v1828
        %s1834 = scalar_lea.vmem %s1, 60
        %v1835 = vld [vmem:[%s1834] sm:$0x3]
        %1836 = vrot.lane.b32.xlu0 %v1734, 126
        %v1837 = vpop.permute.xlu0 %1836
        %1838 = vrot.lane.b32.xlu0 %v1735, 126
        %v1839 = vpop.permute.xlu0 %1838
        %v1843 = vsel %vm233, %v1835, 0
        %1845 = vmatprep.subr.bf16.mxu0 0
        %1846 = vmatpush1.bf16.msra.mxu0 0
        %1847 = vmatprep.subr.bf16.mxu0 0
        %1848 = vmatpush1.bf16.msra.mxu0 0
        %1849 = vmatprep.subr.bf16.mxu0 0
        %1850 = vmatpush1.bf16.msra.mxu0 0
        %1851 = vmatprep.subr.bf16.mxu0 0
        %1852 = vmatpush1.bf16.msra.mxu0 0
        %1853 = vmatprep.subr.bf16.mxu0 0
        %1854 = vmatpush1.bf16.msra.mxu0 0
        %1855 = vmatprep.subr.bf16.mxu0 0
        %1856 = vmatpush1.bf16.msra.mxu0 0
        %1857 = vmatprep.subr.bf16.mxu0 0
        %1858 = vmatpush1.bf16.msra.mxu0 %v1839
        %1859 = vmatprep.subr.bf16.mxu0 0
        %1860 = vmatpush1.bf16.msra.mxu0 %v1837
        %1861 = vmatprep.subr.bf16.mxu0 0
        %1862 = vmatpush2.bf16.msra.mxu0 0
        %1863 = vmatprep.subr.bf16.mxu0 0
        %1864 = vmatpush2.bf16.msra.mxu0 0
        %1865 = vmatprep.subr.bf16.mxu0 0
        %1866 = vmatpush2.bf16.msra.mxu0 0
        %1867 = vmatprep.subr.bf16.mxu0 0
        %1868 = vmatpush2.bf16.msra.mxu0 0
        %1869 = vmatprep.subr.bf16.mxu0 0
        %1870 = vmatpush2.bf16.msra.mxu0 0
        %1871 = vmatprep.subr.bf16.mxu0 0
        %1872 = vmatpush2.bf16.msra.mxu0 0
        %1873 = vmatprep.subr.bf16.mxu0 0
        %1874 = vmatpush2.bf16.msra.mxu0 0
        %1875 = vmatprep.subr.bf16.mxu0 0
        %1876 = vmatpush2.bf16.msra.mxu0 0
        %1877 = vmatprep.mubr.bf16.mxu0 0
        %1878 = vmatmul.mubr.bf16.gmra.mxu0 %v1843
        %v1879 = vpop.f32.mrf.mxu0
        %v1880 = vadd.f32 0.0, %v1879
        %v1881 = vpop.f32.mrf.mxu0
        %v1882 = vpop.f32.mrf.mxu0
        %v1883 = vpop.f32.mrf.mxu0
        %1884 = vdwg.mxu0
        %v1885 = vadd.f32 %v1833, %v1880
        %s1886 = scalar_lea.vmem %s1, 62
        %v1887 = vld [vmem:[%s1886] sm:$0x3]
        %1888 = vrot.lane.b32.xlu0 %v1734, 125
        %v1889 = vpop.permute.xlu0 %1888
        %1890 = vrot.lane.b32.xlu0 %v1735, 125
        %v1891 = vpop.permute.xlu0 %1890
        %v1895 = vsel %vm233, %v1887, 0
        %1897 = vmatprep.subr.bf16.mxu0 0
        %1898 = vmatpush1.bf16.msra.mxu0 0
        %1899 = vmatprep.subr.bf16.mxu0 0
        %1900 = vmatpush1.bf16.msra.mxu0 0
        %1901 = vmatprep.subr.bf16.mxu0 0
        %1902 = vmatpush1.bf16.msra.mxu0 0
        %1903 = vmatprep.subr.bf16.mxu0 0
        %1904 = vmatpush1.bf16.msra.mxu0 0
        %1905 = vmatprep.subr.bf16.mxu0 0
        %1906 = vmatpush1.bf16.msra.mxu0 0
        %1907 = vmatprep.subr.bf16.mxu0 0
        %1908 = vmatpush1.bf16.msra.mxu0 0
        %1909 = vmatprep.subr.bf16.mxu0 0
        %1910 = vmatpush1.bf16.msra.mxu0 %v1891
        %1911 = vmatprep.subr.bf16.mxu0 0
        %1912 = vmatpush1.bf16.msra.mxu0 %v1889
        %1913 = vmatprep.subr.bf16.mxu0 0
        %1914 = vmatpush2.bf16.msra.mxu0 0
        %1915 = vmatprep.subr.bf16.mxu0 0
        %1916 = vmatpush2.bf16.msra.mxu0 0
        %1917 = vmatprep.subr.bf16.mxu0 0
        %1918 = vmatpush2.bf16.msra.mxu0 0
        %1919 = vmatprep.subr.bf16.mxu0 0
        %1920 = vmatpush2.bf16.msra.mxu0 0
        %1921 = vmatprep.subr.bf16.mxu0 0
        %1922 = vmatpush2.bf16.msra.mxu0 0
        %1923 = vmatprep.subr.bf16.mxu0 0
        %1924 = vmatpush2.bf16.msra.mxu0 0
        %1925 = vmatprep.subr.bf16.mxu0 0
        %1926 = vmatpush2.bf16.msra.mxu0 0
        %1927 = vmatprep.subr.bf16.mxu0 0
        %1928 = vmatpush2.bf16.msra.mxu0 0
        %1929 = vmatprep.mubr.bf16.mxu0 0
        %1930 = vmatmul.mubr.bf16.gmra.mxu0 %v1895
        %v1931 = vpop.f32.mrf.mxu0
        %v1932 = vadd.f32 0.0, %v1931
        %v1933 = vpop.f32.mrf.mxu0
        %v1934 = vpop.f32.mrf.mxu0
        %v1935 = vpop.f32.mrf.mxu0
        %1936 = vdwg.mxu0
        %v1937 = vadd.f32 %v1885, %v1932
        %s1938 = scalar_lea.vmem %s1, 64
        %v1939 = vld [vmem:[%s1938] sm:$0x3]
        %1940 = vrot.lane.b32.xlu0 %v1734, 124
        %v1941 = vpop.permute.xlu0 %1940
        %1942 = vrot.lane.b32.xlu0 %v1735, 124
        %v1943 = vpop.permute.xlu0 %1942
        %v1947 = vsel %vm233, %v1939, 0
        %1949 = vmatprep.subr.bf16.mxu0 0
        %1950 = vmatpush1.bf16.msra.mxu0 0
        %1951 = vmatprep.subr.bf16.mxu0 0
        %1952 = vmatpush1.bf16.msra.mxu0 0
        %1953 = vmatprep.subr.bf16.mxu0 0
        %1954 = vmatpush1.bf16.msra.mxu0 0
        %1955 = vmatprep.subr.bf16.mxu0 0
        %1956 = vmatpush1.bf16.msra.mxu0 0
        %1957 = vmatprep.subr.bf16.mxu0 0
        %1958 = vmatpush1.bf16.msra.mxu0 0
        %1959 = vmatprep.subr.bf16.mxu0 0
        %1960 = vmatpush1.bf16.msra.mxu0 0
        %1961 = vmatprep.subr.bf16.mxu0 0
        %1962 = vmatpush1.bf16.msra.mxu0 %v1943
        %1963 = vmatprep.subr.bf16.mxu0 0
        %1964 = vmatpush1.bf16.msra.mxu0 %v1941
        %1965 = vmatprep.subr.bf16.mxu0 0
        %1966 = vmatpush2.bf16.msra.mxu0 0
        %1967 = vmatprep.subr.bf16.mxu0 0
        %1968 = vmatpush2.bf16.msra.mxu0 0
        %1969 = vmatprep.subr.bf16.mxu0 0
        %1970 = vmatpush2.bf16.msra.mxu0 0
        %1971 = vmatprep.subr.bf16.mxu0 0
        %1972 = vmatpush2.bf16.msra.mxu0 0
        %1973 = vmatprep.subr.bf16.mxu0 0
        %1974 = vmatpush2.bf16.msra.mxu0 0
        %1975 = vmatprep.subr.bf16.mxu0 0
        %1976 = vmatpush2.bf16.msra.mxu0 0
        %1977 = vmatprep.subr.bf16.mxu0 0
        %1978 = vmatpush2.bf16.msra.mxu0 0
        %1979 = vmatprep.subr.bf16.mxu0 0
        %1980 = vmatpush2.bf16.msra.mxu0 0
        %1981 = vmatprep.mubr.bf16.mxu0 0
        %1982 = vmatmul.mubr.bf16.gmra.mxu0 %v1947
        %v1983 = vpop.f32.mrf.mxu0
        %v1984 = vadd.f32 0.0, %v1983
        %v1985 = vpop.f32.mrf.mxu0
        %v1986 = vpop.f32.mrf.mxu0
        %v1987 = vpop.f32.mrf.mxu0
        %1988 = vdwg.mxu0
        %v1989 = vadd.f32 %v1937, %v1984
        %s1990 = scalar_lea.vmem %s1, 66
        %v1991 = vld [vmem:[%s1990] sm:$0x3]
        %1992 = vrot.lane.b32.xlu0 %v1734, 123
        %v1993 = vpop.permute.xlu0 %1992
        %1994 = vrot.lane.b32.xlu0 %v1735, 123
        %v1995 = vpop.permute.xlu0 %1994
        %v1999 = vsel %vm233, %v1991, 0
        %2001 = vmatprep.subr.bf16.mxu0 0
        %2002 = vmatpush1.bf16.msra.mxu0 0
        %2003 = vmatprep.subr.bf16.mxu0 0
        %2004 = vmatpush1.bf16.msra.mxu0 0
        %2005 = vmatprep.subr.bf16.mxu0 0
        %2006 = vmatpush1.bf16.msra.mxu0 0
        %2007 = vmatprep.subr.bf16.mxu0 0
        %2008 = vmatpush1.bf16.msra.mxu0 0
        %2009 = vmatprep.subr.bf16.mxu0 0
        %2010 = vmatpush1.bf16.msra.mxu0 0
        %2011 = vmatprep.subr.bf16.mxu0 0
        %2012 = vmatpush1.bf16.msra.mxu0 0
        %2013 = vmatprep.subr.bf16.mxu0 0
        %2014 = vmatpush1.bf16.msra.mxu0 %v1995
        %2015 = vmatprep.subr.bf16.mxu0 0
        %2016 = vmatpush1.bf16.msra.mxu0 %v1993
        %2017 = vmatprep.subr.bf16.mxu0 0
        %2018 = vmatpush2.bf16.msra.mxu0 0
        %2019 = vmatprep.subr.bf16.mxu0 0
        %2020 = vmatpush2.bf16.msra.mxu0 0
        %2021 = vmatprep.subr.bf16.mxu0 0
        %2022 = vmatpush2.bf16.msra.mxu0 0
        %2023 = vmatprep.subr.bf16.mxu0 0
        %2024 = vmatpush2.bf16.msra.mxu0 0
        %2025 = vmatprep.subr.bf16.mxu0 0
        %2026 = vmatpush2.bf16.msra.mxu0 0
        %2027 = vmatprep.subr.bf16.mxu0 0
        %2028 = vmatpush2.bf16.msra.mxu0 0
        %2029 = vmatprep.subr.bf16.mxu0 0
        %2030 = vmatpush2.bf16.msra.mxu0 0
        %2031 = vmatprep.subr.bf16.mxu0 0
        %2032 = vmatpush2.bf16.msra.mxu0 0
        %2033 = vmatprep.mubr.bf16.mxu0 0
        %2034 = vmatmul.mubr.bf16.gmra.mxu0 %v1999
        %v2035 = vpop.f32.mrf.mxu0
        %v2036 = vadd.f32 0.0, %v2035
        %v2037 = vpop.f32.mrf.mxu0
        %v2038 = vpop.f32.mrf.mxu0
        %v2039 = vpop.f32.mrf.mxu0
        %2040 = vdwg.mxu0
        %v2041 = vadd.f32 %v1989, %v2036
        %s2042 = scalar_lea.vmem %s1, 68
        %v2043 = vld [vmem:[%s2042] sm:$0x3]
        %2044 = vrot.lane.b32.xlu0 %v1734, 122
        %v2045 = vpop.permute.xlu0 %2044
        %2046 = vrot.lane.b32.xlu0 %v1735, 122
        %v2047 = vpop.permute.xlu0 %2046
        %v2051 = vsel %vm233, %v2043, 0
        %2053 = vmatprep.subr.bf16.mxu0 0
        %2054 = vmatpush1.bf16.msra.mxu0 0
        %2055 = vmatprep.subr.bf16.mxu0 0
        %2056 = vmatpush1.bf16.msra.mxu0 0
        %2057 = vmatprep.subr.bf16.mxu0 0
        %2058 = vmatpush1.bf16.msra.mxu0 0
        %2059 = vmatprep.subr.bf16.mxu0 0
        %2060 = vmatpush1.bf16.msra.mxu0 0
        %2061 = vmatprep.subr.bf16.mxu0 0
        %2062 = vmatpush1.bf16.msra.mxu0 0
        %2063 = vmatprep.subr.bf16.mxu0 0
        %2064 = vmatpush1.bf16.msra.mxu0 0
        %2065 = vmatprep.subr.bf16.mxu0 0
        %2066 = vmatpush1.bf16.msra.mxu0 %v2047
        %2067 = vmatprep.subr.bf16.mxu0 0
        %2068 = vmatpush1.bf16.msra.mxu0 %v2045
        %2069 = vmatprep.subr.bf16.mxu0 0
        %2070 = vmatpush2.bf16.msra.mxu0 0
        %2071 = vmatprep.subr.bf16.mxu0 0
        %2072 = vmatpush2.bf16.msra.mxu0 0
        %2073 = vmatprep.subr.bf16.mxu0 0
        %2074 = vmatpush2.bf16.msra.mxu0 0
        %2075 = vmatprep.subr.bf16.mxu0 0
        %2076 = vmatpush2.bf16.msra.mxu0 0
        %2077 = vmatprep.subr.bf16.mxu0 0
        %2078 = vmatpush2.bf16.msra.mxu0 0
        %2079 = vmatprep.subr.bf16.mxu0 0
        %2080 = vmatpush2.bf16.msra.mxu0 0
        %2081 = vmatprep.subr.bf16.mxu0 0
        %2082 = vmatpush2.bf16.msra.mxu0 0
        %2083 = vmatprep.subr.bf16.mxu0 0
        %2084 = vmatpush2.bf16.msra.mxu0 0
        %2085 = vmatprep.mubr.bf16.mxu0 0
        %2086 = vmatmul.mubr.bf16.gmra.mxu0 %v2051
        %v2087 = vpop.f32.mrf.mxu0
        %v2088 = vadd.f32 0.0, %v2087
        %v2089 = vpop.f32.mrf.mxu0
        %v2090 = vpop.f32.mrf.mxu0
        %v2091 = vpop.f32.mrf.mxu0
        %2092 = vdwg.mxu0
        %v2093 = vadd.f32 %v2041, %v2088
        %s2094 = sadd.s32 %s202, 5
        %s2095 = smul.u32 %s2094, 4
        %s2096 = smul.addr %s2095, 4
        %s2097 = scalar_lea.vmem %s192, %s2096
        %v2098 = vld [vmem:[%s2097] sm:$0xf]
        %v2099 = vld [vmem:[%s2097 + $0x4] sm:$0xf]
        %v2100 = vld [vmem:[%s2097 + $0x8] sm:$0xf]
        %v2101 = vld [vmem:[%s2097 + $0xc] sm:$0xf]
        %s2102 = scalar_lea.vmem %s1, 70
        %v2103 = vld [vmem:[%s2102] sm:$0x3]
        %v2108 = vunpack.c.l.b16 %v2098
        %v2109 = vunpack.c.l.b16 %v2099
        %v2110 = vunpack.c.l.b16 %v2100
        %v2111 = vunpack.c.l.b16 %v2101
        %v2112 = vpack.c.b16 %v2109, %v2108
        %v2113 = vpack.c.b16 %v2111, %v2110
        %v2117 = vsel %vm233, %v2103, 0
        %2119 = vmatprep.subr.bf16.mxu0 0
        %2120 = vmatpush1.bf16.msra.mxu0 0
        %2121 = vmatprep.subr.bf16.mxu0 0
        %2122 = vmatpush1.bf16.msra.mxu0 0
        %2123 = vmatprep.subr.bf16.mxu0 0
        %2124 = vmatpush1.bf16.msra.mxu0 0
        %2125 = vmatprep.subr.bf16.mxu0 0
        %2126 = vmatpush1.bf16.msra.mxu0 0
        %2127 = vmatprep.subr.bf16.mxu0 0
        %2128 = vmatpush1.bf16.msra.mxu0 0
        %2129 = vmatprep.subr.bf16.mxu0 0
        %2130 = vmatpush1.bf16.msra.mxu0 0
        %2131 = vmatprep.subr.bf16.mxu0 0
        %2132 = vmatpush1.bf16.msra.mxu0 %v2113
        %2133 = vmatprep.subr.bf16.mxu0 0
        %2134 = vmatpush1.bf16.msra.mxu0 %v2112
        %2135 = vmatprep.subr.bf16.mxu0 0
        %2136 = vmatpush2.bf16.msra.mxu0 0
        %2137 = vmatprep.subr.bf16.mxu0 0
        %2138 = vmatpush2.bf16.msra.mxu0 0
        %2139 = vmatprep.subr.bf16.mxu0 0
        %2140 = vmatpush2.bf16.msra.mxu0 0
        %2141 = vmatprep.subr.bf16.mxu0 0
        %2142 = vmatpush2.bf16.msra.mxu0 0
        %2143 = vmatprep.subr.bf16.mxu0 0
        %2144 = vmatpush2.bf16.msra.mxu0 0
        %2145 = vmatprep.subr.bf16.mxu0 0
        %2146 = vmatpush2.bf16.msra.mxu0 0
        %2147 = vmatprep.subr.bf16.mxu0 0
        %2148 = vmatpush2.bf16.msra.mxu0 0
        %2149 = vmatprep.subr.bf16.mxu0 0
        %2150 = vmatpush2.bf16.msra.mxu0 0
        %2151 = vmatprep.mubr.bf16.mxu0 0
        %2152 = vmatmul.mubr.bf16.gmra.mxu0 %v2117
        %v2153 = vpop.f32.mrf.mxu0
        %v2154 = vadd.f32 0.0, %v2153
        %v2155 = vpop.f32.mrf.mxu0
        %v2156 = vpop.f32.mrf.mxu0
        %v2157 = vpop.f32.mrf.mxu0
        %2158 = vdwg.mxu0
        %v2159 = vadd.f32 %v2093, %v2154
        %s2160 = scalar_lea.vmem %s1, 72
        %v2161 = vld [vmem:[%s2160] sm:$0x3]
        %2162 = vrot.lane.b32.xlu0 %v2112, 127
        %v2163 = vpop.permute.xlu0 %2162
        %2164 = vrot.lane.b32.xlu0 %v2113, 127
        %v2165 = vpop.permute.xlu0 %2164
        %v2169 = vsel %vm233, %v2161, 0
        %2171 = vmatprep.subr.bf16.mxu0 0
        %2172 = vmatpush1.bf16.msra.mxu0 0
        %2173 = vmatprep.subr.bf16.mxu0 0
        %2174 = vmatpush1.bf16.msra.mxu0 0
        %2175 = vmatprep.subr.bf16.mxu0 0
        %2176 = vmatpush1.bf16.msra.mxu0 0
        %2177 = vmatprep.subr.bf16.mxu0 0
        %2178 = vmatpush1.bf16.msra.mxu0 0
        %2179 = vmatprep.subr.bf16.mxu0 0
        %2180 = vmatpush1.bf16.msra.mxu0 0
        %2181 = vmatprep.subr.bf16.mxu0 0
        %2182 = vmatpush1.bf16.msra.mxu0 0
        %2183 = vmatprep.subr.bf16.mxu0 0
        %2184 = vmatpush1.bf16.msra.mxu0 %v2165
        %2185 = vmatprep.subr.bf16.mxu0 0
        %2186 = vmatpush1.bf16.msra.mxu0 %v2163
        %2187 = vmatprep.subr.bf16.mxu0 0
        %2188 = vmatpush2.bf16.msra.mxu0 0
        %2189 = vmatprep.subr.bf16.mxu0 0
        %2190 = vmatpush2.bf16.msra.mxu0 0
        %2191 = vmatprep.subr.bf16.mxu0 0
        %2192 = vmatpush2.bf16.msra.mxu0 0
        %2193 = vmatprep.subr.bf16.mxu0 0
        %2194 = vmatpush2.bf16.msra.mxu0 0
        %2195 = vmatprep.subr.bf16.mxu0 0
        %2196 = vmatpush2.bf16.msra.mxu0 0
        %2197 = vmatprep.subr.bf16.mxu0 0
        %2198 = vmatpush2.bf16.msra.mxu0 0
        %2199 = vmatprep.subr.bf16.mxu0 0
        %2200 = vmatpush2.bf16.msra.mxu0 0
        %2201 = vmatprep.subr.bf16.mxu0 0
        %2202 = vmatpush2.bf16.msra.mxu0 0
        %2203 = vmatprep.mubr.bf16.mxu0 0
        %2204 = vmatmul.mubr.bf16.gmra.mxu0 %v2169
        %v2205 = vpop.f32.mrf.mxu0
        %v2206 = vadd.f32 0.0, %v2205
        %v2207 = vpop.f32.mrf.mxu0
        %v2208 = vpop.f32.mrf.mxu0
        %v2209 = vpop.f32.mrf.mxu0
        %2210 = vdwg.mxu0
        %v2211 = vadd.f32 %v2159, %v2206
        %s2212 = scalar_lea.vmem %s1, 74
        %v2213 = vld [vmem:[%s2212] sm:$0x3]
        %2214 = vrot.lane.b32.xlu0 %v2112, 126
        %v2215 = vpop.permute.xlu0 %2214
        %2216 = vrot.lane.b32.xlu0 %v2113, 126
        %v2217 = vpop.permute.xlu0 %2216
        %v2221 = vsel %vm233, %v2213, 0
        %2223 = vmatprep.subr.bf16.mxu0 0
        %2224 = vmatpush1.bf16.msra.mxu0 0
        %2225 = vmatprep.subr.bf16.mxu0 0
        %2226 = vmatpush1.bf16.msra.mxu0 0
        %2227 = vmatprep.subr.bf16.mxu0 0
        %2228 = vmatpush1.bf16.msra.mxu0 0
        %2229 = vmatprep.subr.bf16.mxu0 0
        %2230 = vmatpush1.bf16.msra.mxu0 0
        %2231 = vmatprep.subr.bf16.mxu0 0
        %2232 = vmatpush1.bf16.msra.mxu0 0
        %2233 = vmatprep.subr.bf16.mxu0 0
        %2234 = vmatpush1.bf16.msra.mxu0 0
        %2235 = vmatprep.subr.bf16.mxu0 0
        %2236 = vmatpush1.bf16.msra.mxu0 %v2217
        %2237 = vmatprep.subr.bf16.mxu0 0
        %2238 = vmatpush1.bf16.msra.mxu0 %v2215
        %2239 = vmatprep.subr.bf16.mxu0 0
        %2240 = vmatpush2.bf16.msra.mxu0 0
        %2241 = vmatprep.subr.bf16.mxu0 0
        %2242 = vmatpush2.bf16.msra.mxu0 0
        %2243 = vmatprep.subr.bf16.mxu0 0
        %2244 = vmatpush2.bf16.msra.mxu0 0
        %2245 = vmatprep.subr.bf16.mxu0 0
        %2246 = vmatpush2.bf16.msra.mxu0 0
        %2247 = vmatprep.subr.bf16.mxu0 0
        %2248 = vmatpush2.bf16.msra.mxu0 0
        %2249 = vmatprep.subr.bf16.mxu0 0
        %2250 = vmatpush2.bf16.msra.mxu0 0
        %2251 = vmatprep.subr.bf16.mxu0 0
        %2252 = vmatpush2.bf16.msra.mxu0 0
        %2253 = vmatprep.subr.bf16.mxu0 0
        %2254 = vmatpush2.bf16.msra.mxu0 0
        %2255 = vmatprep.mubr.bf16.mxu0 0
        %2256 = vmatmul.mubr.bf16.gmra.mxu0 %v2221
        %v2257 = vpop.f32.mrf.mxu0
        %v2258 = vadd.f32 0.0, %v2257
        %v2259 = vpop.f32.mrf.mxu0
        %v2260 = vpop.f32.mrf.mxu0
        %v2261 = vpop.f32.mrf.mxu0
        %2262 = vdwg.mxu0
        %v2263 = vadd.f32 %v2211, %v2258
        %s2264 = scalar_lea.vmem %s1, 76
        %v2265 = vld [vmem:[%s2264] sm:$0x3]
        %2266 = vrot.lane.b32.xlu0 %v2112, 125
        %v2267 = vpop.permute.xlu0 %2266
        %2268 = vrot.lane.b32.xlu0 %v2113, 125
        %v2269 = vpop.permute.xlu0 %2268
        %v2273 = vsel %vm233, %v2265, 0
        %2275 = vmatprep.subr.bf16.mxu0 0
        %2276 = vmatpush1.bf16.msra.mxu0 0
        %2277 = vmatprep.subr.bf16.mxu0 0
        %2278 = vmatpush1.bf16.msra.mxu0 0
        %2279 = vmatprep.subr.bf16.mxu0 0
        %2280 = vmatpush1.bf16.msra.mxu0 0
        %2281 = vmatprep.subr.bf16.mxu0 0
        %2282 = vmatpush1.bf16.msra.mxu0 0
        %2283 = vmatprep.subr.bf16.mxu0 0
        %2284 = vmatpush1.bf16.msra.mxu0 0
        %2285 = vmatprep.subr.bf16.mxu0 0
        %2286 = vmatpush1.bf16.msra.mxu0 0
        %2287 = vmatprep.subr.bf16.mxu0 0
        %2288 = vmatpush1.bf16.msra.mxu0 %v2269
        %2289 = vmatprep.subr.bf16.mxu0 0
        %2290 = vmatpush1.bf16.msra.mxu0 %v2267
        %2291 = vmatprep.subr.bf16.mxu0 0
        %2292 = vmatpush2.bf16.msra.mxu0 0
        %2293 = vmatprep.subr.bf16.mxu0 0
        %2294 = vmatpush2.bf16.msra.mxu0 0
        %2295 = vmatprep.subr.bf16.mxu0 0
        %2296 = vmatpush2.bf16.msra.mxu0 0
        %2297 = vmatprep.subr.bf16.mxu0 0
        %2298 = vmatpush2.bf16.msra.mxu0 0
        %2299 = vmatprep.subr.bf16.mxu0 0
        %2300 = vmatpush2.bf16.msra.mxu0 0
        %2301 = vmatprep.subr.bf16.mxu0 0
        %2302 = vmatpush2.bf16.msra.mxu0 0
        %2303 = vmatprep.subr.bf16.mxu0 0
        %2304 = vmatpush2.bf16.msra.mxu0 0
        %2305 = vmatprep.subr.bf16.mxu0 0
        %2306 = vmatpush2.bf16.msra.mxu0 0
        %2307 = vmatprep.mubr.bf16.mxu0 0
        %2308 = vmatmul.mubr.bf16.gmra.mxu0 %v2273
        %v2309 = vpop.f32.mrf.mxu0
        %v2310 = vadd.f32 0.0, %v2309
        %v2311 = vpop.f32.mrf.mxu0
        %v2312 = vpop.f32.mrf.mxu0
        %v2313 = vpop.f32.mrf.mxu0
        %2314 = vdwg.mxu0
        %v2315 = vadd.f32 %v2263, %v2310
        %s2316 = scalar_lea.vmem %s1, 78
        %v2317 = vld [vmem:[%s2316] sm:$0x3]
        %2318 = vrot.lane.b32.xlu0 %v2112, 124
        %v2319 = vpop.permute.xlu0 %2318
        %2320 = vrot.lane.b32.xlu0 %v2113, 124
        %v2321 = vpop.permute.xlu0 %2320
        %v2325 = vsel %vm233, %v2317, 0
        %2327 = vmatprep.subr.bf16.mxu0 0
        %2328 = vmatpush1.bf16.msra.mxu0 0
        %2329 = vmatprep.subr.bf16.mxu0 0
        %2330 = vmatpush1.bf16.msra.mxu0 0
        %2331 = vmatprep.subr.bf16.mxu0 0
        %2332 = vmatpush1.bf16.msra.mxu0 0
        %2333 = vmatprep.subr.bf16.mxu0 0
        %2334 = vmatpush1.bf16.msra.mxu0 0
        %2335 = vmatprep.subr.bf16.mxu0 0
        %2336 = vmatpush1.bf16.msra.mxu0 0
        %2337 = vmatprep.subr.bf16.mxu0 0
        %2338 = vmatpush1.bf16.msra.mxu0 0
        %2339 = vmatprep.subr.bf16.mxu0 0
        %2340 = vmatpush1.bf16.msra.mxu0 %v2321
        %2341 = vmatprep.subr.bf16.mxu0 0
        %2342 = vmatpush1.bf16.msra.mxu0 %v2319
        %2343 = vmatprep.subr.bf16.mxu0 0
        %2344 = vmatpush2.bf16.msra.mxu0 0
        %2345 = vmatprep.subr.bf16.mxu0 0
        %2346 = vmatpush2.bf16.msra.mxu0 0
        %2347 = vmatprep.subr.bf16.mxu0 0
        %2348 = vmatpush2.bf16.msra.mxu0 0
        %2349 = vmatprep.subr.bf16.mxu0 0
        %2350 = vmatpush2.bf16.msra.mxu0 0
        %2351 = vmatprep.subr.bf16.mxu0 0
        %2352 = vmatpush2.bf16.msra.mxu0 0
        %2353 = vmatprep.subr.bf16.mxu0 0
        %2354 = vmatpush2.bf16.msra.mxu0 0
        %2355 = vmatprep.subr.bf16.mxu0 0
        %2356 = vmatpush2.bf16.msra.mxu0 0
        %2357 = vmatprep.subr.bf16.mxu0 0
        %2358 = vmatpush2.bf16.msra.mxu0 0
        %2359 = vmatprep.mubr.bf16.mxu0 0
        %2360 = vmatmul.mubr.bf16.gmra.mxu0 %v2325
        %v2361 = vpop.f32.mrf.mxu0
        %v2362 = vadd.f32 0.0, %v2361
        %v2363 = vpop.f32.mrf.mxu0
        %v2364 = vpop.f32.mrf.mxu0
        %v2365 = vpop.f32.mrf.mxu0
        %2366 = vdwg.mxu0
        %v2367 = vadd.f32 %v2315, %v2362
        %s2368 = scalar_lea.vmem %s1, 80
        %v2369 = vld [vmem:[%s2368] sm:$0x3]
        %2370 = vrot.lane.b32.xlu0 %v2112, 123
        %v2371 = vpop.permute.xlu0 %2370
        %2372 = vrot.lane.b32.xlu0 %v2113, 123
        %v2373 = vpop.permute.xlu0 %2372
        %v2377 = vsel %vm233, %v2369, 0
        %2379 = vmatprep.subr.bf16.mxu0 0
        %2380 = vmatpush1.bf16.msra.mxu0 0
        %2381 = vmatprep.subr.bf16.mxu0 0
        %2382 = vmatpush1.bf16.msra.mxu0 0
        %2383 = vmatprep.subr.bf16.mxu0 0
        %2384 = vmatpush1.bf16.msra.mxu0 0
        %2385 = vmatprep.subr.bf16.mxu0 0
        %2386 = vmatpush1.bf16.msra.mxu0 0
        %2387 = vmatprep.subr.bf16.mxu0 0
        %2388 = vmatpush1.bf16.msra.mxu0 0
        %2389 = vmatprep.subr.bf16.mxu0 0
        %2390 = vmatpush1.bf16.msra.mxu0 0
        %2391 = vmatprep.subr.bf16.mxu0 0
        %2392 = vmatpush1.bf16.msra.mxu0 %v2373
        %2393 = vmatprep.subr.bf16.mxu0 0
        %2394 = vmatpush1.bf16.msra.mxu0 %v2371
        %2395 = vmatprep.subr.bf16.mxu0 0
        %2396 = vmatpush2.bf16.msra.mxu0 0
        %2397 = vmatprep.subr.bf16.mxu0 0
        %2398 = vmatpush2.bf16.msra.mxu0 0
        %2399 = vmatprep.subr.bf16.mxu0 0
        %2400 = vmatpush2.bf16.msra.mxu0 0
        %2401 = vmatprep.subr.bf16.mxu0 0
        %2402 = vmatpush2.bf16.msra.mxu0 0
        %2403 = vmatprep.subr.bf16.mxu0 0
        %2404 = vmatpush2.bf16.msra.mxu0 0
        %2405 = vmatprep.subr.bf16.mxu0 0
        %2406 = vmatpush2.bf16.msra.mxu0 0
        %2407 = vmatprep.subr.bf16.mxu0 0
        %2408 = vmatpush2.bf16.msra.mxu0 0
        %2409 = vmatprep.subr.bf16.mxu0 0
        %2410 = vmatpush2.bf16.msra.mxu0 0
        %2411 = vmatprep.mubr.bf16.mxu0 0
        %2412 = vmatmul.mubr.bf16.gmra.mxu0 %v2377
        %v2413 = vpop.f32.mrf.mxu0
        %v2414 = vadd.f32 0.0, %v2413
        %v2415 = vpop.f32.mrf.mxu0
        %v2416 = vpop.f32.mrf.mxu0
        %v2417 = vpop.f32.mrf.mxu0
        %2418 = vdwg.mxu0
        %v2419 = vadd.f32 %v2367, %v2414
        %s2420 = scalar_lea.vmem %s1, 82
        %v2421 = vld [vmem:[%s2420] sm:$0x3]
        %2422 = vrot.lane.b32.xlu0 %v2112, 122
        %v2423 = vpop.permute.xlu0 %2422
        %2424 = vrot.lane.b32.xlu0 %v2113, 122
        %v2425 = vpop.permute.xlu0 %2424
        %v2429 = vsel %vm233, %v2421, 0
        %2431 = vmatprep.subr.bf16.mxu0 0
        %2432 = vmatpush1.bf16.msra.mxu0 0
        %2433 = vmatprep.subr.bf16.mxu0 0
        %2434 = vmatpush1.bf16.msra.mxu0 0
        %2435 = vmatprep.subr.bf16.mxu0 0
        %2436 = vmatpush1.bf16.msra.mxu0 0
        %2437 = vmatprep.subr.bf16.mxu0 0
        %2438 = vmatpush1.bf16.msra.mxu0 0
        %2439 = vmatprep.subr.bf16.mxu0 0
        %2440 = vmatpush1.bf16.msra.mxu0 0
        %2441 = vmatprep.subr.bf16.mxu0 0
        %2442 = vmatpush1.bf16.msra.mxu0 0
        %2443 = vmatprep.subr.bf16.mxu0 0
        %2444 = vmatpush1.bf16.msra.mxu0 %v2425
        %2445 = vmatprep.subr.bf16.mxu0 0
        %2446 = vmatpush1.bf16.msra.mxu0 %v2423
        %2447 = vmatprep.subr.bf16.mxu0 0
        %2448 = vmatpush2.bf16.msra.mxu0 0
        %2449 = vmatprep.subr.bf16.mxu0 0
        %2450 = vmatpush2.bf16.msra.mxu0 0
        %2451 = vmatprep.subr.bf16.mxu0 0
        %2452 = vmatpush2.bf16.msra.mxu0 0
        %2453 = vmatprep.subr.bf16.mxu0 0
        %2454 = vmatpush2.bf16.msra.mxu0 0
        %2455 = vmatprep.subr.bf16.mxu0 0
        %2456 = vmatpush2.bf16.msra.mxu0 0
        %2457 = vmatprep.subr.bf16.mxu0 0
        %2458 = vmatpush2.bf16.msra.mxu0 0
        %2459 = vmatprep.subr.bf16.mxu0 0
        %2460 = vmatpush2.bf16.msra.mxu0 0
        %2461 = vmatprep.subr.bf16.mxu0 0
        %2462 = vmatpush2.bf16.msra.mxu0 0
        %2463 = vmatprep.mubr.bf16.mxu0 0
        %2464 = vmatmul.mubr.bf16.gmra.mxu0 %v2429
        %v2465 = vpop.f32.mrf.mxu0
        %v2466 = vadd.f32 0.0, %v2465
        %v2467 = vpop.f32.mrf.mxu0
        %v2468 = vpop.f32.mrf.mxu0
        %v2469 = vpop.f32.mrf.mxu0
        %2470 = vdwg.mxu0
        %v2471 = vadd.f32 %v2419, %v2466
        %s2472 = sadd.s32 %s202, 6
        %s2473 = smul.u32 %s2472, 4
        %s2474 = smul.addr %s2473, 4
        %s2475 = scalar_lea.vmem %s192, %s2474
        %v2476 = vld [vmem:[%s2475] sm:$0xf]
        %v2477 = vld [vmem:[%s2475 + $0x4] sm:$0xf]
        %v2478 = vld [vmem:[%s2475 + $0x8] sm:$0xf]
        %v2479 = vld [vmem:[%s2475 + $0xc] sm:$0xf]
        %s2480 = scalar_lea.vmem %s1, 84
        %v2481 = vld [vmem:[%s2480] sm:$0x3]
        %v2486 = vunpack.c.l.b16 %v2476
        %v2487 = vunpack.c.l.b16 %v2477
        %v2488 = vunpack.c.l.b16 %v2478
        %v2489 = vunpack.c.l.b16 %v2479
        %v2490 = vpack.c.b16 %v2487, %v2486
        %v2491 = vpack.c.b16 %v2489, %v2488
        %v2495 = vsel %vm233, %v2481, 0
        %2497 = vmatprep.subr.bf16.mxu0 0
        %2498 = vmatpush1.bf16.msra.mxu0 0
        %2499 = vmatprep.subr.bf16.mxu0 0
        %2500 = vmatpush1.bf16.msra.mxu0 0
        %2501 = vmatprep.subr.bf16.mxu0 0
        %2502 = vmatpush1.bf16.msra.mxu0 0
        %2503 = vmatprep.subr.bf16.mxu0 0
        %2504 = vmatpush1.bf16.msra.mxu0 0
        %2505 = vmatprep.subr.bf16.mxu0 0
        %2506 = vmatpush1.bf16.msra.mxu0 0
        %2507 = vmatprep.subr.bf16.mxu0 0
        %2508 = vmatpush1.bf16.msra.mxu0 0
        %2509 = vmatprep.subr.bf16.mxu0 0
        %2510 = vmatpush1.bf16.msra.mxu0 %v2491
        %2511 = vmatprep.subr.bf16.mxu0 0
        %2512 = vmatpush1.bf16.msra.mxu0 %v2490
        %2513 = vmatprep.subr.bf16.mxu0 0
        %2514 = vmatpush2.bf16.msra.mxu0 0
        %2515 = vmatprep.subr.bf16.mxu0 0
        %2516 = vmatpush2.bf16.msra.mxu0 0
        %2517 = vmatprep.subr.bf16.mxu0 0
        %2518 = vmatpush2.bf16.msra.mxu0 0
        %2519 = vmatprep.subr.bf16.mxu0 0
        %2520 = vmatpush2.bf16.msra.mxu0 0
        %2521 = vmatprep.subr.bf16.mxu0 0
        %2522 = vmatpush2.bf16.msra.mxu0 0
        %2523 = vmatprep.subr.bf16.mxu0 0
        %2524 = vmatpush2.bf16.msra.mxu0 0
        %2525 = vmatprep.subr.bf16.mxu0 0
        %2526 = vmatpush2.bf16.msra.mxu0 0
        %2527 = vmatprep.subr.bf16.mxu0 0
        %2528 = vmatpush2.bf16.msra.mxu0 0
        %2529 = vmatprep.mubr.bf16.mxu0 0
        %2530 = vmatmul.mubr.bf16.gmra.mxu0 %v2495
        %v2531 = vpop.f32.mrf.mxu0
        %v2532 = vadd.f32 0.0, %v2531
        %v2533 = vpop.f32.mrf.mxu0
        %v2534 = vpop.f32.mrf.mxu0
        %v2535 = vpop.f32.mrf.mxu0
        %2536 = vdwg.mxu0
        %v2537 = vadd.f32 %v2471, %v2532
        %s2538 = scalar_lea.vmem %s1, 86
        %v2539 = vld [vmem:[%s2538] sm:$0x3]
        %2540 = vrot.lane.b32.xlu0 %v2490, 127
        %v2541 = vpop.permute.xlu0 %2540
        %2542 = vrot.lane.b32.xlu0 %v2491, 127
        %v2543 = vpop.permute.xlu0 %2542
        %v2547 = vsel %vm233, %v2539, 0
        %2549 = vmatprep.subr.bf16.mxu0 0
        %2550 = vmatpush1.bf16.msra.mxu0 0
        %2551 = vmatprep.subr.bf16.mxu0 0
        %2552 = vmatpush1.bf16.msra.mxu0 0
        %2553 = vmatprep.subr.bf16.mxu0 0
        %2554 = vmatpush1.bf16.msra.mxu0 0
        %2555 = vmatprep.subr.bf16.mxu0 0
        %2556 = vmatpush1.bf16.msra.mxu0 0
        %2557 = vmatprep.subr.bf16.mxu0 0
        %2558 = vmatpush1.bf16.msra.mxu0 0
        %2559 = vmatprep.subr.bf16.mxu0 0
        %2560 = vmatpush1.bf16.msra.mxu0 0
        %2561 = vmatprep.subr.bf16.mxu0 0
        %2562 = vmatpush1.bf16.msra.mxu0 %v2543
        %2563 = vmatprep.subr.bf16.mxu0 0
        %2564 = vmatpush1.bf16.msra.mxu0 %v2541
        %2565 = vmatprep.subr.bf16.mxu0 0
        %2566 = vmatpush2.bf16.msra.mxu0 0
        %2567 = vmatprep.subr.bf16.mxu0 0
        %2568 = vmatpush2.bf16.msra.mxu0 0
        %2569 = vmatprep.subr.bf16.mxu0 0
        %2570 = vmatpush2.bf16.msra.mxu0 0
        %2571 = vmatprep.subr.bf16.mxu0 0
        %2572 = vmatpush2.bf16.msra.mxu0 0
        %2573 = vmatprep.subr.bf16.mxu0 0
        %2574 = vmatpush2.bf16.msra.mxu0 0
        %2575 = vmatprep.subr.bf16.mxu0 0
        %2576 = vmatpush2.bf16.msra.mxu0 0
        %2577 = vmatprep.subr.bf16.mxu0 0
        %2578 = vmatpush2.bf16.msra.mxu0 0
        %2579 = vmatprep.subr.bf16.mxu0 0
        %2580 = vmatpush2.bf16.msra.mxu0 0
        %2581 = vmatprep.mubr.bf16.mxu0 0
        %2582 = vmatmul.mubr.bf16.gmra.mxu0 %v2547
        %v2583 = vpop.f32.mrf.mxu0
        %v2584 = vadd.f32 0.0, %v2583
        %v2585 = vpop.f32.mrf.mxu0
        %v2586 = vpop.f32.mrf.mxu0
        %v2587 = vpop.f32.mrf.mxu0
        %2588 = vdwg.mxu0
        %v2589 = vadd.f32 %v2537, %v2584
        %s2590 = scalar_lea.vmem %s1, 88
        %v2591 = vld [vmem:[%s2590] sm:$0x3]
        %2592 = vrot.lane.b32.xlu0 %v2490, 126
        %v2593 = vpop.permute.xlu0 %2592
        %2594 = vrot.lane.b32.xlu0 %v2491, 126
        %v2595 = vpop.permute.xlu0 %2594
        %v2599 = vsel %vm233, %v2591, 0
        %2601 = vmatprep.subr.bf16.mxu0 0
        %2602 = vmatpush1.bf16.msra.mxu0 0
        %2603 = vmatprep.subr.bf16.mxu0 0
        %2604 = vmatpush1.bf16.msra.mxu0 0
        %2605 = vmatprep.subr.bf16.mxu0 0
        %2606 = vmatpush1.bf16.msra.mxu0 0
        %2607 = vmatprep.subr.bf16.mxu0 0
        %2608 = vmatpush1.bf16.msra.mxu0 0
        %2609 = vmatprep.subr.bf16.mxu0 0
        %2610 = vmatpush1.bf16.msra.mxu0 0
        %2611 = vmatprep.subr.bf16.mxu0 0
        %2612 = vmatpush1.bf16.msra.mxu0 0
        %2613 = vmatprep.subr.bf16.mxu0 0
        %2614 = vmatpush1.bf16.msra.mxu0 %v2595
        %2615 = vmatprep.subr.bf16.mxu0 0
        %2616 = vmatpush1.bf16.msra.mxu0 %v2593
        %2617 = vmatprep.subr.bf16.mxu0 0
        %2618 = vmatpush2.bf16.msra.mxu0 0
        %2619 = vmatprep.subr.bf16.mxu0 0
        %2620 = vmatpush2.bf16.msra.mxu0 0
        %2621 = vmatprep.subr.bf16.mxu0 0
        %2622 = vmatpush2.bf16.msra.mxu0 0
        %2623 = vmatprep.subr.bf16.mxu0 0
        %2624 = vmatpush2.bf16.msra.mxu0 0
        %2625 = vmatprep.subr.bf16.mxu0 0
        %2626 = vmatpush2.bf16.msra.mxu0 0
        %2627 = vmatprep.subr.bf16.mxu0 0
        %2628 = vmatpush2.bf16.msra.mxu0 0
        %2629 = vmatprep.subr.bf16.mxu0 0
        %2630 = vmatpush2.bf16.msra.mxu0 0
        %2631 = vmatprep.subr.bf16.mxu0 0
        %2632 = vmatpush2.bf16.msra.mxu0 0
        %2633 = vmatprep.mubr.bf16.mxu0 0
        %2634 = vmatmul.mubr.bf16.gmra.mxu0 %v2599
        %v2635 = vpop.f32.mrf.mxu0
        %v2636 = vadd.f32 0.0, %v2635
        %v2637 = vpop.f32.mrf.mxu0
        %v2638 = vpop.f32.mrf.mxu0
        %v2639 = vpop.f32.mrf.mxu0
        %2640 = vdwg.mxu0
        %v2641 = vadd.f32 %v2589, %v2636
        %s2642 = scalar_lea.vmem %s1, 90
        %v2643 = vld [vmem:[%s2642] sm:$0x3]
        %2644 = vrot.lane.b32.xlu0 %v2490, 125
        %v2645 = vpop.permute.xlu0 %2644
        %2646 = vrot.lane.b32.xlu0 %v2491, 125
        %v2647 = vpop.permute.xlu0 %2646
        %v2651 = vsel %vm233, %v2643, 0
        %2653 = vmatprep.subr.bf16.mxu0 0
        %2654 = vmatpush1.bf16.msra.mxu0 0
        %2655 = vmatprep.subr.bf16.mxu0 0
        %2656 = vmatpush1.bf16.msra.mxu0 0
        %2657 = vmatprep.subr.bf16.mxu0 0
        %2658 = vmatpush1.bf16.msra.mxu0 0
        %2659 = vmatprep.subr.bf16.mxu0 0
        %2660 = vmatpush1.bf16.msra.mxu0 0
        %2661 = vmatprep.subr.bf16.mxu0 0
        %2662 = vmatpush1.bf16.msra.mxu0 0
        %2663 = vmatprep.subr.bf16.mxu0 0
        %2664 = vmatpush1.bf16.msra.mxu0 0
        %2665 = vmatprep.subr.bf16.mxu0 0
        %2666 = vmatpush1.bf16.msra.mxu0 %v2647
        %2667 = vmatprep.subr.bf16.mxu0 0
        %2668 = vmatpush1.bf16.msra.mxu0 %v2645
        %2669 = vmatprep.subr.bf16.mxu0 0
        %2670 = vmatpush2.bf16.msra.mxu0 0
        %2671 = vmatprep.subr.bf16.mxu0 0
        %2672 = vmatpush2.bf16.msra.mxu0 0
        %2673 = vmatprep.subr.bf16.mxu0 0
        %2674 = vmatpush2.bf16.msra.mxu0 0
        %2675 = vmatprep.subr.bf16.mxu0 0
        %2676 = vmatpush2.bf16.msra.mxu0 0
        %2677 = vmatprep.subr.bf16.mxu0 0
        %2678 = vmatpush2.bf16.msra.mxu0 0
        %2679 = vmatprep.subr.bf16.mxu0 0
        %2680 = vmatpush2.bf16.msra.mxu0 0
        %2681 = vmatprep.subr.bf16.mxu0 0
        %2682 = vmatpush2.bf16.msra.mxu0 0
        %2683 = vmatprep.subr.bf16.mxu0 0
        %2684 = vmatpush2.bf16.msra.mxu0 0
        %2685 = vmatprep.mubr.bf16.mxu0 0
        %2686 = vmatmul.mubr.bf16.gmra.mxu0 %v2651
        %v2687 = vpop.f32.mrf.mxu0
        %v2688 = vadd.f32 0.0, %v2687
        %v2689 = vpop.f32.mrf.mxu0
        %v2690 = vpop.f32.mrf.mxu0
        %v2691 = vpop.f32.mrf.mxu0
        %2692 = vdwg.mxu0
        %v2693 = vadd.f32 %v2641, %v2688
        %s2694 = scalar_lea.vmem %s1, 92
        %v2695 = vld [vmem:[%s2694] sm:$0x3]
        %2696 = vrot.lane.b32.xlu0 %v2490, 124
        %v2697 = vpop.permute.xlu0 %2696
        %2698 = vrot.lane.b32.xlu0 %v2491, 124
        %v2699 = vpop.permute.xlu0 %2698
        %v2703 = vsel %vm233, %v2695, 0
        %2705 = vmatprep.subr.bf16.mxu0 0
        %2706 = vmatpush1.bf16.msra.mxu0 0
        %2707 = vmatprep.subr.bf16.mxu0 0
        %2708 = vmatpush1.bf16.msra.mxu0 0
        %2709 = vmatprep.subr.bf16.mxu0 0
        %2710 = vmatpush1.bf16.msra.mxu0 0
        %2711 = vmatprep.subr.bf16.mxu0 0
        %2712 = vmatpush1.bf16.msra.mxu0 0
        %2713 = vmatprep.subr.bf16.mxu0 0
        %2714 = vmatpush1.bf16.msra.mxu0 0
        %2715 = vmatprep.subr.bf16.mxu0 0
        %2716 = vmatpush1.bf16.msra.mxu0 0
        %2717 = vmatprep.subr.bf16.mxu0 0
        %2718 = vmatpush1.bf16.msra.mxu0 %v2699
        %2719 = vmatprep.subr.bf16.mxu0 0
        %2720 = vmatpush1.bf16.msra.mxu0 %v2697
        %2721 = vmatprep.subr.bf16.mxu0 0
        %2722 = vmatpush2.bf16.msra.mxu0 0
        %2723 = vmatprep.subr.bf16.mxu0 0
        %2724 = vmatpush2.bf16.msra.mxu0 0
        %2725 = vmatprep.subr.bf16.mxu0 0
        %2726 = vmatpush2.bf16.msra.mxu0 0
        %2727 = vmatprep.subr.bf16.mxu0 0
        %2728 = vmatpush2.bf16.msra.mxu0 0
        %2729 = vmatprep.subr.bf16.mxu0 0
        %2730 = vmatpush2.bf16.msra.mxu0 0
        %2731 = vmatprep.subr.bf16.mxu0 0
        %2732 = vmatpush2.bf16.msra.mxu0 0
        %2733 = vmatprep.subr.bf16.mxu0 0
        %2734 = vmatpush2.bf16.msra.mxu0 0
        %2735 = vmatprep.subr.bf16.mxu0 0
        %2736 = vmatpush2.bf16.msra.mxu0 0
        %2737 = vmatprep.mubr.bf16.mxu0 0
        %2738 = vmatmul.mubr.bf16.gmra.mxu0 %v2703
        %v2739 = vpop.f32.mrf.mxu0
        %v2740 = vadd.f32 0.0, %v2739
        %v2741 = vpop.f32.mrf.mxu0
        %v2742 = vpop.f32.mrf.mxu0
        %v2743 = vpop.f32.mrf.mxu0
        %2744 = vdwg.mxu0
        %v2745 = vadd.f32 %v2693, %v2740
        %s2746 = scalar_lea.vmem %s1, 94
        %v2747 = vld [vmem:[%s2746] sm:$0x3]
        %2748 = vrot.lane.b32.xlu0 %v2490, 123
        %v2749 = vpop.permute.xlu0 %2748
        %2750 = vrot.lane.b32.xlu0 %v2491, 123
        %v2751 = vpop.permute.xlu0 %2750
        %v2755 = vsel %vm233, %v2747, 0
        %2757 = vmatprep.subr.bf16.mxu0 0
        %2758 = vmatpush1.bf16.msra.mxu0 0
        %2759 = vmatprep.subr.bf16.mxu0 0
        %2760 = vmatpush1.bf16.msra.mxu0 0
        %2761 = vmatprep.subr.bf16.mxu0 0
        %2762 = vmatpush1.bf16.msra.mxu0 0
        %2763 = vmatprep.subr.bf16.mxu0 0
        %2764 = vmatpush1.bf16.msra.mxu0 0
        %2765 = vmatprep.subr.bf16.mxu0 0
        %2766 = vmatpush1.bf16.msra.mxu0 0
        %2767 = vmatprep.subr.bf16.mxu0 0
        %2768 = vmatpush1.bf16.msra.mxu0 0
        %2769 = vmatprep.subr.bf16.mxu0 0
        %2770 = vmatpush1.bf16.msra.mxu0 %v2751
        %2771 = vmatprep.subr.bf16.mxu0 0
        %2772 = vmatpush1.bf16.msra.mxu0 %v2749
        %2773 = vmatprep.subr.bf16.mxu0 0
        %2774 = vmatpush2.bf16.msra.mxu0 0
        %2775 = vmatprep.subr.bf16.mxu0 0
        %2776 = vmatpush2.bf16.msra.mxu0 0
        %2777 = vmatprep.subr.bf16.mxu0 0
        %2778 = vmatpush2.bf16.msra.mxu0 0
        %2779 = vmatprep.subr.bf16.mxu0 0
        %2780 = vmatpush2.bf16.msra.mxu0 0
        %2781 = vmatprep.subr.bf16.mxu0 0
        %2782 = vmatpush2.bf16.msra.mxu0 0
        %2783 = vmatprep.subr.bf16.mxu0 0
        %2784 = vmatpush2.bf16.msra.mxu0 0
        %2785 = vmatprep.subr.bf16.mxu0 0
        %2786 = vmatpush2.bf16.msra.mxu0 0
        %2787 = vmatprep.subr.bf16.mxu0 0
        %2788 = vmatpush2.bf16.msra.mxu0 0
        %2789 = vmatprep.mubr.bf16.mxu0 0
        %2790 = vmatmul.mubr.bf16.gmra.mxu0 %v2755
        %v2791 = vpop.f32.mrf.mxu0
        %v2792 = vadd.f32 0.0, %v2791
        %v2793 = vpop.f32.mrf.mxu0
        %v2794 = vpop.f32.mrf.mxu0
        %v2795 = vpop.f32.mrf.mxu0
        %2796 = vdwg.mxu0
        %v2797 = vadd.f32 %v2745, %v2792
        %s2798 = scalar_lea.vmem %s1, 96
        %v2799 = vld [vmem:[%s2798] sm:$0x3]
        %2800 = vrot.lane.b32.xlu0 %v2490, 122
        %v2801 = vpop.permute.xlu0 %2800
        %2802 = vrot.lane.b32.xlu0 %v2491, 122
        %v2803 = vpop.permute.xlu0 %2802
        %v2807 = vsel %vm233, %v2799, 0
        %2809 = vmatprep.subr.bf16.mxu0 0
        %2810 = vmatpush1.bf16.msra.mxu0 0
        %2811 = vmatprep.subr.bf16.mxu0 0
        %2812 = vmatpush1.bf16.msra.mxu0 0
        %2813 = vmatprep.subr.bf16.mxu0 0
        %2814 = vmatpush1.bf16.msra.mxu0 0
        %2815 = vmatprep.subr.bf16.mxu0 0
        %2816 = vmatpush1.bf16.msra.mxu0 0
        %2817 = vmatprep.subr.bf16.mxu0 0
        %2818 = vmatpush1.bf16.msra.mxu0 0
        %2819 = vmatprep.subr.bf16.mxu0 0
        %2820 = vmatpush1.bf16.msra.mxu0 0
        %2821 = vmatprep.subr.bf16.mxu0 0
        %2822 = vmatpush1.bf16.msra.mxu0 %v2803
        %2823 = vmatprep.subr.bf16.mxu0 0
        %2824 = vmatpush1.bf16.msra.mxu0 %v2801
        %2825 = vmatprep.subr.bf16.mxu0 0
        %2826 = vmatpush2.bf16.msra.mxu0 0
        %2827 = vmatprep.subr.bf16.mxu0 0
        %2828 = vmatpush2.bf16.msra.mxu0 0
        %2829 = vmatprep.subr.bf16.mxu0 0
        %2830 = vmatpush2.bf16.msra.mxu0 0
        %2831 = vmatprep.subr.bf16.mxu0 0
        %2832 = vmatpush2.bf16.msra.mxu0 0
        %2833 = vmatprep.subr.bf16.mxu0 0
        %2834 = vmatpush2.bf16.msra.mxu0 0
        %2835 = vmatprep.subr.bf16.mxu0 0
        %2836 = vmatpush2.bf16.msra.mxu0 0
        %2837 = vmatprep.subr.bf16.mxu0 0
        %2838 = vmatpush2.bf16.msra.mxu0 0
        %2839 = vmatprep.subr.bf16.mxu0 0
        %2840 = vmatpush2.bf16.msra.mxu0 0
        %2841 = vmatprep.mubr.bf16.mxu0 0
        %2842 = vmatmul.mubr.bf16.gmra.mxu0 %v2807
        %v2843 = vpop.f32.mrf.mxu0
        %v2844 = vadd.f32 0.0, %v2843
        %v2845 = vpop.f32.mrf.mxu0
        %v2846 = vpop.f32.mrf.mxu0
        %v2847 = vpop.f32.mrf.mxu0
        %2848 = vdwg.mxu0
        %v2849 = vadd.f32 %v2797, %v2844
        %2851 = vset.pattern.permute.xlu0 0
        %2852 = vperm.xlu0 %2851, %v199
        %v2853 = vpop.permute.xlu0 %2852
        %v2855 = vmul.f32 %v2849, %v2853
        %2857 = vset.pattern.permute.xlu0 0
        %2858 = vperm.xlu0 %2857, %v200
        %v2859 = vpop.permute.xlu0 %2858
        %v2861 = vadd.f32 %v2855, %v2859
        %v2862 = vsub.f32 0.0, %v2861
        %v2863 = vmul.f32 %v2862, 1.442695
        %v2864 = vpow.pop %v2863
        %v2865 = vadd.f32 %v2864, 1.0
        %v2866 = vrcp.pop %v2865
        %s2867 = scalar_lea.vmem %s197, %s207
        %vm2868 = vcmask 976896
        %2869 = vst.msk [vmem:[%s2867] sm:$0x7] %vm2868, %v2866
      $region41: #{generator_deconv_pallas.21} parent=35 // loop_footer
        %s206 = sadd.s32 1, %s202
      $region42: #{generator_deconv_pallas.21} parent=35 // loop_footer_branch
        %201 = sbr.rel target = $region38
      $region43: #{generator_deconv_pallas.21} parent=35 // loop_exit
        _
      %p2870 = scmp.lt.s32.totalorder %s15, 1
      %s2871 = scalar_select %p2870, %s15, 1
      %s2872 = smul.addr %s2871, 90
      %s2873 = smul.addr %s2872, 4
      %s2874 = scalar_lea.vmem %s4, %s2873
      // Predicated region
      $region44: #{generator_deconv_pallas.21} parent=35 // pred_check
        %p2875 = pneg %p122
      $region45: #{generator_deconv_pallas.21} parent=35 // pred_check_branch
        %2877 = sbr.rel (%p2875) target = $region47
      $region46: #{generator_deconv_pallas.21} parent=35 // pred_region
        _
      $region47: #{generator_deconv_pallas.21} parent=35 // pred_fallthru
        _
    $region36: #{generator_deconv_pallas.21} parent=5 // pred_fallthru
      _
    %p2878 = scmp.le.s32.totalorder 2, %s10
    // Predicated region
    $region48: #{generator_deconv_pallas.21} parent=5 // pred_check
      %p2879 = pneg %p2878
    $region49: #{generator_deconv_pallas.21} parent=5 // pred_check_branch
      %2881 = sbr.rel (%p2879) target = $region51
    $region50: #{generator_deconv_pallas.21} parent=5 // pred_region
      %s2882 = ssub.s32 %s10, 2
      // Predicated region
      $region52: #{generator_deconv_pallas.21} parent=50 // pred_check
        %p2883 = pneg %p128
      $region53: #{generator_deconv_pallas.21} parent=50 // pred_check_branch
        %2885 = sbr.rel (%p2883) target = $region55
      $region54: #{generator_deconv_pallas.21} parent=50 // pred_region
        %p2886 = scmp.lt.s32.totalorder %s16, 1
        %s2887 = scalar_select %p2886, %s16, 1
        %s2888 = smul.addr %s2887, 90
        %s2889 = smul.addr %s2888, 4
        %s2890 = scalar_lea.vmem %s4, %s2889
      $region55: #{generator_deconv_pallas.21} parent=50 // pred_fallthru
        _
    $region51: #{generator_deconv_pallas.21} parent=5 // pred_fallthru
      _
  $region6: #{generator_deconv_pallas.21} parent=0 // loop_footer
    %s14 = sadd.s32 1, %s10
  $region7: #{generator_deconv_pallas.21} parent=0 // loop_footer_branch
    %9 = sbr.rel target = $region3
  $region8: #{generator_deconv_pallas.21} parent=0 // loop_exit
    _

</llo_original>
